<compile_context>
chip_gen: v6e
topology: v6e:2x2x1
jax: 0.10.0
libtpu: 0.0.40
codegen_flags: <defaults>
</compile_context>

<pallas_src>
import math

import jax
import jax.numpy as jnp
from jax.experimental import pallas as pl
from jax.experimental.pallas import tpu as pltpu

# TODO(synk): `max_steps` is an undefined global in the PyTorch source; fixed here.
MAX_STEPS = 1000.0


# ----------------------------- in-kernel math --------------------------------

def _sigmoid(x):
  return 1.0 / (1.0 + jnp.exp(-x))


def _silu(x):
  return x * _sigmoid(x)


def _linear(x, p):
  # x: (N, K), p["w"]: (K, M) pre-transposed, p["b"]: (1, M)
  return jnp.dot(x, p["w"], preferred_element_type=jnp.float32) + p["b"]


def _group_norm(x, p, eps=1e-5):
  # x: (N, C).  p["pool"]: (C, G) with 1/group_size at (c, group(c)),
  # p["bcast"]: (G, C) with 1 at (group(c), c).  Group statistics via matmuls
  # keep everything lane-dense (no (N, G, C/G) reshapes through the XLU).
  mean = jnp.dot(jnp.dot(x, p["pool"], preferred_element_type=jnp.float32),
                 p["bcast"], preferred_element_type=jnp.float32)
  xc = x - mean
  var = jnp.dot(jnp.dot(xc * xc, p["pool"], preferred_element_type=jnp.float32),
                p["bcast"], preferred_element_type=jnp.float32)
  return xc * jax.lax.rsqrt(var + eps) * p["g"] + p["b"]


def _down_block(x, p):
  x = _silu(_linear(x, p["lin1"]))
  skip = x
  x = _silu(_linear(x, p["lin2"]))
  x_skip = x
  x = _group_norm(x, p["gn"])
  x = skip + _silu(_linear(x, p["lin3"]))
  return x, x_skip


def _up_block(x, x_skip, t_emb, y_1h, p):
  x = _silu(_linear(x, p["lin1"]))
  skip = x
  x = _group_norm(x, p["gn"])
  # torch.cat((x, x_skip), 1) @ W2  ==  x @ W2[:d] + x_skip @ W2[d:]
  x = _silu(
      jnp.dot(x, p["lin2"]["wx"], preferred_element_type=jnp.float32)
      + jnp.dot(x_skip, p["lin2"]["ws"], preferred_element_type=jnp.float32)
      + p["lin2"]["b"])
  t_out = t_emb * p["t_lin"]["w"] + p["t_lin"]["b"]   # Linear(1, d) == outer product
  c_out = _linear(y_1h, p["c_lin"])
  x = x * c_out + t_out
  x = _silu(_linear(x, p["lin3"])) + skip
  return x


def _unet_math(x, t_emb, y_1h, p):
  skips = [x]
  h = x
  for dp in p["down"]:
    h, hs = _down_block(h, dp)
    skips.append(hs)
  bp = p["bneck"]
  h = _silu(_group_norm(_linear(h, bp["lin1"]), bp["gn"]))
  h = _silu(_linear(h, bp["lin2"]))
  for up in p["up"]:
    h = _up_block(h, skips.pop(), t_emb, y_1h, up)
  op = p["out"]
  h = _silu(_group_norm(h, op["gn"]))
  # TODO(synk): output_bottleneck=True (second return value) is not wired out.
  return _linear(h, op["lin"]) + skips.pop()


# --------------------------------- kernel ------------------------------------

def _make_kernel(treedef):
  def kernel(*refs):
    # refs = (x_ref, t_ref, y_ref, *param_refs, o_ref)
    x_ref, t_ref, y_ref = refs[0], refs[1], refs[2]
    o_ref = refs[-1]
    leaves = [r[...] for r in refs[3:-1]]
    p = jax.tree_util.tree_unflatten(treedef, leaves)
    o_ref[...] = _unet_math(x_ref[...], t_ref[...], y_ref[...], p)
  return kernel


def unet_forward(params, x, t, y, *, c_emb_dim, max_steps=MAX_STEPS,
                 batch_tile=8):
  shape = x.shape
  B = shape[0]
  x_flat = x.reshape(B, -1).astype(jnp.float32)
  D = x_flat.shape[1]
  t_emb = (t.astype(jnp.float32) / max_steps).reshape(B, 1)
  y_1h = jax.nn.one_hot(y, c_emb_dim, dtype=jnp.float32)

  leaves, treedef = jax.tree_util.tree_flatten(params)
  tb = batch_tile if (B % batch_tile == 0) else B
  grid = (B // tb,)

  data_specs = [
      pl.BlockSpec((tb, D), lambda i: (i, 0)),
      pl.BlockSpec((tb, 1), lambda i: (i, 0)),
      pl.BlockSpec((tb, c_emb_dim), lambda i: (i, 0)),
  ]
  param_specs = [
      pl.BlockSpec(leaf.shape, lambda i, _n=leaf.ndim: (0,) * _n)
      for leaf in leaves
  ]

  out_flat = pl.pallas_call(
      _make_kernel(treedef),
      out_shape=jax.ShapeDtypeStruct((B, D), jnp.float32),
      grid=grid,
      in_specs=data_specs + param_specs,
      out_specs=pl.BlockSpec((tb, D), lambda i: (i, 0)),
      compiler_params=pltpu.CompilerParams(
          dimension_semantics=("parallel",)),
  )(x_flat, t_emb, y_1h, *leaves)
  return out_flat.reshape(shape)


# ------------------------ pure-JAX reference (sanity) -------------------------

def unet_reference(params, x, t, y, *, c_emb_dim, groups=32,
                   max_steps=MAX_STEPS):
  # Mirrors the PyTorch forward (reshape-based GroupNorm, explicit concat).
  shape = x.shape
  B = shape[0]
  h = x.reshape(B, -1).astype(jnp.float32)
  t_emb = (t.astype(jnp.float32) / max_steps).reshape(B, 1)
  y_1h = jax.nn.one_hot(y, c_emb_dim, dtype=jnp.float32)

  def lin(v, p):
    return v @ p["w"] + p["b"]

  def gn(v, p):
    n, c = v.shape
    gs = c // groups
    vg = v.reshape(n, groups, gs)
    mu = jnp.mean(vg, axis=-1, keepdims=True)
    var = jnp.mean((vg - mu) ** 2, axis=-1, keepdims=True)
    vn = ((vg - mu) * jax.lax.rsqrt(var + 1e-5)).reshape(n, c)
    return vn * p["g"] + p["b"]

  skips = [h]
  for dp in params["down"]:
    h = _silu(lin(h, dp["lin1"])); skip = h
    h = _silu(lin(h, dp["lin2"])); xs = h
    h = gn(h, dp["gn"])
    h = skip + _silu(lin(h, dp["lin3"]))
    skips.append(xs)
  bp = params["bneck"]
  h = _silu(gn(lin(h, bp["lin1"]), bp["gn"]))
  h = _silu(lin(h, bp["lin2"]))
  for up in params["up"]:
    xs = skips.pop()
    h = _silu(lin(h, up["lin1"])); skip = h
    hn = gn(h, up["gn"])
    w2 = jnp.concatenate([up["lin2"]["wx"], up["lin2"]["ws"]], axis=0)
    h = _silu(jnp.concatenate([hn, xs], axis=1) @ w2 + up["lin2"]["b"])
    emb = t_emb @ up["t_lin"]["w"] + up["t_lin"]["b"]
    cemb = lin(y_1h, up["c_lin"])
    h = h * cemb + emb
    h = _silu(lin(h, up["lin3"])) + skip
  op = params["out"]
  h = _silu(gn(h, op["gn"]))
  h = lin(h, op["lin"]) + skips.pop()
  return h.reshape(shape)


# ------------------------------ deterministic init ----------------------------

def _init_linear(key, fan_in, fan_out):
  # PyTorch nn.Linear default init; weight stored pre-transposed as (K, N).
  bound = 1.0 / math.sqrt(fan_in)
  kw, kb = jax.random.split(key)
  return {
      "w": jax.random.uniform(kw, (fan_in, fan_out), jnp.float32, -bound, bound),
      "b": jax.random.uniform(kb, (1, fan_out), jnp.float32, -bound, bound),
  }


def _init_group_norm(channels, groups):
  gs = channels // groups
  group_of = jnp.arange(channels) // gs
  onehot = jax.nn.one_hot(group_of, groups, dtype=jnp.float32)   # (C, G)
  return {
      "g": jnp.ones((1, channels), jnp.float32),
      "b": jnp.zeros((1, channels), jnp.float32),
      "pool": onehot / gs,      # channel -> group mean
      "bcast": onehot.T,        # group -> channel broadcast
  }


def init_params(key, *, input_dim, output_dim, hidden_dim, c_emb_dim, groups=32):
  keys = iter(jax.random.split(key, 64))
  params = {"down": [], "up": []}
  in_dim = input_dim
  for dim in hidden_dim[:-1]:
    params["down"].append({
        "lin1": _init_linear(next(keys), in_dim, dim),
        "lin2": _init_linear(next(keys), dim, dim),
        "lin3": _init_linear(next(keys), dim, dim),
        "gn": _init_group_norm(dim, groups),
    })
    in_dim = dim
  hb = hidden_dim[-1]
  params["bneck"] = {
      "lin1": _init_linear(next(keys), in_dim, hb),
      "gn": _init_group_norm(hb, groups),
      "lin2": _init_linear(next(keys), hb, hb),
  }
  for dim in list(reversed(hidden_dim))[:-1]:
    out_dim = dim * 2
    lin2 = _init_linear(next(keys), 2 * out_dim, out_dim)
    params["up"].append({
        "lin1": _init_linear(next(keys), dim, out_dim),
        "lin2": {"wx": lin2["w"][:out_dim], "ws": lin2["w"][out_dim:],
                 "b": lin2["b"]},
        "lin3": _init_linear(next(keys), out_dim, out_dim),
        "t_lin": _init_linear(next(keys), 1, out_dim),
        "c_lin": _init_linear(next(keys), c_emb_dim, out_dim),
        "gn": _init_group_norm(out_dim, groups),
    })
  params["out"] = {
      "gn": _init_group_norm(hidden_dim[0], groups),
      "lin": _init_linear(next(keys), hidden_dim[0], output_dim),
  }
  return params


# ------------------------------------ main ------------------------------------

if __name__ == "__main__":
  # Scaled-down UnetMLP: x (B, 4, 8, 8) flattens to 256 features.  hidden_dim
  # must halve ([h, h/2, h/4]) so the skip concatenations line up, every width
  # is a multiple of the 32 GroupNorm groups, and output_channel equals the
  # flattened input size (the forward adds the flattened input back and
  # reshapes to x.shape).  Original defaults: hidden_dim=[1024, 512, 256].
  B = 16
  IMG = (4, 8, 8)
  D = math.prod(IMG)                 # 256 (== input_channel == output_channel)
  HIDDEN = [256, 128, 64]
  C_EMB = 16
  GROUPS = 32

  key = jax.random.PRNGKey(0)
  kp, kx, kt, ky = jax.random.split(key, 4)
  params = init_params(kp, input_dim=D, output_dim=D, hidden_dim=HIDDEN,
                       c_emb_dim=C_EMB, groups=GROUPS)
  x = jax.random.normal(kx, (B,) + IMG, jnp.float32)
  t = jax.random.randint(kt, (B,), 0, int(MAX_STEPS)).astype(jnp.float32)
  y = jax.random.randint(ky, (B,), 0, C_EMB)

  out = jax.block_until_ready(unet_forward(params, x, t, y, c_emb_dim=C_EMB))
  ref = jax.block_until_ready(
      unet_reference(params, x, t, y, c_emb_dim=C_EMB, groups=GROUPS))

  assert out.shape == x.shape, out.shape
  max_err = float(jnp.max(jnp.abs(out - ref)))
  assert max_err < 5e-2, f"max_err={max_err}"
  print("KERNEL_OK")
</pallas_src>

<mosaic_0001>
module attributes {stable_mosaic.version = 11 : i64} {
  func.func @kernel(%arg0: i32, %arg1: memref<8x256xf32, #tpu.memory_space<vmem>>, %arg2: memref<8x1xf32, #tpu.memory_space<vmem>>, %arg3: memref<8x16xf32, #tpu.memory_space<vmem>>, %arg4: memref<1x64xf32, #tpu.memory_space<vmem>>, %arg5: memref<32x64xf32, #tpu.memory_space<vmem>>, %arg6: memref<1x64xf32, #tpu.memory_space<vmem>>, %arg7: memref<64x32xf32, #tpu.memory_space<vmem>>, %arg8: memref<1x64xf32, #tpu.memory_space<vmem>>, %arg9: memref<128x64xf32, #tpu.memory_space<vmem>>, %arg10: memref<1x64xf32, #tpu.memory_space<vmem>>, %arg11: memref<64x64xf32, #tpu.memory_space<vmem>>, %arg12: memref<1x256xf32, #tpu.memory_space<vmem>>, %arg13: memref<32x256xf32, #tpu.memory_space<vmem>>, %arg14: memref<1x256xf32, #tpu.memory_space<vmem>>, %arg15: memref<256x32xf32, #tpu.memory_space<vmem>>, %arg16: memref<1x256xf32, #tpu.memory_space<vmem>>, %arg17: memref<256x256xf32, #tpu.memory_space<vmem>>, %arg18: memref<1x256xf32, #tpu.memory_space<vmem>>, %arg19: memref<256x256xf32, #tpu.memory_space<vmem>>, %arg20: memref<1x256xf32, #tpu.memory_space<vmem>>, %arg21: memref<256x256xf32, #tpu.memory_space<vmem>>, %arg22: memref<1x128xf32, #tpu.memory_space<vmem>>, %arg23: memref<32x128xf32, #tpu.memory_space<vmem>>, %arg24: memref<1x128xf32, #tpu.memory_space<vmem>>, %arg25: memref<128x32xf32, #tpu.memory_space<vmem>>, %arg26: memref<1x128xf32, #tpu.memory_space<vmem>>, %arg27: memref<256x128xf32, #tpu.memory_space<vmem>>, %arg28: memref<1x128xf32, #tpu.memory_space<vmem>>, %arg29: memref<128x128xf32, #tpu.memory_space<vmem>>, %arg30: memref<1x128xf32, #tpu.memory_space<vmem>>, %arg31: memref<128x128xf32, #tpu.memory_space<vmem>>, %arg32: memref<1x256xf32, #tpu.memory_space<vmem>>, %arg33: memref<32x256xf32, #tpu.memory_space<vmem>>, %arg34: memref<1x256xf32, #tpu.memory_space<vmem>>, %arg35: memref<256x32xf32, #tpu.memory_space<vmem>>, %arg36: memref<1x256xf32, #tpu.memory_space<vmem>>, %arg37: memref<256x256xf32, #tpu.memory_space<vmem>>, %arg38: memref<1x128xf32, #tpu.memory_space<vmem>>, %arg39: memref<16x128xf32, #tpu.memory_space<vmem>>, %arg40: memref<1x128xf32, #tpu.memory_space<vmem>>, %arg41: memref<32x128xf32, #tpu.memory_space<vmem>>, %arg42: memref<1x128xf32, #tpu.memory_space<vmem>>, %arg43: memref<128x32xf32, #tpu.memory_space<vmem>>, %arg44: memref<1x128xf32, #tpu.memory_space<vmem>>, %arg45: memref<64x128xf32, #tpu.memory_space<vmem>>, %arg46: memref<1x128xf32, #tpu.memory_space<vmem>>, %arg47: memref<128x128xf32, #tpu.memory_space<vmem>>, %arg48: memref<128x128xf32, #tpu.memory_space<vmem>>, %arg49: memref<1x128xf32, #tpu.memory_space<vmem>>, %arg50: memref<128x128xf32, #tpu.memory_space<vmem>>, %arg51: memref<1x128xf32, #tpu.memory_space<vmem>>, %arg52: memref<1x128xf32, #tpu.memory_space<vmem>>, %arg53: memref<1x256xf32, #tpu.memory_space<vmem>>, %arg54: memref<16x256xf32, #tpu.memory_space<vmem>>, %arg55: memref<1x256xf32, #tpu.memory_space<vmem>>, %arg56: memref<32x256xf32, #tpu.memory_space<vmem>>, %arg57: memref<1x256xf32, #tpu.memory_space<vmem>>, %arg58: memref<256x32xf32, #tpu.memory_space<vmem>>, %arg59: memref<1x256xf32, #tpu.memory_space<vmem>>, %arg60: memref<128x256xf32, #tpu.memory_space<vmem>>, %arg61: memref<1x256xf32, #tpu.memory_space<vmem>>, %arg62: memref<256x256xf32, #tpu.memory_space<vmem>>, %arg63: memref<256x256xf32, #tpu.memory_space<vmem>>, %arg64: memref<1x256xf32, #tpu.memory_space<vmem>>, %arg65: memref<256x256xf32, #tpu.memory_space<vmem>>, %arg66: memref<1x256xf32, #tpu.memory_space<vmem>>, %arg67: memref<1x256xf32, #tpu.memory_space<vmem>>, %arg68: memref<8x256xf32, #tpu.memory_space<vmem>>) attributes {dimension_semantics = [#tpu.dimension_semantics<parallel>], iteration_bounds = array<i64: 2>, scalar_prefetch = 0 : i64, scratch_operands = 0 : i64, tpu.core_type = #tpu.core_type<tc>, window_params = [{transform_indices = @transform_0, window_bounds = array<i64: 8, 256>}, {transform_indices = @transform_1, window_bounds = array<i64: 8, 1>}, {transform_indices = @transform_2, window_bounds = array<i64: 8, 16>}, {pipeline_mode = #tpu.pipeline_mode<synchronous>, transform_indices = @transform_3, window_bounds = array<i64: 1, 64>}, {pipeline_mode = #tpu.pipeline_mode<synchronous>, transform_indices = @transform_4, window_bounds = array<i64: 32, 64>}, {pipeline_mode = #tpu.pipeline_mode<synchronous>, transform_indices = @transform_5, window_bounds = array<i64: 1, 64>}, {pipeline_mode = #tpu.pipeline_mode<synchronous>, transform_indices = @transform_6, window_bounds = array<i64: 64, 32>}, {pipeline_mode = #tpu.pipeline_mode<synchronous>, transform_indices = @transform_7, window_bounds = array<i64: 1, 64>}, {pipeline_mode = #tpu.pipeline_mode<synchronous>, transform_indices = @transform_8, window_bounds = array<i64: 128, 64>}, {pipeline_mode = #tpu.pipeline_mode<synchronous>, transform_indices = @transform_9, window_bounds = array<i64: 1, 64>}, {pipeline_mode = #tpu.pipeline_mode<synchronous>, transform_indices = @transform_10, window_bounds = array<i64: 64, 64>}, {pipeline_mode = #tpu.pipeline_mode<synchronous>, transform_indices = @transform_11, window_bounds = array<i64: 1, 256>}, {pipeline_mode = #tpu.pipeline_mode<synchronous>, transform_indices = @transform_12, window_bounds = array<i64: 32, 256>}, {pipeline_mode = #tpu.pipeline_mode<synchronous>, transform_indices = @transform_13, window_bounds = array<i64: 1, 256>}, {pipeline_mode = #tpu.pipeline_mode<synchronous>, transform_indices = @transform_14, window_bounds = array<i64: 256, 32>}, {pipeline_mode = #tpu.pipeline_mode<synchronous>, transform_indices = @transform_15, window_bounds = array<i64: 1, 256>}, {pipeline_mode = #tpu.pipeline_mode<synchronous>, transform_indices = @transform_16, window_bounds = array<i64: 256, 256>}, {pipeline_mode = #tpu.pipeline_mode<synchronous>, transform_indices = @transform_17, window_bounds = array<i64: 1, 256>}, {pipeline_mode = #tpu.pipeline_mode<synchronous>, transform_indices = @transform_18, window_bounds = array<i64: 256, 256>}, {pipeline_mode = #tpu.pipeline_mode<synchronous>, transform_indices = @transform_19, window_bounds = array<i64: 1, 256>}, {pipeline_mode = #tpu.pipeline_mode<synchronous>, transform_indices = @transform_20, window_bounds = array<i64: 256, 256>}, {pipeline_mode = #tpu.pipeline_mode<synchronous>, transform_indices = @transform_21, window_bounds = array<i64: 1, 128>}, {pipeline_mode = #tpu.pipeline_mode<synchronous>, transform_indices = @transform_22, window_bounds = array<i64: 32, 128>}, {pipeline_mode = #tpu.pipeline_mode<synchronous>, transform_indices = @transform_23, window_bounds = array<i64: 1, 128>}, {pipeline_mode = #tpu.pipeline_mode<synchronous>, transform_indices = @transform_24, window_bounds = array<i64: 128, 32>}, {pipeline_mode = #tpu.pipeline_mode<synchronous>, transform_indices = @transform_25, window_bounds = array<i64: 1, 128>}, {pipeline_mode = #tpu.pipeline_mode<synchronous>, transform_indices = @transform_26, window_bounds = array<i64: 256, 128>}, {pipeline_mode = #tpu.pipeline_mode<synchronous>, transform_indices = @transform_27, window_bounds = array<i64: 1, 128>}, {pipeline_mode = #tpu.pipeline_mode<synchronous>, transform_indices = @transform_28, window_bounds = array<i64: 128, 128>}, {pipeline_mode = #tpu.pipeline_mode<synchronous>, transform_indices = @transform_29, window_bounds = array<i64: 1, 128>}, {pipeline_mode = #tpu.pipeline_mode<synchronous>, transform_indices = @transform_30, window_bounds = array<i64: 128, 128>}, {pipeline_mode = #tpu.pipeline_mode<synchronous>, transform_indices = @transform_31, window_bounds = array<i64: 1, 256>}, {pipeline_mode = #tpu.pipeline_mode<synchronous>, transform_indices = @transform_32, window_bounds = array<i64: 32, 256>}, {pipeline_mode = #tpu.pipeline_mode<synchronous>, transform_indices = @transform_33, window_bounds = array<i64: 1, 256>}, {pipeline_mode = #tpu.pipeline_mode<synchronous>, transform_indices = @transform_34, window_bounds = array<i64: 256, 32>}, {pipeline_mode = #tpu.pipeline_mode<synchronous>, transform_indices = @transform_35, window_bounds = array<i64: 1, 256>}, {pipeline_mode = #tpu.pipeline_mode<synchronous>, transform_indices = @transform_36, window_bounds = array<i64: 256, 256>}, {pipeline_mode = #tpu.pipeline_mode<synchronous>, transform_indices = @transform_37, window_bounds = array<i64: 1, 128>}, {pipeline_mode = #tpu.pipeline_mode<synchronous>, transform_indices = @transform_38, window_bounds = array<i64: 16, 128>}, {pipeline_mode = #tpu.pipeline_mode<synchronous>, transform_indices = @transform_39, window_bounds = array<i64: 1, 128>}, {pipeline_mode = #tpu.pipeline_mode<synchronous>, transform_indices = @transform_40, window_bounds = array<i64: 32, 128>}, {pipeline_mode = #tpu.pipeline_mode<synchronous>, transform_indices = @transform_41, window_bounds = array<i64: 1, 128>}, {pipeline_mode = #tpu.pipeline_mode<synchronous>, transform_indices = @transform_42, window_bounds = array<i64: 128, 32>}, {pipeline_mode = #tpu.pipeline_mode<synchronous>, transform_indices = @transform_43, window_bounds = array<i64: 1, 128>}, {pipeline_mode = #tpu.pipeline_mode<synchronous>, transform_indices = @transform_44, window_bounds = array<i64: 64, 128>}, {pipeline_mode = #tpu.pipeline_mode<synchronous>, transform_indices = @transform_45, window_bounds = array<i64: 1, 128>}, {pipeline_mode = #tpu.pipeline_mode<synchronous>, transform_indices = @transform_46, window_bounds = array<i64: 128, 128>}, {pipeline_mode = #tpu.pipeline_mode<synchronous>, transform_indices = @transform_47, window_bounds = array<i64: 128, 128>}, {pipeline_mode = #tpu.pipeline_mode<synchronous>, transform_indices = @transform_48, window_bounds = array<i64: 1, 128>}, {pipeline_mode = #tpu.pipeline_mode<synchronous>, transform_indices = @transform_49, window_bounds = array<i64: 128, 128>}, {pipeline_mode = #tpu.pipeline_mode<synchronous>, transform_indices = @transform_50, window_bounds = array<i64: 1, 128>}, {pipeline_mode = #tpu.pipeline_mode<synchronous>, transform_indices = @transform_51, window_bounds = array<i64: 1, 128>}, {pipeline_mode = #tpu.pipeline_mode<synchronous>, transform_indices = @transform_52, window_bounds = array<i64: 1, 256>}, {pipeline_mode = #tpu.pipeline_mode<synchronous>, transform_indices = @transform_53, window_bounds = array<i64: 16, 256>}, {pipeline_mode = #tpu.pipeline_mode<synchronous>, transform_indices = @transform_54, window_bounds = array<i64: 1, 256>}, {pipeline_mode = #tpu.pipeline_mode<synchronous>, transform_indices = @transform_55, window_bounds = array<i64: 32, 256>}, {pipeline_mode = #tpu.pipeline_mode<synchronous>, transform_indices = @transform_56, window_bounds = array<i64: 1, 256>}, {pipeline_mode = #tpu.pipeline_mode<synchronous>, transform_indices = @transform_57, window_bounds = array<i64: 256, 32>}, {pipeline_mode = #tpu.pipeline_mode<synchronous>, transform_indices = @transform_58, window_bounds = array<i64: 1, 256>}, {pipeline_mode = #tpu.pipeline_mode<synchronous>, transform_indices = @transform_59, window_bounds = array<i64: 128, 256>}, {pipeline_mode = #tpu.pipeline_mode<synchronous>, transform_indices = @transform_60, window_bounds = array<i64: 1, 256>}, {pipeline_mode = #tpu.pipeline_mode<synchronous>, transform_indices = @transform_61, window_bounds = array<i64: 256, 256>}, {pipeline_mode = #tpu.pipeline_mode<synchronous>, transform_indices = @transform_62, window_bounds = array<i64: 256, 256>}, {pipeline_mode = #tpu.pipeline_mode<synchronous>, transform_indices = @transform_63, window_bounds = array<i64: 1, 256>}, {pipeline_mode = #tpu.pipeline_mode<synchronous>, transform_indices = @transform_64, window_bounds = array<i64: 256, 256>}, {pipeline_mode = #tpu.pipeline_mode<synchronous>, transform_indices = @transform_65, window_bounds = array<i64: 1, 256>}, {pipeline_mode = #tpu.pipeline_mode<synchronous>, transform_indices = @transform_66, window_bounds = array<i64: 1, 256>}, {transform_indices = @transform_67, window_bounds = array<i64: 8, 256>}]} {
    %c0 = arith.constant 0 : index
    %c0_0 = arith.constant 0 : index
    %0 = vector.load %arg4[%c0, %c0_0] : memref<1x64xf32, #tpu.memory_space<vmem>>, vector<1x64xf32>
    %c0_1 = arith.constant 0 : index
    %c0_2 = arith.constant 0 : index
    %1 = vector.load %arg5[%c0_1, %c0_2] : memref<32x64xf32, #tpu.memory_space<vmem>>, vector<32x64xf32>
    %c0_3 = arith.constant 0 : index
    %c0_4 = arith.constant 0 : index
    %2 = vector.load %arg6[%c0_3, %c0_4] : memref<1x64xf32, #tpu.memory_space<vmem>>, vector<1x64xf32>
    %c0_5 = arith.constant 0 : index
    %c0_6 = arith.constant 0 : index
    %3 = vector.load %arg7[%c0_5, %c0_6] : memref<64x32xf32, #tpu.memory_space<vmem>>, vector<64x32xf32>
    %c0_7 = arith.constant 0 : index
    %c0_8 = arith.constant 0 : index
    %4 = vector.load %arg8[%c0_7, %c0_8] : memref<1x64xf32, #tpu.memory_space<vmem>>, vector<1x64xf32>
    %c0_9 = arith.constant 0 : index
    %c0_10 = arith.constant 0 : index
    %5 = vector.load %arg9[%c0_9, %c0_10] : memref<128x64xf32, #tpu.memory_space<vmem>>, vector<128x64xf32>
    %c0_11 = arith.constant 0 : index
    %c0_12 = arith.constant 0 : index
    %6 = vector.load %arg10[%c0_11, %c0_12] : memref<1x64xf32, #tpu.memory_space<vmem>>, vector<1x64xf32>
    %c0_13 = arith.constant 0 : index
    %c0_14 = arith.constant 0 : index
    %7 = vector.load %arg11[%c0_13, %c0_14] : memref<64x64xf32, #tpu.memory_space<vmem>>, vector<64x64xf32>
    %c0_15 = arith.constant 0 : index
    %c0_16 = arith.constant 0 : index
    %8 = vector.load %arg12[%c0_15, %c0_16] : memref<1x256xf32, #tpu.memory_space<vmem>>, vector<1x256xf32>
    %c0_17 = arith.constant 0 : index
    %c0_18 = arith.constant 0 : index
    %9 = vector.load %arg13[%c0_17, %c0_18] : memref<32x256xf32, #tpu.memory_space<vmem>>, vector<32x256xf32>
    %c0_19 = arith.constant 0 : index
    %c0_20 = arith.constant 0 : index
    %10 = vector.load %arg14[%c0_19, %c0_20] : memref<1x256xf32, #tpu.memory_space<vmem>>, vector<1x256xf32>
    %c0_21 = arith.constant 0 : index
    %c0_22 = arith.constant 0 : index
    %11 = vector.load %arg15[%c0_21, %c0_22] : memref<256x32xf32, #tpu.memory_space<vmem>>, vector<256x32xf32>
    %c0_23 = arith.constant 0 : index
    %c0_24 = arith.constant 0 : index
    %12 = vector.load %arg16[%c0_23, %c0_24] : memref<1x256xf32, #tpu.memory_space<vmem>>, vector<1x256xf32>
    %c0_25 = arith.constant 0 : index
    %c0_26 = arith.constant 0 : index
    %13 = vector.load %arg17[%c0_25, %c0_26] : memref<256x256xf32, #tpu.memory_space<vmem>>, vector<256x256xf32>
    %c0_27 = arith.constant 0 : index
    %c0_28 = arith.constant 0 : index
    %14 = vector.load %arg18[%c0_27, %c0_28] : memref<1x256xf32, #tpu.memory_space<vmem>>, vector<1x256xf32>
    %c0_29 = arith.constant 0 : index
    %c0_30 = arith.constant 0 : index
    %15 = vector.load %arg19[%c0_29, %c0_30] : memref<256x256xf32, #tpu.memory_space<vmem>>, vector<256x256xf32>
    %c0_31 = arith.constant 0 : index
    %c0_32 = arith.constant 0 : index
    %16 = vector.load %arg20[%c0_31, %c0_32] : memref<1x256xf32, #tpu.memory_space<vmem>>, vector<1x256xf32>
    %c0_33 = arith.constant 0 : index
    %c0_34 = arith.constant 0 : index
    %17 = vector.load %arg21[%c0_33, %c0_34] : memref<256x256xf32, #tpu.memory_space<vmem>>, vector<256x256xf32>
    %c0_35 = arith.constant 0 : index
    %c0_36 = arith.constant 0 : index
    %18 = vector.load %arg22[%c0_35, %c0_36] : memref<1x128xf32, #tpu.memory_space<vmem>>, vector<1x128xf32>
    %c0_37 = arith.constant 0 : index
    %c0_38 = arith.constant 0 : index
    %19 = vector.load %arg23[%c0_37, %c0_38] : memref<32x128xf32, #tpu.memory_space<vmem>>, vector<32x128xf32>
    %c0_39 = arith.constant 0 : index
    %c0_40 = arith.constant 0 : index
    %20 = vector.load %arg24[%c0_39, %c0_40] : memref<1x128xf32, #tpu.memory_space<vmem>>, vector<1x128xf32>
    %c0_41 = arith.constant 0 : index
    %c0_42 = arith.constant 0 : index
    %21 = vector.load %arg25[%c0_41, %c0_42] : memref<128x32xf32, #tpu.memory_space<vmem>>, vector<128x32xf32>
    %c0_43 = arith.constant 0 : index
    %c0_44 = arith.constant 0 : index
    %22 = vector.load %arg26[%c0_43, %c0_44] : memref<1x128xf32, #tpu.memory_space<vmem>>, vector<1x128xf32>
    %c0_45 = arith.constant 0 : index
    %c0_46 = arith.constant 0 : index
    %23 = vector.load %arg27[%c0_45, %c0_46] : memref<256x128xf32, #tpu.memory_space<vmem>>, vector<256x128xf32>
    %c0_47 = arith.constant 0 : index
    %c0_48 = arith.constant 0 : index
    %24 = vector.load %arg28[%c0_47, %c0_48] : memref<1x128xf32, #tpu.memory_space<vmem>>, vector<1x128xf32>
    %c0_49 = arith.constant 0 : index
    %c0_50 = arith.constant 0 : index
    %25 = vector.load %arg29[%c0_49, %c0_50] : memref<128x128xf32, #tpu.memory_space<vmem>>, vector<128x128xf32>
    %c0_51 = arith.constant 0 : index
    %c0_52 = arith.constant 0 : index
    %26 = vector.load %arg30[%c0_51, %c0_52] : memref<1x128xf32, #tpu.memory_space<vmem>>, vector<1x128xf32>
    %c0_53 = arith.constant 0 : index
    %c0_54 = arith.constant 0 : index
    %27 = vector.load %arg31[%c0_53, %c0_54] : memref<128x128xf32, #tpu.memory_space<vmem>>, vector<128x128xf32>
    %c0_55 = arith.constant 0 : index
    %c0_56 = arith.constant 0 : index
    %28 = vector.load %arg32[%c0_55, %c0_56] : memref<1x256xf32, #tpu.memory_space<vmem>>, vector<1x256xf32>
    %c0_57 = arith.constant 0 : index
    %c0_58 = arith.constant 0 : index
    %29 = vector.load %arg33[%c0_57, %c0_58] : memref<32x256xf32, #tpu.memory_space<vmem>>, vector<32x256xf32>
    %c0_59 = arith.constant 0 : index
    %c0_60 = arith.constant 0 : index
    %30 = vector.load %arg34[%c0_59, %c0_60] : memref<1x256xf32, #tpu.memory_space<vmem>>, vector<1x256xf32>
    %c0_61 = arith.constant 0 : index
    %c0_62 = arith.constant 0 : index
    %31 = vector.load %arg35[%c0_61, %c0_62] : memref<256x32xf32, #tpu.memory_space<vmem>>, vector<256x32xf32>
    %c0_63 = arith.constant 0 : index
    %c0_64 = arith.constant 0 : index
    %32 = vector.load %arg36[%c0_63, %c0_64] : memref<1x256xf32, #tpu.memory_space<vmem>>, vector<1x256xf32>
    %c0_65 = arith.constant 0 : index
    %c0_66 = arith.constant 0 : index
    %33 = vector.load %arg37[%c0_65, %c0_66] : memref<256x256xf32, #tpu.memory_space<vmem>>, vector<256x256xf32>
    %c0_67 = arith.constant 0 : index
    %c0_68 = arith.constant 0 : index
    %34 = vector.load %arg38[%c0_67, %c0_68] : memref<1x128xf32, #tpu.memory_space<vmem>>, vector<1x128xf32>
    %c0_69 = arith.constant 0 : index
    %c0_70 = arith.constant 0 : index
    %35 = vector.load %arg39[%c0_69, %c0_70] : memref<16x128xf32, #tpu.memory_space<vmem>>, vector<16x128xf32>
    %c0_71 = arith.constant 0 : index
    %c0_72 = arith.constant 0 : index
    %36 = vector.load %arg40[%c0_71, %c0_72] : memref<1x128xf32, #tpu.memory_space<vmem>>, vector<1x128xf32>
    %c0_73 = arith.constant 0 : index
    %c0_74 = arith.constant 0 : index
    %37 = vector.load %arg41[%c0_73, %c0_74] : memref<32x128xf32, #tpu.memory_space<vmem>>, vector<32x128xf32>
    %c0_75 = arith.constant 0 : index
    %c0_76 = arith.constant 0 : index
    %38 = vector.load %arg42[%c0_75, %c0_76] : memref<1x128xf32, #tpu.memory_space<vmem>>, vector<1x128xf32>
    %c0_77 = arith.constant 0 : index
    %c0_78 = arith.constant 0 : index
    %39 = vector.load %arg43[%c0_77, %c0_78] : memref<128x32xf32, #tpu.memory_space<vmem>>, vector<128x32xf32>
    %c0_79 = arith.constant 0 : index
    %c0_80 = arith.constant 0 : index
    %40 = vector.load %arg44[%c0_79, %c0_80] : memref<1x128xf32, #tpu.memory_space<vmem>>, vector<1x128xf32>
    %c0_81 = arith.constant 0 : index
    %c0_82 = arith.constant 0 : index
    %41 = vector.load %arg45[%c0_81, %c0_82] : memref<64x128xf32, #tpu.memory_space<vmem>>, vector<64x128xf32>
    %c0_83 = arith.constant 0 : index
    %c0_84 = arith.constant 0 : index
    %42 = vector.load %arg46[%c0_83, %c0_84] : memref<1x128xf32, #tpu.memory_space<vmem>>, vector<1x128xf32>
    %c0_85 = arith.constant 0 : index
    %c0_86 = arith.constant 0 : index
    %43 = vector.load %arg47[%c0_85, %c0_86] : memref<128x128xf32, #tpu.memory_space<vmem>>, vector<128x128xf32>
    %c0_87 = arith.constant 0 : index
    %c0_88 = arith.constant 0 : index
    %44 = vector.load %arg48[%c0_87, %c0_88] : memref<128x128xf32, #tpu.memory_space<vmem>>, vector<128x128xf32>
    %c0_89 = arith.constant 0 : index
    %c0_90 = arith.constant 0 : index
    %45 = vector.load %arg49[%c0_89, %c0_90] : memref<1x128xf32, #tpu.memory_space<vmem>>, vector<1x128xf32>
    %c0_91 = arith.constant 0 : index
    %c0_92 = arith.constant 0 : index
    %46 = vector.load %arg50[%c0_91, %c0_92] : memref<128x128xf32, #tpu.memory_space<vmem>>, vector<128x128xf32>
    %c0_93 = arith.constant 0 : index
    %c0_94 = arith.constant 0 : index
    %47 = vector.load %arg51[%c0_93, %c0_94] : memref<1x128xf32, #tpu.memory_space<vmem>>, vector<1x128xf32>
    %c0_95 = arith.constant 0 : index
    %c0_96 = arith.constant 0 : index
    %48 = vector.load %arg52[%c0_95, %c0_96] : memref<1x128xf32, #tpu.memory_space<vmem>>, vector<1x128xf32>
    %c0_97 = arith.constant 0 : index
    %c0_98 = arith.constant 0 : index
    %49 = vector.load %arg53[%c0_97, %c0_98] : memref<1x256xf32, #tpu.memory_space<vmem>>, vector<1x256xf32>
    %c0_99 = arith.constant 0 : index
    %c0_100 = arith.constant 0 : index
    %50 = vector.load %arg54[%c0_99, %c0_100] : memref<16x256xf32, #tpu.memory_space<vmem>>, vector<16x256xf32>
    %c0_101 = arith.constant 0 : index
    %c0_102 = arith.constant 0 : index
    %51 = vector.load %arg55[%c0_101, %c0_102] : memref<1x256xf32, #tpu.memory_space<vmem>>, vector<1x256xf32>
    %c0_103 = arith.constant 0 : index
    %c0_104 = arith.constant 0 : index
    %52 = vector.load %arg56[%c0_103, %c0_104] : memref<32x256xf32, #tpu.memory_space<vmem>>, vector<32x256xf32>
    %c0_105 = arith.constant 0 : index
    %c0_106 = arith.constant 0 : index
    %53 = vector.load %arg57[%c0_105, %c0_106] : memref<1x256xf32, #tpu.memory_space<vmem>>, vector<1x256xf32>
    %c0_107 = arith.constant 0 : index
    %c0_108 = arith.constant 0 : index
    %54 = vector.load %arg58[%c0_107, %c0_108] : memref<256x32xf32, #tpu.memory_space<vmem>>, vector<256x32xf32>
    %c0_109 = arith.constant 0 : index
    %c0_110 = arith.constant 0 : index
    %55 = vector.load %arg59[%c0_109, %c0_110] : memref<1x256xf32, #tpu.memory_space<vmem>>, vector<1x256xf32>
    %c0_111 = arith.constant 0 : index
    %c0_112 = arith.constant 0 : index
    %56 = vector.load %arg60[%c0_111, %c0_112] : memref<128x256xf32, #tpu.memory_space<vmem>>, vector<128x256xf32>
    %c0_113 = arith.constant 0 : index
    %c0_114 = arith.constant 0 : index
    %57 = vector.load %arg61[%c0_113, %c0_114] : memref<1x256xf32, #tpu.memory_space<vmem>>, vector<1x256xf32>
    %c0_115 = arith.constant 0 : index
    %c0_116 = arith.constant 0 : index
    %58 = vector.load %arg62[%c0_115, %c0_116] : memref<256x256xf32, #tpu.memory_space<vmem>>, vector<256x256xf32>
    %c0_117 = arith.constant 0 : index
    %c0_118 = arith.constant 0 : index
    %59 = vector.load %arg63[%c0_117, %c0_118] : memref<256x256xf32, #tpu.memory_space<vmem>>, vector<256x256xf32>
    %c0_119 = arith.constant 0 : index
    %c0_120 = arith.constant 0 : index
    %60 = vector.load %arg64[%c0_119, %c0_120] : memref<1x256xf32, #tpu.memory_space<vmem>>, vector<1x256xf32>
    %c0_121 = arith.constant 0 : index
    %c0_122 = arith.constant 0 : index
    %61 = vector.load %arg65[%c0_121, %c0_122] : memref<256x256xf32, #tpu.memory_space<vmem>>, vector<256x256xf32>
    %c0_123 = arith.constant 0 : index
    %c0_124 = arith.constant 0 : index
    %62 = vector.load %arg66[%c0_123, %c0_124] : memref<1x256xf32, #tpu.memory_space<vmem>>, vector<1x256xf32>
    %c0_125 = arith.constant 0 : index
    %c0_126 = arith.constant 0 : index
    %63 = vector.load %arg67[%c0_125, %c0_126] : memref<1x256xf32, #tpu.memory_space<vmem>>, vector<1x256xf32>
    %c0_127 = arith.constant 0 : index
    %c0_128 = arith.constant 0 : index
    %64 = vector.load %arg1[%c0_127, %c0_128] : memref<8x256xf32, #tpu.memory_space<vmem>>, vector<8x256xf32>
    %c0_129 = arith.constant 0 : index
    %c0_130 = arith.constant 0 : index
    %65 = vector.load %arg2[%c0_129, %c0_130] : memref<8x1xf32, #tpu.memory_space<vmem>>, vector<8x1xf32>
    %c0_131 = arith.constant 0 : index
    %c0_132 = arith.constant 0 : index
    %66 = vector.load %arg3[%c0_131, %c0_132] : memref<8x16xf32, #tpu.memory_space<vmem>>, vector<8x16xf32>
    %cst = arith.constant dense<0.000000e+00> : vector<8x256xf32>
    %67 = tpu.matmul %64, %13, %cst {dimension_numbers = #tpu.dot_dimension_numbers<[1], [0], [0], [1], [0, 0, 1, 1], [], []>} : vector<8x256xf32>, vector<256x256xf32>, vector<8x256xf32> -> vector<8x256xf32>
    %68 = vector.broadcast %12 : vector<1x256xf32> to vector<8x256xf32>
    %69 = arith.addf %67, %68 : vector<8x256xf32>
    %cst_133 = arith.constant 0.000000e+00 : f32
    %70 = vector.broadcast %cst_133 : f32 to vector<8x256xf32>
    %71 = arith.subf %70, %69 : vector<8x256xf32>
    %72 = math.exp %71 : vector<8x256xf32>
    %cst_134 = arith.constant 1.000000e+00 : f32
    %73 = vector.broadcast %cst_134 : f32 to vector<8x256xf32>
    %74 = arith.addf %73, %72 : vector<8x256xf32>
    %cst_135 = arith.constant 1.000000e+00 : f32
    %75 = vector.broadcast %cst_135 : f32 to vector<8x256xf32>
    %76 = arith.divf %75, %74 : vector<8x256xf32>
    %77 = arith.mulf %69, %76 : vector<8x256xf32>
    %cst_136 = arith.constant dense<0.000000e+00> : vector<8x256xf32>
    %78 = tpu.matmul %77, %15, %cst_136 {dimension_numbers = #tpu.dot_dimension_numbers<[1], [0], [0], [1], [0, 0, 1, 1], [], []>} : vector<8x256xf32>, vector<256x256xf32>, vector<8x256xf32> -> vector<8x256xf32>
    %79 = vector.broadcast %14 : vector<1x256xf32> to vector<8x256xf32>
    %80 = arith.addf %78, %79 : vector<8x256xf32>
    %cst_137 = arith.constant 0.000000e+00 : f32
    %81 = vector.broadcast %cst_137 : f32 to vector<8x256xf32>
    %82 = arith.subf %81, %80 : vector<8x256xf32>
    %83 = math.exp %82 : vector<8x256xf32>
    %cst_138 = arith.constant 1.000000e+00 : f32
    %84 = vector.broadcast %cst_138 : f32 to vector<8x256xf32>
    %85 = arith.addf %84, %83 : vector<8x256xf32>
    %cst_139 = arith.constant 1.000000e+00 : f32
    %86 = vector.broadcast %cst_139 : f32 to vector<8x256xf32>
    %87 = arith.divf %86, %85 : vector<8x256xf32>
    %88 = arith.mulf %80, %87 : vector<8x256xf32>
    %cst_140 = arith.constant dense<0.000000e+00> : vector<8x32xf32>
    %89 = tpu.matmul %88, %11, %cst_140 {dimension_numbers = #tpu.dot_dimension_numbers<[1], [0], [0], [1], [0, 0, 1, 1], [], []>} : vector<8x256xf32>, vector<256x32xf32>, vector<8x32xf32> -> vector<8x32xf32>
    %cst_141 = arith.constant dense<0.000000e+00> : vector<8x256xf32>
    %90 = tpu.matmul %89, %9, %cst_141 {dimension_numbers = #tpu.dot_dimension_numbers<[1], [0], [0], [1], [0, 0, 1, 1], [], []>} : vector<8x32xf32>, vector<32x256xf32>, vector<8x256xf32> -> vector<8x256xf32>
    %91 = arith.subf %88, %90 : vector<8x256xf32>
    %92 = arith.mulf %91, %91 : vector<8x256xf32>
    %cst_142 = arith.constant dense<0.000000e+00> : vector<8x32xf32>
    %93 = tpu.matmul %92, %11, %cst_142 {dimension_numbers = #tpu.dot_dimension_numbers<[1], [0], [0], [1], [0, 0, 1, 1], [], []>} : vector<8x256xf32>, vector<256x32xf32>, vector<8x32xf32> -> vector<8x32xf32>
    %cst_143 = arith.constant dense<0.000000e+00> : vector<8x256xf32>
    %94 = tpu.matmul %93, %9, %cst_143 {dimension_numbers = #tpu.dot_dimension_numbers<[1], [0], [0], [1], [0, 0, 1, 1], [], []>} : vector<8x32xf32>, vector<32x256xf32>, vector<8x256xf32> -> vector<8x256xf32>
    %cst_144 = arith.constant 9.99999974E-6 : f32
    %95 = vector.broadcast %cst_144 : f32 to vector<8x256xf32>
    %96 = arith.addf %94, %95 : vector<8x256xf32>
    %97 = math.rsqrt %96 : vector<8x256xf32>
    %98 = arith.mulf %91, %97 : vector<8x256xf32>
    %99 = vector.broadcast %10 : vector<1x256xf32> to vector<8x256xf32>
    %100 = arith.mulf %98, %99 : vector<8x256xf32>
    %101 = vector.broadcast %8 : vector<1x256xf32> to vector<8x256xf32>
    %102 = arith.addf %100, %101 : vector<8x256xf32>
    %cst_145 = arith.constant dense<0.000000e+00> : vector<8x256xf32>
    %103 = tpu.matmul %102, %17, %cst_145 {dimension_numbers = #tpu.dot_dimension_numbers<[1], [0], [0], [1], [0, 0, 1, 1], [], []>} : vector<8x256xf32>, vector<256x256xf32>, vector<8x256xf32> -> vector<8x256xf32>
    %104 = vector.broadcast %16 : vector<1x256xf32> to vector<8x256xf32>
    %105 = arith.addf %103, %104 : vector<8x256xf32>
    %cst_146 = arith.constant 0.000000e+00 : f32
    %106 = vector.broadcast %cst_146 : f32 to vector<8x256xf32>
    %107 = arith.subf %106, %105 : vector<8x256xf32>
    %108 = math.exp %107 : vector<8x256xf32>
    %cst_147 = arith.constant 1.000000e+00 : f32
    %109 = vector.broadcast %cst_147 : f32 to vector<8x256xf32>
    %110 = arith.addf %109, %108 : vector<8x256xf32>
    %cst_148 = arith.constant 1.000000e+00 : f32
    %111 = vector.broadcast %cst_148 : f32 to vector<8x256xf32>
    %112 = arith.divf %111, %110 : vector<8x256xf32>
    %113 = arith.mulf %105, %112 : vector<8x256xf32>
    %114 = arith.addf %77, %113 : vector<8x256xf32>
    %cst_149 = arith.constant dense<0.000000e+00> : vector<8x128xf32>
    %115 = tpu.matmul %114, %23, %cst_149 {dimension_numbers = #tpu.dot_dimension_numbers<[1], [0], [0], [1], [0, 0, 1, 1], [], []>} : vector<8x256xf32>, vector<256x128xf32>, vector<8x128xf32> -> vector<8x128xf32>
    %116 = vector.broadcast %22 : vector<1x128xf32> to vector<8x128xf32>
    %117 = arith.addf %115, %116 : vector<8x128xf32>
    %cst_150 = arith.constant 0.000000e+00 : f32
    %118 = vector.broadcast %cst_150 : f32 to vector<8x128xf32>
    %119 = arith.subf %118, %117 : vector<8x128xf32>
    %120 = math.exp %119 : vector<8x128xf32>
    %cst_151 = arith.constant 1.000000e+00 : f32
    %121 = vector.broadcast %cst_151 : f32 to vector<8x128xf32>
    %122 = arith.addf %121, %120 : vector<8x128xf32>
    %cst_152 = arith.constant 1.000000e+00 : f32
    %123 = vector.broadcast %cst_152 : f32 to vector<8x128xf32>
    %124 = arith.divf %123, %122 : vector<8x128xf32>
    %125 = arith.mulf %117, %124 : vector<8x128xf32>
    %cst_153 = arith.constant dense<0.000000e+00> : vector<8x128xf32>
    %126 = tpu.matmul %125, %25, %cst_153 {dimension_numbers = #tpu.dot_dimension_numbers<[1], [0], [0], [1], [0, 0, 1, 1], [], []>} : vector<8x128xf32>, vector<128x128xf32>, vector<8x128xf32> -> vector<8x128xf32>
    %127 = vector.broadcast %24 : vector<1x128xf32> to vector<8x128xf32>
    %128 = arith.addf %126, %127 : vector<8x128xf32>
    %cst_154 = arith.constant 0.000000e+00 : f32
    %129 = vector.broadcast %cst_154 : f32 to vector<8x128xf32>
    %130 = arith.subf %129, %128 : vector<8x128xf32>
    %131 = math.exp %130 : vector<8x128xf32>
    %cst_155 = arith.constant 1.000000e+00 : f32
    %132 = vector.broadcast %cst_155 : f32 to vector<8x128xf32>
    %133 = arith.addf %132, %131 : vector<8x128xf32>
    %cst_156 = arith.constant 1.000000e+00 : f32
    %134 = vector.broadcast %cst_156 : f32 to vector<8x128xf32>
    %135 = arith.divf %134, %133 : vector<8x128xf32>
    %136 = arith.mulf %128, %135 : vector<8x128xf32>
    %cst_157 = arith.constant dense<0.000000e+00> : vector<8x32xf32>
    %137 = tpu.matmul %136, %21, %cst_157 {dimension_numbers = #tpu.dot_dimension_numbers<[1], [0], [0], [1], [0, 0, 1, 1], [], []>} : vector<8x128xf32>, vector<128x32xf32>, vector<8x32xf32> -> vector<8x32xf32>
    %cst_158 = arith.constant dense<0.000000e+00> : vector<8x128xf32>
    %138 = tpu.matmul %137, %19, %cst_158 {dimension_numbers = #tpu.dot_dimension_numbers<[1], [0], [0], [1], [0, 0, 1, 1], [], []>} : vector<8x32xf32>, vector<32x128xf32>, vector<8x128xf32> -> vector<8x128xf32>
    %139 = arith.subf %136, %138 : vector<8x128xf32>
    %140 = arith.mulf %139, %139 : vector<8x128xf32>
    %cst_159 = arith.constant dense<0.000000e+00> : vector<8x32xf32>
    %141 = tpu.matmul %140, %21, %cst_159 {dimension_numbers = #tpu.dot_dimension_numbers<[1], [0], [0], [1], [0, 0, 1, 1], [], []>} : vector<8x128xf32>, vector<128x32xf32>, vector<8x32xf32> -> vector<8x32xf32>
    %cst_160 = arith.constant dense<0.000000e+00> : vector<8x128xf32>
    %142 = tpu.matmul %141, %19, %cst_160 {dimension_numbers = #tpu.dot_dimension_numbers<[1], [0], [0], [1], [0, 0, 1, 1], [], []>} : vector<8x32xf32>, vector<32x128xf32>, vector<8x128xf32> -> vector<8x128xf32>
    %cst_161 = arith.constant 9.99999974E-6 : f32
    %143 = vector.broadcast %cst_161 : f32 to vector<8x128xf32>
    %144 = arith.addf %142, %143 : vector<8x128xf32>
    %145 = math.rsqrt %144 : vector<8x128xf32>
    %146 = arith.mulf %139, %145 : vector<8x128xf32>
    %147 = vector.broadcast %20 : vector<1x128xf32> to vector<8x128xf32>
    %148 = arith.mulf %146, %147 : vector<8x128xf32>
    %149 = vector.broadcast %18 : vector<1x128xf32> to vector<8x128xf32>
    %150 = arith.addf %148, %149 : vector<8x128xf32>
    %cst_162 = arith.constant dense<0.000000e+00> : vector<8x128xf32>
    %151 = tpu.matmul %150, %27, %cst_162 {dimension_numbers = #tpu.dot_dimension_numbers<[1], [0], [0], [1], [0, 0, 1, 1], [], []>} : vector<8x128xf32>, vector<128x128xf32>, vector<8x128xf32> -> vector<8x128xf32>
    %152 = vector.broadcast %26 : vector<1x128xf32> to vector<8x128xf32>
    %153 = arith.addf %151, %152 : vector<8x128xf32>
    %cst_163 = arith.constant 0.000000e+00 : f32
    %154 = vector.broadcast %cst_163 : f32 to vector<8x128xf32>
    %155 = arith.subf %154, %153 : vector<8x128xf32>
    %156 = math.exp %155 : vector<8x128xf32>
    %cst_164 = arith.constant 1.000000e+00 : f32
    %157 = vector.broadcast %cst_164 : f32 to vector<8x128xf32>
    %158 = arith.addf %157, %156 : vector<8x128xf32>
    %cst_165 = arith.constant 1.000000e+00 : f32
    %159 = vector.broadcast %cst_165 : f32 to vector<8x128xf32>
    %160 = arith.divf %159, %158 : vector<8x128xf32>
    %161 = arith.mulf %153, %160 : vector<8x128xf32>
    %162 = arith.addf %125, %161 : vector<8x128xf32>
    %cst_166 = arith.constant dense<0.000000e+00> : vector<8x64xf32>
    %163 = tpu.matmul %162, %5, %cst_166 {dimension_numbers = #tpu.dot_dimension_numbers<[1], [0], [0], [1], [0, 0, 1, 1], [], []>} : vector<8x128xf32>, vector<128x64xf32>, vector<8x64xf32> -> vector<8x64xf32>
    %164 = vector.broadcast %4 : vector<1x64xf32> to vector<8x64xf32>
    %165 = arith.addf %163, %164 : vector<8x64xf32>
    %cst_167 = arith.constant dense<0.000000e+00> : vector<8x32xf32>
    %166 = tpu.matmul %165, %3, %cst_167 {dimension_numbers = #tpu.dot_dimension_numbers<[1], [0], [0], [1], [0, 0, 1, 1], [], []>} : vector<8x64xf32>, vector<64x32xf32>, vector<8x32xf32> -> vector<8x32xf32>
    %cst_168 = arith.constant dense<0.000000e+00> : vector<8x64xf32>
    %167 = tpu.matmul %166, %1, %cst_168 {dimension_numbers = #tpu.dot_dimension_numbers<[1], [0], [0], [1], [0, 0, 1, 1], [], []>} : vector<8x32xf32>, vector<32x64xf32>, vector<8x64xf32> -> vector<8x64xf32>
    %168 = arith.subf %165, %167 : vector<8x64xf32>
    %169 = arith.mulf %168, %168 : vector<8x64xf32>
    %cst_169 = arith.constant dense<0.000000e+00> : vector<8x32xf32>
    %170 = tpu.matmul %169, %3, %cst_169 {dimension_numbers = #tpu.dot_dimension_numbers<[1], [0], [0], [1], [0, 0, 1, 1], [], []>} : vector<8x64xf32>, vector<64x32xf32>, vector<8x32xf32> -> vector<8x32xf32>
    %cst_170 = arith.constant dense<0.000000e+00> : vector<8x64xf32>
    %171 = tpu.matmul %170, %1, %cst_170 {dimension_numbers = #tpu.dot_dimension_numbers<[1], [0], [0], [1], [0, 0, 1, 1], [], []>} : vector<8x32xf32>, vector<32x64xf32>, vector<8x64xf32> -> vector<8x64xf32>
    %cst_171 = arith.constant 9.99999974E-6 : f32
    %172 = vector.broadcast %cst_171 : f32 to vector<8x64xf32>
    %173 = arith.addf %171, %172 : vector<8x64xf32>
    %174 = math.rsqrt %173 : vector<8x64xf32>
    %175 = arith.mulf %168, %174 : vector<8x64xf32>
    %176 = vector.broadcast %2 : vector<1x64xf32> to vector<8x64xf32>
    %177 = arith.mulf %175, %176 : vector<8x64xf32>
    %178 = vector.broadcast %0 : vector<1x64xf32> to vector<8x64xf32>
    %179 = arith.addf %177, %178 : vector<8x64xf32>
    %cst_172 = arith.constant 0.000000e+00 : f32
    %180 = vector.broadcast %cst_172 : f32 to vector<8x64xf32>
    %181 = arith.subf %180, %179 : vector<8x64xf32>
    %182 = math.exp %181 : vector<8x64xf32>
    %cst_173 = arith.constant 1.000000e+00 : f32
    %183 = vector.broadcast %cst_173 : f32 to vector<8x64xf32>
    %184 = arith.addf %183, %182 : vector<8x64xf32>
    %cst_174 = arith.constant 1.000000e+00 : f32
    %185 = vector.broadcast %cst_174 : f32 to vector<8x64xf32>
    %186 = arith.divf %185, %184 : vector<8x64xf32>
    %187 = arith.mulf %179, %186 : vector<8x64xf32>
    %cst_175 = arith.constant dense<0.000000e+00> : vector<8x64xf32>
    %188 = tpu.matmul %187, %7, %cst_175 {dimension_numbers = #tpu.dot_dimension_numbers<[1], [0], [0], [1], [0, 0, 1, 1], [], []>} : vector<8x64xf32>, vector<64x64xf32>, vector<8x64xf32> -> vector<8x64xf32>
    %189 = vector.broadcast %6 : vector<1x64xf32> to vector<8x64xf32>
    %190 = arith.addf %188, %189 : vector<8x64xf32>
    %cst_176 = arith.constant 0.000000e+00 : f32
    %191 = vector.broadcast %cst_176 : f32 to vector<8x64xf32>
    %192 = arith.subf %191, %190 : vector<8x64xf32>
    %193 = math.exp %192 : vector<8x64xf32>
    %cst_177 = arith.constant 1.000000e+00 : f32
    %194 = vector.broadcast %cst_177 : f32 to vector<8x64xf32>
    %195 = arith.addf %194, %193 : vector<8x64xf32>
    %cst_178 = arith.constant 1.000000e+00 : f32
    %196 = vector.broadcast %cst_178 : f32 to vector<8x64xf32>
    %197 = arith.divf %196, %195 : vector<8x64xf32>
    %198 = arith.mulf %190, %197 : vector<8x64xf32>
    %cst_179 = arith.constant dense<0.000000e+00> : vector<8x128xf32>
    %199 = tpu.matmul %198, %41, %cst_179 {dimension_numbers = #tpu.dot_dimension_numbers<[1], [0], [0], [1], [0, 0, 1, 1], [], []>} : vector<8x64xf32>, vector<64x128xf32>, vector<8x128xf32> -> vector<8x128xf32>
    %200 = vector.broadcast %40 : vector<1x128xf32> to vector<8x128xf32>
    %201 = arith.addf %199, %200 : vector<8x128xf32>
    %cst_180 = arith.constant 0.000000e+00 : f32
    %202 = vector.broadcast %cst_180 : f32 to vector<8x128xf32>
    %203 = arith.subf %202, %201 : vector<8x128xf32>
    %204 = math.exp %203 : vector<8x128xf32>
    %cst_181 = arith.constant 1.000000e+00 : f32
    %205 = vector.broadcast %cst_181 : f32 to vector<8x128xf32>
    %206 = arith.addf %205, %204 : vector<8x128xf32>
    %cst_182 = arith.constant 1.000000e+00 : f32
    %207 = vector.broadcast %cst_182 : f32 to vector<8x128xf32>
    %208 = arith.divf %207, %206 : vector<8x128xf32>
    %209 = arith.mulf %201, %208 : vector<8x128xf32>
    %cst_183 = arith.constant dense<0.000000e+00> : vector<8x32xf32>
    %210 = tpu.matmul %209, %39, %cst_183 {dimension_numbers = #tpu.dot_dimension_numbers<[1], [0], [0], [1], [0, 0, 1, 1], [], []>} : vector<8x128xf32>, vector<128x32xf32>, vector<8x32xf32> -> vector<8x32xf32>
    %cst_184 = arith.constant dense<0.000000e+00> : vector<8x128xf32>
    %211 = tpu.matmul %210, %37, %cst_184 {dimension_numbers = #tpu.dot_dimension_numbers<[1], [0], [0], [1], [0, 0, 1, 1], [], []>} : vector<8x32xf32>, vector<32x128xf32>, vector<8x128xf32> -> vector<8x128xf32>
    %212 = arith.subf %209, %211 : vector<8x128xf32>
    %213 = arith.mulf %212, %212 : vector<8x128xf32>
    %cst_185 = arith.constant dense<0.000000e+00> : vector<8x32xf32>
    %214 = tpu.matmul %213, %39, %cst_185 {dimension_numbers = #tpu.dot_dimension_numbers<[1], [0], [0], [1], [0, 0, 1, 1], [], []>} : vector<8x128xf32>, vector<128x32xf32>, vector<8x32xf32> -> vector<8x32xf32>
    %cst_186 = arith.constant dense<0.000000e+00> : vector<8x128xf32>
    %215 = tpu.matmul %214, %37, %cst_186 {dimension_numbers = #tpu.dot_dimension_numbers<[1], [0], [0], [1], [0, 0, 1, 1], [], []>} : vector<8x32xf32>, vector<32x128xf32>, vector<8x128xf32> -> vector<8x128xf32>
    %cst_187 = arith.constant 9.99999974E-6 : f32
    %216 = vector.broadcast %cst_187 : f32 to vector<8x128xf32>
    %217 = arith.addf %215, %216 : vector<8x128xf32>
    %218 = math.rsqrt %217 : vector<8x128xf32>
    %219 = arith.mulf %212, %218 : vector<8x128xf32>
    %220 = vector.broadcast %38 : vector<1x128xf32> to vector<8x128xf32>
    %221 = arith.mulf %219, %220 : vector<8x128xf32>
    %222 = vector.broadcast %36 : vector<1x128xf32> to vector<8x128xf32>
    %223 = arith.addf %221, %222 : vector<8x128xf32>
    %cst_188 = arith.constant dense<0.000000e+00> : vector<8x128xf32>
    %224 = tpu.matmul %223, %44, %cst_188 {dimension_numbers = #tpu.dot_dimension_numbers<[1], [0], [0], [1], [0, 0, 1, 1], [], []>} : vector<8x128xf32>, vector<128x128xf32>, vector<8x128xf32> -> vector<8x128xf32>
    %cst_189 = arith.constant dense<0.000000e+00> : vector<8x128xf32>
    %225 = tpu.matmul %136, %43, %cst_189 {dimension_numbers = #tpu.dot_dimension_numbers<[1], [0], [0], [1], [0, 0, 1, 1], [], []>} : vector<8x128xf32>, vector<128x128xf32>, vector<8x128xf32> -> vector<8x128xf32>
    %226 = arith.addf %224, %225 : vector<8x128xf32>
    %227 = vector.broadcast %42 : vector<1x128xf32> to vector<8x128xf32>
    %228 = arith.addf %226, %227 : vector<8x128xf32>
    %cst_190 = arith.constant 0.000000e+00 : f32
    %229 = vector.broadcast %cst_190 : f32 to vector<8x128xf32>
    %230 = arith.subf %229, %228 : vector<8x128xf32>
    %231 = math.exp %230 : vector<8x128xf32>
    %cst_191 = arith.constant 1.000000e+00 : f32
    %232 = vector.broadcast %cst_191 : f32 to vector<8x128xf32>
    %233 = arith.addf %232, %231 : vector<8x128xf32>
    %cst_192 = arith.constant 1.000000e+00 : f32
    %234 = vector.broadcast %cst_192 : f32 to vector<8x128xf32>
    %235 = arith.divf %234, %233 : vector<8x128xf32>
    %236 = arith.mulf %228, %235 : vector<8x128xf32>
    %237 = vector.broadcast %65 : vector<8x1xf32> to vector<8x128xf32>
    %238 = vector.broadcast %48 : vector<1x128xf32> to vector<8x128xf32>
    %239 = arith.mulf %237, %238 : vector<8x128xf32>
    %240 = vector.broadcast %47 : vector<1x128xf32> to vector<8x128xf32>
    %241 = arith.addf %239, %240 : vector<8x128xf32>
    %cst_193 = arith.constant dense<0.000000e+00> : vector<8x128xf32>
    %242 = tpu.matmul %66, %35, %cst_193 {dimension_numbers = #tpu.dot_dimension_numbers<[1], [0], [0], [1], [0, 0, 1, 1], [], []>} : vector<8x16xf32>, vector<16x128xf32>, vector<8x128xf32> -> vector<8x128xf32>
    %243 = vector.broadcast %34 : vector<1x128xf32> to vector<8x128xf32>
    %244 = arith.addf %242, %243 : vector<8x128xf32>
    %245 = arith.mulf %236, %244 : vector<8x128xf32>
    %246 = arith.addf %245, %241 : vector<8x128xf32>
    %cst_194 = arith.constant dense<0.000000e+00> : vector<8x128xf32>
    %247 = tpu.matmul %246, %46, %cst_194 {dimension_numbers = #tpu.dot_dimension_numbers<[1], [0], [0], [1], [0, 0, 1, 1], [], []>} : vector<8x128xf32>, vector<128x128xf32>, vector<8x128xf32> -> vector<8x128xf32>
    %248 = vector.broadcast %45 : vector<1x128xf32> to vector<8x128xf32>
    %249 = arith.addf %247, %248 : vector<8x128xf32>
    %cst_195 = arith.constant 0.000000e+00 : f32
    %250 = vector.broadcast %cst_195 : f32 to vector<8x128xf32>
    %251 = arith.subf %250, %249 : vector<8x128xf32>
    %252 = math.exp %251 : vector<8x128xf32>
    %cst_196 = arith.constant 1.000000e+00 : f32
    %253 = vector.broadcast %cst_196 : f32 to vector<8x128xf32>
    %254 = arith.addf %253, %252 : vector<8x128xf32>
    %cst_197 = arith.constant 1.000000e+00 : f32
    %255 = vector.broadcast %cst_197 : f32 to vector<8x128xf32>
    %256 = arith.divf %255, %254 : vector<8x128xf32>
    %257 = arith.mulf %249, %256 : vector<8x128xf32>
    %258 = arith.addf %257, %209 : vector<8x128xf32>
    %cst_198 = arith.constant dense<0.000000e+00> : vector<8x256xf32>
    %259 = tpu.matmul %258, %56, %cst_198 {dimension_numbers = #tpu.dot_dimension_numbers<[1], [0], [0], [1], [0, 0, 1, 1], [], []>} : vector<8x128xf32>, vector<128x256xf32>, vector<8x256xf32> -> vector<8x256xf32>
    %260 = vector.broadcast %55 : vector<1x256xf32> to vector<8x256xf32>
    %261 = arith.addf %259, %260 : vector<8x256xf32>
    %cst_199 = arith.constant 0.000000e+00 : f32
    %262 = vector.broadcast %cst_199 : f32 to vector<8x256xf32>
    %263 = arith.subf %262, %261 : vector<8x256xf32>
    %264 = math.exp %263 : vector<8x256xf32>
    %cst_200 = arith.constant 1.000000e+00 : f32
    %265 = vector.broadcast %cst_200 : f32 to vector<8x256xf32>
    %266 = arith.addf %265, %264 : vector<8x256xf32>
    %cst_201 = arith.constant 1.000000e+00 : f32
    %267 = vector.broadcast %cst_201 : f32 to vector<8x256xf32>
    %268 = arith.divf %267, %266 : vector<8x256xf32>
    %269 = arith.mulf %261, %268 : vector<8x256xf32>
    %cst_202 = arith.constant dense<0.000000e+00> : vector<8x32xf32>
    %270 = tpu.matmul %269, %54, %cst_202 {dimension_numbers = #tpu.dot_dimension_numbers<[1], [0], [0], [1], [0, 0, 1, 1], [], []>} : vector<8x256xf32>, vector<256x32xf32>, vector<8x32xf32> -> vector<8x32xf32>
    %cst_203 = arith.constant dense<0.000000e+00> : vector<8x256xf32>
    %271 = tpu.matmul %270, %52, %cst_203 {dimension_numbers = #tpu.dot_dimension_numbers<[1], [0], [0], [1], [0, 0, 1, 1], [], []>} : vector<8x32xf32>, vector<32x256xf32>, vector<8x256xf32> -> vector<8x256xf32>
    %272 = arith.subf %269, %271 : vector<8x256xf32>
    %273 = arith.mulf %272, %272 : vector<8x256xf32>
    %cst_204 = arith.constant dense<0.000000e+00> : vector<8x32xf32>
    %274 = tpu.matmul %273, %54, %cst_204 {dimension_numbers = #tpu.dot_dimension_numbers<[1], [0], [0], [1], [0, 0, 1, 1], [], []>} : vector<8x256xf32>, vector<256x32xf32>, vector<8x32xf32> -> vector<8x32xf32>
    %cst_205 = arith.constant dense<0.000000e+00> : vector<8x256xf32>
    %275 = tpu.matmul %274, %52, %cst_205 {dimension_numbers = #tpu.dot_dimension_numbers<[1], [0], [0], [1], [0, 0, 1, 1], [], []>} : vector<8x32xf32>, vector<32x256xf32>, vector<8x256xf32> -> vector<8x256xf32>
    %cst_206 = arith.constant 9.99999974E-6 : f32
    %276 = vector.broadcast %cst_206 : f32 to vector<8x256xf32>
    %277 = arith.addf %275, %276 : vector<8x256xf32>
    %278 = math.rsqrt %277 : vector<8x256xf32>
    %279 = arith.mulf %272, %278 : vector<8x256xf32>
    %280 = vector.broadcast %53 : vector<1x256xf32> to vector<8x256xf32>
    %281 = arith.mulf %279, %280 : vector<8x256xf32>
    %282 = vector.broadcast %51 : vector<1x256xf32> to vector<8x256xf32>
    %283 = arith.addf %281, %282 : vector<8x256xf32>
    %cst_207 = arith.constant dense<0.000000e+00> : vector<8x256xf32>
    %284 = tpu.matmul %283, %59, %cst_207 {dimension_numbers = #tpu.dot_dimension_numbers<[1], [0], [0], [1], [0, 0, 1, 1], [], []>} : vector<8x256xf32>, vector<256x256xf32>, vector<8x256xf32> -> vector<8x256xf32>
    %cst_208 = arith.constant dense<0.000000e+00> : vector<8x256xf32>
    %285 = tpu.matmul %88, %58, %cst_208 {dimension_numbers = #tpu.dot_dimension_numbers<[1], [0], [0], [1], [0, 0, 1, 1], [], []>} : vector<8x256xf32>, vector<256x256xf32>, vector<8x256xf32> -> vector<8x256xf32>
    %286 = arith.addf %284, %285 : vector<8x256xf32>
    %287 = vector.broadcast %57 : vector<1x256xf32> to vector<8x256xf32>
    %288 = arith.addf %286, %287 : vector<8x256xf32>
    %cst_209 = arith.constant 0.000000e+00 : f32
    %289 = vector.broadcast %cst_209 : f32 to vector<8x256xf32>
    %290 = arith.subf %289, %288 : vector<8x256xf32>
    %291 = math.exp %290 : vector<8x256xf32>
    %cst_210 = arith.constant 1.000000e+00 : f32
    %292 = vector.broadcast %cst_210 : f32 to vector<8x256xf32>
    %293 = arith.addf %292, %291 : vector<8x256xf32>
    %cst_211 = arith.constant 1.000000e+00 : f32
    %294 = vector.broadcast %cst_211 : f32 to vector<8x256xf32>
    %295 = arith.divf %294, %293 : vector<8x256xf32>
    %296 = arith.mulf %288, %295 : vector<8x256xf32>
    %297 = vector.broadcast %65 : vector<8x1xf32> to vector<8x256xf32>
    %298 = vector.broadcast %63 : vector<1x256xf32> to vector<8x256xf32>
    %299 = arith.mulf %297, %298 : vector<8x256xf32>
    %300 = vector.broadcast %62 : vector<1x256xf32> to vector<8x256xf32>
    %301 = arith.addf %299, %300 : vector<8x256xf32>
    %cst_212 = arith.constant dense<0.000000e+00> : vector<8x256xf32>
    %302 = tpu.matmul %66, %50, %cst_212 {dimension_numbers = #tpu.dot_dimension_numbers<[1], [0], [0], [1], [0, 0, 1, 1], [], []>} : vector<8x16xf32>, vector<16x256xf32>, vector<8x256xf32> -> vector<8x256xf32>
    %303 = vector.broadcast %49 : vector<1x256xf32> to vector<8x256xf32>
    %304 = arith.addf %302, %303 : vector<8x256xf32>
    %305 = arith.mulf %296, %304 : vector<8x256xf32>
    %306 = arith.addf %305, %301 : vector<8x256xf32>
    %cst_213 = arith.constant dense<0.000000e+00> : vector<8x256xf32>
    %307 = tpu.matmul %306, %61, %cst_213 {dimension_numbers = #tpu.dot_dimension_numbers<[1], [0], [0], [1], [0, 0, 1, 1], [], []>} : vector<8x256xf32>, vector<256x256xf32>, vector<8x256xf32> -> vector<8x256xf32>
    %308 = vector.broadcast %60 : vector<1x256xf32> to vector<8x256xf32>
    %309 = arith.addf %307, %308 : vector<8x256xf32>
    %cst_214 = arith.constant 0.000000e+00 : f32
    %310 = vector.broadcast %cst_214 : f32 to vector<8x256xf32>
    %311 = arith.subf %310, %309 : vector<8x256xf32>
    %312 = math.exp %311 : vector<8x256xf32>
    %cst_215 = arith.constant 1.000000e+00 : f32
    %313 = vector.broadcast %cst_215 : f32 to vector<8x256xf32>
    %314 = arith.addf %313, %312 : vector<8x256xf32>
    %cst_216 = arith.constant 1.000000e+00 : f32
    %315 = vector.broadcast %cst_216 : f32 to vector<8x256xf32>
    %316 = arith.divf %315, %314 : vector<8x256xf32>
    %317 = arith.mulf %309, %316 : vector<8x256xf32>
    %318 = arith.addf %317, %269 : vector<8x256xf32>
    %cst_217 = arith.constant dense<0.000000e+00> : vector<8x32xf32>
    %319 = tpu.matmul %318, %31, %cst_217 {dimension_numbers = #tpu.dot_dimension_numbers<[1], [0], [0], [1], [0, 0, 1, 1], [], []>} : vector<8x256xf32>, vector<256x32xf32>, vector<8x32xf32> -> vector<8x32xf32>
    %cst_218 = arith.constant dense<0.000000e+00> : vector<8x256xf32>
    %320 = tpu.matmul %319, %29, %cst_218 {dimension_numbers = #tpu.dot_dimension_numbers<[1], [0], [0], [1], [0, 0, 1, 1], [], []>} : vector<8x32xf32>, vector<32x256xf32>, vector<8x256xf32> -> vector<8x256xf32>
    %321 = arith.subf %318, %320 : vector<8x256xf32>
    %322 = arith.mulf %321, %321 : vector<8x256xf32>
    %cst_219 = arith.constant dense<0.000000e+00> : vector<8x32xf32>
    %323 = tpu.matmul %322, %31, %cst_219 {dimension_numbers = #tpu.dot_dimension_numbers<[1], [0], [0], [1], [0, 0, 1, 1], [], []>} : vector<8x256xf32>, vector<256x32xf32>, vector<8x32xf32> -> vector<8x32xf32>
    %cst_220 = arith.constant dense<0.000000e+00> : vector<8x256xf32>
    %324 = tpu.matmul %323, %29, %cst_220 {dimension_numbers = #tpu.dot_dimension_numbers<[1], [0], [0], [1], [0, 0, 1, 1], [], []>} : vector<8x32xf32>, vector<32x256xf32>, vector<8x256xf32> -> vector<8x256xf32>
    %cst_221 = arith.constant 9.99999974E-6 : f32
    %325 = vector.broadcast %cst_221 : f32 to vector<8x256xf32>
    %326 = arith.addf %324, %325 : vector<8x256xf32>
    %327 = math.rsqrt %326 : vector<8x256xf32>
    %328 = arith.mulf %321, %327 : vector<8x256xf32>
    %329 = vector.broadcast %30 : vector<1x256xf32> to vector<8x256xf32>
    %330 = arith.mulf %328, %329 : vector<8x256xf32>
    %331 = vector.broadcast %28 : vector<1x256xf32> to vector<8x256xf32>
    %332 = arith.addf %330, %331 : vector<8x256xf32>
    %cst_222 = arith.constant 0.000000e+00 : f32
    %333 = vector.broadcast %cst_222 : f32 to vector<8x256xf32>
    %334 = arith.subf %333, %332 : vector<8x256xf32>
    %335 = math.exp %334 : vector<8x256xf32>
    %cst_223 = arith.constant 1.000000e+00 : f32
    %336 = vector.broadcast %cst_223 : f32 to vector<8x256xf32>
    %337 = arith.addf %336, %335 : vector<8x256xf32>
    %cst_224 = arith.constant 1.000000e+00 : f32
    %338 = vector.broadcast %cst_224 : f32 to vector<8x256xf32>
    %339 = arith.divf %338, %337 : vector<8x256xf32>
    %340 = arith.mulf %332, %339 : vector<8x256xf32>
    %cst_225 = arith.constant dense<0.000000e+00> : vector<8x256xf32>
    %341 = tpu.matmul %340, %33, %cst_225 {dimension_numbers = #tpu.dot_dimension_numbers<[1], [0], [0], [1], [0, 0, 1, 1], [], []>} : vector<8x256xf32>, vector<256x256xf32>, vector<8x256xf32> -> vector<8x256xf32>
    %342 = vector.broadcast %32 : vector<1x256xf32> to vector<8x256xf32>
    %343 = arith.addf %341, %342 : vector<8x256xf32>
    %344 = arith.addf %343, %64 : vector<8x256xf32>
    %c0_226 = arith.constant 0 : index
    %c0_227 = arith.constant 0 : index
    %345 = vector.load %arg68[%c0_226, %c0_227] : memref<8x256xf32, #tpu.memory_space<vmem>>, vector<8x256xf32>
    tpu.vector_store %arg68[%c0_226, %c0_227], %344 {strides = array<i32>} : memref<8x256xf32, #tpu.memory_space<vmem>>, vector<8x256xf32>,
    return
  }
  func.func @transform_0(%arg0: i32) -> (i32, i32) {
    %c0_i32 = arith.constant 0 : i32
    %c0_i32_0 = arith.constant 0 : i32
    return %arg0, %c0_i32 : i32, i32
  }
  func.func @transform_1(%arg0: i32) -> (i32, i32) {
    %c0_i32 = arith.constant 0 : i32
    %c0_i32_0 = arith.constant 0 : i32
    return %arg0, %c0_i32 : i32, i32
  }
  func.func @transform_2(%arg0: i32) -> (i32, i32) {
    %c0_i32 = arith.constant 0 : i32
    %c0_i32_0 = arith.constant 0 : i32
    return %arg0, %c0_i32 : i32, i32
  }
  func.func @transform_3(%arg0: i32) -> (i32, i32) {
    %c0_i32 = arith.constant 0 : i32
    %c0_i32_0 = arith.constant 0 : i32
    %c0_i32_1 = arith.constant 0 : i32
    return %c0_i32, %c0_i32_0 : i32, i32
  }
  func.func @transform_4(%arg0: i32) -> (i32, i32) {
    %c0_i32 = arith.constant 0 : i32
    %c0_i32_0 = arith.constant 0 : i32
    %c0_i32_1 = arith.constant 0 : i32
    return %c0_i32, %c0_i32_0 : i32, i32
  }
  func.func @transform_5(%arg0: i32) -> (i32, i32) {
    %c0_i32 = arith.constant 0 : i32
    %c0_i32_0 = arith.constant 0 : i32
    %c0_i32_1 = arith.constant 0 : i32
    return %c0_i32, %c0_i32_0 : i32, i32
  }
  func.func @transform_6(%arg0: i32) -> (i32, i32) {
    %c0_i32 = arith.constant 0 : i32
    %c0_i32_0 = arith.constant 0 : i32
    %c0_i32_1 = arith.constant 0 : i32
    return %c0_i32, %c0_i32_0 : i32, i32
  }
  func.func @transform_7(%arg0: i32) -> (i32, i32) {
    %c0_i32 = arith.constant 0 : i32
    %c0_i32_0 = arith.constant 0 : i32
    %c0_i32_1 = arith.constant 0 : i32
    return %c0_i32, %c0_i32_0 : i32, i32
  }
  func.func @transform_8(%arg0: i32) -> (i32, i32) {
    %c0_i32 = arith.constant 0 : i32
    %c0_i32_0 = arith.constant 0 : i32
    %c0_i32_1 = arith.constant 0 : i32
    return %c0_i32, %c0_i32_0 : i32, i32
  }
  func.func @transform_9(%arg0: i32) -> (i32, i32) {
    %c0_i32 = arith.constant 0 : i32
    %c0_i32_0 = arith.constant 0 : i32
    %c0_i32_1 = arith.constant 0 : i32
    return %c0_i32, %c0_i32_0 : i32, i32
  }
  func.func @transform_10(%arg0: i32) -> (i32, i32) {
    %c0_i32 = arith.constant 0 : i32
    %c0_i32_0 = arith.constant 0 : i32
    %c0_i32_1 = arith.constant 0 : i32
    return %c0_i32, %c0_i32_0 : i32, i32
  }
  func.func @transform_11(%arg0: i32) -> (i32, i32) {
    %c0_i32 = arith.constant 0 : i32
    %c0_i32_0 = arith.constant 0 : i32
    %c0_i32_1 = arith.constant 0 : i32
    return %c0_i32, %c0_i32_0 : i32, i32
  }
  func.func @transform_12(%arg0: i32) -> (i32, i32) {
    %c0_i32 = arith.constant 0 : i32
    %c0_i32_0 = arith.constant 0 : i32
    %c0_i32_1 = arith.constant 0 : i32
    return %c0_i32, %c0_i32_0 : i32, i32
  }
  func.func @transform_13(%arg0: i32) -> (i32, i32) {
    %c0_i32 = arith.constant 0 : i32
    %c0_i32_0 = arith.constant 0 : i32
    %c0_i32_1 = arith.constant 0 : i32
    return %c0_i32, %c0_i32_0 : i32, i32
  }
  func.func @transform_14(%arg0: i32) -> (i32, i32) {
    %c0_i32 = arith.constant 0 : i32
    %c0_i32_0 = arith.constant 0 : i32
    %c0_i32_1 = arith.constant 0 : i32
    return %c0_i32, %c0_i32_0 : i32, i32
  }
  func.func @transform_15(%arg0: i32) -> (i32, i32) {
    %c0_i32 = arith.constant 0 : i32
    %c0_i32_0 = arith.constant 0 : i32
    %c0_i32_1 = arith.constant 0 : i32
    return %c0_i32, %c0_i32_0 : i32, i32
  }
  func.func @transform_16(%arg0: i32) -> (i32, i32) {
    %c0_i32 = arith.constant 0 : i32
    %c0_i32_0 = arith.constant 0 : i32
    %c0_i32_1 = arith.constant 0 : i32
    return %c0_i32, %c0_i32_0 : i32, i32
  }
  func.func @transform_17(%arg0: i32) -> (i32, i32) {
    %c0_i32 = arith.constant 0 : i32
    %c0_i32_0 = arith.constant 0 : i32
    %c0_i32_1 = arith.constant 0 : i32
    return %c0_i32, %c0_i32_0 : i32, i32
  }
  func.func @transform_18(%arg0: i32) -> (i32, i32) {
    %c0_i32 = arith.constant 0 : i32
    %c0_i32_0 = arith.constant 0 : i32
    %c0_i32_1 = arith.constant 0 : i32
    return %c0_i32, %c0_i32_0 : i32, i32
  }
  func.func @transform_19(%arg0: i32) -> (i32, i32) {
    %c0_i32 = arith.constant 0 : i32
    %c0_i32_0 = arith.constant 0 : i32
    %c0_i32_1 = arith.constant 0 : i32
    return %c0_i32, %c0_i32_0 : i32, i32
  }
  func.func @transform_20(%arg0: i32) -> (i32, i32) {
    %c0_i32 = arith.constant 0 : i32
    %c0_i32_0 = arith.constant 0 : i32
    %c0_i32_1 = arith.constant 0 : i32
    return %c0_i32, %c0_i32_0 : i32, i32
  }
  func.func @transform_21(%arg0: i32) -> (i32, i32) {
    %c0_i32 = arith.constant 0 : i32
    %c0_i32_0 = arith.constant 0 : i32
    %c0_i32_1 = arith.constant 0 : i32
    return %c0_i32, %c0_i32_0 : i32, i32
  }
  func.func @transform_22(%arg0: i32) -> (i32, i32) {
    %c0_i32 = arith.constant 0 : i32
    %c0_i32_0 = arith.constant 0 : i32
    %c0_i32_1 = arith.constant 0 : i32
    return %c0_i32, %c0_i32_0 : i32, i32
  }
  func.func @transform_23(%arg0: i32) -> (i32, i32) {
    %c0_i32 = arith.constant 0 : i32
    %c0_i32_0 = arith.constant 0 : i32
    %c0_i32_1 = arith.constant 0 : i32
    return %c0_i32, %c0_i32_0 : i32, i32
  }
  func.func @transform_24(%arg0: i32) -> (i32, i32) {
    %c0_i32 = arith.constant 0 : i32
    %c0_i32_0 = arith.constant 0 : i32
    %c0_i32_1 = arith.constant 0 : i32
    return %c0_i32, %c0_i32_0 : i32, i32
  }
  func.func @transform_25(%arg0: i32) -> (i32, i32) {
    %c0_i32 = arith.constant 0 : i32
    %c0_i32_0 = arith.constant 0 : i32
    %c0_i32_1 = arith.constant 0 : i32
    return %c0_i32, %c0_i32_0 : i32, i32
  }
  func.func @transform_26(%arg0: i32) -> (i32, i32) {
    %c0_i32 = arith.constant 0 : i32
    %c0_i32_0 = arith.constant 0 : i32
    %c0_i32_1 = arith.constant 0 : i32
    return %c0_i32, %c0_i32_0 : i32, i32
  }
  func.func @transform_27(%arg0: i32) -> (i32, i32) {
    %c0_i32 = arith.constant 0 : i32
    %c0_i32_0 = arith.constant 0 : i32
    %c0_i32_1 = arith.constant 0 : i32
    return %c0_i32, %c0_i32_0 : i32, i32
  }
  func.func @transform_28(%arg0: i32) -> (i32, i32) {
    %c0_i32 = arith.constant 0 : i32
    %c0_i32_0 = arith.constant 0 : i32
    %c0_i32_1 = arith.constant 0 : i32
    return %c0_i32, %c0_i32_0 : i32, i32
  }
  func.func @transform_29(%arg0: i32) -> (i32, i32) {
    %c0_i32 = arith.constant 0 : i32
    %c0_i32_0 = arith.constant 0 : i32
    %c0_i32_1 = arith.constant 0 : i32
    return %c0_i32, %c0_i32_0 : i32, i32
  }
  func.func @transform_30(%arg0: i32) -> (i32, i32) {
    %c0_i32 = arith.constant 0 : i32
    %c0_i32_0 = arith.constant 0 : i32
    %c0_i32_1 = arith.constant 0 : i32
    return %c0_i32, %c0_i32_0 : i32, i32
  }
  func.func @transform_31(%arg0: i32) -> (i32, i32) {
    %c0_i32 = arith.constant 0 : i32
    %c0_i32_0 = arith.constant 0 : i32
    %c0_i32_1 = arith.constant 0 : i32
    return %c0_i32, %c0_i32_0 : i32, i32
  }
  func.func @transform_32(%arg0: i32) -> (i32, i32) {
    %c0_i32 = arith.constant 0 : i32
    %c0_i32_0 = arith.constant 0 : i32
    %c0_i32_1 = arith.constant 0 : i32
    return %c0_i32, %c0_i32_0 : i32, i32
  }
  func.func @transform_33(%arg0: i32) -> (i32, i32) {
    %c0_i32 = arith.constant 0 : i32
    %c0_i32_0 = arith.constant 0 : i32
    %c0_i32_1 = arith.constant 0 : i32
    return %c0_i32, %c0_i32_0 : i32, i32
  }
  func.func @transform_34(%arg0: i32) -> (i32, i32) {
    %c0_i32 = arith.constant 0 : i32
    %c0_i32_0 = arith.constant 0 : i32
    %c0_i32_1 = arith.constant 0 : i32
    return %c0_i32, %c0_i32_0 : i32, i32
  }
  func.func @transform_35(%arg0: i32) -> (i32, i32) {
    %c0_i32 = arith.constant 0 : i32
    %c0_i32_0 = arith.constant 0 : i32
    %c0_i32_1 = arith.constant 0 : i32
    return %c0_i32, %c0_i32_0 : i32, i32
  }
  func.func @transform_36(%arg0: i32) -> (i32, i32) {
    %c0_i32 = arith.constant 0 : i32
    %c0_i32_0 = arith.constant 0 : i32
    %c0_i32_1 = arith.constant 0 : i32
    return %c0_i32, %c0_i32_0 : i32, i32
  }
  func.func @transform_37(%arg0: i32) -> (i32, i32) {
    %c0_i32 = arith.constant 0 : i32
    %c0_i32_0 = arith.constant 0 : i32
    %c0_i32_1 = arith.constant 0 : i32
    return %c0_i32, %c0_i32_0 : i32, i32
  }
  func.func @transform_38(%arg0: i32) -> (i32, i32) {
    %c0_i32 = arith.constant 0 : i32
    %c0_i32_0 = arith.constant 0 : i32
    %c0_i32_1 = arith.constant 0 : i32
    return %c0_i32, %c0_i32_0 : i32, i32
  }
  func.func @transform_39(%arg0: i32) -> (i32, i32) {
    %c0_i32 = arith.constant 0 : i32
    %c0_i32_0 = arith.constant 0 : i32
    %c0_i32_1 = arith.constant 0 : i32
    return %c0_i32, %c0_i32_0 : i32, i32
  }
  func.func @transform_40(%arg0: i32) -> (i32, i32) {
    %c0_i32 = arith.constant 0 : i32
    %c0_i32_0 = arith.constant 0 : i32
    %c0_i32_1 = arith.constant 0 : i32
    return %c0_i32, %c0_i32_0 : i32, i32
  }
  func.func @transform_41(%arg0: i32) -> (i32, i32) {
    %c0_i32 = arith.constant 0 : i32
    %c0_i32_0 = arith.constant 0 : i32
    %c0_i32_1 = arith.constant 0 : i32
    return %c0_i32, %c0_i32_0 : i32, i32
  }
  func.func @transform_42(%arg0: i32) -> (i32, i32) {
    %c0_i32 = arith.constant 0 : i32
    %c0_i32_0 = arith.constant 0 : i32
    %c0_i32_1 = arith.constant 0 : i32
    return %c0_i32, %c0_i32_0 : i32, i32
  }
  func.func @transform_43(%arg0: i32) -> (i32, i32) {
    %c0_i32 = arith.constant 0 : i32
    %c0_i32_0 = arith.constant 0 : i32
    %c0_i32_1 = arith.constant 0 : i32
    return %c0_i32, %c0_i32_0 : i32, i32
  }
  func.func @transform_44(%arg0: i32) -> (i32, i32) {
    %c0_i32 = arith.constant 0 : i32
    %c0_i32_0 = arith.constant 0 : i32
    %c0_i32_1 = arith.constant 0 : i32
    return %c0_i32, %c0_i32_0 : i32, i32
  }
  func.func @transform_45(%arg0: i32) -> (i32, i32) {
    %c0_i32 = arith.constant 0 : i32
    %c0_i32_0 = arith.constant 0 : i32
    %c0_i32_1 = arith.constant 0 : i32
    return %c0_i32, %c0_i32_0 : i32, i32
  }
  func.func @transform_46(%arg0: i32) -> (i32, i32) {
    %c0_i32 = arith.constant 0 : i32
    %c0_i32_0 = arith.constant 0 : i32
    %c0_i32_1 = arith.constant 0 : i32
    return %c0_i32, %c0_i32_0 : i32, i32
  }
  func.func @transform_47(%arg0: i32) -> (i32, i32) {
    %c0_i32 = arith.constant 0 : i32
    %c0_i32_0 = arith.constant 0 : i32
    %c0_i32_1 = arith.constant 0 : i32
    return %c0_i32, %c0_i32_0 : i32, i32
  }
  func.func @transform_48(%arg0: i32) -> (i32, i32) {
    %c0_i32 = arith.constant 0 : i32
    %c0_i32_0 = arith.constant 0 : i32
    %c0_i32_1 = arith.constant 0 : i32
    return %c0_i32, %c0_i32_0 : i32, i32
  }
  func.func @transform_49(%arg0: i32) -> (i32, i32) {
    %c0_i32 = arith.constant 0 : i32
    %c0_i32_0 = arith.constant 0 : i32
    %c0_i32_1 = arith.constant 0 : i32
    return %c0_i32, %c0_i32_0 : i32, i32
  }
  func.func @transform_50(%arg0: i32) -> (i32, i32) {
    %c0_i32 = arith.constant 0 : i32
    %c0_i32_0 = arith.constant 0 : i32
    %c0_i32_1 = arith.constant 0 : i32
    return %c0_i32, %c0_i32_0 : i32, i32
  }
  func.func @transform_51(%arg0: i32) -> (i32, i32) {
    %c0_i32 = arith.constant 0 : i32
    %c0_i32_0 = arith.constant 0 : i32
    %c0_i32_1 = arith.constant 0 : i32
    return %c0_i32, %c0_i32_0 : i32, i32
  }
  func.func @transform_52(%arg0: i32) -> (i32, i32) {
    %c0_i32 = arith.constant 0 : i32
    %c0_i32_0 = arith.constant 0 : i32
    %c0_i32_1 = arith.constant 0 : i32
    return %c0_i32, %c0_i32_0 : i32, i32
  }
  func.func @transform_53(%arg0: i32) -> (i32, i32) {
    %c0_i32 = arith.constant 0 : i32
    %c0_i32_0 = arith.constant 0 : i32
    %c0_i32_1 = arith.constant 0 : i32
    return %c0_i32, %c0_i32_0 : i32, i32
  }
  func.func @transform_54(%arg0: i32) -> (i32, i32) {
    %c0_i32 = arith.constant 0 : i32
    %c0_i32_0 = arith.constant 0 : i32
    %c0_i32_1 = arith.constant 0 : i32
    return %c0_i32, %c0_i32_0 : i32, i32
  }
  func.func @transform_55(%arg0: i32) -> (i32, i32) {
    %c0_i32 = arith.constant 0 : i32
    %c0_i32_0 = arith.constant 0 : i32
    %c0_i32_1 = arith.constant 0 : i32
    return %c0_i32, %c0_i32_0 : i32, i32
  }
  func.func @transform_56(%arg0: i32) -> (i32, i32) {
    %c0_i32 = arith.constant 0 : i32
    %c0_i32_0 = arith.constant 0 : i32
    %c0_i32_1 = arith.constant 0 : i32
    return %c0_i32, %c0_i32_0 : i32, i32
  }
  func.func @transform_57(%arg0: i32) -> (i32, i32) {
    %c0_i32 = arith.constant 0 : i32
    %c0_i32_0 = arith.constant 0 : i32
    %c0_i32_1 = arith.constant 0 : i32
    return %c0_i32, %c0_i32_0 : i32, i32
  }
  func.func @transform_58(%arg0: i32) -> (i32, i32) {
    %c0_i32 = arith.constant 0 : i32
    %c0_i32_0 = arith.constant 0 : i32
    %c0_i32_1 = arith.constant 0 : i32
    return %c0_i32, %c0_i32_0 : i32, i32
  }
  func.func @transform_59(%arg0: i32) -> (i32, i32) {
    %c0_i32 = arith.constant 0 : i32
    %c0_i32_0 = arith.constant 0 : i32
    %c0_i32_1 = arith.constant 0 : i32
    return %c0_i32, %c0_i32_0 : i32, i32
  }
  func.func @transform_60(%arg0: i32) -> (i32, i32) {
    %c0_i32 = arith.constant 0 : i32
    %c0_i32_0 = arith.constant 0 : i32
    %c0_i32_1 = arith.constant 0 : i32
    return %c0_i32, %c0_i32_0 : i32, i32
  }
  func.func @transform_61(%arg0: i32) -> (i32, i32) {
    %c0_i32 = arith.constant 0 : i32
    %c0_i32_0 = arith.constant 0 : i32
    %c0_i32_1 = arith.constant 0 : i32
    return %c0_i32, %c0_i32_0 : i32, i32
  }
  func.func @transform_62(%arg0: i32) -> (i32, i32) {
    %c0_i32 = arith.constant 0 : i32
    %c0_i32_0 = arith.constant 0 : i32
    %c0_i32_1 = arith.constant 0 : i32
    return %c0_i32, %c0_i32_0 : i32, i32
  }
  func.func @transform_63(%arg0: i32) -> (i32, i32) {
    %c0_i32 = arith.constant 0 : i32
    %c0_i32_0 = arith.constant 0 : i32
    %c0_i32_1 = arith.constant 0 : i32
    return %c0_i32, %c0_i32_0 : i32, i32
  }
  func.func @transform_64(%arg0: i32) -> (i32, i32) {
    %c0_i32 = arith.constant 0 : i32
    %c0_i32_0 = arith.constant 0 : i32
    %c0_i32_1 = arith.constant 0 : i32
    return %c0_i32, %c0_i32_0 : i32, i32
  }
  func.func @transform_65(%arg0: i32) -> (i32, i32) {
    %c0_i32 = arith.constant 0 : i32
    %c0_i32_0 = arith.constant 0 : i32
    %c0_i32_1 = arith.constant 0 : i32
    return %c0_i32, %c0_i32_0 : i32, i32
  }
  func.func @transform_66(%arg0: i32) -> (i32, i32) {
    %c0_i32 = arith.constant 0 : i32
    %c0_i32_0 = arith.constant 0 : i32
    %c0_i32_1 = arith.constant 0 : i32
    return %c0_i32, %c0_i32_0 : i32, i32
  }
  func.func @transform_67(%arg0: i32) -> (i32, i32) {
    %c0_i32 = arith.constant 0 : i32
    %c0_i32_0 = arith.constant 0 : i32
    return %arg0, %c0_i32 : i32, i32
  }
}

</mosaic_0001>

<llo_original>
// kernel: tpu_custom_call.1
$region0: #{tpu_custom_call.1}
  #allocation0 [shape = 'u32[]', space=smem, size = 0x4, offset = 0x4, fixed_abs, tag = 'smem constant byte address 0x4 - core index']
  #allocation1 [shape = 'u32[144,128]{1,0:T(1,128)}', space=vmem, size = 0x12000, scoped, tag = 'internal scratch']
  %s0 = inlined_call_operand.smem [shape: u32[68], index: -1, kind: input, shape index: {}]
  %s1 = sld [smem:[%s0]]
  %s2 = scalar_lea.smem %s0, 1
  %s3 = sld [smem:[%s2]]
  %s4 = scalar_lea.smem %s0, 2
  %s5 = sld [smem:[%s4]]
  %s6 = scalar_lea.smem %s0, 3
  %s7 = sld [smem:[%s6]]
  %s8 = scalar_lea.smem %s0, 4
  %s9 = sld [smem:[%s8]]
  %s10 = scalar_lea.smem %s0, 5
  %s11 = sld [smem:[%s10]]
  %s12 = scalar_lea.smem %s0, 6
  %s13 = sld [smem:[%s12]]
  %s14 = scalar_lea.smem %s0, 7
  %s15 = sld [smem:[%s14]]
  %s16 = scalar_lea.smem %s0, 8
  %s17 = sld [smem:[%s16]]
  %s18 = scalar_lea.smem %s0, 9
  %s19 = sld [smem:[%s18]]
  %s20 = scalar_lea.smem %s0, 10
  %s21 = sld [smem:[%s20]]
  %s22 = scalar_lea.smem %s0, 11
  %s23 = sld [smem:[%s22]]
  %s24 = scalar_lea.smem %s0, 12
  %s25 = sld [smem:[%s24]]
  %s26 = scalar_lea.smem %s0, 13
  %s27 = sld [smem:[%s26]]
  %s28 = scalar_lea.smem %s0, 14
  %s29 = sld [smem:[%s28]]
  %s30 = scalar_lea.smem %s0, 15
  %s31 = sld [smem:[%s30]]
  %s32 = scalar_lea.smem %s0, 16
  %s33 = sld [smem:[%s32]]
  %s34 = scalar_lea.smem %s0, 17
  %s35 = sld [smem:[%s34]]
  %s36 = scalar_lea.smem %s0, 18
  %s37 = sld [smem:[%s36]]
  %s38 = scalar_lea.smem %s0, 19
  %s39 = sld [smem:[%s38]]
  %s40 = scalar_lea.smem %s0, 20
  %s41 = sld [smem:[%s40]]
  %s42 = scalar_lea.smem %s0, 21
  %s43 = sld [smem:[%s42]]
  %s44 = scalar_lea.smem %s0, 22
  %s45 = sld [smem:[%s44]]
  %s46 = scalar_lea.smem %s0, 23
  %s47 = sld [smem:[%s46]]
  %s48 = scalar_lea.smem %s0, 24
  %s49 = sld [smem:[%s48]]
  %s50 = scalar_lea.smem %s0, 25
  %s51 = sld [smem:[%s50]]
  %s52 = scalar_lea.smem %s0, 26
  %s53 = sld [smem:[%s52]]
  %s54 = scalar_lea.smem %s0, 27
  %s55 = sld [smem:[%s54]]
  %s56 = scalar_lea.smem %s0, 28
  %s57 = sld [smem:[%s56]]
  %s58 = scalar_lea.smem %s0, 29
  %s59 = sld [smem:[%s58]]
  %s60 = scalar_lea.smem %s0, 30
  %s61 = sld [smem:[%s60]]
  %s62 = scalar_lea.smem %s0, 31
  %s63 = sld [smem:[%s62]]
  %s64 = scalar_lea.smem %s0, 32
  %s65 = sld [smem:[%s64]]
  %s66 = scalar_lea.smem %s0, 33
  %s67 = sld [smem:[%s66]]
  %s68 = scalar_lea.smem %s0, 34
  %s69 = sld [smem:[%s68]]
  %s70 = scalar_lea.smem %s0, 35
  %s71 = sld [smem:[%s70]]
  %s72 = scalar_lea.smem %s0, 36
  %s73 = sld [smem:[%s72]]
  %s74 = scalar_lea.smem %s0, 37
  %s75 = sld [smem:[%s74]]
  %s76 = scalar_lea.smem %s0, 38
  %s77 = sld [smem:[%s76]]
  %s78 = scalar_lea.smem %s0, 39
  %s79 = sld [smem:[%s78]]
  %s80 = scalar_lea.smem %s0, 40
  %s81 = sld [smem:[%s80]]
  %s82 = scalar_lea.smem %s0, 41
  %s83 = sld [smem:[%s82]]
  %s84 = scalar_lea.smem %s0, 42
  %s85 = sld [smem:[%s84]]
  %s86 = scalar_lea.smem %s0, 43
  %s87 = sld [smem:[%s86]]
  %s88 = scalar_lea.smem %s0, 44
  %s89 = sld [smem:[%s88]]
  %s90 = scalar_lea.smem %s0, 45
  %s91 = sld [smem:[%s90]]
  %s92 = scalar_lea.smem %s0, 46
  %s93 = sld [smem:[%s92]]
  %s94 = scalar_lea.smem %s0, 47
  %s95 = sld [smem:[%s94]]
  %s96 = scalar_lea.smem %s0, 48
  %s97 = sld [smem:[%s96]]
  %s98 = scalar_lea.smem %s0, 49
  %s99 = sld [smem:[%s98]]
  %s100 = scalar_lea.smem %s0, 50
  %s101 = sld [smem:[%s100]]
  %s102 = scalar_lea.smem %s0, 51
  %s103 = sld [smem:[%s102]]
  %s104 = scalar_lea.smem %s0, 52
  %s105 = sld [smem:[%s104]]
  %s106 = scalar_lea.smem %s0, 53
  %s107 = sld [smem:[%s106]]
  %s108 = scalar_lea.smem %s0, 54
  %s109 = sld [smem:[%s108]]
  %s110 = scalar_lea.smem %s0, 55
  %s111 = sld [smem:[%s110]]
  %s112 = scalar_lea.smem %s0, 56
  %s113 = sld [smem:[%s112]]
  %s114 = scalar_lea.smem %s0, 57
  %s115 = sld [smem:[%s114]]
  %s116 = scalar_lea.smem %s0, 58
  %s117 = sld [smem:[%s116]]
  %s118 = scalar_lea.smem %s0, 59
  %s119 = sld [smem:[%s118]]
  %s120 = scalar_lea.smem %s0, 60
  %s121 = sld [smem:[%s120]]
  %s122 = scalar_lea.smem %s0, 61
  %s123 = sld [smem:[%s122]]
  %s124 = scalar_lea.smem %s0, 62
  %s125 = sld [smem:[%s124]]
  %s126 = scalar_lea.smem %s0, 63
  %s127 = sld [smem:[%s126]]
  %s128 = scalar_lea.smem %s0, 64
  %s129 = sld [smem:[%s128]]
  %s130 = scalar_lea.smem %s0, 65
  %s131 = sld [smem:[%s130]]
  %s132 = scalar_lea.smem %s0, 66
  %s133 = sld [smem:[%s132]]
  %s134 = scalar_lea.smem %s0, 67
  %s135 = sld [smem:[%s134]]
  %s136 = sld [smem:[#allocation0]]
  $region477: #{tpu_custom_call.1} parent=0
    _
  %s138 = ssub.s32 1, %s136
  %s139 = scalar_select 0, %s138, %s136
  $region1: #{tpu_custom_call.1} parent=0
    #allocation2 [shape = 'u8[16384]{0}', space=vmem, size = 0x4000, scoped, tag = 'input window, operand 0']
    #allocation3 [shape = 's32[2]{0}', space=sflag, size = 0x8, scoped, tag = 'scoped memory for tpu_custom_call.1']
    #allocation4 [shape = 's32[2]{0}', space=sflag, size = 0x8, scoped, tag = 'scoped memory for tpu_custom_call.1']
    #allocation5 [shape = 'u8[8192]{0}', space=vmem, size = 0x2000, scoped, tag = 'input window, operand 2']
    #allocation6 [shape = 's32[2]{0}', space=sflag, size = 0x8, scoped, tag = 'scoped memory for tpu_custom_call.1']
    #allocation7 [shape = 'u8[512]{0}', space=vmem, size = 0x400, scoped, tag = 'input window, operand 3, single buffered']
    #allocation8 [shape = 'u8[16384]{0}', space=vmem, size = 0x4000, scoped, tag = 'input window, operand 4, single buffered']
    #allocation9 [shape = 's32[1]{0}', space=sflag, size = 0x4, scoped, tag = 'scoped memory for tpu_custom_call.1']
    #allocation10 [shape = 'u8[512]{0}', space=vmem, size = 0x400, scoped, tag = 'input window, operand 5, single buffered']
    #allocation11 [shape = 'u8[512]{0}', space=vmem, size = 0x400, scoped, tag = 'input window, operand 7, single buffered']
    #allocation12 [shape = 's32[1]{0}', space=sflag, size = 0x4, scoped, tag = 'scoped memory for tpu_custom_call.1']
    #allocation13 [shape = 'u8[512]{0}', space=vmem, size = 0x400, scoped, tag = 'input window, operand 9, single buffered']
    #allocation14 [shape = 'u8[1024]{0}', space=vmem, size = 0x400, scoped, tag = 'input window, operand 11, single buffered']
    #allocation15 [shape = 's32[1]{0}', space=sflag, size = 0x4, scoped, tag = 'scoped memory for tpu_custom_call.1']
    #allocation16 [shape = 'u8[32768]{0}', space=vmem, size = 0x8000, scoped, tag = 'input window, operand 12, single buffered']
    #allocation17 [shape = 'u8[1024]{0}', space=vmem, size = 0x400, scoped, tag = 'input window, operand 13, single buffered']
    #allocation18 [shape = 's32[1]{0}', space=sflag, size = 0x4, scoped, tag = 'scoped memory for tpu_custom_call.1']
    #allocation19 [shape = 'u8[1024]{0}', space=vmem, size = 0x400, scoped, tag = 'input window, operand 15, single buffered']
    #allocation20 [shape = 'u8[1024]{0}', space=vmem, size = 0x400, scoped, tag = 'input window, operand 17, single buffered']
    #allocation21 [shape = 's32[1]{0}', space=sflag, size = 0x4, scoped, tag = 'scoped memory for tpu_custom_call.1']
    #allocation22 [shape = 'u8[512]{0}', space=vmem, size = 0x400, scoped, tag = 'input window, operand 21, single buffered']
    #allocation23 [shape = 'u8[16384]{0}', space=vmem, size = 0x4000, scoped, tag = 'input window, operand 22, single buffered']
    #allocation24 [shape = 's32[1]{0}', space=sflag, size = 0x4, scoped, tag = 'scoped memory for tpu_custom_call.1']
    #allocation25 [shape = 'u8[512]{0}', space=vmem, size = 0x400, scoped, tag = 'input window, operand 23, single buffered']
    #allocation26 [shape = 'u8[512]{0}', space=vmem, size = 0x400, scoped, tag = 'input window, operand 25, single buffered']
    #allocation27 [shape = 's32[1]{0}', space=sflag, size = 0x4, scoped, tag = 'scoped memory for tpu_custom_call.1']
    #allocation28 [shape = 'u8[131072]{0}', space=vmem, size = 0x20000, scoped, tag = 'input window, operand 26, single buffered']
    #allocation29 [shape = 'u8[512]{0}', space=vmem, size = 0x400, scoped, tag = 'input window, operand 27, single buffered']
    #allocation30 [shape = 's32[1]{0}', space=sflag, size = 0x4, scoped, tag = 'scoped memory for tpu_custom_call.1']
    #allocation31 [shape = 'u8[65536]{0}', space=vmem, size = 0x10000, scoped, tag = 'input window, operand 28, single buffered']
    #allocation32 [shape = 'u8[512]{0}', space=vmem, size = 0x400, scoped, tag = 'input window, operand 29, single buffered']
    #allocation33 [shape = 's32[1]{0}', space=sflag, size = 0x4, scoped, tag = 'scoped memory for tpu_custom_call.1']
    #allocation34 [shape = 'u8[65536]{0}', space=vmem, size = 0x10000, scoped, tag = 'input window, operand 30, single buffered']
    #allocation35 [shape = 'u8[32768]{0}', space=vmem, size = 0x8000, scoped, tag = 'input window, operand 32, single buffered']
    #allocation36 [shape = 's32[1]{0}', space=sflag, size = 0x4, scoped, tag = 'scoped memory for tpu_custom_call.1']
    #allocation37 [shape = 'u8[262144]{0}', space=vmem, size = 0x40000, scoped, tag = 'input window, operand 36, single buffered']
    #allocation38 [shape = 'u8[512]{0}', space=vmem, size = 0x400, scoped, tag = 'input window, operand 37, single buffered']
    #allocation39 [shape = 's32[1]{0}', space=sflag, size = 0x4, scoped, tag = 'scoped memory for tpu_custom_call.1']
    #allocation40 [shape = 'u8[8192]{0}', space=vmem, size = 0x2000, scoped, tag = 'input window, operand 38, single buffered']
    #allocation41 [shape = 'u8[512]{0}', space=vmem, size = 0x400, scoped, tag = 'input window, operand 39, single buffered']
    #allocation42 [shape = 's32[1]{0}', space=sflag, size = 0x4, scoped, tag = 'scoped memory for tpu_custom_call.1']
    #allocation43 [shape = 'u8[16384]{0}', space=vmem, size = 0x4000, scoped, tag = 'input window, operand 40, single buffered']
    #allocation44 [shape = 'u8[512]{0}', space=vmem, size = 0x400, scoped, tag = 'input window, operand 41, single buffered']
    #allocation45 [shape = 's32[1]{0}', space=sflag, size = 0x4, scoped, tag = 'scoped memory for tpu_custom_call.1']
    #allocation46 [shape = 'u8[512]{0}', space=vmem, size = 0x400, scoped, tag = 'input window, operand 43, single buffered']
    #allocation47 [shape = 'u8[32768]{0}', space=vmem, size = 0x8000, scoped, tag = 'input window, operand 44, single buffered']
    #allocation48 [shape = 's32[1]{0}', space=sflag, size = 0x4, scoped, tag = 'scoped memory for tpu_custom_call.1']
    #allocation49 [shape = 'u8[512]{0}', space=vmem, size = 0x400, scoped, tag = 'input window, operand 45, single buffered']
    #allocation50 [shape = 'u8[65536]{0}', space=vmem, size = 0x10000, scoped, tag = 'input window, operand 46, single buffered']
    #allocation51 [shape = 's32[1]{0}', space=sflag, size = 0x4, scoped, tag = 'scoped memory for tpu_custom_call.1']
    #allocation52 [shape = 'u8[65536]{0}', space=vmem, size = 0x10000, scoped, tag = 'input window, operand 47, single buffered']
    #allocation53 [shape = 'u8[512]{0}', space=vmem, size = 0x400, scoped, tag = 'input window, operand 48, single buffered']
    #allocation54 [shape = 's32[1]{0}', space=sflag, size = 0x4, scoped, tag = 'scoped memory for tpu_custom_call.1']
    #allocation55 [shape = 'u8[65536]{0}', space=vmem, size = 0x10000, scoped, tag = 'input window, operand 49, single buffered']
    #allocation56 [shape = 'u8[512]{0}', space=vmem, size = 0x400, scoped, tag = 'input window, operand 50, single buffered']
    #allocation57 [shape = 's32[1]{0}', space=sflag, size = 0x4, scoped, tag = 'scoped memory for tpu_custom_call.1']
    #allocation58 [shape = 'u8[512]{0}', space=vmem, size = 0x400, scoped, tag = 'input window, operand 51, single buffered']
    #allocation59 [shape = 'u8[16384]{0}', space=vmem, size = 0x4000, scoped, tag = 'input window, operand 53, single buffered']
    #allocation60 [shape = 's32[1]{0}', space=sflag, size = 0x4, scoped, tag = 'scoped memory for tpu_custom_call.1']
    #allocation61 [shape = 'u8[1024]{0}', space=vmem, size = 0x400, scoped, tag = 'input window, operand 56, single buffered']
    #allocation62 [shape = 'u8[1024]{0}', space=vmem, size = 0x400, scoped, tag = 'input window, operand 58, single buffered']
    #allocation63 [shape = 's32[1]{0}', space=sflag, size = 0x4, scoped, tag = 'scoped memory for tpu_custom_call.1']
    #allocation64 [shape = 'u8[131072]{0}', space=vmem, size = 0x20000, scoped, tag = 'input window, operand 59, single buffered']
    #allocation65 [shape = 'u8[262144]{0}', space=vmem, size = 0x40000, scoped, tag = 'input window, operand 61, single buffered']
    #allocation66 [shape = 's32[1]{0}', space=sflag, size = 0x4, scoped, tag = 'scoped memory for tpu_custom_call.1']
    #allocation67 [shape = 'u8[262144]{0}', space=vmem, size = 0x40000, scoped, tag = 'input window, operand 62, single buffered']
    #allocation68 [shape = 'u8[262144]{0}', space=vmem, size = 0x40000, scoped, tag = 'input window, operand 64, single buffered']
    #allocation69 [shape = 's32[1]{0}', space=sflag, size = 0x4, scoped, tag = 'scoped memory for tpu_custom_call.1']
    #allocation70 [shape = 'u8[16384]{0}', space=vmem, size = 0x4000, scoped, tag = 'output window, operand 0']
    %140 = vsyncpa [#allocation3], 0
    %s141 = scalar_lea.sflag [#allocation3], 1
    %142 = vsyncpa %s141, 0
    %143 = vsyncpa [#allocation6], 0
    %s144 = scalar_lea.sflag [#allocation6], 1
    %145 = vsyncpa %s144, 0
    %146 = vsyncpa [#allocation9], 0
    %147 = vsyncpa [#allocation12], 0
    %148 = vsyncpa [#allocation15], 0
    %149 = vsyncpa [#allocation18], 0
    %150 = vsyncpa [#allocation21], 0
    %151 = vsyncpa [#allocation24], 0
    %152 = vsyncpa [#allocation27], 0
    %153 = vsyncpa [#allocation30], 0
    %154 = vsyncpa [#allocation33], 0
    %155 = vsyncpa [#allocation36], 0
    %156 = vsyncpa [#allocation39], 0
    %157 = vsyncpa [#allocation42], 0
    %158 = vsyncpa [#allocation45], 0
    %159 = vsyncpa [#allocation48], 0
    %160 = vsyncpa [#allocation51], 0
    %161 = vsyncpa [#allocation54], 0
    %162 = vsyncpa [#allocation57], 0
    %163 = vsyncpa [#allocation60], 0
    %164 = vsyncpa [#allocation63], 0
    %165 = vsyncpa [#allocation66], 0
    %166 = vsyncpa [#allocation69], 0
    %167 = vsyncpa [#allocation4], 0
    %s168 = scalar_lea.sflag [#allocation4], 1
    %169 = vsyncpa %s168, 0
    loop: start=0, step=1, limit=4
    $region2: #{tpu_custom_call.1} parent=1 // loop_pre_header
      _
    $region3: #{tpu_custom_call.1} parent=1 // loop_header
      %s171 = sphi 0, %s175
      %p172 = scmp.ge.s32.totalorder %s171, 4
      %s181 = sphi 0, %s183
      %s184 = sphi 0, %s181
      %s185 = sphi 0, %s184
      %s201 = sphi 0, %s185
      %s207 = sphi 0, %s209
      %s210 = sphi 0, %s207
      %s211 = sphi 0, %s210
      %s227 = sphi 0, %s211
      %s233 = sphi 0, %s235
      %s236 = sphi 0, %s233
      %s237 = sphi 0, %s236
      %s253 = sphi 0, %s237
      %s257 = sphi 0, %s257
      %s259 = sphi 0, %s257
      %s260 = sphi 0, %s259
      %s274 = sphi 0, %s260
      %s278 = sphi 0, %s278
      %s280 = sphi 0, %s278
      %s281 = sphi 0, %s280
      %s295 = sphi 0, %s281
      %s299 = sphi 0, %s299
      %s301 = sphi 0, %s299
      %s302 = sphi 0, %s301
      %s316 = sphi 0, %s302
      %s320 = sphi 0, %s320
      %s322 = sphi 0, %s320
      %s323 = sphi 0, %s322
      %s337 = sphi 0, %s323
      %s341 = sphi 0, %s341
      %s343 = sphi 0, %s341
      %s344 = sphi 0, %s343
      %s358 = sphi 0, %s344
      %s362 = sphi 0, %s362
      %s364 = sphi 0, %s362
      %s365 = sphi 0, %s364
      %s379 = sphi 0, %s365
      %s383 = sphi 0, %s383
      %s385 = sphi 0, %s383
      %s386 = sphi 0, %s385
      %s400 = sphi 0, %s386
      %s404 = sphi 0, %s404
      %s406 = sphi 0, %s404
      %s407 = sphi 0, %s406
      %s421 = sphi 0, %s407
      %s425 = sphi 0, %s425
      %s427 = sphi 0, %s425
      %s428 = sphi 0, %s427
      %s442 = sphi 0, %s428
      %s446 = sphi 0, %s446
      %s448 = sphi 0, %s446
      %s449 = sphi 0, %s448
      %s463 = sphi 0, %s449
      %s467 = sphi 0, %s467
      %s469 = sphi 0, %s467
      %s470 = sphi 0, %s469
      %s484 = sphi 0, %s470
      %s488 = sphi 0, %s488
      %s490 = sphi 0, %s488
      %s491 = sphi 0, %s490
      %s505 = sphi 0, %s491
      %s509 = sphi 0, %s509
      %s511 = sphi 0, %s509
      %s512 = sphi 0, %s511
      %s526 = sphi 0, %s512
      %s530 = sphi 0, %s530
      %s532 = sphi 0, %s530
      %s533 = sphi 0, %s532
      %s547 = sphi 0, %s533
      %s551 = sphi 0, %s551
      %s553 = sphi 0, %s551
      %s554 = sphi 0, %s553
      %s568 = sphi 0, %s554
      %s572 = sphi 0, %s572
      %s574 = sphi 0, %s572
      %s575 = sphi 0, %s574
      %s589 = sphi 0, %s575
      %s593 = sphi 0, %s593
      %s595 = sphi 0, %s593
      %s596 = sphi 0, %s595
      %s610 = sphi 0, %s596
      %s614 = sphi 0, %s614
      %s616 = sphi 0, %s614
      %s617 = sphi 0, %s616
      %s631 = sphi 0, %s617
      %s635 = sphi 0, %s635
      %s637 = sphi 0, %s635
      %s638 = sphi 0, %s637
      %s652 = sphi 0, %s638
      %s656 = sphi 0, %s656
      %s658 = sphi 0, %s656
      %s659 = sphi 0, %s658
      %s673 = sphi 0, %s659
      %s677 = sphi 0, %s677
      %s679 = sphi 0, %s677
      %s680 = sphi 0, %s679
      %s694 = sphi 0, %s680
      %s698 = sphi 0, %s698
      %s700 = sphi 0, %s698
      %s701 = sphi 0, %s700
      %s715 = sphi 0, %s701
      %s719 = sphi 0, %s719
      %s721 = sphi 0, %s719
      %s722 = sphi 0, %s721
      %s736 = sphi 0, %s722
      %s740 = sphi 0, %s740
      %s742 = sphi 0, %s740
      %s743 = sphi 0, %s742
      %s757 = sphi 0, %s743
      %s761 = sphi 0, %s761
      %s763 = sphi 0, %s761
      %s764 = sphi 0, %s763
      %s778 = sphi 0, %s764
      %s782 = sphi 0, %s782
      %s784 = sphi 0, %s782
      %s785 = sphi 0, %s784
      %s799 = sphi 0, %s785
      %s803 = sphi 0, %s803
      %s805 = sphi 0, %s803
      %s806 = sphi 0, %s805
      %s820 = sphi 0, %s806
      %s824 = sphi 0, %s824
      %s826 = sphi 0, %s824
      %s827 = sphi 0, %s826
      %s841 = sphi 0, %s827
      %s845 = sphi 0, %s845
      %s847 = sphi 0, %s845
      %s848 = sphi 0, %s847
      %s862 = sphi 0, %s848
      %s866 = sphi 0, %s866
      %s868 = sphi 0, %s866
      %s869 = sphi 0, %s868
      %s883 = sphi 0, %s869
      %s887 = sphi 0, %s887
      %s889 = sphi 0, %s887
      %s890 = sphi 0, %s889
      %s904 = sphi 0, %s890
      %s908 = sphi 0, %s908
      %s910 = sphi 0, %s908
      %s911 = sphi 0, %s910
      %s925 = sphi 0, %s911
      %s929 = sphi 0, %s929
      %s931 = sphi 0, %s929
      %s932 = sphi 0, %s931
      %s946 = sphi 0, %s932
      %s950 = sphi 0, %s950
      %s952 = sphi 0, %s950
      %s953 = sphi 0, %s952
      %s967 = sphi 0, %s953
      %s971 = sphi 0, %s971
      %s973 = sphi 0, %s971
      %s974 = sphi 0, %s973
      %s988 = sphi 0, %s974
      %s992 = sphi 0, %s992
      %s994 = sphi 0, %s992
      %s995 = sphi 0, %s994
      %s1009 = sphi 0, %s995
      %s1013 = sphi 0, %s1013
      %s1015 = sphi 0, %s1013
      %s1016 = sphi 0, %s1015
      %s1030 = sphi 0, %s1016
      %s1034 = sphi 0, %s1034
      %s1036 = sphi 0, %s1034
      %s1037 = sphi 0, %s1036
      %s1051 = sphi 0, %s1037
      %s1055 = sphi 0, %s1055
      %s1057 = sphi 0, %s1055
      %s1058 = sphi 0, %s1057
      %s1072 = sphi 0, %s1058
      %s1076 = sphi 0, %s1076
      %s1078 = sphi 0, %s1076
      %s1079 = sphi 0, %s1078
      %s1093 = sphi 0, %s1079
      %s1097 = sphi 0, %s1097
      %s1099 = sphi 0, %s1097
      %s1100 = sphi 0, %s1099
      %s1114 = sphi 0, %s1100
      %s1118 = sphi 0, %s1118
      %s1120 = sphi 0, %s1118
      %s1121 = sphi 0, %s1120
      %s1135 = sphi 0, %s1121
      %s1139 = sphi 0, %s1139
      %s1141 = sphi 0, %s1139
      %s1142 = sphi 0, %s1141
      %s1156 = sphi 0, %s1142
      %s1160 = sphi 0, %s1160
      %s1162 = sphi 0, %s1160
      %s1163 = sphi 0, %s1162
      %s1177 = sphi 0, %s1163
      %s1181 = sphi 0, %s1181
      %s1183 = sphi 0, %s1181
      %s1184 = sphi 0, %s1183
      %s1198 = sphi 0, %s1184
      %s1202 = sphi 0, %s1202
      %s1204 = sphi 0, %s1202
      %s1205 = sphi 0, %s1204
      %s1219 = sphi 0, %s1205
      %s1223 = sphi 0, %s1223
      %s1225 = sphi 0, %s1223
      %s1226 = sphi 0, %s1225
      %s1240 = sphi 0, %s1226
      %s1244 = sphi 0, %s1244
      %s1246 = sphi 0, %s1244
      %s1247 = sphi 0, %s1246
      %s1261 = sphi 0, %s1247
      %s1265 = sphi 0, %s1265
      %s1267 = sphi 0, %s1265
      %s1268 = sphi 0, %s1267
      %s1282 = sphi 0, %s1268
      %s1286 = sphi 0, %s1286
      %s1288 = sphi 0, %s1286
      %s1289 = sphi 0, %s1288
      %s1303 = sphi 0, %s1289
      %s1307 = sphi 0, %s1307
      %s1309 = sphi 0, %s1307
      %s1310 = sphi 0, %s1309
      %s1324 = sphi 0, %s1310
      %s1328 = sphi 0, %s1328
      %s1330 = sphi 0, %s1328
      %s1331 = sphi 0, %s1330
      %s1345 = sphi 0, %s1331
      %s1349 = sphi 0, %s1349
      %s1351 = sphi 0, %s1349
      %s1352 = sphi 0, %s1351
      %s1366 = sphi 0, %s1352
      %s1370 = sphi 0, %s1370
      %s1372 = sphi 0, %s1370
      %s1373 = sphi 0, %s1372
      %s1387 = sphi 0, %s1373
      %s1391 = sphi 0, %s1391
      %s1393 = sphi 0, %s1391
      %s1394 = sphi 0, %s1393
      %s1408 = sphi 0, %s1394
      %s1412 = sphi 0, %s1412
      %s1414 = sphi 0, %s1412
      %s1415 = sphi 0, %s1414
      %s1429 = sphi 0, %s1415
      %s1433 = sphi 0, %s1433
      %s1435 = sphi 0, %s1433
      %s1436 = sphi 0, %s1435
      %s1450 = sphi 0, %s1436
      %s1454 = sphi 0, %s1454
      %s1456 = sphi 0, %s1454
      %s1457 = sphi 0, %s1456
      %s1471 = sphi 0, %s1457
      %s1475 = sphi 0, %s1475
      %s1477 = sphi 0, %s1475
      %s1478 = sphi 0, %s1477
      %s1492 = sphi 0, %s1478
      %s1496 = sphi 0, %s1496
      %s1498 = sphi 0, %s1496
      %s1499 = sphi 0, %s1498
      %s1513 = sphi 0, %s1499
      %s1517 = sphi 0, %s1517
      %s1519 = sphi 0, %s1517
      %s1520 = sphi 0, %s1519
      %s1534 = sphi 0, %s1520
      %s1538 = sphi 0, %s1538
      %s1540 = sphi 0, %s1538
      %s1541 = sphi 0, %s1540
      %s1555 = sphi 0, %s1541
      %s1559 = sphi 0, %s1559
      %s1561 = sphi 0, %s1559
      %s1562 = sphi 0, %s1561
      %s1576 = sphi 0, %s1562
      %s1580 = sphi 0, %s1580
      %s1582 = sphi 0, %s1580
      %s1583 = sphi 0, %s1582
      %s1597 = sphi 0, %s1583
      %s1603 = sphi 0, %s1605
      %s1606 = sphi 0, %s1603
      %s1607 = sphi 0, %s1606
      %s1623 = sphi 0, %s1607
    $region4: #{tpu_custom_call.1} parent=1 // loop_header_branch
      %174 = sbr.rel (%p172) target = $region8
    $region5: #{tpu_custom_call.1} parent=1 // loop_body
      %s176 = ssub.s32 %s171, 1
      %s177 = ssub.s32 %s171, 2
      %s178 = sadd.s32 %s171, 1
      %s179 = ssub.s32 %s171, %s178
      %p180 = scmp.eq.s32.totalorder %s179, 0
      %s182 = sadd.s32 %s181, 1
      %s183 = scalar_select %p180, %s181, %s182
      %p186 = pneg %p180
      %p187 = scmp.eq.s32.totalorder %s171, 1
      %p188 = por %p186, %p187
      %p189 = scmp.ne.s32.totalorder %s181, %s184
      %p190 = scmp.eq.s32.totalorder %s171, 0
      %p191 = por %p189, %p190
      %p192 = scmp.ne.s32.totalorder %s181, %s184
      %p193 = scmp.eq.s32.totalorder %s176, 1
      %p194 = por %p192, %p193
      %p195 = scmp.ne.s32.totalorder %s184, %s185
      %p196 = scmp.eq.s32.totalorder %s176, 0
      %p197 = por %p195, %p196
      %p198 = scmp.ne.s32.totalorder %s184, %s185
      %p199 = scmp.eq.s32.totalorder %s177, 1
      %p200 = por %p198, %p199
      %p202 = scmp.ne.s32.totalorder %s185, %s201
      %p203 = scmp.eq.s32.totalorder %s177, 0
      %p204 = por %p202, %p203
      %s205 = ssub.s32 %s171, %s178
      %p206 = scmp.eq.s32.totalorder %s205, 0
      %s208 = sadd.s32 %s207, 1
      %s209 = scalar_select %p206, %s207, %s208
      %p212 = pneg %p206
      %p213 = scmp.eq.s32.totalorder %s171, 1
      %p214 = por %p212, %p213
      %p215 = scmp.ne.s32.totalorder %s207, %s210
      %p216 = scmp.eq.s32.totalorder %s171, 0
      %p217 = por %p215, %p216
      %p218 = scmp.ne.s32.totalorder %s207, %s210
      %p219 = scmp.eq.s32.totalorder %s176, 1
      %p220 = por %p218, %p219
      %p221 = scmp.ne.s32.totalorder %s210, %s211
      %p222 = scmp.eq.s32.totalorder %s176, 0
      %p223 = por %p221, %p222
      %p224 = scmp.ne.s32.totalorder %s210, %s211
      %p225 = scmp.eq.s32.totalorder %s177, 1
      %p226 = por %p224, %p225
      %p228 = scmp.ne.s32.totalorder %s211, %s227
      %p229 = scmp.eq.s32.totalorder %s177, 0
      %p230 = por %p228, %p229
      %s231 = ssub.s32 %s171, %s178
      %p232 = scmp.eq.s32.totalorder %s231, 0
      %s234 = sadd.s32 %s233, 1
      %s235 = scalar_select %p232, %s233, %s234
      %p238 = pneg %p232
      %p239 = scmp.eq.s32.totalorder %s171, 1
      %p240 = por %p238, %p239
      %p241 = scmp.ne.s32.totalorder %s233, %s236
      %p242 = scmp.eq.s32.totalorder %s171, 0
      %p243 = por %p241, %p242
      %p244 = scmp.ne.s32.totalorder %s233, %s236
      %p245 = scmp.eq.s32.totalorder %s176, 1
      %p246 = por %p244, %p245
      %p247 = scmp.ne.s32.totalorder %s236, %s237
      %p248 = scmp.eq.s32.totalorder %s176, 0
      %p249 = por %p247, %p248
      %p250 = scmp.ne.s32.totalorder %s236, %s237
      %p251 = scmp.eq.s32.totalorder %s177, 1
      %p252 = por %p250, %p251
      %p254 = scmp.ne.s32.totalorder %s237, %s253
      %p255 = scmp.eq.s32.totalorder %s177, 0
      %p256 = por %p254, %p255
      %s258 = sadd.s32 %s257, 1
      %p261 = scmp.eq.s32.totalorder %s171, 1
      %p262 = scmp.ne.s32.totalorder %s257, %s259
      %p263 = scmp.eq.s32.totalorder %s171, 0
      %p264 = por %p262, %p263
      %p265 = scmp.ne.s32.totalorder %s257, %s259
      %p266 = scmp.eq.s32.totalorder %s176, 1
      %p267 = por %p265, %p266
      %p268 = scmp.ne.s32.totalorder %s259, %s260
      %p269 = scmp.eq.s32.totalorder %s176, 0
      %p270 = por %p268, %p269
      %p271 = scmp.ne.s32.totalorder %s259, %s260
      %p272 = scmp.eq.s32.totalorder %s177, 1
      %p273 = por %p271, %p272
      %p275 = scmp.ne.s32.totalorder %s260, %s274
      %p276 = scmp.eq.s32.totalorder %s177, 0
      %p277 = por %p275, %p276
      %s279 = sadd.s32 %s278, 1
      %p282 = scmp.eq.s32.totalorder %s171, 1
      %p283 = scmp.ne.s32.totalorder %s278, %s280
      %p284 = scmp.eq.s32.totalorder %s171, 0
      %p285 = por %p283, %p284
      %p286 = scmp.ne.s32.totalorder %s278, %s280
      %p287 = scmp.eq.s32.totalorder %s176, 1
      %p288 = por %p286, %p287
      %p289 = scmp.ne.s32.totalorder %s280, %s281
      %p290 = scmp.eq.s32.totalorder %s176, 0
      %p291 = por %p289, %p290
      %p292 = scmp.ne.s32.totalorder %s280, %s281
      %p293 = scmp.eq.s32.totalorder %s177, 1
      %p294 = por %p292, %p293
      %p296 = scmp.ne.s32.totalorder %s281, %s295
      %p297 = scmp.eq.s32.totalorder %s177, 0
      %p298 = por %p296, %p297
      %s300 = sadd.s32 %s299, 1
      %p303 = scmp.eq.s32.totalorder %s171, 1
      %p304 = scmp.ne.s32.totalorder %s299, %s301
      %p305 = scmp.eq.s32.totalorder %s171, 0
      %p306 = por %p304, %p305
      %p307 = scmp.ne.s32.totalorder %s299, %s301
      %p308 = scmp.eq.s32.totalorder %s176, 1
      %p309 = por %p307, %p308
      %p310 = scmp.ne.s32.totalorder %s301, %s302
      %p311 = scmp.eq.s32.totalorder %s176, 0
      %p312 = por %p310, %p311
      %p313 = scmp.ne.s32.totalorder %s301, %s302
      %p314 = scmp.eq.s32.totalorder %s177, 1
      %p315 = por %p313, %p314
      %p317 = scmp.ne.s32.totalorder %s302, %s316
      %p318 = scmp.eq.s32.totalorder %s177, 0
      %p319 = por %p317, %p318
      %s321 = sadd.s32 %s320, 1
      %p324 = scmp.eq.s32.totalorder %s171, 1
      %p325 = scmp.ne.s32.totalorder %s320, %s322
      %p326 = scmp.eq.s32.totalorder %s171, 0
      %p327 = por %p325, %p326
      %p328 = scmp.ne.s32.totalorder %s320, %s322
      %p329 = scmp.eq.s32.totalorder %s176, 1
      %p330 = por %p328, %p329
      %p331 = scmp.ne.s32.totalorder %s322, %s323
      %p332 = scmp.eq.s32.totalorder %s176, 0
      %p333 = por %p331, %p332
      %p334 = scmp.ne.s32.totalorder %s322, %s323
      %p335 = scmp.eq.s32.totalorder %s177, 1
      %p336 = por %p334, %p335
      %p338 = scmp.ne.s32.totalorder %s323, %s337
      %p339 = scmp.eq.s32.totalorder %s177, 0
      %p340 = por %p338, %p339
      %s342 = sadd.s32 %s341, 1
      %p345 = scmp.eq.s32.totalorder %s171, 1
      %p346 = scmp.ne.s32.totalorder %s341, %s343
      %p347 = scmp.eq.s32.totalorder %s171, 0
      %p348 = por %p346, %p347
      %p349 = scmp.ne.s32.totalorder %s341, %s343
      %p350 = scmp.eq.s32.totalorder %s176, 1
      %p351 = por %p349, %p350
      %p352 = scmp.ne.s32.totalorder %s343, %s344
      %p353 = scmp.eq.s32.totalorder %s176, 0
      %p354 = por %p352, %p353
      %p355 = scmp.ne.s32.totalorder %s343, %s344
      %p356 = scmp.eq.s32.totalorder %s177, 1
      %p357 = por %p355, %p356
      %p359 = scmp.ne.s32.totalorder %s344, %s358
      %p360 = scmp.eq.s32.totalorder %s177, 0
      %p361 = por %p359, %p360
      %s363 = sadd.s32 %s362, 1
      %p366 = scmp.eq.s32.totalorder %s171, 1
      %p367 = scmp.ne.s32.totalorder %s362, %s364
      %p368 = scmp.eq.s32.totalorder %s171, 0
      %p369 = por %p367, %p368
      %p370 = scmp.ne.s32.totalorder %s362, %s364
      %p371 = scmp.eq.s32.totalorder %s176, 1
      %p372 = por %p370, %p371
      %p373 = scmp.ne.s32.totalorder %s364, %s365
      %p374 = scmp.eq.s32.totalorder %s176, 0
      %p375 = por %p373, %p374
      %p376 = scmp.ne.s32.totalorder %s364, %s365
      %p377 = scmp.eq.s32.totalorder %s177, 1
      %p378 = por %p376, %p377
      %p380 = scmp.ne.s32.totalorder %s365, %s379
      %p381 = scmp.eq.s32.totalorder %s177, 0
      %p382 = por %p380, %p381
      %s384 = sadd.s32 %s383, 1
      %p387 = scmp.eq.s32.totalorder %s171, 1
      %p388 = scmp.ne.s32.totalorder %s383, %s385
      %p389 = scmp.eq.s32.totalorder %s171, 0
      %p390 = por %p388, %p389
      %p391 = scmp.ne.s32.totalorder %s383, %s385
      %p392 = scmp.eq.s32.totalorder %s176, 1
      %p393 = por %p391, %p392
      %p394 = scmp.ne.s32.totalorder %s385, %s386
      %p395 = scmp.eq.s32.totalorder %s176, 0
      %p396 = por %p394, %p395
      %p397 = scmp.ne.s32.totalorder %s385, %s386
      %p398 = scmp.eq.s32.totalorder %s177, 1
      %p399 = por %p397, %p398
      %p401 = scmp.ne.s32.totalorder %s386, %s400
      %p402 = scmp.eq.s32.totalorder %s177, 0
      %p403 = por %p401, %p402
      %s405 = sadd.s32 %s404, 1
      %p408 = scmp.eq.s32.totalorder %s171, 1
      %p409 = scmp.ne.s32.totalorder %s404, %s406
      %p410 = scmp.eq.s32.totalorder %s171, 0
      %p411 = por %p409, %p410
      %p412 = scmp.ne.s32.totalorder %s404, %s406
      %p413 = scmp.eq.s32.totalorder %s176, 1
      %p414 = por %p412, %p413
      %p415 = scmp.ne.s32.totalorder %s406, %s407
      %p416 = scmp.eq.s32.totalorder %s176, 0
      %p417 = por %p415, %p416
      %p418 = scmp.ne.s32.totalorder %s406, %s407
      %p419 = scmp.eq.s32.totalorder %s177, 1
      %p420 = por %p418, %p419
      %p422 = scmp.ne.s32.totalorder %s407, %s421
      %p423 = scmp.eq.s32.totalorder %s177, 0
      %p424 = por %p422, %p423
      %s426 = sadd.s32 %s425, 1
      %p429 = scmp.eq.s32.totalorder %s171, 1
      %p430 = scmp.ne.s32.totalorder %s425, %s427
      %p431 = scmp.eq.s32.totalorder %s171, 0
      %p432 = por %p430, %p431
      %p433 = scmp.ne.s32.totalorder %s425, %s427
      %p434 = scmp.eq.s32.totalorder %s176, 1
      %p435 = por %p433, %p434
      %p436 = scmp.ne.s32.totalorder %s427, %s428
      %p437 = scmp.eq.s32.totalorder %s176, 0
      %p438 = por %p436, %p437
      %p439 = scmp.ne.s32.totalorder %s427, %s428
      %p440 = scmp.eq.s32.totalorder %s177, 1
      %p441 = por %p439, %p440
      %p443 = scmp.ne.s32.totalorder %s428, %s442
      %p444 = scmp.eq.s32.totalorder %s177, 0
      %p445 = por %p443, %p444
      %s447 = sadd.s32 %s446, 1
      %p450 = scmp.eq.s32.totalorder %s171, 1
      %p451 = scmp.ne.s32.totalorder %s446, %s448
      %p452 = scmp.eq.s32.totalorder %s171, 0
      %p453 = por %p451, %p452
      %p454 = scmp.ne.s32.totalorder %s446, %s448
      %p455 = scmp.eq.s32.totalorder %s176, 1
      %p456 = por %p454, %p455
      %p457 = scmp.ne.s32.totalorder %s448, %s449
      %p458 = scmp.eq.s32.totalorder %s176, 0
      %p459 = por %p457, %p458
      %p460 = scmp.ne.s32.totalorder %s448, %s449
      %p461 = scmp.eq.s32.totalorder %s177, 1
      %p462 = por %p460, %p461
      %p464 = scmp.ne.s32.totalorder %s449, %s463
      %p465 = scmp.eq.s32.totalorder %s177, 0
      %p466 = por %p464, %p465
      %s468 = sadd.s32 %s467, 1
      %p471 = scmp.eq.s32.totalorder %s171, 1
      %p472 = scmp.ne.s32.totalorder %s467, %s469
      %p473 = scmp.eq.s32.totalorder %s171, 0
      %p474 = por %p472, %p473
      %p475 = scmp.ne.s32.totalorder %s467, %s469
      %p476 = scmp.eq.s32.totalorder %s176, 1
      %p477 = por %p475, %p476
      %p478 = scmp.ne.s32.totalorder %s469, %s470
      %p479 = scmp.eq.s32.totalorder %s176, 0
      %p480 = por %p478, %p479
      %p481 = scmp.ne.s32.totalorder %s469, %s470
      %p482 = scmp.eq.s32.totalorder %s177, 1
      %p483 = por %p481, %p482
      %p485 = scmp.ne.s32.totalorder %s470, %s484
      %p486 = scmp.eq.s32.totalorder %s177, 0
      %p487 = por %p485, %p486
      %s489 = sadd.s32 %s488, 1
      %p492 = scmp.eq.s32.totalorder %s171, 1
      %p493 = scmp.ne.s32.totalorder %s488, %s490
      %p494 = scmp.eq.s32.totalorder %s171, 0
      %p495 = por %p493, %p494
      %p496 = scmp.ne.s32.totalorder %s488, %s490
      %p497 = scmp.eq.s32.totalorder %s176, 1
      %p498 = por %p496, %p497
      %p499 = scmp.ne.s32.totalorder %s490, %s491
      %p500 = scmp.eq.s32.totalorder %s176, 0
      %p501 = por %p499, %p500
      %p502 = scmp.ne.s32.totalorder %s490, %s491
      %p503 = scmp.eq.s32.totalorder %s177, 1
      %p504 = por %p502, %p503
      %p506 = scmp.ne.s32.totalorder %s491, %s505
      %p507 = scmp.eq.s32.totalorder %s177, 0
      %p508 = por %p506, %p507
      %s510 = sadd.s32 %s509, 1
      %p513 = scmp.eq.s32.totalorder %s171, 1
      %p514 = scmp.ne.s32.totalorder %s509, %s511
      %p515 = scmp.eq.s32.totalorder %s171, 0
      %p516 = por %p514, %p515
      %p517 = scmp.ne.s32.totalorder %s509, %s511
      %p518 = scmp.eq.s32.totalorder %s176, 1
      %p519 = por %p517, %p518
      %p520 = scmp.ne.s32.totalorder %s511, %s512
      %p521 = scmp.eq.s32.totalorder %s176, 0
      %p522 = por %p520, %p521
      %p523 = scmp.ne.s32.totalorder %s511, %s512
      %p524 = scmp.eq.s32.totalorder %s177, 1
      %p525 = por %p523, %p524
      %p527 = scmp.ne.s32.totalorder %s512, %s526
      %p528 = scmp.eq.s32.totalorder %s177, 0
      %p529 = por %p527, %p528
      %s531 = sadd.s32 %s530, 1
      %p534 = scmp.eq.s32.totalorder %s171, 1
      %p535 = scmp.ne.s32.totalorder %s530, %s532
      %p536 = scmp.eq.s32.totalorder %s171, 0
      %p537 = por %p535, %p536
      %p538 = scmp.ne.s32.totalorder %s530, %s532
      %p539 = scmp.eq.s32.totalorder %s176, 1
      %p540 = por %p538, %p539
      %p541 = scmp.ne.s32.totalorder %s532, %s533
      %p542 = scmp.eq.s32.totalorder %s176, 0
      %p543 = por %p541, %p542
      %p544 = scmp.ne.s32.totalorder %s532, %s533
      %p545 = scmp.eq.s32.totalorder %s177, 1
      %p546 = por %p544, %p545
      %p548 = scmp.ne.s32.totalorder %s533, %s547
      %p549 = scmp.eq.s32.totalorder %s177, 0
      %p550 = por %p548, %p549
      %s552 = sadd.s32 %s551, 1
      %p555 = scmp.eq.s32.totalorder %s171, 1
      %p556 = scmp.ne.s32.totalorder %s551, %s553
      %p557 = scmp.eq.s32.totalorder %s171, 0
      %p558 = por %p556, %p557
      %p559 = scmp.ne.s32.totalorder %s551, %s553
      %p560 = scmp.eq.s32.totalorder %s176, 1
      %p561 = por %p559, %p560
      %p562 = scmp.ne.s32.totalorder %s553, %s554
      %p563 = scmp.eq.s32.totalorder %s176, 0
      %p564 = por %p562, %p563
      %p565 = scmp.ne.s32.totalorder %s553, %s554
      %p566 = scmp.eq.s32.totalorder %s177, 1
      %p567 = por %p565, %p566
      %p569 = scmp.ne.s32.totalorder %s554, %s568
      %p570 = scmp.eq.s32.totalorder %s177, 0
      %p571 = por %p569, %p570
      %s573 = sadd.s32 %s572, 1
      %p576 = scmp.eq.s32.totalorder %s171, 1
      %p577 = scmp.ne.s32.totalorder %s572, %s574
      %p578 = scmp.eq.s32.totalorder %s171, 0
      %p579 = por %p577, %p578
      %p580 = scmp.ne.s32.totalorder %s572, %s574
      %p581 = scmp.eq.s32.totalorder %s176, 1
      %p582 = por %p580, %p581
      %p583 = scmp.ne.s32.totalorder %s574, %s575
      %p584 = scmp.eq.s32.totalorder %s176, 0
      %p585 = por %p583, %p584
      %p586 = scmp.ne.s32.totalorder %s574, %s575
      %p587 = scmp.eq.s32.totalorder %s177, 1
      %p588 = por %p586, %p587
      %p590 = scmp.ne.s32.totalorder %s575, %s589
      %p591 = scmp.eq.s32.totalorder %s177, 0
      %p592 = por %p590, %p591
      %s594 = sadd.s32 %s593, 1
      %p597 = scmp.eq.s32.totalorder %s171, 1
      %p598 = scmp.ne.s32.totalorder %s593, %s595
      %p599 = scmp.eq.s32.totalorder %s171, 0
      %p600 = por %p598, %p599
      %p601 = scmp.ne.s32.totalorder %s593, %s595
      %p602 = scmp.eq.s32.totalorder %s176, 1
      %p603 = por %p601, %p602
      %p604 = scmp.ne.s32.totalorder %s595, %s596
      %p605 = scmp.eq.s32.totalorder %s176, 0
      %p606 = por %p604, %p605
      %p607 = scmp.ne.s32.totalorder %s595, %s596
      %p608 = scmp.eq.s32.totalorder %s177, 1
      %p609 = por %p607, %p608
      %p611 = scmp.ne.s32.totalorder %s596, %s610
      %p612 = scmp.eq.s32.totalorder %s177, 0
      %p613 = por %p611, %p612
      %s615 = sadd.s32 %s614, 1
      %p618 = scmp.eq.s32.totalorder %s171, 1
      %p619 = scmp.ne.s32.totalorder %s614, %s616
      %p620 = scmp.eq.s32.totalorder %s171, 0
      %p621 = por %p619, %p620
      %p622 = scmp.ne.s32.totalorder %s614, %s616
      %p623 = scmp.eq.s32.totalorder %s176, 1
      %p624 = por %p622, %p623
      %p625 = scmp.ne.s32.totalorder %s616, %s617
      %p626 = scmp.eq.s32.totalorder %s176, 0
      %p627 = por %p625, %p626
      %p628 = scmp.ne.s32.totalorder %s616, %s617
      %p629 = scmp.eq.s32.totalorder %s177, 1
      %p630 = por %p628, %p629
      %p632 = scmp.ne.s32.totalorder %s617, %s631
      %p633 = scmp.eq.s32.totalorder %s177, 0
      %p634 = por %p632, %p633
      %s636 = sadd.s32 %s635, 1
      %p639 = scmp.eq.s32.totalorder %s171, 1
      %p640 = scmp.ne.s32.totalorder %s635, %s637
      %p641 = scmp.eq.s32.totalorder %s171, 0
      %p642 = por %p640, %p641
      %p643 = scmp.ne.s32.totalorder %s635, %s637
      %p644 = scmp.eq.s32.totalorder %s176, 1
      %p645 = por %p643, %p644
      %p646 = scmp.ne.s32.totalorder %s637, %s638
      %p647 = scmp.eq.s32.totalorder %s176, 0
      %p648 = por %p646, %p647
      %p649 = scmp.ne.s32.totalorder %s637, %s638
      %p650 = scmp.eq.s32.totalorder %s177, 1
      %p651 = por %p649, %p650
      %p653 = scmp.ne.s32.totalorder %s638, %s652
      %p654 = scmp.eq.s32.totalorder %s177, 0
      %p655 = por %p653, %p654
      %s657 = sadd.s32 %s656, 1
      %p660 = scmp.eq.s32.totalorder %s171, 1
      %p661 = scmp.ne.s32.totalorder %s656, %s658
      %p662 = scmp.eq.s32.totalorder %s171, 0
      %p663 = por %p661, %p662
      %p664 = scmp.ne.s32.totalorder %s656, %s658
      %p665 = scmp.eq.s32.totalorder %s176, 1
      %p666 = por %p664, %p665
      %p667 = scmp.ne.s32.totalorder %s658, %s659
      %p668 = scmp.eq.s32.totalorder %s176, 0
      %p669 = por %p667, %p668
      %p670 = scmp.ne.s32.totalorder %s658, %s659
      %p671 = scmp.eq.s32.totalorder %s177, 1
      %p672 = por %p670, %p671
      %p674 = scmp.ne.s32.totalorder %s659, %s673
      %p675 = scmp.eq.s32.totalorder %s177, 0
      %p676 = por %p674, %p675
      %s678 = sadd.s32 %s677, 1
      %p681 = scmp.eq.s32.totalorder %s171, 1
      %p682 = scmp.ne.s32.totalorder %s677, %s679
      %p683 = scmp.eq.s32.totalorder %s171, 0
      %p684 = por %p682, %p683
      %p685 = scmp.ne.s32.totalorder %s677, %s679
      %p686 = scmp.eq.s32.totalorder %s176, 1
      %p687 = por %p685, %p686
      %p688 = scmp.ne.s32.totalorder %s679, %s680
      %p689 = scmp.eq.s32.totalorder %s176, 0
      %p690 = por %p688, %p689
      %p691 = scmp.ne.s32.totalorder %s679, %s680
      %p692 = scmp.eq.s32.totalorder %s177, 1
      %p693 = por %p691, %p692
      %p695 = scmp.ne.s32.totalorder %s680, %s694
      %p696 = scmp.eq.s32.totalorder %s177, 0
      %p697 = por %p695, %p696
      %s699 = sadd.s32 %s698, 1
      %p702 = scmp.eq.s32.totalorder %s171, 1
      %p703 = scmp.ne.s32.totalorder %s698, %s700
      %p704 = scmp.eq.s32.totalorder %s171, 0
      %p705 = por %p703, %p704
      %p706 = scmp.ne.s32.totalorder %s698, %s700
      %p707 = scmp.eq.s32.totalorder %s176, 1
      %p708 = por %p706, %p707
      %p709 = scmp.ne.s32.totalorder %s700, %s701
      %p710 = scmp.eq.s32.totalorder %s176, 0
      %p711 = por %p709, %p710
      %p712 = scmp.ne.s32.totalorder %s700, %s701
      %p713 = scmp.eq.s32.totalorder %s177, 1
      %p714 = por %p712, %p713
      %p716 = scmp.ne.s32.totalorder %s701, %s715
      %p717 = scmp.eq.s32.totalorder %s177, 0
      %p718 = por %p716, %p717
      %s720 = sadd.s32 %s719, 1
      %p723 = scmp.eq.s32.totalorder %s171, 1
      %p724 = scmp.ne.s32.totalorder %s719, %s721
      %p725 = scmp.eq.s32.totalorder %s171, 0
      %p726 = por %p724, %p725
      %p727 = scmp.ne.s32.totalorder %s719, %s721
      %p728 = scmp.eq.s32.totalorder %s176, 1
      %p729 = por %p727, %p728
      %p730 = scmp.ne.s32.totalorder %s721, %s722
      %p731 = scmp.eq.s32.totalorder %s176, 0
      %p732 = por %p730, %p731
      %p733 = scmp.ne.s32.totalorder %s721, %s722
      %p734 = scmp.eq.s32.totalorder %s177, 1
      %p735 = por %p733, %p734
      %p737 = scmp.ne.s32.totalorder %s722, %s736
      %p738 = scmp.eq.s32.totalorder %s177, 0
      %p739 = por %p737, %p738
      %s741 = sadd.s32 %s740, 1
      %p744 = scmp.eq.s32.totalorder %s171, 1
      %p745 = scmp.ne.s32.totalorder %s740, %s742
      %p746 = scmp.eq.s32.totalorder %s171, 0
      %p747 = por %p745, %p746
      %p748 = scmp.ne.s32.totalorder %s740, %s742
      %p749 = scmp.eq.s32.totalorder %s176, 1
      %p750 = por %p748, %p749
      %p751 = scmp.ne.s32.totalorder %s742, %s743
      %p752 = scmp.eq.s32.totalorder %s176, 0
      %p753 = por %p751, %p752
      %p754 = scmp.ne.s32.totalorder %s742, %s743
      %p755 = scmp.eq.s32.totalorder %s177, 1
      %p756 = por %p754, %p755
      %p758 = scmp.ne.s32.totalorder %s743, %s757
      %p759 = scmp.eq.s32.totalorder %s177, 0
      %p760 = por %p758, %p759
      %s762 = sadd.s32 %s761, 1
      %p765 = scmp.eq.s32.totalorder %s171, 1
      %p766 = scmp.ne.s32.totalorder %s761, %s763
      %p767 = scmp.eq.s32.totalorder %s171, 0
      %p768 = por %p766, %p767
      %p769 = scmp.ne.s32.totalorder %s761, %s763
      %p770 = scmp.eq.s32.totalorder %s176, 1
      %p771 = por %p769, %p770
      %p772 = scmp.ne.s32.totalorder %s763, %s764
      %p773 = scmp.eq.s32.totalorder %s176, 0
      %p774 = por %p772, %p773
      %p775 = scmp.ne.s32.totalorder %s763, %s764
      %p776 = scmp.eq.s32.totalorder %s177, 1
      %p777 = por %p775, %p776
      %p779 = scmp.ne.s32.totalorder %s764, %s778
      %p780 = scmp.eq.s32.totalorder %s177, 0
      %p781 = por %p779, %p780
      %s783 = sadd.s32 %s782, 1
      %p786 = scmp.eq.s32.totalorder %s171, 1
      %p787 = scmp.ne.s32.totalorder %s782, %s784
      %p788 = scmp.eq.s32.totalorder %s171, 0
      %p789 = por %p787, %p788
      %p790 = scmp.ne.s32.totalorder %s782, %s784
      %p791 = scmp.eq.s32.totalorder %s176, 1
      %p792 = por %p790, %p791
      %p793 = scmp.ne.s32.totalorder %s784, %s785
      %p794 = scmp.eq.s32.totalorder %s176, 0
      %p795 = por %p793, %p794
      %p796 = scmp.ne.s32.totalorder %s784, %s785
      %p797 = scmp.eq.s32.totalorder %s177, 1
      %p798 = por %p796, %p797
      %p800 = scmp.ne.s32.totalorder %s785, %s799
      %p801 = scmp.eq.s32.totalorder %s177, 0
      %p802 = por %p800, %p801
      %s804 = sadd.s32 %s803, 1
      %p807 = scmp.eq.s32.totalorder %s171, 1
      %p808 = scmp.ne.s32.totalorder %s803, %s805
      %p809 = scmp.eq.s32.totalorder %s171, 0
      %p810 = por %p808, %p809
      %p811 = scmp.ne.s32.totalorder %s803, %s805
      %p812 = scmp.eq.s32.totalorder %s176, 1
      %p813 = por %p811, %p812
      %p814 = scmp.ne.s32.totalorder %s805, %s806
      %p815 = scmp.eq.s32.totalorder %s176, 0
      %p816 = por %p814, %p815
      %p817 = scmp.ne.s32.totalorder %s805, %s806
      %p818 = scmp.eq.s32.totalorder %s177, 1
      %p819 = por %p817, %p818
      %p821 = scmp.ne.s32.totalorder %s806, %s820
      %p822 = scmp.eq.s32.totalorder %s177, 0
      %p823 = por %p821, %p822
      %s825 = sadd.s32 %s824, 1
      %p828 = scmp.eq.s32.totalorder %s171, 1
      %p829 = scmp.ne.s32.totalorder %s824, %s826
      %p830 = scmp.eq.s32.totalorder %s171, 0
      %p831 = por %p829, %p830
      %p832 = scmp.ne.s32.totalorder %s824, %s826
      %p833 = scmp.eq.s32.totalorder %s176, 1
      %p834 = por %p832, %p833
      %p835 = scmp.ne.s32.totalorder %s826, %s827
      %p836 = scmp.eq.s32.totalorder %s176, 0
      %p837 = por %p835, %p836
      %p838 = scmp.ne.s32.totalorder %s826, %s827
      %p839 = scmp.eq.s32.totalorder %s177, 1
      %p840 = por %p838, %p839
      %p842 = scmp.ne.s32.totalorder %s827, %s841
      %p843 = scmp.eq.s32.totalorder %s177, 0
      %p844 = por %p842, %p843
      %s846 = sadd.s32 %s845, 1
      %p849 = scmp.eq.s32.totalorder %s171, 1
      %p850 = scmp.ne.s32.totalorder %s845, %s847
      %p851 = scmp.eq.s32.totalorder %s171, 0
      %p852 = por %p850, %p851
      %p853 = scmp.ne.s32.totalorder %s845, %s847
      %p854 = scmp.eq.s32.totalorder %s176, 1
      %p855 = por %p853, %p854
      %p856 = scmp.ne.s32.totalorder %s847, %s848
      %p857 = scmp.eq.s32.totalorder %s176, 0
      %p858 = por %p856, %p857
      %p859 = scmp.ne.s32.totalorder %s847, %s848
      %p860 = scmp.eq.s32.totalorder %s177, 1
      %p861 = por %p859, %p860
      %p863 = scmp.ne.s32.totalorder %s848, %s862
      %p864 = scmp.eq.s32.totalorder %s177, 0
      %p865 = por %p863, %p864
      %s867 = sadd.s32 %s866, 1
      %p870 = scmp.eq.s32.totalorder %s171, 1
      %p871 = scmp.ne.s32.totalorder %s866, %s868
      %p872 = scmp.eq.s32.totalorder %s171, 0
      %p873 = por %p871, %p872
      %p874 = scmp.ne.s32.totalorder %s866, %s868
      %p875 = scmp.eq.s32.totalorder %s176, 1
      %p876 = por %p874, %p875
      %p877 = scmp.ne.s32.totalorder %s868, %s869
      %p878 = scmp.eq.s32.totalorder %s176, 0
      %p879 = por %p877, %p878
      %p880 = scmp.ne.s32.totalorder %s868, %s869
      %p881 = scmp.eq.s32.totalorder %s177, 1
      %p882 = por %p880, %p881
      %p884 = scmp.ne.s32.totalorder %s869, %s883
      %p885 = scmp.eq.s32.totalorder %s177, 0
      %p886 = por %p884, %p885
      %s888 = sadd.s32 %s887, 1
      %p891 = scmp.eq.s32.totalorder %s171, 1
      %p892 = scmp.ne.s32.totalorder %s887, %s889
      %p893 = scmp.eq.s32.totalorder %s171, 0
      %p894 = por %p892, %p893
      %p895 = scmp.ne.s32.totalorder %s887, %s889
      %p896 = scmp.eq.s32.totalorder %s176, 1
      %p897 = por %p895, %p896
      %p898 = scmp.ne.s32.totalorder %s889, %s890
      %p899 = scmp.eq.s32.totalorder %s176, 0
      %p900 = por %p898, %p899
      %p901 = scmp.ne.s32.totalorder %s889, %s890
      %p902 = scmp.eq.s32.totalorder %s177, 1
      %p903 = por %p901, %p902
      %p905 = scmp.ne.s32.totalorder %s890, %s904
      %p906 = scmp.eq.s32.totalorder %s177, 0
      %p907 = por %p905, %p906
      %s909 = sadd.s32 %s908, 1
      %p912 = scmp.eq.s32.totalorder %s171, 1
      %p913 = scmp.ne.s32.totalorder %s908, %s910
      %p914 = scmp.eq.s32.totalorder %s171, 0
      %p915 = por %p913, %p914
      %p916 = scmp.ne.s32.totalorder %s908, %s910
      %p917 = scmp.eq.s32.totalorder %s176, 1
      %p918 = por %p916, %p917
      %p919 = scmp.ne.s32.totalorder %s910, %s911
      %p920 = scmp.eq.s32.totalorder %s176, 0
      %p921 = por %p919, %p920
      %p922 = scmp.ne.s32.totalorder %s910, %s911
      %p923 = scmp.eq.s32.totalorder %s177, 1
      %p924 = por %p922, %p923
      %p926 = scmp.ne.s32.totalorder %s911, %s925
      %p927 = scmp.eq.s32.totalorder %s177, 0
      %p928 = por %p926, %p927
      %s930 = sadd.s32 %s929, 1
      %p933 = scmp.eq.s32.totalorder %s171, 1
      %p934 = scmp.ne.s32.totalorder %s929, %s931
      %p935 = scmp.eq.s32.totalorder %s171, 0
      %p936 = por %p934, %p935
      %p937 = scmp.ne.s32.totalorder %s929, %s931
      %p938 = scmp.eq.s32.totalorder %s176, 1
      %p939 = por %p937, %p938
      %p940 = scmp.ne.s32.totalorder %s931, %s932
      %p941 = scmp.eq.s32.totalorder %s176, 0
      %p942 = por %p940, %p941
      %p943 = scmp.ne.s32.totalorder %s931, %s932
      %p944 = scmp.eq.s32.totalorder %s177, 1
      %p945 = por %p943, %p944
      %p947 = scmp.ne.s32.totalorder %s932, %s946
      %p948 = scmp.eq.s32.totalorder %s177, 0
      %p949 = por %p947, %p948
      %s951 = sadd.s32 %s950, 1
      %p954 = scmp.eq.s32.totalorder %s171, 1
      %p955 = scmp.ne.s32.totalorder %s950, %s952
      %p956 = scmp.eq.s32.totalorder %s171, 0
      %p957 = por %p955, %p956
      %p958 = scmp.ne.s32.totalorder %s950, %s952
      %p959 = scmp.eq.s32.totalorder %s176, 1
      %p960 = por %p958, %p959
      %p961 = scmp.ne.s32.totalorder %s952, %s953
      %p962 = scmp.eq.s32.totalorder %s176, 0
      %p963 = por %p961, %p962
      %p964 = scmp.ne.s32.totalorder %s952, %s953
      %p965 = scmp.eq.s32.totalorder %s177, 1
      %p966 = por %p964, %p965
      %p968 = scmp.ne.s32.totalorder %s953, %s967
      %p969 = scmp.eq.s32.totalorder %s177, 0
      %p970 = por %p968, %p969
      %s972 = sadd.s32 %s971, 1
      %p975 = scmp.eq.s32.totalorder %s171, 1
      %p976 = scmp.ne.s32.totalorder %s971, %s973
      %p977 = scmp.eq.s32.totalorder %s171, 0
      %p978 = por %p976, %p977
      %p979 = scmp.ne.s32.totalorder %s971, %s973
      %p980 = scmp.eq.s32.totalorder %s176, 1
      %p981 = por %p979, %p980
      %p982 = scmp.ne.s32.totalorder %s973, %s974
      %p983 = scmp.eq.s32.totalorder %s176, 0
      %p984 = por %p982, %p983
      %p985 = scmp.ne.s32.totalorder %s973, %s974
      %p986 = scmp.eq.s32.totalorder %s177, 1
      %p987 = por %p985, %p986
      %p989 = scmp.ne.s32.totalorder %s974, %s988
      %p990 = scmp.eq.s32.totalorder %s177, 0
      %p991 = por %p989, %p990
      %s993 = sadd.s32 %s992, 1
      %p996 = scmp.eq.s32.totalorder %s171, 1
      %p997 = scmp.ne.s32.totalorder %s992, %s994
      %p998 = scmp.eq.s32.totalorder %s171, 0
      %p999 = por %p997, %p998
      %p1000 = scmp.ne.s32.totalorder %s992, %s994
      %p1001 = scmp.eq.s32.totalorder %s176, 1
      %p1002 = por %p1000, %p1001
      %p1003 = scmp.ne.s32.totalorder %s994, %s995
      %p1004 = scmp.eq.s32.totalorder %s176, 0
      %p1005 = por %p1003, %p1004
      %p1006 = scmp.ne.s32.totalorder %s994, %s995
      %p1007 = scmp.eq.s32.totalorder %s177, 1
      %p1008 = por %p1006, %p1007
      %p1010 = scmp.ne.s32.totalorder %s995, %s1009
      %p1011 = scmp.eq.s32.totalorder %s177, 0
      %p1012 = por %p1010, %p1011
      %s1014 = sadd.s32 %s1013, 1
      %p1017 = scmp.eq.s32.totalorder %s171, 1
      %p1018 = scmp.ne.s32.totalorder %s1013, %s1015
      %p1019 = scmp.eq.s32.totalorder %s171, 0
      %p1020 = por %p1018, %p1019
      %p1021 = scmp.ne.s32.totalorder %s1013, %s1015
      %p1022 = scmp.eq.s32.totalorder %s176, 1
      %p1023 = por %p1021, %p1022
      %p1024 = scmp.ne.s32.totalorder %s1015, %s1016
      %p1025 = scmp.eq.s32.totalorder %s176, 0
      %p1026 = por %p1024, %p1025
      %p1027 = scmp.ne.s32.totalorder %s1015, %s1016
      %p1028 = scmp.eq.s32.totalorder %s177, 1
      %p1029 = por %p1027, %p1028
      %p1031 = scmp.ne.s32.totalorder %s1016, %s1030
      %p1032 = scmp.eq.s32.totalorder %s177, 0
      %p1033 = por %p1031, %p1032
      %s1035 = sadd.s32 %s1034, 1
      %p1038 = scmp.eq.s32.totalorder %s171, 1
      %p1039 = scmp.ne.s32.totalorder %s1034, %s1036
      %p1040 = scmp.eq.s32.totalorder %s171, 0
      %p1041 = por %p1039, %p1040
      %p1042 = scmp.ne.s32.totalorder %s1034, %s1036
      %p1043 = scmp.eq.s32.totalorder %s176, 1
      %p1044 = por %p1042, %p1043
      %p1045 = scmp.ne.s32.totalorder %s1036, %s1037
      %p1046 = scmp.eq.s32.totalorder %s176, 0
      %p1047 = por %p1045, %p1046
      %p1048 = scmp.ne.s32.totalorder %s1036, %s1037
      %p1049 = scmp.eq.s32.totalorder %s177, 1
      %p1050 = por %p1048, %p1049
      %p1052 = scmp.ne.s32.totalorder %s1037, %s1051
      %p1053 = scmp.eq.s32.totalorder %s177, 0
      %p1054 = por %p1052, %p1053
      %s1056 = sadd.s32 %s1055, 1
      %p1059 = scmp.eq.s32.totalorder %s171, 1
      %p1060 = scmp.ne.s32.totalorder %s1055, %s1057
      %p1061 = scmp.eq.s32.totalorder %s171, 0
      %p1062 = por %p1060, %p1061
      %p1063 = scmp.ne.s32.totalorder %s1055, %s1057
      %p1064 = scmp.eq.s32.totalorder %s176, 1
      %p1065 = por %p1063, %p1064
      %p1066 = scmp.ne.s32.totalorder %s1057, %s1058
      %p1067 = scmp.eq.s32.totalorder %s176, 0
      %p1068 = por %p1066, %p1067
      %p1069 = scmp.ne.s32.totalorder %s1057, %s1058
      %p1070 = scmp.eq.s32.totalorder %s177, 1
      %p1071 = por %p1069, %p1070
      %p1073 = scmp.ne.s32.totalorder %s1058, %s1072
      %p1074 = scmp.eq.s32.totalorder %s177, 0
      %p1075 = por %p1073, %p1074
      %s1077 = sadd.s32 %s1076, 1
      %p1080 = scmp.eq.s32.totalorder %s171, 1
      %p1081 = scmp.ne.s32.totalorder %s1076, %s1078
      %p1082 = scmp.eq.s32.totalorder %s171, 0
      %p1083 = por %p1081, %p1082
      %p1084 = scmp.ne.s32.totalorder %s1076, %s1078
      %p1085 = scmp.eq.s32.totalorder %s176, 1
      %p1086 = por %p1084, %p1085
      %p1087 = scmp.ne.s32.totalorder %s1078, %s1079
      %p1088 = scmp.eq.s32.totalorder %s176, 0
      %p1089 = por %p1087, %p1088
      %p1090 = scmp.ne.s32.totalorder %s1078, %s1079
      %p1091 = scmp.eq.s32.totalorder %s177, 1
      %p1092 = por %p1090, %p1091
      %p1094 = scmp.ne.s32.totalorder %s1079, %s1093
      %p1095 = scmp.eq.s32.totalorder %s177, 0
      %p1096 = por %p1094, %p1095
      %s1098 = sadd.s32 %s1097, 1
      %p1101 = scmp.eq.s32.totalorder %s171, 1
      %p1102 = scmp.ne.s32.totalorder %s1097, %s1099
      %p1103 = scmp.eq.s32.totalorder %s171, 0
      %p1104 = por %p1102, %p1103
      %p1105 = scmp.ne.s32.totalorder %s1097, %s1099
      %p1106 = scmp.eq.s32.totalorder %s176, 1
      %p1107 = por %p1105, %p1106
      %p1108 = scmp.ne.s32.totalorder %s1099, %s1100
      %p1109 = scmp.eq.s32.totalorder %s176, 0
      %p1110 = por %p1108, %p1109
      %p1111 = scmp.ne.s32.totalorder %s1099, %s1100
      %p1112 = scmp.eq.s32.totalorder %s177, 1
      %p1113 = por %p1111, %p1112
      %p1115 = scmp.ne.s32.totalorder %s1100, %s1114
      %p1116 = scmp.eq.s32.totalorder %s177, 0
      %p1117 = por %p1115, %p1116
      %s1119 = sadd.s32 %s1118, 1
      %p1122 = scmp.eq.s32.totalorder %s171, 1
      %p1123 = scmp.ne.s32.totalorder %s1118, %s1120
      %p1124 = scmp.eq.s32.totalorder %s171, 0
      %p1125 = por %p1123, %p1124
      %p1126 = scmp.ne.s32.totalorder %s1118, %s1120
      %p1127 = scmp.eq.s32.totalorder %s176, 1
      %p1128 = por %p1126, %p1127
      %p1129 = scmp.ne.s32.totalorder %s1120, %s1121
      %p1130 = scmp.eq.s32.totalorder %s176, 0
      %p1131 = por %p1129, %p1130
      %p1132 = scmp.ne.s32.totalorder %s1120, %s1121
      %p1133 = scmp.eq.s32.totalorder %s177, 1
      %p1134 = por %p1132, %p1133
      %p1136 = scmp.ne.s32.totalorder %s1121, %s1135
      %p1137 = scmp.eq.s32.totalorder %s177, 0
      %p1138 = por %p1136, %p1137
      %s1140 = sadd.s32 %s1139, 1
      %p1143 = scmp.eq.s32.totalorder %s171, 1
      %p1144 = scmp.ne.s32.totalorder %s1139, %s1141
      %p1145 = scmp.eq.s32.totalorder %s171, 0
      %p1146 = por %p1144, %p1145
      %p1147 = scmp.ne.s32.totalorder %s1139, %s1141
      %p1148 = scmp.eq.s32.totalorder %s176, 1
      %p1149 = por %p1147, %p1148
      %p1150 = scmp.ne.s32.totalorder %s1141, %s1142
      %p1151 = scmp.eq.s32.totalorder %s176, 0
      %p1152 = por %p1150, %p1151
      %p1153 = scmp.ne.s32.totalorder %s1141, %s1142
      %p1154 = scmp.eq.s32.totalorder %s177, 1
      %p1155 = por %p1153, %p1154
      %p1157 = scmp.ne.s32.totalorder %s1142, %s1156
      %p1158 = scmp.eq.s32.totalorder %s177, 0
      %p1159 = por %p1157, %p1158
      %s1161 = sadd.s32 %s1160, 1
      %p1164 = scmp.eq.s32.totalorder %s171, 1
      %p1165 = scmp.ne.s32.totalorder %s1160, %s1162
      %p1166 = scmp.eq.s32.totalorder %s171, 0
      %p1167 = por %p1165, %p1166
      %p1168 = scmp.ne.s32.totalorder %s1160, %s1162
      %p1169 = scmp.eq.s32.totalorder %s176, 1
      %p1170 = por %p1168, %p1169
      %p1171 = scmp.ne.s32.totalorder %s1162, %s1163
      %p1172 = scmp.eq.s32.totalorder %s176, 0
      %p1173 = por %p1171, %p1172
      %p1174 = scmp.ne.s32.totalorder %s1162, %s1163
      %p1175 = scmp.eq.s32.totalorder %s177, 1
      %p1176 = por %p1174, %p1175
      %p1178 = scmp.ne.s32.totalorder %s1163, %s1177
      %p1179 = scmp.eq.s32.totalorder %s177, 0
      %p1180 = por %p1178, %p1179
      %s1182 = sadd.s32 %s1181, 1
      %p1185 = scmp.eq.s32.totalorder %s171, 1
      %p1186 = scmp.ne.s32.totalorder %s1181, %s1183
      %p1187 = scmp.eq.s32.totalorder %s171, 0
      %p1188 = por %p1186, %p1187
      %p1189 = scmp.ne.s32.totalorder %s1181, %s1183
      %p1190 = scmp.eq.s32.totalorder %s176, 1
      %p1191 = por %p1189, %p1190
      %p1192 = scmp.ne.s32.totalorder %s1183, %s1184
      %p1193 = scmp.eq.s32.totalorder %s176, 0
      %p1194 = por %p1192, %p1193
      %p1195 = scmp.ne.s32.totalorder %s1183, %s1184
      %p1196 = scmp.eq.s32.totalorder %s177, 1
      %p1197 = por %p1195, %p1196
      %p1199 = scmp.ne.s32.totalorder %s1184, %s1198
      %p1200 = scmp.eq.s32.totalorder %s177, 0
      %p1201 = por %p1199, %p1200
      %s1203 = sadd.s32 %s1202, 1
      %p1206 = scmp.eq.s32.totalorder %s171, 1
      %p1207 = scmp.ne.s32.totalorder %s1202, %s1204
      %p1208 = scmp.eq.s32.totalorder %s171, 0
      %p1209 = por %p1207, %p1208
      %p1210 = scmp.ne.s32.totalorder %s1202, %s1204
      %p1211 = scmp.eq.s32.totalorder %s176, 1
      %p1212 = por %p1210, %p1211
      %p1213 = scmp.ne.s32.totalorder %s1204, %s1205
      %p1214 = scmp.eq.s32.totalorder %s176, 0
      %p1215 = por %p1213, %p1214
      %p1216 = scmp.ne.s32.totalorder %s1204, %s1205
      %p1217 = scmp.eq.s32.totalorder %s177, 1
      %p1218 = por %p1216, %p1217
      %p1220 = scmp.ne.s32.totalorder %s1205, %s1219
      %p1221 = scmp.eq.s32.totalorder %s177, 0
      %p1222 = por %p1220, %p1221
      %s1224 = sadd.s32 %s1223, 1
      %p1227 = scmp.eq.s32.totalorder %s171, 1
      %p1228 = scmp.ne.s32.totalorder %s1223, %s1225
      %p1229 = scmp.eq.s32.totalorder %s171, 0
      %p1230 = por %p1228, %p1229
      %p1231 = scmp.ne.s32.totalorder %s1223, %s1225
      %p1232 = scmp.eq.s32.totalorder %s176, 1
      %p1233 = por %p1231, %p1232
      %p1234 = scmp.ne.s32.totalorder %s1225, %s1226
      %p1235 = scmp.eq.s32.totalorder %s176, 0
      %p1236 = por %p1234, %p1235
      %p1237 = scmp.ne.s32.totalorder %s1225, %s1226
      %p1238 = scmp.eq.s32.totalorder %s177, 1
      %p1239 = por %p1237, %p1238
      %p1241 = scmp.ne.s32.totalorder %s1226, %s1240
      %p1242 = scmp.eq.s32.totalorder %s177, 0
      %p1243 = por %p1241, %p1242
      %s1245 = sadd.s32 %s1244, 1
      %p1248 = scmp.eq.s32.totalorder %s171, 1
      %p1249 = scmp.ne.s32.totalorder %s1244, %s1246
      %p1250 = scmp.eq.s32.totalorder %s171, 0
      %p1251 = por %p1249, %p1250
      %p1252 = scmp.ne.s32.totalorder %s1244, %s1246
      %p1253 = scmp.eq.s32.totalorder %s176, 1
      %p1254 = por %p1252, %p1253
      %p1255 = scmp.ne.s32.totalorder %s1246, %s1247
      %p1256 = scmp.eq.s32.totalorder %s176, 0
      %p1257 = por %p1255, %p1256
      %p1258 = scmp.ne.s32.totalorder %s1246, %s1247
      %p1259 = scmp.eq.s32.totalorder %s177, 1
      %p1260 = por %p1258, %p1259
      %p1262 = scmp.ne.s32.totalorder %s1247, %s1261
      %p1263 = scmp.eq.s32.totalorder %s177, 0
      %p1264 = por %p1262, %p1263
      %s1266 = sadd.s32 %s1265, 1
      %p1269 = scmp.eq.s32.totalorder %s171, 1
      %p1270 = scmp.ne.s32.totalorder %s1265, %s1267
      %p1271 = scmp.eq.s32.totalorder %s171, 0
      %p1272 = por %p1270, %p1271
      %p1273 = scmp.ne.s32.totalorder %s1265, %s1267
      %p1274 = scmp.eq.s32.totalorder %s176, 1
      %p1275 = por %p1273, %p1274
      %p1276 = scmp.ne.s32.totalorder %s1267, %s1268
      %p1277 = scmp.eq.s32.totalorder %s176, 0
      %p1278 = por %p1276, %p1277
      %p1279 = scmp.ne.s32.totalorder %s1267, %s1268
      %p1280 = scmp.eq.s32.totalorder %s177, 1
      %p1281 = por %p1279, %p1280
      %p1283 = scmp.ne.s32.totalorder %s1268, %s1282
      %p1284 = scmp.eq.s32.totalorder %s177, 0
      %p1285 = por %p1283, %p1284
      %s1287 = sadd.s32 %s1286, 1
      %p1290 = scmp.eq.s32.totalorder %s171, 1
      %p1291 = scmp.ne.s32.totalorder %s1286, %s1288
      %p1292 = scmp.eq.s32.totalorder %s171, 0
      %p1293 = por %p1291, %p1292
      %p1294 = scmp.ne.s32.totalorder %s1286, %s1288
      %p1295 = scmp.eq.s32.totalorder %s176, 1
      %p1296 = por %p1294, %p1295
      %p1297 = scmp.ne.s32.totalorder %s1288, %s1289
      %p1298 = scmp.eq.s32.totalorder %s176, 0
      %p1299 = por %p1297, %p1298
      %p1300 = scmp.ne.s32.totalorder %s1288, %s1289
      %p1301 = scmp.eq.s32.totalorder %s177, 1
      %p1302 = por %p1300, %p1301
      %p1304 = scmp.ne.s32.totalorder %s1289, %s1303
      %p1305 = scmp.eq.s32.totalorder %s177, 0
      %p1306 = por %p1304, %p1305
      %s1308 = sadd.s32 %s1307, 1
      %p1311 = scmp.eq.s32.totalorder %s171, 1
      %p1312 = scmp.ne.s32.totalorder %s1307, %s1309
      %p1313 = scmp.eq.s32.totalorder %s171, 0
      %p1314 = por %p1312, %p1313
      %p1315 = scmp.ne.s32.totalorder %s1307, %s1309
      %p1316 = scmp.eq.s32.totalorder %s176, 1
      %p1317 = por %p1315, %p1316
      %p1318 = scmp.ne.s32.totalorder %s1309, %s1310
      %p1319 = scmp.eq.s32.totalorder %s176, 0
      %p1320 = por %p1318, %p1319
      %p1321 = scmp.ne.s32.totalorder %s1309, %s1310
      %p1322 = scmp.eq.s32.totalorder %s177, 1
      %p1323 = por %p1321, %p1322
      %p1325 = scmp.ne.s32.totalorder %s1310, %s1324
      %p1326 = scmp.eq.s32.totalorder %s177, 0
      %p1327 = por %p1325, %p1326
      %s1329 = sadd.s32 %s1328, 1
      %p1332 = scmp.eq.s32.totalorder %s171, 1
      %p1333 = scmp.ne.s32.totalorder %s1328, %s1330
      %p1334 = scmp.eq.s32.totalorder %s171, 0
      %p1335 = por %p1333, %p1334
      %p1336 = scmp.ne.s32.totalorder %s1328, %s1330
      %p1337 = scmp.eq.s32.totalorder %s176, 1
      %p1338 = por %p1336, %p1337
      %p1339 = scmp.ne.s32.totalorder %s1330, %s1331
      %p1340 = scmp.eq.s32.totalorder %s176, 0
      %p1341 = por %p1339, %p1340
      %p1342 = scmp.ne.s32.totalorder %s1330, %s1331
      %p1343 = scmp.eq.s32.totalorder %s177, 1
      %p1344 = por %p1342, %p1343
      %p1346 = scmp.ne.s32.totalorder %s1331, %s1345
      %p1347 = scmp.eq.s32.totalorder %s177, 0
      %p1348 = por %p1346, %p1347
      %s1350 = sadd.s32 %s1349, 1
      %p1353 = scmp.eq.s32.totalorder %s171, 1
      %p1354 = scmp.ne.s32.totalorder %s1349, %s1351
      %p1355 = scmp.eq.s32.totalorder %s171, 0
      %p1356 = por %p1354, %p1355
      %p1357 = scmp.ne.s32.totalorder %s1349, %s1351
      %p1358 = scmp.eq.s32.totalorder %s176, 1
      %p1359 = por %p1357, %p1358
      %p1360 = scmp.ne.s32.totalorder %s1351, %s1352
      %p1361 = scmp.eq.s32.totalorder %s176, 0
      %p1362 = por %p1360, %p1361
      %p1363 = scmp.ne.s32.totalorder %s1351, %s1352
      %p1364 = scmp.eq.s32.totalorder %s177, 1
      %p1365 = por %p1363, %p1364
      %p1367 = scmp.ne.s32.totalorder %s1352, %s1366
      %p1368 = scmp.eq.s32.totalorder %s177, 0
      %p1369 = por %p1367, %p1368
      %s1371 = sadd.s32 %s1370, 1
      %p1374 = scmp.eq.s32.totalorder %s171, 1
      %p1375 = scmp.ne.s32.totalorder %s1370, %s1372
      %p1376 = scmp.eq.s32.totalorder %s171, 0
      %p1377 = por %p1375, %p1376
      %p1378 = scmp.ne.s32.totalorder %s1370, %s1372
      %p1379 = scmp.eq.s32.totalorder %s176, 1
      %p1380 = por %p1378, %p1379
      %p1381 = scmp.ne.s32.totalorder %s1372, %s1373
      %p1382 = scmp.eq.s32.totalorder %s176, 0
      %p1383 = por %p1381, %p1382
      %p1384 = scmp.ne.s32.totalorder %s1372, %s1373
      %p1385 = scmp.eq.s32.totalorder %s177, 1
      %p1386 = por %p1384, %p1385
      %p1388 = scmp.ne.s32.totalorder %s1373, %s1387
      %p1389 = scmp.eq.s32.totalorder %s177, 0
      %p1390 = por %p1388, %p1389
      %s1392 = sadd.s32 %s1391, 1
      %p1395 = scmp.eq.s32.totalorder %s171, 1
      %p1396 = scmp.ne.s32.totalorder %s1391, %s1393
      %p1397 = scmp.eq.s32.totalorder %s171, 0
      %p1398 = por %p1396, %p1397
      %p1399 = scmp.ne.s32.totalorder %s1391, %s1393
      %p1400 = scmp.eq.s32.totalorder %s176, 1
      %p1401 = por %p1399, %p1400
      %p1402 = scmp.ne.s32.totalorder %s1393, %s1394
      %p1403 = scmp.eq.s32.totalorder %s176, 0
      %p1404 = por %p1402, %p1403
      %p1405 = scmp.ne.s32.totalorder %s1393, %s1394
      %p1406 = scmp.eq.s32.totalorder %s177, 1
      %p1407 = por %p1405, %p1406
      %p1409 = scmp.ne.s32.totalorder %s1394, %s1408
      %p1410 = scmp.eq.s32.totalorder %s177, 0
      %p1411 = por %p1409, %p1410
      %s1413 = sadd.s32 %s1412, 1
      %p1416 = scmp.eq.s32.totalorder %s171, 1
      %p1417 = scmp.ne.s32.totalorder %s1412, %s1414
      %p1418 = scmp.eq.s32.totalorder %s171, 0
      %p1419 = por %p1417, %p1418
      %p1420 = scmp.ne.s32.totalorder %s1412, %s1414
      %p1421 = scmp.eq.s32.totalorder %s176, 1
      %p1422 = por %p1420, %p1421
      %p1423 = scmp.ne.s32.totalorder %s1414, %s1415
      %p1424 = scmp.eq.s32.totalorder %s176, 0
      %p1425 = por %p1423, %p1424
      %p1426 = scmp.ne.s32.totalorder %s1414, %s1415
      %p1427 = scmp.eq.s32.totalorder %s177, 1
      %p1428 = por %p1426, %p1427
      %p1430 = scmp.ne.s32.totalorder %s1415, %s1429
      %p1431 = scmp.eq.s32.totalorder %s177, 0
      %p1432 = por %p1430, %p1431
      %s1434 = sadd.s32 %s1433, 1
      %p1437 = scmp.eq.s32.totalorder %s171, 1
      %p1438 = scmp.ne.s32.totalorder %s1433, %s1435
      %p1439 = scmp.eq.s32.totalorder %s171, 0
      %p1440 = por %p1438, %p1439
      %p1441 = scmp.ne.s32.totalorder %s1433, %s1435
      %p1442 = scmp.eq.s32.totalorder %s176, 1
      %p1443 = por %p1441, %p1442
      %p1444 = scmp.ne.s32.totalorder %s1435, %s1436
      %p1445 = scmp.eq.s32.totalorder %s176, 0
      %p1446 = por %p1444, %p1445
      %p1447 = scmp.ne.s32.totalorder %s1435, %s1436
      %p1448 = scmp.eq.s32.totalorder %s177, 1
      %p1449 = por %p1447, %p1448
      %p1451 = scmp.ne.s32.totalorder %s1436, %s1450
      %p1452 = scmp.eq.s32.totalorder %s177, 0
      %p1453 = por %p1451, %p1452
      %s1455 = sadd.s32 %s1454, 1
      %p1458 = scmp.eq.s32.totalorder %s171, 1
      %p1459 = scmp.ne.s32.totalorder %s1454, %s1456
      %p1460 = scmp.eq.s32.totalorder %s171, 0
      %p1461 = por %p1459, %p1460
      %p1462 = scmp.ne.s32.totalorder %s1454, %s1456
      %p1463 = scmp.eq.s32.totalorder %s176, 1
      %p1464 = por %p1462, %p1463
      %p1465 = scmp.ne.s32.totalorder %s1456, %s1457
      %p1466 = scmp.eq.s32.totalorder %s176, 0
      %p1467 = por %p1465, %p1466
      %p1468 = scmp.ne.s32.totalorder %s1456, %s1457
      %p1469 = scmp.eq.s32.totalorder %s177, 1
      %p1470 = por %p1468, %p1469
      %p1472 = scmp.ne.s32.totalorder %s1457, %s1471
      %p1473 = scmp.eq.s32.totalorder %s177, 0
      %p1474 = por %p1472, %p1473
      %s1476 = sadd.s32 %s1475, 1
      %p1479 = scmp.eq.s32.totalorder %s171, 1
      %p1480 = scmp.ne.s32.totalorder %s1475, %s1477
      %p1481 = scmp.eq.s32.totalorder %s171, 0
      %p1482 = por %p1480, %p1481
      %p1483 = scmp.ne.s32.totalorder %s1475, %s1477
      %p1484 = scmp.eq.s32.totalorder %s176, 1
      %p1485 = por %p1483, %p1484
      %p1486 = scmp.ne.s32.totalorder %s1477, %s1478
      %p1487 = scmp.eq.s32.totalorder %s176, 0
      %p1488 = por %p1486, %p1487
      %p1489 = scmp.ne.s32.totalorder %s1477, %s1478
      %p1490 = scmp.eq.s32.totalorder %s177, 1
      %p1491 = por %p1489, %p1490
      %p1493 = scmp.ne.s32.totalorder %s1478, %s1492
      %p1494 = scmp.eq.s32.totalorder %s177, 0
      %p1495 = por %p1493, %p1494
      %s1497 = sadd.s32 %s1496, 1
      %p1500 = scmp.eq.s32.totalorder %s171, 1
      %p1501 = scmp.ne.s32.totalorder %s1496, %s1498
      %p1502 = scmp.eq.s32.totalorder %s171, 0
      %p1503 = por %p1501, %p1502
      %p1504 = scmp.ne.s32.totalorder %s1496, %s1498
      %p1505 = scmp.eq.s32.totalorder %s176, 1
      %p1506 = por %p1504, %p1505
      %p1507 = scmp.ne.s32.totalorder %s1498, %s1499
      %p1508 = scmp.eq.s32.totalorder %s176, 0
      %p1509 = por %p1507, %p1508
      %p1510 = scmp.ne.s32.totalorder %s1498, %s1499
      %p1511 = scmp.eq.s32.totalorder %s177, 1
      %p1512 = por %p1510, %p1511
      %p1514 = scmp.ne.s32.totalorder %s1499, %s1513
      %p1515 = scmp.eq.s32.totalorder %s177, 0
      %p1516 = por %p1514, %p1515
      %s1518 = sadd.s32 %s1517, 1
      %p1521 = scmp.eq.s32.totalorder %s171, 1
      %p1522 = scmp.ne.s32.totalorder %s1517, %s1519
      %p1523 = scmp.eq.s32.totalorder %s171, 0
      %p1524 = por %p1522, %p1523
      %p1525 = scmp.ne.s32.totalorder %s1517, %s1519
      %p1526 = scmp.eq.s32.totalorder %s176, 1
      %p1527 = por %p1525, %p1526
      %p1528 = scmp.ne.s32.totalorder %s1519, %s1520
      %p1529 = scmp.eq.s32.totalorder %s176, 0
      %p1530 = por %p1528, %p1529
      %p1531 = scmp.ne.s32.totalorder %s1519, %s1520
      %p1532 = scmp.eq.s32.totalorder %s177, 1
      %p1533 = por %p1531, %p1532
      %p1535 = scmp.ne.s32.totalorder %s1520, %s1534
      %p1536 = scmp.eq.s32.totalorder %s177, 0
      %p1537 = por %p1535, %p1536
      %s1539 = sadd.s32 %s1538, 1
      %p1542 = scmp.eq.s32.totalorder %s171, 1
      %p1543 = scmp.ne.s32.totalorder %s1538, %s1540
      %p1544 = scmp.eq.s32.totalorder %s171, 0
      %p1545 = por %p1543, %p1544
      %p1546 = scmp.ne.s32.totalorder %s1538, %s1540
      %p1547 = scmp.eq.s32.totalorder %s176, 1
      %p1548 = por %p1546, %p1547
      %p1549 = scmp.ne.s32.totalorder %s1540, %s1541
      %p1550 = scmp.eq.s32.totalorder %s176, 0
      %p1551 = por %p1549, %p1550
      %p1552 = scmp.ne.s32.totalorder %s1540, %s1541
      %p1553 = scmp.eq.s32.totalorder %s177, 1
      %p1554 = por %p1552, %p1553
      %p1556 = scmp.ne.s32.totalorder %s1541, %s1555
      %p1557 = scmp.eq.s32.totalorder %s177, 0
      %p1558 = por %p1556, %p1557
      %s1560 = sadd.s32 %s1559, 1
      %p1563 = scmp.eq.s32.totalorder %s171, 1
      %p1564 = scmp.ne.s32.totalorder %s1559, %s1561
      %p1565 = scmp.eq.s32.totalorder %s171, 0
      %p1566 = por %p1564, %p1565
      %p1567 = scmp.ne.s32.totalorder %s1559, %s1561
      %p1568 = scmp.eq.s32.totalorder %s176, 1
      %p1569 = por %p1567, %p1568
      %p1570 = scmp.ne.s32.totalorder %s1561, %s1562
      %p1571 = scmp.eq.s32.totalorder %s176, 0
      %p1572 = por %p1570, %p1571
      %p1573 = scmp.ne.s32.totalorder %s1561, %s1562
      %p1574 = scmp.eq.s32.totalorder %s177, 1
      %p1575 = por %p1573, %p1574
      %p1577 = scmp.ne.s32.totalorder %s1562, %s1576
      %p1578 = scmp.eq.s32.totalorder %s177, 0
      %p1579 = por %p1577, %p1578
      %s1581 = sadd.s32 %s1580, 1
      %p1584 = scmp.eq.s32.totalorder %s171, 1
      %p1585 = scmp.ne.s32.totalorder %s1580, %s1582
      %p1586 = scmp.eq.s32.totalorder %s171, 0
      %p1587 = por %p1585, %p1586
      %p1588 = scmp.ne.s32.totalorder %s1580, %s1582
      %p1589 = scmp.eq.s32.totalorder %s176, 1
      %p1590 = por %p1588, %p1589
      %p1591 = scmp.ne.s32.totalorder %s1582, %s1583
      %p1592 = scmp.eq.s32.totalorder %s176, 0
      %p1593 = por %p1591, %p1592
      %p1594 = scmp.ne.s32.totalorder %s1582, %s1583
      %p1595 = scmp.eq.s32.totalorder %s177, 1
      %p1596 = por %p1594, %p1595
      %p1598 = scmp.ne.s32.totalorder %s1583, %s1597
      %p1599 = scmp.eq.s32.totalorder %s177, 0
      %p1600 = por %p1598, %p1599
      %s1601 = ssub.s32 %s171, %s178
      %p1602 = scmp.eq.s32.totalorder %s1601, 0
      %s1604 = sadd.s32 %s1603, 1
      %s1605 = scalar_select %p1602, %s1603, %s1604
      %p1608 = pneg %p1602
      %p1609 = scmp.eq.s32.totalorder %s171, 1
      %p1610 = por %p1608, %p1609
      %p1611 = scmp.ne.s32.totalorder %s1603, %s1606
      %p1612 = scmp.eq.s32.totalorder %s171, 0
      %p1613 = por %p1611, %p1612
      %p1614 = scmp.ne.s32.totalorder %s1603, %s1606
      %p1615 = scmp.eq.s32.totalorder %s176, 1
      %p1616 = por %p1614, %p1615
      %p1617 = scmp.ne.s32.totalorder %s1606, %s1607
      %p1618 = scmp.eq.s32.totalorder %s176, 0
      %p1619 = por %p1617, %p1618
      %p1620 = scmp.ne.s32.totalorder %s1606, %s1607
      %p1621 = scmp.eq.s32.totalorder %s177, 1
      %p1622 = por %p1620, %p1621
      %p1624 = scmp.ne.s32.totalorder %s1607, %s1623
      %p1625 = scmp.eq.s32.totalorder %s177, 0
      %p1626 = por %p1624, %p1625
      %p1627 = scmp.le.s32.totalorder 1, %s171
      %p1628 = scmp.lt.s32.totalorder %s171, 3
      %p1629 = pnand %p1627, %p1628
      %p1630 = pneg %p1629
      // Predicated region
      $region9: #{tpu_custom_call.1} parent=5 // pred_check
        _
      $region10: #{tpu_custom_call.1} parent=5 // pred_check_branch
        %1632 = sbr.rel (%p1629) target = $region12
      $region11: #{tpu_custom_call.1} parent=5 // pred_region
        %s1633 = ssub.s32 %s171, 1
        // Predicated region
        $region13: #{tpu_custom_call.1} parent=11 // pred_check
          %p1634 = pneg %p270
        $region14: #{tpu_custom_call.1} parent=11 // pred_check_branch
          %1636 = sbr.rel (%p1634) target = $region16
        $region15: #{tpu_custom_call.1} parent=11 // pred_region
          %s1638 = ssub.s32 16, 16
          %1639 = vsyncadd [#allocation6], %s1638
          %s1641 = sshll.u32 [#allocation7], 4
          %s1642 = int_to_ptr.vmem [resolvable:$true] %s1641
          %1644 = dma.hbm_to_vmem [thread:$0]  %s7, 16, %s1642, [#allocation6]
        $region16: #{tpu_custom_call.1} parent=11 // pred_fallthru
          _
        // Predicated region
        $region17: #{tpu_custom_call.1} parent=11 // pred_check
          %p1645 = pneg %p291
        $region18: #{tpu_custom_call.1} parent=11 // pred_check_branch
          %1647 = sbr.rel (%p1645) target = $region20
        $region19: #{tpu_custom_call.1} parent=11 // pred_region
          %s1649 = ssub.s32 512, 512
          %1650 = vsyncadd [#allocation9], %s1649
          %s1651 = sshll.u32 [#allocation8], 4
          %s1652 = int_to_ptr.vmem [resolvable:$true] %s1651
          %1657 = dma.hbm_to_vmem [thread:$0]  %s9, 512, %s1652, [#allocation9], 128, 128, 8
        $region20: #{tpu_custom_call.1} parent=11 // pred_fallthru
          _
        // Predicated region
        $region21: #{tpu_custom_call.1} parent=11 // pred_check
          %p1658 = pneg %p312
        $region22: #{tpu_custom_call.1} parent=11 // pred_check_branch
          %1660 = sbr.rel (%p1658) target = $region24
        $region23: #{tpu_custom_call.1} parent=11 // pred_region
          %s1662 = ssub.s32 16, 16
          %1663 = vsyncadd [#allocation9], %s1662
          %s1665 = sshll.u32 [#allocation10], 4
          %s1666 = int_to_ptr.vmem [resolvable:$true] %s1665
          %1668 = dma.hbm_to_vmem [thread:$0]  %s11, 16, %s1666, [#allocation9]
        $region24: #{tpu_custom_call.1} parent=11 // pred_fallthru
          _
        // Predicated region
        $region25: #{tpu_custom_call.1} parent=11 // pred_check
          %p1669 = pneg %p333
        $region26: #{tpu_custom_call.1} parent=11 // pred_check_branch
          %1671 = sbr.rel (%p1669) target = $region28
        $region27: #{tpu_custom_call.1} parent=11 // pred_region
          _
        $region28: #{tpu_custom_call.1} parent=11 // pred_fallthru
          _
        // Predicated region
        $region29: #{tpu_custom_call.1} parent=11 // pred_check
          %p1672 = pneg %p354
        $region30: #{tpu_custom_call.1} parent=11 // pred_check_branch
          %1674 = sbr.rel (%p1672) target = $region32
        $region31: #{tpu_custom_call.1} parent=11 // pred_region
          %s1676 = ssub.s32 16, 16
          %1677 = vsyncadd [#allocation12], %s1676
          %s1679 = sshll.u32 [#allocation11], 4
          %s1680 = int_to_ptr.vmem [resolvable:$true] %s1679
          %1682 = dma.hbm_to_vmem [thread:$0]  %s15, 16, %s1680, [#allocation12]
        $region32: #{tpu_custom_call.1} parent=11 // pred_fallthru
          _
        // Predicated region
        $region33: #{tpu_custom_call.1} parent=11 // pred_check
          %p1683 = pneg %p375
        $region34: #{tpu_custom_call.1} parent=11 // pred_check_branch
          %1685 = sbr.rel (%p1683) target = $region36
        $region35: #{tpu_custom_call.1} parent=11 // pred_region
          _
        $region36: #{tpu_custom_call.1} parent=11 // pred_fallthru
          _
        // Predicated region
        $region37: #{tpu_custom_call.1} parent=11 // pred_check
          %p1686 = pneg %p396
        $region38: #{tpu_custom_call.1} parent=11 // pred_check_branch
          %1688 = sbr.rel (%p1686) target = $region40
        $region39: #{tpu_custom_call.1} parent=11 // pred_region
          %s1690 = ssub.s32 16, 16
          %1691 = vsyncadd [#allocation12], %s1690
          %s1693 = sshll.u32 [#allocation13], 4
          %s1694 = int_to_ptr.vmem [resolvable:$true] %s1693
          %1696 = dma.hbm_to_vmem [thread:$0]  %s19, 16, %s1694, [#allocation12]
        $region40: #{tpu_custom_call.1} parent=11 // pred_fallthru
          _
        // Predicated region
        $region41: #{tpu_custom_call.1} parent=11 // pred_check
          %p1697 = pneg %p417
        $region42: #{tpu_custom_call.1} parent=11 // pred_check_branch
          %1699 = sbr.rel (%p1697) target = $region44
        $region43: #{tpu_custom_call.1} parent=11 // pred_region
          _
        $region44: #{tpu_custom_call.1} parent=11 // pred_fallthru
          _
        // Predicated region
        $region45: #{tpu_custom_call.1} parent=11 // pred_check
          %p1700 = pneg %p438
        $region46: #{tpu_custom_call.1} parent=11 // pred_check_branch
          %1702 = sbr.rel (%p1700) target = $region48
        $region47: #{tpu_custom_call.1} parent=11 // pred_region
          %s1704 = ssub.s32 32, 32
          %1705 = vsyncadd [#allocation15], %s1704
          %s1707 = sshll.u32 [#allocation14], 4
          %s1708 = int_to_ptr.vmem [resolvable:$true] %s1707
          %1710 = dma.hbm_to_vmem [thread:$0]  %s23, 32, %s1708, [#allocation15]
        $region48: #{tpu_custom_call.1} parent=11 // pred_fallthru
          _
        // Predicated region
        $region49: #{tpu_custom_call.1} parent=11 // pred_check
          %p1711 = pneg %p459
        $region50: #{tpu_custom_call.1} parent=11 // pred_check_branch
          %1713 = sbr.rel (%p1711) target = $region52
        $region51: #{tpu_custom_call.1} parent=11 // pred_region
          %s1715 = ssub.s32 1024, 1024
          %1716 = vsyncadd [#allocation15], %s1715
          %s1717 = sshll.u32 [#allocation16], 4
          %s1718 = int_to_ptr.vmem [resolvable:$true] %s1717
          %1723 = dma.hbm_to_vmem [thread:$0]  %s25, 1024, %s1718, [#allocation15], 256, 256, 16
        $region52: #{tpu_custom_call.1} parent=11 // pred_fallthru
          _
        // Predicated region
        $region53: #{tpu_custom_call.1} parent=11 // pred_check
          %p1724 = pneg %p480
        $region54: #{tpu_custom_call.1} parent=11 // pred_check_branch
          %1726 = sbr.rel (%p1724) target = $region56
        $region55: #{tpu_custom_call.1} parent=11 // pred_region
          %s1728 = ssub.s32 32, 32
          %1729 = vsyncadd [#allocation18], %s1728
          %s1731 = sshll.u32 [#allocation17], 4
          %s1732 = int_to_ptr.vmem [resolvable:$true] %s1731
          %1734 = dma.hbm_to_vmem [thread:$0]  %s27, 32, %s1732, [#allocation18]
        $region56: #{tpu_custom_call.1} parent=11 // pred_fallthru
          _
        // Predicated region
        $region57: #{tpu_custom_call.1} parent=11 // pred_check
          %p1735 = pneg %p501
        $region58: #{tpu_custom_call.1} parent=11 // pred_check_branch
          %1737 = sbr.rel (%p1735) target = $region60
        $region59: #{tpu_custom_call.1} parent=11 // pred_region
          _
        $region60: #{tpu_custom_call.1} parent=11 // pred_fallthru
          _
        // Predicated region
        $region61: #{tpu_custom_call.1} parent=11 // pred_check
          %p1738 = pneg %p522
        $region62: #{tpu_custom_call.1} parent=11 // pred_check_branch
          %1740 = sbr.rel (%p1738) target = $region64
        $region63: #{tpu_custom_call.1} parent=11 // pred_region
          %s1742 = ssub.s32 32, 32
          %1743 = vsyncadd [#allocation18], %s1742
          %s1745 = sshll.u32 [#allocation19], 4
          %s1746 = int_to_ptr.vmem [resolvable:$true] %s1745
          %1748 = dma.hbm_to_vmem [thread:$0]  %s31, 32, %s1746, [#allocation18]
        $region64: #{tpu_custom_call.1} parent=11 // pred_fallthru
          _
        // Predicated region
        $region65: #{tpu_custom_call.1} parent=11 // pred_check
          %p1749 = pneg %p543
        $region66: #{tpu_custom_call.1} parent=11 // pred_check_branch
          %1751 = sbr.rel (%p1749) target = $region68
        $region67: #{tpu_custom_call.1} parent=11 // pred_region
          _
        $region68: #{tpu_custom_call.1} parent=11 // pred_fallthru
          _
        // Predicated region
        $region69: #{tpu_custom_call.1} parent=11 // pred_check
          %p1752 = pneg %p564
        $region70: #{tpu_custom_call.1} parent=11 // pred_check_branch
          %1754 = sbr.rel (%p1752) target = $region72
        $region71: #{tpu_custom_call.1} parent=11 // pred_region
          %s1756 = ssub.s32 32, 32
          %1757 = vsyncadd [#allocation21], %s1756
          %s1759 = sshll.u32 [#allocation20], 4
          %s1760 = int_to_ptr.vmem [resolvable:$true] %s1759
          %1762 = dma.hbm_to_vmem [thread:$0]  %s35, 32, %s1760, [#allocation21]
        $region72: #{tpu_custom_call.1} parent=11 // pred_fallthru
          _
        // Predicated region
        $region73: #{tpu_custom_call.1} parent=11 // pred_check
          %p1763 = pneg %p585
        $region74: #{tpu_custom_call.1} parent=11 // pred_check_branch
          %1765 = sbr.rel (%p1763) target = $region76
        $region75: #{tpu_custom_call.1} parent=11 // pred_region
          _
        $region76: #{tpu_custom_call.1} parent=11 // pred_fallthru
          _
        // Predicated region
        $region77: #{tpu_custom_call.1} parent=11 // pred_check
          %p1766 = pneg %p606
        $region78: #{tpu_custom_call.1} parent=11 // pred_check_branch
          %1768 = sbr.rel (%p1766) target = $region80
        $region79: #{tpu_custom_call.1} parent=11 // pred_region
          _
        $region80: #{tpu_custom_call.1} parent=11 // pred_fallthru
          _
        // Predicated region
        $region81: #{tpu_custom_call.1} parent=11 // pred_check
          %p1769 = pneg %p627
        $region82: #{tpu_custom_call.1} parent=11 // pred_check_branch
          %1771 = sbr.rel (%p1769) target = $region84
        $region83: #{tpu_custom_call.1} parent=11 // pred_region
          _
        $region84: #{tpu_custom_call.1} parent=11 // pred_fallthru
          _
        // Predicated region
        $region85: #{tpu_custom_call.1} parent=11 // pred_check
          %p1772 = pneg %p648
        $region86: #{tpu_custom_call.1} parent=11 // pred_check_branch
          %1774 = sbr.rel (%p1772) target = $region88
        $region87: #{tpu_custom_call.1} parent=11 // pred_region
          %s1776 = ssub.s32 16, 16
          %1777 = vsyncadd [#allocation21], %s1776
          %s1779 = sshll.u32 [#allocation22], 4
          %s1780 = int_to_ptr.vmem [resolvable:$true] %s1779
          %1782 = dma.hbm_to_vmem [thread:$0]  %s43, 16, %s1780, [#allocation21]
        $region88: #{tpu_custom_call.1} parent=11 // pred_fallthru
          _
        // Predicated region
        $region89: #{tpu_custom_call.1} parent=11 // pred_check
          %p1783 = pneg %p669
        $region90: #{tpu_custom_call.1} parent=11 // pred_check_branch
          %1785 = sbr.rel (%p1783) target = $region92
        $region91: #{tpu_custom_call.1} parent=11 // pred_region
          %s1787 = ssub.s32 512, 512
          %1788 = vsyncadd [#allocation24], %s1787
          %s1789 = sshll.u32 [#allocation23], 4
          %s1790 = int_to_ptr.vmem [resolvable:$true] %s1789
          %1795 = dma.hbm_to_vmem [thread:$0]  %s45, 512, %s1790, [#allocation24], 128, 128, 8
        $region92: #{tpu_custom_call.1} parent=11 // pred_fallthru
          _
        // Predicated region
        $region93: #{tpu_custom_call.1} parent=11 // pred_check
          %p1796 = pneg %p690
        $region94: #{tpu_custom_call.1} parent=11 // pred_check_branch
          %1798 = sbr.rel (%p1796) target = $region96
        $region95: #{tpu_custom_call.1} parent=11 // pred_region
          %s1800 = ssub.s32 16, 16
          %1801 = vsyncadd [#allocation24], %s1800
          %s1803 = sshll.u32 [#allocation25], 4
          %s1804 = int_to_ptr.vmem [resolvable:$true] %s1803
          %1806 = dma.hbm_to_vmem [thread:$0]  %s47, 16, %s1804, [#allocation24]
        $region96: #{tpu_custom_call.1} parent=11 // pred_fallthru
          _
        // Predicated region
        $region97: #{tpu_custom_call.1} parent=11 // pred_check
          %p1807 = pneg %p711
        $region98: #{tpu_custom_call.1} parent=11 // pred_check_branch
          %1809 = sbr.rel (%p1807) target = $region100
        $region99: #{tpu_custom_call.1} parent=11 // pred_region
          _
        $region100: #{tpu_custom_call.1} parent=11 // pred_fallthru
          _
        // Predicated region
        $region101: #{tpu_custom_call.1} parent=11 // pred_check
          %p1810 = pneg %p732
        $region102: #{tpu_custom_call.1} parent=11 // pred_check_branch
          %1812 = sbr.rel (%p1810) target = $region104
        $region103: #{tpu_custom_call.1} parent=11 // pred_region
          %s1814 = ssub.s32 16, 16
          %1815 = vsyncadd [#allocation27], %s1814
          %s1817 = sshll.u32 [#allocation26], 4
          %s1818 = int_to_ptr.vmem [resolvable:$true] %s1817
          %1820 = dma.hbm_to_vmem [thread:$0]  %s51, 16, %s1818, [#allocation27]
        $region104: #{tpu_custom_call.1} parent=11 // pred_fallthru
          _
        // Predicated region
        $region105: #{tpu_custom_call.1} parent=11 // pred_check
          %p1821 = pneg %p753
        $region106: #{tpu_custom_call.1} parent=11 // pred_check_branch
          %1823 = sbr.rel (%p1821) target = $region108
        $region107: #{tpu_custom_call.1} parent=11 // pred_region
          %s1825 = ssub.s32 4096, 4096
          %1826 = vsyncadd [#allocation27], %s1825
          %s1827 = sshll.u32 [#allocation28], 4
          %s1828 = int_to_ptr.vmem [resolvable:$true] %s1827
          %1833 = dma.hbm_to_vmem [thread:$0]  %s53, 4096, %s1828, [#allocation27], 128, 128, 8
        $region108: #{tpu_custom_call.1} parent=11 // pred_fallthru
          _
        // Predicated region
        $region109: #{tpu_custom_call.1} parent=11 // pred_check
          %p1834 = pneg %p774
        $region110: #{tpu_custom_call.1} parent=11 // pred_check_branch
          %1836 = sbr.rel (%p1834) target = $region112
        $region111: #{tpu_custom_call.1} parent=11 // pred_region
          %s1838 = ssub.s32 16, 16
          %1839 = vsyncadd [#allocation30], %s1838
          %s1841 = sshll.u32 [#allocation29], 4
          %s1842 = int_to_ptr.vmem [resolvable:$true] %s1841
          %1844 = dma.hbm_to_vmem [thread:$0]  %s55, 16, %s1842, [#allocation30]
        $region112: #{tpu_custom_call.1} parent=11 // pred_fallthru
          _
        // Predicated region
        $region113: #{tpu_custom_call.1} parent=11 // pred_check
          %p1845 = pneg %p795
        $region114: #{tpu_custom_call.1} parent=11 // pred_check_branch
          %1847 = sbr.rel (%p1845) target = $region116
        $region115: #{tpu_custom_call.1} parent=11 // pred_region
          %s1849 = ssub.s32 2048, 2048
          %1850 = vsyncadd [#allocation30], %s1849
          %s1851 = sshll.u32 [#allocation31], 4
          %s1852 = int_to_ptr.vmem [resolvable:$true] %s1851
          %1857 = dma.hbm_to_vmem [thread:$0]  %s57, 2048, %s1852, [#allocation30], 128, 128, 8
        $region116: #{tpu_custom_call.1} parent=11 // pred_fallthru
          _
        // Predicated region
        $region117: #{tpu_custom_call.1} parent=11 // pred_check
          %p1858 = pneg %p816
        $region118: #{tpu_custom_call.1} parent=11 // pred_check_branch
          %1860 = sbr.rel (%p1858) target = $region120
        $region119: #{tpu_custom_call.1} parent=11 // pred_region
          %s1862 = ssub.s32 16, 16
          %1863 = vsyncadd [#allocation33], %s1862
          %s1865 = sshll.u32 [#allocation32], 4
          %s1866 = int_to_ptr.vmem [resolvable:$true] %s1865
          %1868 = dma.hbm_to_vmem [thread:$0]  %s59, 16, %s1866, [#allocation33]
        $region120: #{tpu_custom_call.1} parent=11 // pred_fallthru
          _
        // Predicated region
        $region121: #{tpu_custom_call.1} parent=11 // pred_check
          %p1869 = pneg %p837
        $region122: #{tpu_custom_call.1} parent=11 // pred_check_branch
          %1871 = sbr.rel (%p1869) target = $region124
        $region123: #{tpu_custom_call.1} parent=11 // pred_region
          %s1873 = ssub.s32 2048, 2048
          %1874 = vsyncadd [#allocation33], %s1873
          %s1875 = sshll.u32 [#allocation34], 4
          %s1876 = int_to_ptr.vmem [resolvable:$true] %s1875
          %1881 = dma.hbm_to_vmem [thread:$0]  %s61, 2048, %s1876, [#allocation33], 128, 128, 8
        $region124: #{tpu_custom_call.1} parent=11 // pred_fallthru
          _
        // Predicated region
        $region125: #{tpu_custom_call.1} parent=11 // pred_check
          %p1882 = pneg %p858
        $region126: #{tpu_custom_call.1} parent=11 // pred_check_branch
          %1884 = sbr.rel (%p1882) target = $region128
        $region127: #{tpu_custom_call.1} parent=11 // pred_region
          _
        $region128: #{tpu_custom_call.1} parent=11 // pred_fallthru
          _
        // Predicated region
        $region129: #{tpu_custom_call.1} parent=11 // pred_check
          %p1885 = pneg %p879
        $region130: #{tpu_custom_call.1} parent=11 // pred_check_branch
          %1887 = sbr.rel (%p1885) target = $region132
        $region131: #{tpu_custom_call.1} parent=11 // pred_region
          %s1889 = ssub.s32 1024, 1024
          %1890 = vsyncadd [#allocation36], %s1889
          %s1891 = sshll.u32 [#allocation35], 4
          %s1892 = int_to_ptr.vmem [resolvable:$true] %s1891
          %1897 = dma.hbm_to_vmem [thread:$0]  %s65, 1024, %s1892, [#allocation36], 256, 256, 16
        $region132: #{tpu_custom_call.1} parent=11 // pred_fallthru
          _
        // Predicated region
        $region133: #{tpu_custom_call.1} parent=11 // pred_check
          %p1898 = pneg %p900
        $region134: #{tpu_custom_call.1} parent=11 // pred_check_branch
          %1900 = sbr.rel (%p1898) target = $region136
        $region135: #{tpu_custom_call.1} parent=11 // pred_region
          _
        $region136: #{tpu_custom_call.1} parent=11 // pred_fallthru
          _
        // Predicated region
        $region137: #{tpu_custom_call.1} parent=11 // pred_check
          %p1901 = pneg %p921
        $region138: #{tpu_custom_call.1} parent=11 // pred_check_branch
          %1903 = sbr.rel (%p1901) target = $region140
        $region139: #{tpu_custom_call.1} parent=11 // pred_region
          _
        $region140: #{tpu_custom_call.1} parent=11 // pred_fallthru
          _
        // Predicated region
        $region141: #{tpu_custom_call.1} parent=11 // pred_check
          %p1904 = pneg %p942
        $region142: #{tpu_custom_call.1} parent=11 // pred_check_branch
          %1906 = sbr.rel (%p1904) target = $region144
        $region143: #{tpu_custom_call.1} parent=11 // pred_region
          _
        $region144: #{tpu_custom_call.1} parent=11 // pred_fallthru
          _
        // Predicated region
        $region145: #{tpu_custom_call.1} parent=11 // pred_check
          %p1907 = pneg %p963
        $region146: #{tpu_custom_call.1} parent=11 // pred_check_branch
          %1909 = sbr.rel (%p1907) target = $region148
        $region147: #{tpu_custom_call.1} parent=11 // pred_region
          %s1911 = ssub.s32 8192, 8192
          %1912 = vsyncadd [#allocation36], %s1911
          %s1913 = sshll.u32 [#allocation37], 4
          %s1914 = int_to_ptr.vmem [resolvable:$true] %s1913
          %1919 = dma.hbm_to_vmem [thread:$0]  %s73, 8192, %s1914, [#allocation36], 256, 256, 16
        $region148: #{tpu_custom_call.1} parent=11 // pred_fallthru
          _
        // Predicated region
        $region149: #{tpu_custom_call.1} parent=11 // pred_check
          %p1920 = pneg %p984
        $region150: #{tpu_custom_call.1} parent=11 // pred_check_branch
          %1922 = sbr.rel (%p1920) target = $region152
        $region151: #{tpu_custom_call.1} parent=11 // pred_region
          %s1924 = ssub.s32 16, 16
          %1925 = vsyncadd [#allocation39], %s1924
          %s1927 = sshll.u32 [#allocation38], 4
          %s1928 = int_to_ptr.vmem [resolvable:$true] %s1927
          %1930 = dma.hbm_to_vmem [thread:$0]  %s75, 16, %s1928, [#allocation39]
        $region152: #{tpu_custom_call.1} parent=11 // pred_fallthru
          _
        // Predicated region
        $region153: #{tpu_custom_call.1} parent=11 // pred_check
          %p1931 = pneg %p1005
        $region154: #{tpu_custom_call.1} parent=11 // pred_check_branch
          %1933 = sbr.rel (%p1931) target = $region156
        $region155: #{tpu_custom_call.1} parent=11 // pred_region
          %s1935 = ssub.s32 256, 256
          %1936 = vsyncadd [#allocation39], %s1935
          %s1937 = sshll.u32 [#allocation40], 4
          %s1938 = int_to_ptr.vmem [resolvable:$true] %s1937
          %1943 = dma.hbm_to_vmem [thread:$0]  %s77, 256, %s1938, [#allocation39], 128, 128, 8
        $region156: #{tpu_custom_call.1} parent=11 // pred_fallthru
          _
        // Predicated region
        $region157: #{tpu_custom_call.1} parent=11 // pred_check
          %p1944 = pneg %p1026
        $region158: #{tpu_custom_call.1} parent=11 // pred_check_branch
          %1946 = sbr.rel (%p1944) target = $region160
        $region159: #{tpu_custom_call.1} parent=11 // pred_region
          %s1948 = ssub.s32 16, 16
          %1949 = vsyncadd [#allocation42], %s1948
          %s1951 = sshll.u32 [#allocation41], 4
          %s1952 = int_to_ptr.vmem [resolvable:$true] %s1951
          %1954 = dma.hbm_to_vmem [thread:$0]  %s79, 16, %s1952, [#allocation42]
        $region160: #{tpu_custom_call.1} parent=11 // pred_fallthru
          _
        // Predicated region
        $region161: #{tpu_custom_call.1} parent=11 // pred_check
          %p1955 = pneg %p1047
        $region162: #{tpu_custom_call.1} parent=11 // pred_check_branch
          %1957 = sbr.rel (%p1955) target = $region164
        $region163: #{tpu_custom_call.1} parent=11 // pred_region
          %s1959 = ssub.s32 512, 512
          %1960 = vsyncadd [#allocation42], %s1959
          %s1961 = sshll.u32 [#allocation43], 4
          %s1962 = int_to_ptr.vmem [resolvable:$true] %s1961
          %1967 = dma.hbm_to_vmem [thread:$0]  %s81, 512, %s1962, [#allocation42], 128, 128, 8
        $region164: #{tpu_custom_call.1} parent=11 // pred_fallthru
          _
        // Predicated region
        $region165: #{tpu_custom_call.1} parent=11 // pred_check
          %p1968 = pneg %p1068
        $region166: #{tpu_custom_call.1} parent=11 // pred_check_branch
          %1970 = sbr.rel (%p1968) target = $region168
        $region167: #{tpu_custom_call.1} parent=11 // pred_region
          %s1972 = ssub.s32 16, 16
          %1973 = vsyncadd [#allocation45], %s1972
          %s1975 = sshll.u32 [#allocation44], 4
          %s1976 = int_to_ptr.vmem [resolvable:$true] %s1975
          %1978 = dma.hbm_to_vmem [thread:$0]  %s83, 16, %s1976, [#allocation45]
        $region168: #{tpu_custom_call.1} parent=11 // pred_fallthru
          _
        // Predicated region
        $region169: #{tpu_custom_call.1} parent=11 // pred_check
          %p1979 = pneg %p1089
        $region170: #{tpu_custom_call.1} parent=11 // pred_check_branch
          %1981 = sbr.rel (%p1979) target = $region172
        $region171: #{tpu_custom_call.1} parent=11 // pred_region
          _
        $region172: #{tpu_custom_call.1} parent=11 // pred_fallthru
          _
        // Predicated region
        $region173: #{tpu_custom_call.1} parent=11 // pred_check
          %p1982 = pneg %p1110
        $region174: #{tpu_custom_call.1} parent=11 // pred_check_branch
          %1984 = sbr.rel (%p1982) target = $region176
        $region175: #{tpu_custom_call.1} parent=11 // pred_region
          %s1986 = ssub.s32 16, 16
          %1987 = vsyncadd [#allocation45], %s1986
          %s1989 = sshll.u32 [#allocation46], 4
          %s1990 = int_to_ptr.vmem [resolvable:$true] %s1989
          %1992 = dma.hbm_to_vmem [thread:$0]  %s87, 16, %s1990, [#allocation45]
        $region176: #{tpu_custom_call.1} parent=11 // pred_fallthru
          _
        // Predicated region
        $region177: #{tpu_custom_call.1} parent=11 // pred_check
          %p1993 = pneg %p1131
        $region178: #{tpu_custom_call.1} parent=11 // pred_check_branch
          %1995 = sbr.rel (%p1993) target = $region180
        $region179: #{tpu_custom_call.1} parent=11 // pred_region
          %s1997 = ssub.s32 1024, 1024
          %1998 = vsyncadd [#allocation48], %s1997
          %s1999 = sshll.u32 [#allocation47], 4
          %s2000 = int_to_ptr.vmem [resolvable:$true] %s1999
          %2005 = dma.hbm_to_vmem [thread:$0]  %s89, 1024, %s2000, [#allocation48], 128, 128, 8
        $region180: #{tpu_custom_call.1} parent=11 // pred_fallthru
          _
        // Predicated region
        $region181: #{tpu_custom_call.1} parent=11 // pred_check
          %p2006 = pneg %p1152
        $region182: #{tpu_custom_call.1} parent=11 // pred_check_branch
          %2008 = sbr.rel (%p2006) target = $region184
        $region183: #{tpu_custom_call.1} parent=11 // pred_region
          %s2010 = ssub.s32 16, 16
          %2011 = vsyncadd [#allocation48], %s2010
          %s2013 = sshll.u32 [#allocation49], 4
          %s2014 = int_to_ptr.vmem [resolvable:$true] %s2013
          %2016 = dma.hbm_to_vmem [thread:$0]  %s91, 16, %s2014, [#allocation48]
        $region184: #{tpu_custom_call.1} parent=11 // pred_fallthru
          _
        // Predicated region
        $region185: #{tpu_custom_call.1} parent=11 // pred_check
          %p2017 = pneg %p1173
        $region186: #{tpu_custom_call.1} parent=11 // pred_check_branch
          %2019 = sbr.rel (%p2017) target = $region188
        $region187: #{tpu_custom_call.1} parent=11 // pred_region
          %s2021 = ssub.s32 2048, 2048
          %2022 = vsyncadd [#allocation51], %s2021
          %s2023 = sshll.u32 [#allocation50], 4
          %s2024 = int_to_ptr.vmem [resolvable:$true] %s2023
          %2029 = dma.hbm_to_vmem [thread:$0]  %s93, 2048, %s2024, [#allocation51], 128, 128, 8
        $region188: #{tpu_custom_call.1} parent=11 // pred_fallthru
          _
        // Predicated region
        $region189: #{tpu_custom_call.1} parent=11 // pred_check
          %p2030 = pneg %p1194
        $region190: #{tpu_custom_call.1} parent=11 // pred_check_branch
          %2032 = sbr.rel (%p2030) target = $region192
        $region191: #{tpu_custom_call.1} parent=11 // pred_region
          %s2034 = ssub.s32 2048, 2048
          %2035 = vsyncadd [#allocation51], %s2034
          %s2036 = sshll.u32 [#allocation52], 4
          %s2037 = int_to_ptr.vmem [resolvable:$true] %s2036
          %2042 = dma.hbm_to_vmem [thread:$0]  %s95, 2048, %s2037, [#allocation51], 128, 128, 8
        $region192: #{tpu_custom_call.1} parent=11 // pred_fallthru
          _
        // Predicated region
        $region193: #{tpu_custom_call.1} parent=11 // pred_check
          %p2043 = pneg %p1215
        $region194: #{tpu_custom_call.1} parent=11 // pred_check_branch
          %2045 = sbr.rel (%p2043) target = $region196
        $region195: #{tpu_custom_call.1} parent=11 // pred_region
          %s2047 = ssub.s32 16, 16
          %2048 = vsyncadd [#allocation54], %s2047
          %s2050 = sshll.u32 [#allocation53], 4
          %s2051 = int_to_ptr.vmem [resolvable:$true] %s2050
          %2053 = dma.hbm_to_vmem [thread:$0]  %s97, 16, %s2051, [#allocation54]
        $region196: #{tpu_custom_call.1} parent=11 // pred_fallthru
          _
        // Predicated region
        $region197: #{tpu_custom_call.1} parent=11 // pred_check
          %p2054 = pneg %p1236
        $region198: #{tpu_custom_call.1} parent=11 // pred_check_branch
          %2056 = sbr.rel (%p2054) target = $region200
        $region199: #{tpu_custom_call.1} parent=11 // pred_region
          %s2058 = ssub.s32 2048, 2048
          %2059 = vsyncadd [#allocation54], %s2058
          %s2060 = sshll.u32 [#allocation55], 4
          %s2061 = int_to_ptr.vmem [resolvable:$true] %s2060
          %2066 = dma.hbm_to_vmem [thread:$0]  %s99, 2048, %s2061, [#allocation54], 128, 128, 8
        $region200: #{tpu_custom_call.1} parent=11 // pred_fallthru
          _
        // Predicated region
        $region201: #{tpu_custom_call.1} parent=11 // pred_check
          %p2067 = pneg %p1257
        $region202: #{tpu_custom_call.1} parent=11 // pred_check_branch
          %2069 = sbr.rel (%p2067) target = $region204
        $region203: #{tpu_custom_call.1} parent=11 // pred_region
          %s2071 = ssub.s32 16, 16
          %2072 = vsyncadd [#allocation57], %s2071
          %s2074 = sshll.u32 [#allocation56], 4
          %s2075 = int_to_ptr.vmem [resolvable:$true] %s2074
          %2077 = dma.hbm_to_vmem [thread:$0]  %s101, 16, %s2075, [#allocation57]
        $region204: #{tpu_custom_call.1} parent=11 // pred_fallthru
          _
        // Predicated region
        $region205: #{tpu_custom_call.1} parent=11 // pred_check
          %p2078 = pneg %p1278
        $region206: #{tpu_custom_call.1} parent=11 // pred_check_branch
          %2080 = sbr.rel (%p2078) target = $region208
        $region207: #{tpu_custom_call.1} parent=11 // pred_region
          %s2082 = ssub.s32 16, 16
          %2083 = vsyncadd [#allocation57], %s2082
          %s2085 = sshll.u32 [#allocation58], 4
          %s2086 = int_to_ptr.vmem [resolvable:$true] %s2085
          %2088 = dma.hbm_to_vmem [thread:$0]  %s103, 16, %s2086, [#allocation57]
        $region208: #{tpu_custom_call.1} parent=11 // pred_fallthru
          _
        // Predicated region
        $region209: #{tpu_custom_call.1} parent=11 // pred_check
          %p2089 = pneg %p1299
        $region210: #{tpu_custom_call.1} parent=11 // pred_check_branch
          %2091 = sbr.rel (%p2089) target = $region212
        $region211: #{tpu_custom_call.1} parent=11 // pred_region
          _
        $region212: #{tpu_custom_call.1} parent=11 // pred_fallthru
          _
        // Predicated region
        $region213: #{tpu_custom_call.1} parent=11 // pred_check
          %p2092 = pneg %p1320
        $region214: #{tpu_custom_call.1} parent=11 // pred_check_branch
          %2094 = sbr.rel (%p2092) target = $region216
        $region215: #{tpu_custom_call.1} parent=11 // pred_region
          %s2096 = ssub.s32 512, 512
          %2097 = vsyncadd [#allocation60], %s2096
          %s2098 = sshll.u32 [#allocation59], 4
          %s2099 = int_to_ptr.vmem [resolvable:$true] %s2098
          %2104 = dma.hbm_to_vmem [thread:$0]  %s107, 512, %s2099, [#allocation60], 256, 256, 16
        $region216: #{tpu_custom_call.1} parent=11 // pred_fallthru
          _
        // Predicated region
        $region217: #{tpu_custom_call.1} parent=11 // pred_check
          %p2105 = pneg %p1341
        $region218: #{tpu_custom_call.1} parent=11 // pred_check_branch
          %2107 = sbr.rel (%p2105) target = $region220
        $region219: #{tpu_custom_call.1} parent=11 // pred_region
          _
        $region220: #{tpu_custom_call.1} parent=11 // pred_fallthru
          _
        // Predicated region
        $region221: #{tpu_custom_call.1} parent=11 // pred_check
          %p2108 = pneg %p1362
        $region222: #{tpu_custom_call.1} parent=11 // pred_check_branch
          %2110 = sbr.rel (%p2108) target = $region224
        $region223: #{tpu_custom_call.1} parent=11 // pred_region
          _
        $region224: #{tpu_custom_call.1} parent=11 // pred_fallthru
          _
        // Predicated region
        $region225: #{tpu_custom_call.1} parent=11 // pred_check
          %p2111 = pneg %p1383
        $region226: #{tpu_custom_call.1} parent=11 // pred_check_branch
          %2113 = sbr.rel (%p2111) target = $region228
        $region227: #{tpu_custom_call.1} parent=11 // pred_region
          %s2115 = ssub.s32 32, 32
          %2116 = vsyncadd [#allocation60], %s2115
          %s2118 = sshll.u32 [#allocation61], 4
          %s2119 = int_to_ptr.vmem [resolvable:$true] %s2118
          %2121 = dma.hbm_to_vmem [thread:$0]  %s113, 32, %s2119, [#allocation60]
        $region228: #{tpu_custom_call.1} parent=11 // pred_fallthru
          _
        // Predicated region
        $region229: #{tpu_custom_call.1} parent=11 // pred_check
          %p2122 = pneg %p1404
        $region230: #{tpu_custom_call.1} parent=11 // pred_check_branch
          %2124 = sbr.rel (%p2122) target = $region232
        $region231: #{tpu_custom_call.1} parent=11 // pred_region
          _
        $region232: #{tpu_custom_call.1} parent=11 // pred_fallthru
          _
        // Predicated region
        $region233: #{tpu_custom_call.1} parent=11 // pred_check
          %p2125 = pneg %p1425
        $region234: #{tpu_custom_call.1} parent=11 // pred_check_branch
          %2127 = sbr.rel (%p2125) target = $region236
        $region235: #{tpu_custom_call.1} parent=11 // pred_region
          %s2129 = ssub.s32 32, 32
          %2130 = vsyncadd [#allocation63], %s2129
          %s2132 = sshll.u32 [#allocation62], 4
          %s2133 = int_to_ptr.vmem [resolvable:$true] %s2132
          %2135 = dma.hbm_to_vmem [thread:$0]  %s117, 32, %s2133, [#allocation63]
        $region236: #{tpu_custom_call.1} parent=11 // pred_fallthru
          _
        // Predicated region
        $region237: #{tpu_custom_call.1} parent=11 // pred_check
          %p2136 = pneg %p1446
        $region238: #{tpu_custom_call.1} parent=11 // pred_check_branch
          %2138 = sbr.rel (%p2136) target = $region240
        $region239: #{tpu_custom_call.1} parent=11 // pred_region
          %s2140 = ssub.s32 4096, 4096
          %2141 = vsyncadd [#allocation63], %s2140
          %s2142 = sshll.u32 [#allocation64], 4
          %s2143 = int_to_ptr.vmem [resolvable:$true] %s2142
          %2148 = dma.hbm_to_vmem [thread:$0]  %s119, 4096, %s2143, [#allocation63], 256, 256, 16
        $region240: #{tpu_custom_call.1} parent=11 // pred_fallthru
          _
        // Predicated region
        $region241: #{tpu_custom_call.1} parent=11 // pred_check
          %p2149 = pneg %p1467
        $region242: #{tpu_custom_call.1} parent=11 // pred_check_branch
          %2151 = sbr.rel (%p2149) target = $region244
        $region243: #{tpu_custom_call.1} parent=11 // pred_region
          _
        $region244: #{tpu_custom_call.1} parent=11 // pred_fallthru
          _
        // Predicated region
        $region245: #{tpu_custom_call.1} parent=11 // pred_check
          %p2152 = pneg %p1488
        $region246: #{tpu_custom_call.1} parent=11 // pred_check_branch
          %2154 = sbr.rel (%p2152) target = $region248
        $region247: #{tpu_custom_call.1} parent=11 // pred_region
          %s2156 = ssub.s32 8192, 8192
          %2157 = vsyncadd [#allocation66], %s2156
          %s2158 = sshll.u32 [#allocation65], 4
          %s2159 = int_to_ptr.vmem [resolvable:$true] %s2158
          %2164 = dma.hbm_to_vmem [thread:$0]  %s123, 8192, %s2159, [#allocation66], 256, 256, 16
        $region248: #{tpu_custom_call.1} parent=11 // pred_fallthru
          _
        // Predicated region
        $region249: #{tpu_custom_call.1} parent=11 // pred_check
          %p2165 = pneg %p1509
        $region250: #{tpu_custom_call.1} parent=11 // pred_check_branch
          %2167 = sbr.rel (%p2165) target = $region252
        $region251: #{tpu_custom_call.1} parent=11 // pred_region
          %s2169 = ssub.s32 8192, 8192
          %2170 = vsyncadd [#allocation66], %s2169
          %s2171 = sshll.u32 [#allocation67], 4
          %s2172 = int_to_ptr.vmem [resolvable:$true] %s2171
          %2177 = dma.hbm_to_vmem [thread:$0]  %s125, 8192, %s2172, [#allocation66], 256, 256, 16
        $region252: #{tpu_custom_call.1} parent=11 // pred_fallthru
          _
        // Predicated region
        $region253: #{tpu_custom_call.1} parent=11 // pred_check
          %p2178 = pneg %p1530
        $region254: #{tpu_custom_call.1} parent=11 // pred_check_branch
          %2180 = sbr.rel (%p2178) target = $region256
        $region255: #{tpu_custom_call.1} parent=11 // pred_region
          _
        $region256: #{tpu_custom_call.1} parent=11 // pred_fallthru
          _
        // Predicated region
        $region257: #{tpu_custom_call.1} parent=11 // pred_check
          %p2181 = pneg %p1551
        $region258: #{tpu_custom_call.1} parent=11 // pred_check_branch
          %2183 = sbr.rel (%p2181) target = $region260
        $region259: #{tpu_custom_call.1} parent=11 // pred_region
          %s2185 = ssub.s32 8192, 8192
          %2186 = vsyncadd [#allocation69], %s2185
          %s2187 = sshll.u32 [#allocation68], 4
          %s2188 = int_to_ptr.vmem [resolvable:$true] %s2187
          %2193 = dma.hbm_to_vmem [thread:$0]  %s129, 8192, %s2188, [#allocation69], 256, 256, 16
        $region260: #{tpu_custom_call.1} parent=11 // pred_fallthru
          _
        // Predicated region
        $region261: #{tpu_custom_call.1} parent=11 // pred_check
          %p2194 = pneg %p1572
        $region262: #{tpu_custom_call.1} parent=11 // pred_check_branch
          %2196 = sbr.rel (%p2194) target = $region264
        $region263: #{tpu_custom_call.1} parent=11 // pred_region
          _
        $region264: #{tpu_custom_call.1} parent=11 // pred_fallthru
          _
        // Predicated region
        $region265: #{tpu_custom_call.1} parent=11 // pred_check
          %p2197 = pneg %p1593
        $region266: #{tpu_custom_call.1} parent=11 // pred_check_branch
          %2199 = sbr.rel (%p2197) target = $region268
        $region267: #{tpu_custom_call.1} parent=11 // pred_region
          _
        $region268: #{tpu_custom_call.1} parent=11 // pred_fallthru
          _
      $region12: #{tpu_custom_call.1} parent=5 // pred_fallthru
        _
      %p2200 = scmp.lt.s32.totalorder %s171, 2
      // Predicated region
      $region269: #{tpu_custom_call.1} parent=5 // pred_check
        %p2201 = pneg %p2200
      $region270: #{tpu_custom_call.1} parent=5 // pred_check_branch
        %2203 = sbr.rel (%p2201) target = $region272
      $region271: #{tpu_custom_call.1} parent=5 // pred_region
        // Predicated region
        $region273: #{tpu_custom_call.1} parent=271 // pred_check
          %p2204 = pneg %p191
        $region274: #{tpu_custom_call.1} parent=271 // pred_check_branch
          %2206 = sbr.rel (%p2204) target = $region276
        $region275: #{tpu_custom_call.1} parent=271 // pred_region
          %s2207 = sand.u32 %s181, 1
          %s2208 = scalar_lea.sflag [#allocation3], %s2207
          %s2209 = sand.u32 %s181, 1
          %s2210 = smul.addr %s2209, 16
          %s2211 = scalar_lea.vmem [#allocation2], %s2210
          %s2213 = ssub.s32 256, 256
          %2214 = vsyncadd %s2208, %s2213
          %s2215 = smul.addr %s171, 2
          %s2216 = smul.addr %s2215, 128
          %s2217 = scalar_lea.hbm %s1, %s2216
          %s2219 = sshll.u32 %s2211, 4
          %s2220 = int_to_ptr.vmem [resolvable:$true] %s2219
          %2222 = dma.hbm_to_vmem [thread:$0]  %s2217, 256, %s2220, %s2208
        $region276: #{tpu_custom_call.1} parent=271 // pred_fallthru
          _
        // Predicated region
        $region277: #{tpu_custom_call.1} parent=271 // pred_check
          %p2223 = pneg %p217
        $region278: #{tpu_custom_call.1} parent=271 // pred_check_branch
          %2225 = sbr.rel (%p2223) target = $region280
        $region279: #{tpu_custom_call.1} parent=271 // pred_region
          %p2226 = scmp.lt.s32.totalorder %s171, 1
          %s2227 = scalar_select %p2226, %s171, 1
          %s2228 = smul.addr %s2227, 8
          %s2229 = scalar_lea.vmem %s3, %s2228
        $region280: #{tpu_custom_call.1} parent=271 // pred_fallthru
          _
        // Predicated region
        $region281: #{tpu_custom_call.1} parent=271 // pred_check
          %p2230 = pneg %p243
        $region282: #{tpu_custom_call.1} parent=271 // pred_check_branch
          %2232 = sbr.rel (%p2230) target = $region284
        $region283: #{tpu_custom_call.1} parent=271 // pred_region
          %s2233 = sand.u32 %s171, 1
          %s2234 = scalar_lea.sflag [#allocation6], %s2233
          %s2235 = sand.u32 %s233, 1
          %s2236 = smul.addr %s2235, 8
          %s2237 = scalar_lea.vmem [#allocation5], %s2236
          %s2239 = ssub.s32 128, 128
          %2240 = vsyncadd %s2234, %s2239
          %s2241 = smul.addr %s171, 128
          %s2242 = scalar_lea.hbm %s5, %s2241
          %s2244 = sshll.u32 %s2237, 4
          %s2245 = int_to_ptr.vmem [resolvable:$true] %s2244
          %2247 = dma.hbm_to_vmem [thread:$0]  %s2242, 128, %s2245, %s2234
        $region284: #{tpu_custom_call.1} parent=271 // pred_fallthru
          _
      $region272: #{tpu_custom_call.1} parent=5 // pred_fallthru
        _
      %p2248 = scmp.le.s32.totalorder 1, %s171
      %p2249 = scmp.lt.s32.totalorder %s171, 3
      %p2250 = pnand %p2248, %p2249
      %p2251 = pneg %p2250
      // Predicated region
      $region285: #{tpu_custom_call.1} parent=5 // pred_check
        _
      $region286: #{tpu_custom_call.1} parent=5 // pred_check_branch
        %2253 = sbr.rel (%p2250) target = $region288
      $region287: #{tpu_custom_call.1} parent=5 // pred_region
        %s2254 = ssub.s32 %s171, 1
        %s2255 = sand.u32 %s184, 1
        %s2256 = scalar_lea.sflag [#allocation3], %s2255
        %s2257 = sand.u32 %s184, 1
        %s2258 = smul.addr %s2257, 16
        %s2259 = scalar_lea.vmem [#allocation2], %s2258
        // Predicated region
        $region289: #{tpu_custom_call.1} parent=287 // pred_check
          %p2260 = pneg %p197
        $region290: #{tpu_custom_call.1} parent=287 // pred_check_branch
          %2262 = sbr.rel (%p2260) target = $region292
        $region291: #{tpu_custom_call.1} parent=287 // pred_region
          %2263 = dma.done %s2256, 256
        $region292: #{tpu_custom_call.1} parent=287 // pred_fallthru
          _
        %s2264 = sand.u32 %s176, 1
        %s2265 = scalar_lea.sflag [#allocation6], %s2264
        %s2266 = sand.u32 %s236, 1
        %s2267 = smul.addr %s2266, 8
        %s2268 = scalar_lea.vmem [#allocation5], %s2267
        // Predicated region
        $region293: #{tpu_custom_call.1} parent=287 // pred_check
          %p2269 = pneg %p249
        $region294: #{tpu_custom_call.1} parent=287 // pred_check_branch
          %2271 = sbr.rel (%p2269) target = $region296
        $region295: #{tpu_custom_call.1} parent=287 // pred_region
          %2272 = dma.done %s2265, 128
        $region296: #{tpu_custom_call.1} parent=287 // pred_fallthru
          _
        // Predicated region
        $region297: #{tpu_custom_call.1} parent=287 // pred_check
          %p2273 = pneg %p270
        $region298: #{tpu_custom_call.1} parent=287 // pred_check_branch
          %2275 = sbr.rel (%p2273) target = $region300
        $region299: #{tpu_custom_call.1} parent=287 // pred_region
          %2276 = dma.done [#allocation6], 16
        $region300: #{tpu_custom_call.1} parent=287 // pred_fallthru
          _
        // Predicated region
        $region301: #{tpu_custom_call.1} parent=287 // pred_check
          %p2277 = pneg %p291
        $region302: #{tpu_custom_call.1} parent=287 // pred_check_branch
          %2279 = sbr.rel (%p2277) target = $region304
        $region303: #{tpu_custom_call.1} parent=287 // pred_region
          %2280 = dma.done [#allocation9], 512
        $region304: #{tpu_custom_call.1} parent=287 // pred_fallthru
          _
        // Predicated region
        $region305: #{tpu_custom_call.1} parent=287 // pred_check
          %p2281 = pneg %p312
        $region306: #{tpu_custom_call.1} parent=287 // pred_check_branch
          %2283 = sbr.rel (%p2281) target = $region308
        $region307: #{tpu_custom_call.1} parent=287 // pred_region
          %2284 = dma.done [#allocation9], 16
        $region308: #{tpu_custom_call.1} parent=287 // pred_fallthru
          _
        // Predicated region
        $region309: #{tpu_custom_call.1} parent=287 // pred_check
          %p2285 = pneg %p354
        $region310: #{tpu_custom_call.1} parent=287 // pred_check_branch
          %2287 = sbr.rel (%p2285) target = $region312
        $region311: #{tpu_custom_call.1} parent=287 // pred_region
          %2288 = dma.done [#allocation12], 16
        $region312: #{tpu_custom_call.1} parent=287 // pred_fallthru
          _
        // Predicated region
        $region313: #{tpu_custom_call.1} parent=287 // pred_check
          %p2289 = pneg %p396
        $region314: #{tpu_custom_call.1} parent=287 // pred_check_branch
          %2291 = sbr.rel (%p2289) target = $region316
        $region315: #{tpu_custom_call.1} parent=287 // pred_region
          %2292 = dma.done [#allocation12], 16
        $region316: #{tpu_custom_call.1} parent=287 // pred_fallthru
          _
        // Predicated region
        $region317: #{tpu_custom_call.1} parent=287 // pred_check
          %p2293 = pneg %p438
        $region318: #{tpu_custom_call.1} parent=287 // pred_check_branch
          %2295 = sbr.rel (%p2293) target = $region320
        $region319: #{tpu_custom_call.1} parent=287 // pred_region
          %2296 = dma.done [#allocation15], 32
        $region320: #{tpu_custom_call.1} parent=287 // pred_fallthru
          _
        // Predicated region
        $region321: #{tpu_custom_call.1} parent=287 // pred_check
          %p2297 = pneg %p459
        $region322: #{tpu_custom_call.1} parent=287 // pred_check_branch
          %2299 = sbr.rel (%p2297) target = $region324
        $region323: #{tpu_custom_call.1} parent=287 // pred_region
          %2300 = dma.done [#allocation15], 1024
        $region324: #{tpu_custom_call.1} parent=287 // pred_fallthru
          _
        // Predicated region
        $region325: #{tpu_custom_call.1} parent=287 // pred_check
          %p2301 = pneg %p480
        $region326: #{tpu_custom_call.1} parent=287 // pred_check_branch
          %2303 = sbr.rel (%p2301) target = $region328
        $region327: #{tpu_custom_call.1} parent=287 // pred_region
          %2304 = dma.done [#allocation18], 32
        $region328: #{tpu_custom_call.1} parent=287 // pred_fallthru
          _
        // Predicated region
        $region329: #{tpu_custom_call.1} parent=287 // pred_check
          %p2305 = pneg %p522
        $region330: #{tpu_custom_call.1} parent=287 // pred_check_branch
          %2307 = sbr.rel (%p2305) target = $region332
        $region331: #{tpu_custom_call.1} parent=287 // pred_region
          %2308 = dma.done [#allocation18], 32
        $region332: #{tpu_custom_call.1} parent=287 // pred_fallthru
          _
        // Predicated region
        $region333: #{tpu_custom_call.1} parent=287 // pred_check
          %p2309 = pneg %p564
        $region334: #{tpu_custom_call.1} parent=287 // pred_check_branch
          %2311 = sbr.rel (%p2309) target = $region336
        $region335: #{tpu_custom_call.1} parent=287 // pred_region
          %2312 = dma.done [#allocation21], 32
        $region336: #{tpu_custom_call.1} parent=287 // pred_fallthru
          _
        // Predicated region
        $region337: #{tpu_custom_call.1} parent=287 // pred_check
          %p2313 = pneg %p648
        $region338: #{tpu_custom_call.1} parent=287 // pred_check_branch
          %2315 = sbr.rel (%p2313) target = $region340
        $region339: #{tpu_custom_call.1} parent=287 // pred_region
          %2316 = dma.done [#allocation21], 16
        $region340: #{tpu_custom_call.1} parent=287 // pred_fallthru
          _
        // Predicated region
        $region341: #{tpu_custom_call.1} parent=287 // pred_check
          %p2317 = pneg %p669
        $region342: #{tpu_custom_call.1} parent=287 // pred_check_branch
          %2319 = sbr.rel (%p2317) target = $region344
        $region343: #{tpu_custom_call.1} parent=287 // pred_region
          %2320 = dma.done [#allocation24], 512
        $region344: #{tpu_custom_call.1} parent=287 // pred_fallthru
          _
        // Predicated region
        $region345: #{tpu_custom_call.1} parent=287 // pred_check
          %p2321 = pneg %p690
        $region346: #{tpu_custom_call.1} parent=287 // pred_check_branch
          %2323 = sbr.rel (%p2321) target = $region348
        $region347: #{tpu_custom_call.1} parent=287 // pred_region
          %2324 = dma.done [#allocation24], 16
        $region348: #{tpu_custom_call.1} parent=287 // pred_fallthru
          _
        // Predicated region
        $region349: #{tpu_custom_call.1} parent=287 // pred_check
          %p2325 = pneg %p732
        $region350: #{tpu_custom_call.1} parent=287 // pred_check_branch
          %2327 = sbr.rel (%p2325) target = $region352
        $region351: #{tpu_custom_call.1} parent=287 // pred_region
          %2328 = dma.done [#allocation27], 16
        $region352: #{tpu_custom_call.1} parent=287 // pred_fallthru
          _
        // Predicated region
        $region353: #{tpu_custom_call.1} parent=287 // pred_check
          %p2329 = pneg %p753
        $region354: #{tpu_custom_call.1} parent=287 // pred_check_branch
          %2331 = sbr.rel (%p2329) target = $region356
        $region355: #{tpu_custom_call.1} parent=287 // pred_region
          %2332 = dma.done [#allocation27], 4096
        $region356: #{tpu_custom_call.1} parent=287 // pred_fallthru
          _
        // Predicated region
        $region357: #{tpu_custom_call.1} parent=287 // pred_check
          %p2333 = pneg %p774
        $region358: #{tpu_custom_call.1} parent=287 // pred_check_branch
          %2335 = sbr.rel (%p2333) target = $region360
        $region359: #{tpu_custom_call.1} parent=287 // pred_region
          %2336 = dma.done [#allocation30], 16
        $region360: #{tpu_custom_call.1} parent=287 // pred_fallthru
          _
        // Predicated region
        $region361: #{tpu_custom_call.1} parent=287 // pred_check
          %p2337 = pneg %p795
        $region362: #{tpu_custom_call.1} parent=287 // pred_check_branch
          %2339 = sbr.rel (%p2337) target = $region364
        $region363: #{tpu_custom_call.1} parent=287 // pred_region
          %2340 = dma.done [#allocation30], 2048
        $region364: #{tpu_custom_call.1} parent=287 // pred_fallthru
          _
        // Predicated region
        $region365: #{tpu_custom_call.1} parent=287 // pred_check
          %p2341 = pneg %p816
        $region366: #{tpu_custom_call.1} parent=287 // pred_check_branch
          %2343 = sbr.rel (%p2341) target = $region368
        $region367: #{tpu_custom_call.1} parent=287 // pred_region
          %2344 = dma.done [#allocation33], 16
        $region368: #{tpu_custom_call.1} parent=287 // pred_fallthru
          _
        // Predicated region
        $region369: #{tpu_custom_call.1} parent=287 // pred_check
          %p2345 = pneg %p837
        $region370: #{tpu_custom_call.1} parent=287 // pred_check_branch
          %2347 = sbr.rel (%p2345) target = $region372
        $region371: #{tpu_custom_call.1} parent=287 // pred_region
          %2348 = dma.done [#allocation33], 2048
        $region372: #{tpu_custom_call.1} parent=287 // pred_fallthru
          _
        // Predicated region
        $region373: #{tpu_custom_call.1} parent=287 // pred_check
          %p2349 = pneg %p879
        $region374: #{tpu_custom_call.1} parent=287 // pred_check_branch
          %2351 = sbr.rel (%p2349) target = $region376
        $region375: #{tpu_custom_call.1} parent=287 // pred_region
          %2352 = dma.done [#allocation36], 1024
        $region376: #{tpu_custom_call.1} parent=287 // pred_fallthru
          _
        // Predicated region
        $region377: #{tpu_custom_call.1} parent=287 // pred_check
          %p2353 = pneg %p963
        $region378: #{tpu_custom_call.1} parent=287 // pred_check_branch
          %2355 = sbr.rel (%p2353) target = $region380
        $region379: #{tpu_custom_call.1} parent=287 // pred_region
          %2356 = dma.done [#allocation36], 8192
        $region380: #{tpu_custom_call.1} parent=287 // pred_fallthru
          _
        // Predicated region
        $region381: #{tpu_custom_call.1} parent=287 // pred_check
          %p2357 = pneg %p984
        $region382: #{tpu_custom_call.1} parent=287 // pred_check_branch
          %2359 = sbr.rel (%p2357) target = $region384
        $region383: #{tpu_custom_call.1} parent=287 // pred_region
          %2360 = dma.done [#allocation39], 16
        $region384: #{tpu_custom_call.1} parent=287 // pred_fallthru
          _
        // Predicated region
        $region385: #{tpu_custom_call.1} parent=287 // pred_check
          %p2361 = pneg %p1005
        $region386: #{tpu_custom_call.1} parent=287 // pred_check_branch
          %2363 = sbr.rel (%p2361) target = $region388
        $region387: #{tpu_custom_call.1} parent=287 // pred_region
          %2364 = dma.done [#allocation39], 256
        $region388: #{tpu_custom_call.1} parent=287 // pred_fallthru
          _
        // Predicated region
        $region389: #{tpu_custom_call.1} parent=287 // pred_check
          %p2365 = pneg %p1026
        $region390: #{tpu_custom_call.1} parent=287 // pred_check_branch
          %2367 = sbr.rel (%p2365) target = $region392
        $region391: #{tpu_custom_call.1} parent=287 // pred_region
          %2368 = dma.done [#allocation42], 16
        $region392: #{tpu_custom_call.1} parent=287 // pred_fallthru
          _
        // Predicated region
        $region393: #{tpu_custom_call.1} parent=287 // pred_check
          %p2369 = pneg %p1047
        $region394: #{tpu_custom_call.1} parent=287 // pred_check_branch
          %2371 = sbr.rel (%p2369) target = $region396
        $region395: #{tpu_custom_call.1} parent=287 // pred_region
          %2372 = dma.done [#allocation42], 512
        $region396: #{tpu_custom_call.1} parent=287 // pred_fallthru
          _
        // Predicated region
        $region397: #{tpu_custom_call.1} parent=287 // pred_check
          %p2373 = pneg %p1068
        $region398: #{tpu_custom_call.1} parent=287 // pred_check_branch
          %2375 = sbr.rel (%p2373) target = $region400
        $region399: #{tpu_custom_call.1} parent=287 // pred_region
          %2376 = dma.done [#allocation45], 16
        $region400: #{tpu_custom_call.1} parent=287 // pred_fallthru
          _
        // Predicated region
        $region401: #{tpu_custom_call.1} parent=287 // pred_check
          %p2377 = pneg %p1110
        $region402: #{tpu_custom_call.1} parent=287 // pred_check_branch
          %2379 = sbr.rel (%p2377) target = $region404
        $region403: #{tpu_custom_call.1} parent=287 // pred_region
          %2380 = dma.done [#allocation45], 16
        $region404: #{tpu_custom_call.1} parent=287 // pred_fallthru
          _
        // Predicated region
        $region405: #{tpu_custom_call.1} parent=287 // pred_check
          %p2381 = pneg %p1131
        $region406: #{tpu_custom_call.1} parent=287 // pred_check_branch
          %2383 = sbr.rel (%p2381) target = $region408
        $region407: #{tpu_custom_call.1} parent=287 // pred_region
          %2384 = dma.done [#allocation48], 1024
        $region408: #{tpu_custom_call.1} parent=287 // pred_fallthru
          _
        // Predicated region
        $region409: #{tpu_custom_call.1} parent=287 // pred_check
          %p2385 = pneg %p1152
        $region410: #{tpu_custom_call.1} parent=287 // pred_check_branch
          %2387 = sbr.rel (%p2385) target = $region412
        $region411: #{tpu_custom_call.1} parent=287 // pred_region
          %2388 = dma.done [#allocation48], 16
        $region412: #{tpu_custom_call.1} parent=287 // pred_fallthru
          _
        // Predicated region
        $region413: #{tpu_custom_call.1} parent=287 // pred_check
          %p2389 = pneg %p1173
        $region414: #{tpu_custom_call.1} parent=287 // pred_check_branch
          %2391 = sbr.rel (%p2389) target = $region416
        $region415: #{tpu_custom_call.1} parent=287 // pred_region
          %2392 = dma.done [#allocation51], 2048
        $region416: #{tpu_custom_call.1} parent=287 // pred_fallthru
          _
        // Predicated region
        $region417: #{tpu_custom_call.1} parent=287 // pred_check
          %p2393 = pneg %p1194
        $region418: #{tpu_custom_call.1} parent=287 // pred_check_branch
          %2395 = sbr.rel (%p2393) target = $region420
        $region419: #{tpu_custom_call.1} parent=287 // pred_region
          %2396 = dma.done [#allocation51], 2048
        $region420: #{tpu_custom_call.1} parent=287 // pred_fallthru
          _
        // Predicated region
        $region421: #{tpu_custom_call.1} parent=287 // pred_check
          %p2397 = pneg %p1215
        $region422: #{tpu_custom_call.1} parent=287 // pred_check_branch
          %2399 = sbr.rel (%p2397) target = $region424
        $region423: #{tpu_custom_call.1} parent=287 // pred_region
          %2400 = dma.done [#allocation54], 16
        $region424: #{tpu_custom_call.1} parent=287 // pred_fallthru
          _
        // Predicated region
        $region425: #{tpu_custom_call.1} parent=287 // pred_check
          %p2401 = pneg %p1236
        $region426: #{tpu_custom_call.1} parent=287 // pred_check_branch
          %2403 = sbr.rel (%p2401) target = $region428
        $region427: #{tpu_custom_call.1} parent=287 // pred_region
          %2404 = dma.done [#allocation54], 2048
        $region428: #{tpu_custom_call.1} parent=287 // pred_fallthru
          _
        // Predicated region
        $region429: #{tpu_custom_call.1} parent=287 // pred_check
          %p2405 = pneg %p1257
        $region430: #{tpu_custom_call.1} parent=287 // pred_check_branch
          %2407 = sbr.rel (%p2405) target = $region432
        $region431: #{tpu_custom_call.1} parent=287 // pred_region
          %2408 = dma.done [#allocation57], 16
        $region432: #{tpu_custom_call.1} parent=287 // pred_fallthru
          _
        // Predicated region
        $region433: #{tpu_custom_call.1} parent=287 // pred_check
          %p2409 = pneg %p1278
        $region434: #{tpu_custom_call.1} parent=287 // pred_check_branch
          %2411 = sbr.rel (%p2409) target = $region436
        $region435: #{tpu_custom_call.1} parent=287 // pred_region
          %2412 = dma.done [#allocation57], 16
        $region436: #{tpu_custom_call.1} parent=287 // pred_fallthru
          _
        // Predicated region
        $region437: #{tpu_custom_call.1} parent=287 // pred_check
          %p2413 = pneg %p1320
        $region438: #{tpu_custom_call.1} parent=287 // pred_check_branch
          %2415 = sbr.rel (%p2413) target = $region440
        $region439: #{tpu_custom_call.1} parent=287 // pred_region
          %2416 = dma.done [#allocation60], 512
        $region440: #{tpu_custom_call.1} parent=287 // pred_fallthru
          _
        // Predicated region
        $region441: #{tpu_custom_call.1} parent=287 // pred_check
          %p2417 = pneg %p1383
        $region442: #{tpu_custom_call.1} parent=287 // pred_check_branch
          %2419 = sbr.rel (%p2417) target = $region444
        $region443: #{tpu_custom_call.1} parent=287 // pred_region
          %2420 = dma.done [#allocation60], 32
        $region444: #{tpu_custom_call.1} parent=287 // pred_fallthru
          _
        // Predicated region
        $region445: #{tpu_custom_call.1} parent=287 // pred_check
          %p2421 = pneg %p1425
        $region446: #{tpu_custom_call.1} parent=287 // pred_check_branch
          %2423 = sbr.rel (%p2421) target = $region448
        $region447: #{tpu_custom_call.1} parent=287 // pred_region
          %2424 = dma.done [#allocation63], 32
        $region448: #{tpu_custom_call.1} parent=287 // pred_fallthru
          _
        // Predicated region
        $region449: #{tpu_custom_call.1} parent=287 // pred_check
          %p2425 = pneg %p1446
        $region450: #{tpu_custom_call.1} parent=287 // pred_check_branch
          %2427 = sbr.rel (%p2425) target = $region452
        $region451: #{tpu_custom_call.1} parent=287 // pred_region
          %2428 = dma.done [#allocation63], 4096
        $region452: #{tpu_custom_call.1} parent=287 // pred_fallthru
          _
        // Predicated region
        $region453: #{tpu_custom_call.1} parent=287 // pred_check
          %p2429 = pneg %p1488
        $region454: #{tpu_custom_call.1} parent=287 // pred_check_branch
          %2431 = sbr.rel (%p2429) target = $region456
        $region455: #{tpu_custom_call.1} parent=287 // pred_region
          %2432 = dma.done [#allocation66], 8192
        $region456: #{tpu_custom_call.1} parent=287 // pred_fallthru
          _
        // Predicated region
        $region457: #{tpu_custom_call.1} parent=287 // pred_check
          %p2433 = pneg %p1509
        $region458: #{tpu_custom_call.1} parent=287 // pred_check_branch
          %2435 = sbr.rel (%p2433) target = $region460
        $region459: #{tpu_custom_call.1} parent=287 // pred_region
          %2436 = dma.done [#allocation66], 8192
        $region460: #{tpu_custom_call.1} parent=287 // pred_fallthru
          _
        // Predicated region
        $region461: #{tpu_custom_call.1} parent=287 // pred_check
          %p2437 = pneg %p1551
        $region462: #{tpu_custom_call.1} parent=287 // pred_check_branch
          %2439 = sbr.rel (%p2437) target = $region464
        $region463: #{tpu_custom_call.1} parent=287 // pred_region
          %2440 = dma.done [#allocation69], 8192
        $region464: #{tpu_custom_call.1} parent=287 // pred_fallthru
          _
        %s2441 = sand.u32 %s184, 1
        %s2442 = scalar_lea.sflag [#allocation3], %s2441
        %s2443 = sand.u32 %s184, 1
        %s2444 = smul.addr %s2443, 16
        %s2445 = scalar_lea.vmem [#allocation2], %s2444
        %p2446 = pneg %p197
        %p2447 = pneg %p194
        %p2448 = scmp.lt.s32.totalorder %s176, 1
        %s2449 = scalar_select %p2448, %s176, 1
        %s2450 = smul.addr %s2449, 8
        %s2451 = scalar_lea.vmem %s3, %s2450
        %p2452 = pneg %p223
        %p2453 = pneg %p220
        %s2454 = sand.u32 %s176, 1
        %s2455 = scalar_lea.sflag [#allocation6], %s2454
        %s2456 = sand.u32 %s236, 1
        %s2457 = smul.addr %s2456, 8
        %s2458 = scalar_lea.vmem [#allocation5], %s2457
        %p2459 = pneg %p249
        %p2460 = pneg %p246
        %p2461 = pneg %p270
        %p2462 = pneg %p267
        %p2463 = pneg %p291
        %p2464 = pneg %p288
        %p2465 = pneg %p312
        %p2466 = pneg %p309
        %p2467 = pneg %p333
        %p2468 = pneg %p330
        %p2469 = pneg %p354
        %p2470 = pneg %p351
        %p2471 = pneg %p375
        %p2472 = pneg %p372
        %p2473 = pneg %p396
        %p2474 = pneg %p393
        %p2475 = pneg %p417
        %p2476 = pneg %p414
        %p2477 = pneg %p438
        %p2478 = pneg %p435
        %p2479 = pneg %p459
        %p2480 = pneg %p456
        %p2481 = pneg %p480
        %p2482 = pneg %p477
        %p2483 = pneg %p501
        %p2484 = pneg %p498
        %p2485 = pneg %p522
        %p2486 = pneg %p519
        %p2487 = pneg %p543
        %p2488 = pneg %p540
        %p2489 = pneg %p564
        %p2490 = pneg %p561
        %p2491 = pneg %p585
        %p2492 = pneg %p582
        %p2493 = pneg %p606
        %p2494 = pneg %p603
        %p2495 = pneg %p627
        %p2496 = pneg %p624
        %p2497 = pneg %p648
        %p2498 = pneg %p645
        %p2499 = pneg %p669
        %p2500 = pneg %p666
        %p2501 = pneg %p690
        %p2502 = pneg %p687
        %p2503 = pneg %p711
        %p2504 = pneg %p708
        %p2505 = pneg %p732
        %p2506 = pneg %p729
        %p2507 = pneg %p753
        %p2508 = pneg %p750
        %p2509 = pneg %p774
        %p2510 = pneg %p771
        %p2511 = pneg %p795
        %p2512 = pneg %p792
        %p2513 = pneg %p816
        %p2514 = pneg %p813
        %p2515 = pneg %p837
        %p2516 = pneg %p834
        %p2517 = pneg %p858
        %p2518 = pneg %p855
        %p2519 = pneg %p879
        %p2520 = pneg %p876
        %p2521 = pneg %p900
        %p2522 = pneg %p897
        %p2523 = pneg %p921
        %p2524 = pneg %p918
        %p2525 = pneg %p942
        %p2526 = pneg %p939
        %p2527 = pneg %p963
        %p2528 = pneg %p960
        %p2529 = pneg %p984
        %p2530 = pneg %p981
        %p2531 = pneg %p1005
        %p2532 = pneg %p1002
        %p2533 = pneg %p1026
        %p2534 = pneg %p1023
        %p2535 = pneg %p1047
        %p2536 = pneg %p1044
        %p2537 = pneg %p1068
        %p2538 = pneg %p1065
        %p2539 = pneg %p1089
        %p2540 = pneg %p1086
        %p2541 = pneg %p1110
        %p2542 = pneg %p1107
        %p2543 = pneg %p1131
        %p2544 = pneg %p1128
        %p2545 = pneg %p1152
        %p2546 = pneg %p1149
        %p2547 = pneg %p1173
        %p2548 = pneg %p1170
        %p2549 = pneg %p1194
        %p2550 = pneg %p1191
        %p2551 = pneg %p1215
        %p2552 = pneg %p1212
        %p2553 = pneg %p1236
        %p2554 = pneg %p1233
        %p2555 = pneg %p1257
        %p2556 = pneg %p1254
        %p2557 = pneg %p1278
        %p2558 = pneg %p1275
        %p2559 = pneg %p1299
        %p2560 = pneg %p1296
        %p2561 = pneg %p1320
        %p2562 = pneg %p1317
        %p2563 = pneg %p1341
        %p2564 = pneg %p1338
        %p2565 = pneg %p1362
        %p2566 = pneg %p1359
        %p2567 = pneg %p1383
        %p2568 = pneg %p1380
        %p2569 = pneg %p1404
        %p2570 = pneg %p1401
        %p2571 = pneg %p1425
        %p2572 = pneg %p1422
        %p2573 = pneg %p1446
        %p2574 = pneg %p1443
        %p2575 = pneg %p1467
        %p2576 = pneg %p1464
        %p2577 = pneg %p1488
        %p2578 = pneg %p1485
        %p2579 = pneg %p1509
        %p2580 = pneg %p1506
        %p2581 = pneg %p1530
        %p2582 = pneg %p1527
        %p2583 = pneg %p1551
        %p2584 = pneg %p1548
        %p2585 = pneg %p1572
        %p2586 = pneg %p1569
        %p2587 = pneg %p1593
        %p2588 = pneg %p1590
        %p2589 = pneg %p1619
        %p2590 = pneg %p1616
        %s2591 = sand.u32 %s1606, 1
        %s2592 = scalar_lea.sflag [#allocation4], %s2591
        %s2593 = sand.u32 %s1606, 1
        %s2594 = smul.addr %s2593, 16
        %s2595 = scalar_lea.vmem [#allocation70], %s2594
        %p2596 = scmp.lt.s32.totalorder %s176, 1
        %s2597 = scalar_select %p2596, %s176, 1
        %s2598 = smul.addr %s2597, 8
        %s2599 = scalar_lea.vmem %s3, %s2598
        %v2600 = vld [vmem:[#allocation7] sm:$0x1]
        %v2601 = vld [vmem:[#allocation8] sm:$0xff]
        %v2602 = vld [vmem:[#allocation8 + $0x8] sm:$0xff]
        %v2603 = vld [vmem:[#allocation8 + $0x10] sm:$0xff]
        %v2604 = vld [vmem:[#allocation8 + $0x18] sm:$0xff]
        %v2605 = vld [vmem:[#allocation10] sm:$0x1]
        %v2606 = vld [vmem:[%s13] sm:$0xff]
        %v2607 = vld [vmem:[%s13 + $0x8] sm:$0xff]
        %v2608 = vld [vmem:[%s13 + $0x10] sm:$0xff]
        %v2609 = vld [vmem:[%s13 + $0x18] sm:$0xff]
        %v2610 = vld [vmem:[%s13 + $0x20] sm:$0xff]
        %v2611 = vld [vmem:[%s13 + $0x28] sm:$0xff]
        %v2612 = vld [vmem:[%s13 + $0x30] sm:$0xff]
        %v2613 = vld [vmem:[%s13 + $0x38] sm:$0xff]
        %v2614 = vld [vmem:[#allocation11] sm:$0x1]
        %v2615 = vld [vmem:[%s17] sm:$0xff]
        %v2616 = vld [vmem:[%s17 + $0x8] sm:$0xff]
        %v2617 = vld [vmem:[%s17 + $0x10] sm:$0xff]
        %v2618 = vld [vmem:[%s17 + $0x18] sm:$0xff]
        %v2619 = vld [vmem:[%s17 + $0x20] sm:$0xff]
        %v2620 = vld [vmem:[%s17 + $0x28] sm:$0xff]
        %v2621 = vld [vmem:[%s17 + $0x30] sm:$0xff]
        %v2622 = vld [vmem:[%s17 + $0x38] sm:$0xff]
        %v2623 = vld [vmem:[%s17 + $0x40] sm:$0xff]
        %v2624 = vld [vmem:[%s17 + $0x48] sm:$0xff]
        %v2625 = vld [vmem:[%s17 + $0x50] sm:$0xff]
        %v2626 = vld [vmem:[%s17 + $0x58] sm:$0xff]
        %v2627 = vld [vmem:[%s17 + $0x60] sm:$0xff]
        %v2628 = vld [vmem:[%s17 + $0x68] sm:$0xff]
        %v2629 = vld [vmem:[%s17 + $0x70] sm:$0xff]
        %v2630 = vld [vmem:[%s17 + $0x78] sm:$0xff]
        %v2631 = vld [vmem:[#allocation13] sm:$0x1]
        %v2632 = vld [vmem:[%s21] sm:$0xff]
        %v2633 = vld [vmem:[%s21 + $0x8] sm:$0xff]
        %v2634 = vld [vmem:[%s21 + $0x10] sm:$0xff]
        %v2635 = vld [vmem:[%s21 + $0x18] sm:$0xff]
        %v2636 = vld [vmem:[%s21 + $0x20] sm:$0xff]
        %v2637 = vld [vmem:[%s21 + $0x28] sm:$0xff]
        %v2638 = vld [vmem:[%s21 + $0x30] sm:$0xff]
        %v2639 = vld [vmem:[%s21 + $0x38] sm:$0xff]
        %v2640 = vld [vmem:[#allocation14] sm:$0x3]
        %v2641 = vld [vmem:[#allocation16] sm:$0xff]
        %v2642 = vld [vmem:[#allocation16 + $0x8] sm:$0xff]
        %v2643 = vld [vmem:[#allocation16 + $0x10] sm:$0xff]
        %v2644 = vld [vmem:[#allocation16 + $0x18] sm:$0xff]
        %v2645 = vld [vmem:[#allocation16 + $0x20] sm:$0xff]
        %v2646 = vld [vmem:[#allocation16 + $0x28] sm:$0xff]
        %v2647 = vld [vmem:[#allocation16 + $0x30] sm:$0xff]
        %v2648 = vld [vmem:[#allocation16 + $0x38] sm:$0xff]
        %v2649 = vld [vmem:[#allocation17] sm:$0x3]
        %v2650 = vld [vmem:[%s29] sm:$0xff]
        %v2651 = vld [vmem:[%s29 + $0x8] sm:$0xff]
        %v2652 = vld [vmem:[%s29 + $0x10] sm:$0xff]
        %v2653 = vld [vmem:[%s29 + $0x18] sm:$0xff]
        %v2654 = vld [vmem:[%s29 + $0x20] sm:$0xff]
        %v2655 = vld [vmem:[%s29 + $0x28] sm:$0xff]
        %v2656 = vld [vmem:[%s29 + $0x30] sm:$0xff]
        %v2657 = vld [vmem:[%s29 + $0x38] sm:$0xff]
        %v2658 = vld [vmem:[%s29 + $0x40] sm:$0xff]
        %v2659 = vld [vmem:[%s29 + $0x48] sm:$0xff]
        %v2660 = vld [vmem:[%s29 + $0x50] sm:$0xff]
        %v2661 = vld [vmem:[%s29 + $0x58] sm:$0xff]
        %v2662 = vld [vmem:[%s29 + $0x60] sm:$0xff]
        %v2663 = vld [vmem:[%s29 + $0x68] sm:$0xff]
        %v2664 = vld [vmem:[%s29 + $0x70] sm:$0xff]
        %v2665 = vld [vmem:[%s29 + $0x78] sm:$0xff]
        %v2666 = vld [vmem:[%s29 + $0x80] sm:$0xff]
        %v2667 = vld [vmem:[%s29 + $0x88] sm:$0xff]
        %v2668 = vld [vmem:[%s29 + $0x90] sm:$0xff]
        %v2669 = vld [vmem:[%s29 + $0x98] sm:$0xff]
        %v2670 = vld [vmem:[%s29 + $0xa0] sm:$0xff]
        %v2671 = vld [vmem:[%s29 + $0xa8] sm:$0xff]
        %v2672 = vld [vmem:[%s29 + $0xb0] sm:$0xff]
        %v2673 = vld [vmem:[%s29 + $0xb8] sm:$0xff]
        %v2674 = vld [vmem:[%s29 + $0xc0] sm:$0xff]
        %v2675 = vld [vmem:[%s29 + $0xc8] sm:$0xff]
        %v2676 = vld [vmem:[%s29 + $0xd0] sm:$0xff]
        %v2677 = vld [vmem:[%s29 + $0xd8] sm:$0xff]
        %v2678 = vld [vmem:[%s29 + $0xe0] sm:$0xff]
        %v2679 = vld [vmem:[%s29 + $0xe8] sm:$0xff]
        %v2680 = vld [vmem:[%s29 + $0xf0] sm:$0xff]
        %v2681 = vld [vmem:[%s29 + $0xf8] sm:$0xff]
        %v2682 = vld [vmem:[#allocation19] sm:$0x3]
        %v2683 = vld [vmem:[%s33] sm:$0xff]
        %v2684 = vld [vmem:[%s33 + $0x8] sm:$0xff]
        %v2685 = vld [vmem:[%s33 + $0x10] sm:$0xff]
        %v2686 = vld [vmem:[%s33 + $0x18] sm:$0xff]
        %v2687 = vld [vmem:[%s33 + $0x20] sm:$0xff]
        %v2688 = vld [vmem:[%s33 + $0x28] sm:$0xff]
        %v2689 = vld [vmem:[%s33 + $0x30] sm:$0xff]
        %v2690 = vld [vmem:[%s33 + $0x38] sm:$0xff]
        %v2691 = vld [vmem:[%s33 + $0x40] sm:$0xff]
        %v2692 = vld [vmem:[%s33 + $0x48] sm:$0xff]
        %v2693 = vld [vmem:[%s33 + $0x50] sm:$0xff]
        %v2694 = vld [vmem:[%s33 + $0x58] sm:$0xff]
        %v2695 = vld [vmem:[%s33 + $0x60] sm:$0xff]
        %v2696 = vld [vmem:[%s33 + $0x68] sm:$0xff]
        %v2697 = vld [vmem:[%s33 + $0x70] sm:$0xff]
        %v2698 = vld [vmem:[%s33 + $0x78] sm:$0xff]
        %v2699 = vld [vmem:[%s33 + $0x80] sm:$0xff]
        %v2700 = vld [vmem:[%s33 + $0x88] sm:$0xff]
        %v2701 = vld [vmem:[%s33 + $0x90] sm:$0xff]
        %v2702 = vld [vmem:[%s33 + $0x98] sm:$0xff]
        %v2703 = vld [vmem:[%s33 + $0xa0] sm:$0xff]
        %v2704 = vld [vmem:[%s33 + $0xa8] sm:$0xff]
        %v2705 = vld [vmem:[%s33 + $0xb0] sm:$0xff]
        %v2706 = vld [vmem:[%s33 + $0xb8] sm:$0xff]
        %v2707 = vld [vmem:[%s33 + $0xc0] sm:$0xff]
        %v2708 = vld [vmem:[%s33 + $0xc8] sm:$0xff]
        %v2709 = vld [vmem:[%s33 + $0xd0] sm:$0xff]
        %v2710 = vld [vmem:[%s33 + $0xd8] sm:$0xff]
        %v2711 = vld [vmem:[%s33 + $0xe0] sm:$0xff]
        %v2712 = vld [vmem:[%s33 + $0xe8] sm:$0xff]
        %v2713 = vld [vmem:[%s33 + $0xf0] sm:$0xff]
        %v2714 = vld [vmem:[%s33 + $0xf8] sm:$0xff]
        %v2715 = vld [vmem:[%s33 + $0x100] sm:$0xff]
        %v2716 = vld [vmem:[%s33 + $0x108] sm:$0xff]
        %v2717 = vld [vmem:[%s33 + $0x110] sm:$0xff]
        %v2718 = vld [vmem:[%s33 + $0x118] sm:$0xff]
        %v2719 = vld [vmem:[%s33 + $0x120] sm:$0xff]
        %v2720 = vld [vmem:[%s33 + $0x128] sm:$0xff]
        %v2721 = vld [vmem:[%s33 + $0x130] sm:$0xff]
        %v2722 = vld [vmem:[%s33 + $0x138] sm:$0xff]
        %v2723 = vld [vmem:[%s33 + $0x140] sm:$0xff]
        %v2724 = vld [vmem:[%s33 + $0x148] sm:$0xff]
        %v2725 = vld [vmem:[%s33 + $0x150] sm:$0xff]
        %v2726 = vld [vmem:[%s33 + $0x158] sm:$0xff]
        %v2727 = vld [vmem:[%s33 + $0x160] sm:$0xff]
        %v2728 = vld [vmem:[%s33 + $0x168] sm:$0xff]
        %v2729 = vld [vmem:[%s33 + $0x170] sm:$0xff]
        %v2730 = vld [vmem:[%s33 + $0x178] sm:$0xff]
        %v2731 = vld [vmem:[%s33 + $0x180] sm:$0xff]
        %v2732 = vld [vmem:[%s33 + $0x188] sm:$0xff]
        %v2733 = vld [vmem:[%s33 + $0x190] sm:$0xff]
        %v2734 = vld [vmem:[%s33 + $0x198] sm:$0xff]
        %v2735 = vld [vmem:[%s33 + $0x1a0] sm:$0xff]
        %v2736 = vld [vmem:[%s33 + $0x1a8] sm:$0xff]
        %v2737 = vld [vmem:[%s33 + $0x1b0] sm:$0xff]
        %v2738 = vld [vmem:[%s33 + $0x1b8] sm:$0xff]
        %v2739 = vld [vmem:[%s33 + $0x1c0] sm:$0xff]
        %v2740 = vld [vmem:[%s33 + $0x1c8] sm:$0xff]
        %v2741 = vld [vmem:[%s33 + $0x1d0] sm:$0xff]
        %v2742 = vld [vmem:[%s33 + $0x1d8] sm:$0xff]
        %v2743 = vld [vmem:[%s33 + $0x1e0] sm:$0xff]
        %v2744 = vld [vmem:[%s33 + $0x1e8] sm:$0xff]
        %v2745 = vld [vmem:[%s33 + $0x1f0] sm:$0xff]
        %v2746 = vld [vmem:[%s33 + $0x1f8] sm:$0xff]
        %v2747 = vld [vmem:[#allocation20] sm:$0x3]
        %v2748 = vld [vmem:[%s37] sm:$0xff]
        %v2749 = vld [vmem:[%s37 + $0x8] sm:$0xff]
        %v2750 = vld [vmem:[%s37 + $0x10] sm:$0xff]
        %v2751 = vld [vmem:[%s37 + $0x18] sm:$0xff]
        %v2752 = vld [vmem:[%s37 + $0x20] sm:$0xff]
        %v2753 = vld [vmem:[%s37 + $0x28] sm:$0xff]
        %v2754 = vld [vmem:[%s37 + $0x30] sm:$0xff]
        %v2755 = vld [vmem:[%s37 + $0x38] sm:$0xff]
        %v2756 = vld [vmem:[%s37 + $0x40] sm:$0xff]
        %v2757 = vld [vmem:[%s37 + $0x48] sm:$0xff]
        %v2758 = vld [vmem:[%s37 + $0x50] sm:$0xff]
        %v2759 = vld [vmem:[%s37 + $0x58] sm:$0xff]
        %v2760 = vld [vmem:[%s37 + $0x60] sm:$0xff]
        %v2761 = vld [vmem:[%s37 + $0x68] sm:$0xff]
        %v2762 = vld [vmem:[%s37 + $0x70] sm:$0xff]
        %v2763 = vld [vmem:[%s37 + $0x78] sm:$0xff]
        %v2764 = vld [vmem:[%s37 + $0x80] sm:$0xff]
        %v2765 = vld [vmem:[%s37 + $0x88] sm:$0xff]
        %v2766 = vld [vmem:[%s37 + $0x90] sm:$0xff]
        %v2767 = vld [vmem:[%s37 + $0x98] sm:$0xff]
        %v2768 = vld [vmem:[%s37 + $0xa0] sm:$0xff]
        %v2769 = vld [vmem:[%s37 + $0xa8] sm:$0xff]
        %v2770 = vld [vmem:[%s37 + $0xb0] sm:$0xff]
        %v2771 = vld [vmem:[%s37 + $0xb8] sm:$0xff]
        %v2772 = vld [vmem:[%s37 + $0xc0] sm:$0xff]
        %v2773 = vld [vmem:[%s37 + $0xc8] sm:$0xff]
        %v2774 = vld [vmem:[%s37 + $0xd0] sm:$0xff]
        %v2775 = vld [vmem:[%s37 + $0xd8] sm:$0xff]
        %v2776 = vld [vmem:[%s37 + $0xe0] sm:$0xff]
        %v2777 = vld [vmem:[%s37 + $0xe8] sm:$0xff]
        %v2778 = vld [vmem:[%s37 + $0xf0] sm:$0xff]
        %v2779 = vld [vmem:[%s37 + $0xf8] sm:$0xff]
        %v2780 = vld [vmem:[%s37 + $0x100] sm:$0xff]
        %v2781 = vld [vmem:[%s37 + $0x108] sm:$0xff]
        %v2782 = vld [vmem:[%s37 + $0x110] sm:$0xff]
        %v2783 = vld [vmem:[%s37 + $0x118] sm:$0xff]
        %v2784 = vld [vmem:[%s37 + $0x120] sm:$0xff]
        %v2785 = vld [vmem:[%s37 + $0x128] sm:$0xff]
        %v2786 = vld [vmem:[%s37 + $0x130] sm:$0xff]
        %v2787 = vld [vmem:[%s37 + $0x138] sm:$0xff]
        %v2788 = vld [vmem:[%s37 + $0x140] sm:$0xff]
        %v2789 = vld [vmem:[%s37 + $0x148] sm:$0xff]
        %v2790 = vld [vmem:[%s37 + $0x150] sm:$0xff]
        %v2791 = vld [vmem:[%s37 + $0x158] sm:$0xff]
        %v2792 = vld [vmem:[%s37 + $0x160] sm:$0xff]
        %v2793 = vld [vmem:[%s37 + $0x168] sm:$0xff]
        %v2794 = vld [vmem:[%s37 + $0x170] sm:$0xff]
        %v2795 = vld [vmem:[%s37 + $0x178] sm:$0xff]
        %v2796 = vld [vmem:[%s37 + $0x180] sm:$0xff]
        %v2797 = vld [vmem:[%s37 + $0x188] sm:$0xff]
        %v2798 = vld [vmem:[%s37 + $0x190] sm:$0xff]
        %v2799 = vld [vmem:[%s37 + $0x198] sm:$0xff]
        %v2800 = vld [vmem:[%s37 + $0x1a0] sm:$0xff]
        %v2801 = vld [vmem:[%s37 + $0x1a8] sm:$0xff]
        %v2802 = vld [vmem:[%s37 + $0x1b0] sm:$0xff]
        %v2803 = vld [vmem:[%s37 + $0x1b8] sm:$0xff]
        %v2804 = vld [vmem:[%s37 + $0x1c0] sm:$0xff]
        %v2805 = vld [vmem:[%s37 + $0x1c8] sm:$0xff]
        %v2806 = vld [vmem:[%s37 + $0x1d0] sm:$0xff]
        %v2807 = vld [vmem:[%s37 + $0x1d8] sm:$0xff]
        %v2808 = vld [vmem:[%s37 + $0x1e0] sm:$0xff]
        %v2809 = vld [vmem:[%s37 + $0x1e8] sm:$0xff]
        %v2810 = vld [vmem:[%s37 + $0x1f0] sm:$0xff]
        %v2811 = vld [vmem:[%s37 + $0x1f8] sm:$0xff]
        %v2812 = vld [vmem:[%s39] sm:$0x3]
        %v2813 = vld [vmem:[%s41] sm:$0xff]
        %v2814 = vld [vmem:[%s41 + $0x8] sm:$0xff]
        %v2815 = vld [vmem:[%s41 + $0x10] sm:$0xff]
        %v2816 = vld [vmem:[%s41 + $0x18] sm:$0xff]
        %v2817 = vld [vmem:[%s41 + $0x20] sm:$0xff]
        %v2818 = vld [vmem:[%s41 + $0x28] sm:$0xff]
        %v2819 = vld [vmem:[%s41 + $0x30] sm:$0xff]
        %v2820 = vld [vmem:[%s41 + $0x38] sm:$0xff]
        %v2821 = vld [vmem:[%s41 + $0x40] sm:$0xff]
        %v2822 = vld [vmem:[%s41 + $0x48] sm:$0xff]
        %v2823 = vld [vmem:[%s41 + $0x50] sm:$0xff]
        %v2824 = vld [vmem:[%s41 + $0x58] sm:$0xff]
        %v2825 = vld [vmem:[%s41 + $0x60] sm:$0xff]
        %v2826 = vld [vmem:[%s41 + $0x68] sm:$0xff]
        %v2827 = vld [vmem:[%s41 + $0x70] sm:$0xff]
        %v2828 = vld [vmem:[%s41 + $0x78] sm:$0xff]
        %v2829 = vld [vmem:[%s41 + $0x80] sm:$0xff]
        %v2830 = vld [vmem:[%s41 + $0x88] sm:$0xff]
        %v2831 = vld [vmem:[%s41 + $0x90] sm:$0xff]
        %v2832 = vld [vmem:[%s41 + $0x98] sm:$0xff]
        %v2833 = vld [vmem:[%s41 + $0xa0] sm:$0xff]
        %v2834 = vld [vmem:[%s41 + $0xa8] sm:$0xff]
        %v2835 = vld [vmem:[%s41 + $0xb0] sm:$0xff]
        %v2836 = vld [vmem:[%s41 + $0xb8] sm:$0xff]
        %v2837 = vld [vmem:[%s41 + $0xc0] sm:$0xff]
        %v2838 = vld [vmem:[%s41 + $0xc8] sm:$0xff]
        %v2839 = vld [vmem:[%s41 + $0xd0] sm:$0xff]
        %v2840 = vld [vmem:[%s41 + $0xd8] sm:$0xff]
        %v2841 = vld [vmem:[%s41 + $0xe0] sm:$0xff]
        %v2842 = vld [vmem:[%s41 + $0xe8] sm:$0xff]
        %v2843 = vld [vmem:[%s41 + $0xf0] sm:$0xff]
        %v2844 = vld [vmem:[%s41 + $0xf8] sm:$0xff]
        %v2845 = vld [vmem:[%s41 + $0x100] sm:$0xff]
        %v2846 = vld [vmem:[%s41 + $0x108] sm:$0xff]
        %v2847 = vld [vmem:[%s41 + $0x110] sm:$0xff]
        %v2848 = vld [vmem:[%s41 + $0x118] sm:$0xff]
        %v2849 = vld [vmem:[%s41 + $0x120] sm:$0xff]
        %v2850 = vld [vmem:[%s41 + $0x128] sm:$0xff]
        %v2851 = vld [vmem:[%s41 + $0x130] sm:$0xff]
        %v2852 = vld [vmem:[%s41 + $0x138] sm:$0xff]
        %v2853 = vld [vmem:[%s41 + $0x140] sm:$0xff]
        %v2854 = vld [vmem:[%s41 + $0x148] sm:$0xff]
        %v2855 = vld [vmem:[%s41 + $0x150] sm:$0xff]
        %v2856 = vld [vmem:[%s41 + $0x158] sm:$0xff]
        %v2857 = vld [vmem:[%s41 + $0x160] sm:$0xff]
        %v2858 = vld [vmem:[%s41 + $0x168] sm:$0xff]
        %v2859 = vld [vmem:[%s41 + $0x170] sm:$0xff]
        %v2860 = vld [vmem:[%s41 + $0x178] sm:$0xff]
        %v2861 = vld [vmem:[%s41 + $0x180] sm:$0xff]
        %v2862 = vld [vmem:[%s41 + $0x188] sm:$0xff]
        %v2863 = vld [vmem:[%s41 + $0x190] sm:$0xff]
        %v2864 = vld [vmem:[%s41 + $0x198] sm:$0xff]
        %v2865 = vld [vmem:[%s41 + $0x1a0] sm:$0xff]
        %v2866 = vld [vmem:[%s41 + $0x1a8] sm:$0xff]
        %v2867 = vld [vmem:[%s41 + $0x1b0] sm:$0xff]
        %v2868 = vld [vmem:[%s41 + $0x1b8] sm:$0xff]
        %v2869 = vld [vmem:[%s41 + $0x1c0] sm:$0xff]
        %v2870 = vld [vmem:[%s41 + $0x1c8] sm:$0xff]
        %v2871 = vld [vmem:[%s41 + $0x1d0] sm:$0xff]
        %v2872 = vld [vmem:[%s41 + $0x1d8] sm:$0xff]
        %v2873 = vld [vmem:[%s41 + $0x1e0] sm:$0xff]
        %v2874 = vld [vmem:[%s41 + $0x1e8] sm:$0xff]
        %v2875 = vld [vmem:[%s41 + $0x1f0] sm:$0xff]
        %v2876 = vld [vmem:[%s41 + $0x1f8] sm:$0xff]
        %v2877 = vld [vmem:[#allocation22] sm:$0x1]
        %v2878 = vld [vmem:[#allocation23] sm:$0xff]
        %v2879 = vld [vmem:[#allocation23 + $0x8] sm:$0xff]
        %v2880 = vld [vmem:[#allocation23 + $0x10] sm:$0xff]
        %v2881 = vld [vmem:[#allocation23 + $0x18] sm:$0xff]
        %v2882 = vld [vmem:[#allocation25] sm:$0x1]
        %v2883 = vld [vmem:[%s49] sm:$0xff]
        %v2884 = vld [vmem:[%s49 + $0x8] sm:$0xff]
        %v2885 = vld [vmem:[%s49 + $0x10] sm:$0xff]
        %v2886 = vld [vmem:[%s49 + $0x18] sm:$0xff]
        %v2887 = vld [vmem:[%s49 + $0x20] sm:$0xff]
        %v2888 = vld [vmem:[%s49 + $0x28] sm:$0xff]
        %v2889 = vld [vmem:[%s49 + $0x30] sm:$0xff]
        %v2890 = vld [vmem:[%s49 + $0x38] sm:$0xff]
        %v2891 = vld [vmem:[%s49 + $0x40] sm:$0xff]
        %v2892 = vld [vmem:[%s49 + $0x48] sm:$0xff]
        %v2893 = vld [vmem:[%s49 + $0x50] sm:$0xff]
        %v2894 = vld [vmem:[%s49 + $0x58] sm:$0xff]
        %v2895 = vld [vmem:[%s49 + $0x60] sm:$0xff]
        %v2896 = vld [vmem:[%s49 + $0x68] sm:$0xff]
        %v2897 = vld [vmem:[%s49 + $0x70] sm:$0xff]
        %v2898 = vld [vmem:[%s49 + $0x78] sm:$0xff]
        %v2899 = vld [vmem:[#allocation26] sm:$0x1]
        %v2900 = vld [vmem:[#allocation28] sm:$0xff]
        %v2901 = vld [vmem:[#allocation28 + $0x8] sm:$0xff]
        %v2902 = vld [vmem:[#allocation28 + $0x10] sm:$0xff]
        %v2903 = vld [vmem:[#allocation28 + $0x18] sm:$0xff]
        %v2904 = vld [vmem:[#allocation28 + $0x20] sm:$0xff]
        %v2905 = vld [vmem:[#allocation28 + $0x28] sm:$0xff]
        %v2906 = vld [vmem:[#allocation28 + $0x30] sm:$0xff]
        %v2907 = vld [vmem:[#allocation28 + $0x38] sm:$0xff]
        %v2908 = vld [vmem:[#allocation28 + $0x40] sm:$0xff]
        %v2909 = vld [vmem:[#allocation28 + $0x48] sm:$0xff]
        %v2910 = vld [vmem:[#allocation28 + $0x50] sm:$0xff]
        %v2911 = vld [vmem:[#allocation28 + $0x58] sm:$0xff]
        %v2912 = vld [vmem:[#allocation28 + $0x60] sm:$0xff]
        %v2913 = vld [vmem:[#allocation28 + $0x68] sm:$0xff]
        %v2914 = vld [vmem:[#allocation28 + $0x70] sm:$0xff]
        %v2915 = vld [vmem:[#allocation28 + $0x78] sm:$0xff]
        %v2916 = vld [vmem:[#allocation28 + $0x80] sm:$0xff]
        %v2917 = vld [vmem:[#allocation28 + $0x88] sm:$0xff]
        %v2918 = vld [vmem:[#allocation28 + $0x90] sm:$0xff]
        %v2919 = vld [vmem:[#allocation28 + $0x98] sm:$0xff]
        %v2920 = vld [vmem:[#allocation28 + $0xa0] sm:$0xff]
        %v2921 = vld [vmem:[#allocation28 + $0xa8] sm:$0xff]
        %v2922 = vld [vmem:[#allocation28 + $0xb0] sm:$0xff]
        %v2923 = vld [vmem:[#allocation28 + $0xb8] sm:$0xff]
        %v2924 = vld [vmem:[#allocation28 + $0xc0] sm:$0xff]
        %v2925 = vld [vmem:[#allocation28 + $0xc8] sm:$0xff]
        %v2926 = vld [vmem:[#allocation28 + $0xd0] sm:$0xff]
        %v2927 = vld [vmem:[#allocation28 + $0xd8] sm:$0xff]
        %v2928 = vld [vmem:[#allocation28 + $0xe0] sm:$0xff]
        %v2929 = vld [vmem:[#allocation28 + $0xe8] sm:$0xff]
        %v2930 = vld [vmem:[#allocation28 + $0xf0] sm:$0xff]
        %v2931 = vld [vmem:[#allocation28 + $0xf8] sm:$0xff]
        %v2932 = vld [vmem:[#allocation29] sm:$0x1]
        %v2933 = vld [vmem:[#allocation31] sm:$0xff]
        %v2934 = vld [vmem:[#allocation31 + $0x8] sm:$0xff]
        %v2935 = vld [vmem:[#allocation31 + $0x10] sm:$0xff]
        %v2936 = vld [vmem:[#allocation31 + $0x18] sm:$0xff]
        %v2937 = vld [vmem:[#allocation31 + $0x20] sm:$0xff]
        %v2938 = vld [vmem:[#allocation31 + $0x28] sm:$0xff]
        %v2939 = vld [vmem:[#allocation31 + $0x30] sm:$0xff]
        %v2940 = vld [vmem:[#allocation31 + $0x38] sm:$0xff]
        %v2941 = vld [vmem:[#allocation31 + $0x40] sm:$0xff]
        %v2942 = vld [vmem:[#allocation31 + $0x48] sm:$0xff]
        %v2943 = vld [vmem:[#allocation31 + $0x50] sm:$0xff]
        %v2944 = vld [vmem:[#allocation31 + $0x58] sm:$0xff]
        %v2945 = vld [vmem:[#allocation31 + $0x60] sm:$0xff]
        %v2946 = vld [vmem:[#allocation31 + $0x68] sm:$0xff]
        %v2947 = vld [vmem:[#allocation31 + $0x70] sm:$0xff]
        %v2948 = vld [vmem:[#allocation31 + $0x78] sm:$0xff]
        %v2949 = vld [vmem:[#allocation32] sm:$0x1]
        %v2950 = vld [vmem:[#allocation34] sm:$0xff]
        %v2951 = vld [vmem:[#allocation34 + $0x8] sm:$0xff]
        %v2952 = vld [vmem:[#allocation34 + $0x10] sm:$0xff]
        %v2953 = vld [vmem:[#allocation34 + $0x18] sm:$0xff]
        %v2954 = vld [vmem:[#allocation34 + $0x20] sm:$0xff]
        %v2955 = vld [vmem:[#allocation34 + $0x28] sm:$0xff]
        %v2956 = vld [vmem:[#allocation34 + $0x30] sm:$0xff]
        %v2957 = vld [vmem:[#allocation34 + $0x38] sm:$0xff]
        %v2958 = vld [vmem:[#allocation34 + $0x40] sm:$0xff]
        %v2959 = vld [vmem:[#allocation34 + $0x48] sm:$0xff]
        %v2960 = vld [vmem:[#allocation34 + $0x50] sm:$0xff]
        %v2961 = vld [vmem:[#allocation34 + $0x58] sm:$0xff]
        %v2962 = vld [vmem:[#allocation34 + $0x60] sm:$0xff]
        %v2963 = vld [vmem:[#allocation34 + $0x68] sm:$0xff]
        %v2964 = vld [vmem:[#allocation34 + $0x70] sm:$0xff]
        %v2965 = vld [vmem:[#allocation34 + $0x78] sm:$0xff]
        %v2966 = vld [vmem:[%s63] sm:$0x3]
        %v2967 = vld [vmem:[#allocation35] sm:$0xff]
        %v2968 = vld [vmem:[#allocation35 + $0x8] sm:$0xff]
        %v2969 = vld [vmem:[#allocation35 + $0x10] sm:$0xff]
        %v2970 = vld [vmem:[#allocation35 + $0x18] sm:$0xff]
        %v2971 = vld [vmem:[#allocation35 + $0x20] sm:$0xff]
        %v2972 = vld [vmem:[#allocation35 + $0x28] sm:$0xff]
        %v2973 = vld [vmem:[#allocation35 + $0x30] sm:$0xff]
        %v2974 = vld [vmem:[#allocation35 + $0x38] sm:$0xff]
        %v2975 = vld [vmem:[%s67] sm:$0x3]
        %v2976 = vld [vmem:[%s69] sm:$0xff]
        %v2977 = vld [vmem:[%s69 + $0x8] sm:$0xff]
        %v2978 = vld [vmem:[%s69 + $0x10] sm:$0xff]
        %v2979 = vld [vmem:[%s69 + $0x18] sm:$0xff]
        %v2980 = vld [vmem:[%s69 + $0x20] sm:$0xff]
        %v2981 = vld [vmem:[%s69 + $0x28] sm:$0xff]
        %v2982 = vld [vmem:[%s69 + $0x30] sm:$0xff]
        %v2983 = vld [vmem:[%s69 + $0x38] sm:$0xff]
        %v2984 = vld [vmem:[%s69 + $0x40] sm:$0xff]
        %v2985 = vld [vmem:[%s69 + $0x48] sm:$0xff]
        %v2986 = vld [vmem:[%s69 + $0x50] sm:$0xff]
        %v2987 = vld [vmem:[%s69 + $0x58] sm:$0xff]
        %v2988 = vld [vmem:[%s69 + $0x60] sm:$0xff]
        %v2989 = vld [vmem:[%s69 + $0x68] sm:$0xff]
        %v2990 = vld [vmem:[%s69 + $0x70] sm:$0xff]
        %v2991 = vld [vmem:[%s69 + $0x78] sm:$0xff]
        %v2992 = vld [vmem:[%s69 + $0x80] sm:$0xff]
        %v2993 = vld [vmem:[%s69 + $0x88] sm:$0xff]
        %v2994 = vld [vmem:[%s69 + $0x90] sm:$0xff]
        %v2995 = vld [vmem:[%s69 + $0x98] sm:$0xff]
        %v2996 = vld [vmem:[%s69 + $0xa0] sm:$0xff]
        %v2997 = vld [vmem:[%s69 + $0xa8] sm:$0xff]
        %v2998 = vld [vmem:[%s69 + $0xb0] sm:$0xff]
        %v2999 = vld [vmem:[%s69 + $0xb8] sm:$0xff]
        %v3000 = vld [vmem:[%s69 + $0xc0] sm:$0xff]
        %v3001 = vld [vmem:[%s69 + $0xc8] sm:$0xff]
        %v3002 = vld [vmem:[%s69 + $0xd0] sm:$0xff]
        %v3003 = vld [vmem:[%s69 + $0xd8] sm:$0xff]
        %v3004 = vld [vmem:[%s69 + $0xe0] sm:$0xff]
        %v3005 = vld [vmem:[%s69 + $0xe8] sm:$0xff]
        %v3006 = vld [vmem:[%s69 + $0xf0] sm:$0xff]
        %v3007 = vld [vmem:[%s69 + $0xf8] sm:$0xff]
        %v3008 = vld [vmem:[%s71] sm:$0x3]
        %v3009 = vld [vmem:[#allocation37] sm:$0xff]
        %v3010 = vld [vmem:[#allocation37 + $0x8] sm:$0xff]
        %v3011 = vld [vmem:[#allocation37 + $0x10] sm:$0xff]
        %v3012 = vld [vmem:[#allocation37 + $0x18] sm:$0xff]
        %v3013 = vld [vmem:[#allocation37 + $0x20] sm:$0xff]
        %v3014 = vld [vmem:[#allocation37 + $0x28] sm:$0xff]
        %v3015 = vld [vmem:[#allocation37 + $0x30] sm:$0xff]
        %v3016 = vld [vmem:[#allocation37 + $0x38] sm:$0xff]
        %v3017 = vld [vmem:[#allocation37 + $0x40] sm:$0xff]
        %v3018 = vld [vmem:[#allocation37 + $0x48] sm:$0xff]
        %v3019 = vld [vmem:[#allocation37 + $0x50] sm:$0xff]
        %v3020 = vld [vmem:[#allocation37 + $0x58] sm:$0xff]
        %v3021 = vld [vmem:[#allocation37 + $0x60] sm:$0xff]
        %v3022 = vld [vmem:[#allocation37 + $0x68] sm:$0xff]
        %v3023 = vld [vmem:[#allocation37 + $0x70] sm:$0xff]
        %v3024 = vld [vmem:[#allocation37 + $0x78] sm:$0xff]
        %v3025 = vld [vmem:[#allocation37 + $0x80] sm:$0xff]
        %v3026 = vld [vmem:[#allocation37 + $0x88] sm:$0xff]
        %v3027 = vld [vmem:[#allocation37 + $0x90] sm:$0xff]
        %v3028 = vld [vmem:[#allocation37 + $0x98] sm:$0xff]
        %v3029 = vld [vmem:[#allocation37 + $0xa0] sm:$0xff]
        %v3030 = vld [vmem:[#allocation37 + $0xa8] sm:$0xff]
        %v3031 = vld [vmem:[#allocation37 + $0xb0] sm:$0xff]
        %v3032 = vld [vmem:[#allocation37 + $0xb8] sm:$0xff]
        %v3033 = vld [vmem:[#allocation37 + $0xc0] sm:$0xff]
        %v3034 = vld [vmem:[#allocation37 + $0xc8] sm:$0xff]
        %v3035 = vld [vmem:[#allocation37 + $0xd0] sm:$0xff]
        %v3036 = vld [vmem:[#allocation37 + $0xd8] sm:$0xff]
        %v3037 = vld [vmem:[#allocation37 + $0xe0] sm:$0xff]
        %v3038 = vld [vmem:[#allocation37 + $0xe8] sm:$0xff]
        %v3039 = vld [vmem:[#allocation37 + $0xf0] sm:$0xff]
        %v3040 = vld [vmem:[#allocation37 + $0xf8] sm:$0xff]
        %v3041 = vld [vmem:[#allocation37 + $0x100] sm:$0xff]
        %v3042 = vld [vmem:[#allocation37 + $0x108] sm:$0xff]
        %v3043 = vld [vmem:[#allocation37 + $0x110] sm:$0xff]
        %v3044 = vld [vmem:[#allocation37 + $0x118] sm:$0xff]
        %v3045 = vld [vmem:[#allocation37 + $0x120] sm:$0xff]
        %v3046 = vld [vmem:[#allocation37 + $0x128] sm:$0xff]
        %v3047 = vld [vmem:[#allocation37 + $0x130] sm:$0xff]
        %v3048 = vld [vmem:[#allocation37 + $0x138] sm:$0xff]
        %v3049 = vld [vmem:[#allocation37 + $0x140] sm:$0xff]
        %v3050 = vld [vmem:[#allocation37 + $0x148] sm:$0xff]
        %v3051 = vld [vmem:[#allocation37 + $0x150] sm:$0xff]
        %v3052 = vld [vmem:[#allocation37 + $0x158] sm:$0xff]
        %v3053 = vld [vmem:[#allocation37 + $0x160] sm:$0xff]
        %v3054 = vld [vmem:[#allocation37 + $0x168] sm:$0xff]
        %v3055 = vld [vmem:[#allocation37 + $0x170] sm:$0xff]
        %v3056 = vld [vmem:[#allocation37 + $0x178] sm:$0xff]
        %v3057 = vld [vmem:[#allocation37 + $0x180] sm:$0xff]
        %v3058 = vld [vmem:[#allocation37 + $0x188] sm:$0xff]
        %v3059 = vld [vmem:[#allocation37 + $0x190] sm:$0xff]
        %v3060 = vld [vmem:[#allocation37 + $0x198] sm:$0xff]
        %v3061 = vld [vmem:[#allocation37 + $0x1a0] sm:$0xff]
        %v3062 = vld [vmem:[#allocation37 + $0x1a8] sm:$0xff]
        %v3063 = vld [vmem:[#allocation37 + $0x1b0] sm:$0xff]
        %v3064 = vld [vmem:[#allocation37 + $0x1b8] sm:$0xff]
        %v3065 = vld [vmem:[#allocation37 + $0x1c0] sm:$0xff]
        %v3066 = vld [vmem:[#allocation37 + $0x1c8] sm:$0xff]
        %v3067 = vld [vmem:[#allocation37 + $0x1d0] sm:$0xff]
        %v3068 = vld [vmem:[#allocation37 + $0x1d8] sm:$0xff]
        %v3069 = vld [vmem:[#allocation37 + $0x1e0] sm:$0xff]
        %v3070 = vld [vmem:[#allocation37 + $0x1e8] sm:$0xff]
        %v3071 = vld [vmem:[#allocation37 + $0x1f0] sm:$0xff]
        %v3072 = vld [vmem:[#allocation37 + $0x1f8] sm:$0xff]
        %v3073 = vld [vmem:[#allocation38] sm:$0x1]
        %v3074 = vld [vmem:[#allocation40] sm:$0xff]
        %v3075 = vld [vmem:[#allocation40 + $0x8] sm:$0xff]
        %v3076 = vld [vmem:[#allocation41] sm:$0x1]
        %v3077 = vld [vmem:[#allocation43] sm:$0xff]
        %v3078 = vld [vmem:[#allocation43 + $0x8] sm:$0xff]
        %v3079 = vld [vmem:[#allocation43 + $0x10] sm:$0xff]
        %v3080 = vld [vmem:[#allocation43 + $0x18] sm:$0xff]
        %v3081 = vld [vmem:[#allocation44] sm:$0x1]
        %v3082 = vld [vmem:[%s85] sm:$0xff]
        %v3083 = vld [vmem:[%s85 + $0x8] sm:$0xff]
        %v3084 = vld [vmem:[%s85 + $0x10] sm:$0xff]
        %v3085 = vld [vmem:[%s85 + $0x18] sm:$0xff]
        %v3086 = vld [vmem:[%s85 + $0x20] sm:$0xff]
        %v3087 = vld [vmem:[%s85 + $0x28] sm:$0xff]
        %v3088 = vld [vmem:[%s85 + $0x30] sm:$0xff]
        %v3089 = vld [vmem:[%s85 + $0x38] sm:$0xff]
        %v3090 = vld [vmem:[%s85 + $0x40] sm:$0xff]
        %v3091 = vld [vmem:[%s85 + $0x48] sm:$0xff]
        %v3092 = vld [vmem:[%s85 + $0x50] sm:$0xff]
        %v3093 = vld [vmem:[%s85 + $0x58] sm:$0xff]
        %v3094 = vld [vmem:[%s85 + $0x60] sm:$0xff]
        %v3095 = vld [vmem:[%s85 + $0x68] sm:$0xff]
        %v3096 = vld [vmem:[%s85 + $0x70] sm:$0xff]
        %v3097 = vld [vmem:[%s85 + $0x78] sm:$0xff]
        %v3098 = vld [vmem:[#allocation46] sm:$0x1]
        %v3099 = vld [vmem:[#allocation47] sm:$0xff]
        %v3100 = vld [vmem:[#allocation47 + $0x8] sm:$0xff]
        %v3101 = vld [vmem:[#allocation47 + $0x10] sm:$0xff]
        %v3102 = vld [vmem:[#allocation47 + $0x18] sm:$0xff]
        %v3103 = vld [vmem:[#allocation47 + $0x20] sm:$0xff]
        %v3104 = vld [vmem:[#allocation47 + $0x28] sm:$0xff]
        %v3105 = vld [vmem:[#allocation47 + $0x30] sm:$0xff]
        %v3106 = vld [vmem:[#allocation47 + $0x38] sm:$0xff]
        %v3107 = vld [vmem:[#allocation49] sm:$0x1]
        %v3108 = vld [vmem:[#allocation50] sm:$0xff]
        %v3109 = vld [vmem:[#allocation50 + $0x8] sm:$0xff]
        %v3110 = vld [vmem:[#allocation50 + $0x10] sm:$0xff]
        %v3111 = vld [vmem:[#allocation50 + $0x18] sm:$0xff]
        %v3112 = vld [vmem:[#allocation50 + $0x20] sm:$0xff]
        %v3113 = vld [vmem:[#allocation50 + $0x28] sm:$0xff]
        %v3114 = vld [vmem:[#allocation50 + $0x30] sm:$0xff]
        %v3115 = vld [vmem:[#allocation50 + $0x38] sm:$0xff]
        %v3116 = vld [vmem:[#allocation50 + $0x40] sm:$0xff]
        %v3117 = vld [vmem:[#allocation50 + $0x48] sm:$0xff]
        %v3118 = vld [vmem:[#allocation50 + $0x50] sm:$0xff]
        %v3119 = vld [vmem:[#allocation50 + $0x58] sm:$0xff]
        %v3120 = vld [vmem:[#allocation50 + $0x60] sm:$0xff]
        %v3121 = vld [vmem:[#allocation50 + $0x68] sm:$0xff]
        %v3122 = vld [vmem:[#allocation50 + $0x70] sm:$0xff]
        %v3123 = vld [vmem:[#allocation50 + $0x78] sm:$0xff]
        %v3124 = vld [vmem:[#allocation52] sm:$0xff]
        %v3125 = vld [vmem:[#allocation52 + $0x8] sm:$0xff]
        %v3126 = vld [vmem:[#allocation52 + $0x10] sm:$0xff]
        %v3127 = vld [vmem:[#allocation52 + $0x18] sm:$0xff]
        %v3128 = vld [vmem:[#allocation52 + $0x20] sm:$0xff]
        %v3129 = vld [vmem:[#allocation52 + $0x28] sm:$0xff]
        %v3130 = vld [vmem:[#allocation52 + $0x30] sm:$0xff]
        %v3131 = vld [vmem:[#allocation52 + $0x38] sm:$0xff]
        %v3132 = vld [vmem:[#allocation52 + $0x40] sm:$0xff]
        %v3133 = vld [vmem:[#allocation52 + $0x48] sm:$0xff]
        %v3134 = vld [vmem:[#allocation52 + $0x50] sm:$0xff]
        %v3135 = vld [vmem:[#allocation52 + $0x58] sm:$0xff]
        %v3136 = vld [vmem:[#allocation52 + $0x60] sm:$0xff]
        %v3137 = vld [vmem:[#allocation52 + $0x68] sm:$0xff]
        %v3138 = vld [vmem:[#allocation52 + $0x70] sm:$0xff]
        %v3139 = vld [vmem:[#allocation52 + $0x78] sm:$0xff]
        %v3140 = vld [vmem:[#allocation53] sm:$0x1]
        %v3141 = vld [vmem:[#allocation55] sm:$0xff]
        %v3142 = vld [vmem:[#allocation55 + $0x8] sm:$0xff]
        %v3143 = vld [vmem:[#allocation55 + $0x10] sm:$0xff]
        %v3144 = vld [vmem:[#allocation55 + $0x18] sm:$0xff]
        %v3145 = vld [vmem:[#allocation55 + $0x20] sm:$0xff]
        %v3146 = vld [vmem:[#allocation55 + $0x28] sm:$0xff]
        %v3147 = vld [vmem:[#allocation55 + $0x30] sm:$0xff]
        %v3148 = vld [vmem:[#allocation55 + $0x38] sm:$0xff]
        %v3149 = vld [vmem:[#allocation55 + $0x40] sm:$0xff]
        %v3150 = vld [vmem:[#allocation55 + $0x48] sm:$0xff]
        %v3151 = vld [vmem:[#allocation55 + $0x50] sm:$0xff]
        %v3152 = vld [vmem:[#allocation55 + $0x58] sm:$0xff]
        %v3153 = vld [vmem:[#allocation55 + $0x60] sm:$0xff]
        %v3154 = vld [vmem:[#allocation55 + $0x68] sm:$0xff]
        %v3155 = vld [vmem:[#allocation55 + $0x70] sm:$0xff]
        %v3156 = vld [vmem:[#allocation55 + $0x78] sm:$0xff]
        %v3157 = vld [vmem:[#allocation56] sm:$0x1]
        %v3158 = vld [vmem:[#allocation58] sm:$0x1]
        %v3159 = vld [vmem:[%s105] sm:$0x3]
        %v3160 = vld [vmem:[#allocation59] sm:$0xff]
        %v3161 = vld [vmem:[#allocation59 + $0x8] sm:$0xff]
        %v3162 = vld [vmem:[#allocation59 + $0x10] sm:$0xff]
        %v3163 = vld [vmem:[#allocation59 + $0x18] sm:$0xff]
        %v3164 = vld [vmem:[%s109] sm:$0x3]
        %v3165 = vld [vmem:[%s111] sm:$0xff]
        %v3166 = vld [vmem:[%s111 + $0x8] sm:$0xff]
        %v3167 = vld [vmem:[%s111 + $0x10] sm:$0xff]
        %v3168 = vld [vmem:[%s111 + $0x18] sm:$0xff]
        %v3169 = vld [vmem:[%s111 + $0x20] sm:$0xff]
        %v3170 = vld [vmem:[%s111 + $0x28] sm:$0xff]
        %v3171 = vld [vmem:[%s111 + $0x30] sm:$0xff]
        %v3172 = vld [vmem:[%s111 + $0x38] sm:$0xff]
        %v3173 = vld [vmem:[#allocation61] sm:$0x3]
        %v3174 = vld [vmem:[%s115] sm:$0xff]
        %v3175 = vld [vmem:[%s115 + $0x8] sm:$0xff]
        %v3176 = vld [vmem:[%s115 + $0x10] sm:$0xff]
        %v3177 = vld [vmem:[%s115 + $0x18] sm:$0xff]
        %v3178 = vld [vmem:[%s115 + $0x20] sm:$0xff]
        %v3179 = vld [vmem:[%s115 + $0x28] sm:$0xff]
        %v3180 = vld [vmem:[%s115 + $0x30] sm:$0xff]
        %v3181 = vld [vmem:[%s115 + $0x38] sm:$0xff]
        %v3182 = vld [vmem:[%s115 + $0x40] sm:$0xff]
        %v3183 = vld [vmem:[%s115 + $0x48] sm:$0xff]
        %v3184 = vld [vmem:[%s115 + $0x50] sm:$0xff]
        %v3185 = vld [vmem:[%s115 + $0x58] sm:$0xff]
        %v3186 = vld [vmem:[%s115 + $0x60] sm:$0xff]
        %v3187 = vld [vmem:[%s115 + $0x68] sm:$0xff]
        %v3188 = vld [vmem:[%s115 + $0x70] sm:$0xff]
        %v3189 = vld [vmem:[%s115 + $0x78] sm:$0xff]
        %v3190 = vld [vmem:[%s115 + $0x80] sm:$0xff]
        %v3191 = vld [vmem:[%s115 + $0x88] sm:$0xff]
        %v3192 = vld [vmem:[%s115 + $0x90] sm:$0xff]
        %v3193 = vld [vmem:[%s115 + $0x98] sm:$0xff]
        %v3194 = vld [vmem:[%s115 + $0xa0] sm:$0xff]
        %v3195 = vld [vmem:[%s115 + $0xa8] sm:$0xff]
        %v3196 = vld [vmem:[%s115 + $0xb0] sm:$0xff]
        %v3197 = vld [vmem:[%s115 + $0xb8] sm:$0xff]
        %v3198 = vld [vmem:[%s115 + $0xc0] sm:$0xff]
        %v3199 = vld [vmem:[%s115 + $0xc8] sm:$0xff]
        %v3200 = vld [vmem:[%s115 + $0xd0] sm:$0xff]
        %v3201 = vld [vmem:[%s115 + $0xd8] sm:$0xff]
        %v3202 = vld [vmem:[%s115 + $0xe0] sm:$0xff]
        %v3203 = vld [vmem:[%s115 + $0xe8] sm:$0xff]
        %v3204 = vld [vmem:[%s115 + $0xf0] sm:$0xff]
        %v3205 = vld [vmem:[%s115 + $0xf8] sm:$0xff]
        %v3206 = vld [vmem:[#allocation62] sm:$0x3]
        %v3207 = vld [vmem:[#allocation64] sm:$0xff]
        %v3208 = vld [vmem:[#allocation64 + $0x8] sm:$0xff]
        %v3209 = vld [vmem:[#allocation64 + $0x10] sm:$0xff]
        %v3210 = vld [vmem:[#allocation64 + $0x18] sm:$0xff]
        %v3211 = vld [vmem:[#allocation64 + $0x20] sm:$0xff]
        %v3212 = vld [vmem:[#allocation64 + $0x28] sm:$0xff]
        %v3213 = vld [vmem:[#allocation64 + $0x30] sm:$0xff]
        %v3214 = vld [vmem:[#allocation64 + $0x38] sm:$0xff]
        %v3215 = vld [vmem:[#allocation64 + $0x40] sm:$0xff]
        %v3216 = vld [vmem:[#allocation64 + $0x48] sm:$0xff]
        %v3217 = vld [vmem:[#allocation64 + $0x50] sm:$0xff]
        %v3218 = vld [vmem:[#allocation64 + $0x58] sm:$0xff]
        %v3219 = vld [vmem:[#allocation64 + $0x60] sm:$0xff]
        %v3220 = vld [vmem:[#allocation64 + $0x68] sm:$0xff]
        %v3221 = vld [vmem:[#allocation64 + $0x70] sm:$0xff]
        %v3222 = vld [vmem:[#allocation64 + $0x78] sm:$0xff]
        %v3223 = vld [vmem:[#allocation64 + $0x80] sm:$0xff]
        %v3224 = vld [vmem:[#allocation64 + $0x88] sm:$0xff]
        %v3225 = vld [vmem:[#allocation64 + $0x90] sm:$0xff]
        %v3226 = vld [vmem:[#allocation64 + $0x98] sm:$0xff]
        %v3227 = vld [vmem:[#allocation64 + $0xa0] sm:$0xff]
        %v3228 = vld [vmem:[#allocation64 + $0xa8] sm:$0xff]
        %v3229 = vld [vmem:[#allocation64 + $0xb0] sm:$0xff]
        %v3230 = vld [vmem:[#allocation64 + $0xb8] sm:$0xff]
        %v3231 = vld [vmem:[#allocation64 + $0xc0] sm:$0xff]
        %v3232 = vld [vmem:[#allocation64 + $0xc8] sm:$0xff]
        %v3233 = vld [vmem:[#allocation64 + $0xd0] sm:$0xff]
        %v3234 = vld [vmem:[#allocation64 + $0xd8] sm:$0xff]
        %v3235 = vld [vmem:[#allocation64 + $0xe0] sm:$0xff]
        %v3236 = vld [vmem:[#allocation64 + $0xe8] sm:$0xff]
        %v3237 = vld [vmem:[#allocation64 + $0xf0] sm:$0xff]
        %v3238 = vld [vmem:[#allocation64 + $0xf8] sm:$0xff]
        %v3239 = vld [vmem:[%s121] sm:$0x3]
        %v3240 = vld [vmem:[#allocation65] sm:$0xff]
        %v3241 = vld [vmem:[#allocation65 + $0x8] sm:$0xff]
        %v3242 = vld [vmem:[#allocation65 + $0x10] sm:$0xff]
        %v3243 = vld [vmem:[#allocation65 + $0x18] sm:$0xff]
        %v3244 = vld [vmem:[#allocation65 + $0x20] sm:$0xff]
        %v3245 = vld [vmem:[#allocation65 + $0x28] sm:$0xff]
        %v3246 = vld [vmem:[#allocation65 + $0x30] sm:$0xff]
        %v3247 = vld [vmem:[#allocation65 + $0x38] sm:$0xff]
        %v3248 = vld [vmem:[#allocation65 + $0x40] sm:$0xff]
        %v3249 = vld [vmem:[#allocation65 + $0x48] sm:$0xff]
        %v3250 = vld [vmem:[#allocation65 + $0x50] sm:$0xff]
        %v3251 = vld [vmem:[#allocation65 + $0x58] sm:$0xff]
        %v3252 = vld [vmem:[#allocation65 + $0x60] sm:$0xff]
        %v3253 = vld [vmem:[#allocation65 + $0x68] sm:$0xff]
        %v3254 = vld [vmem:[#allocation65 + $0x70] sm:$0xff]
        %v3255 = vld [vmem:[#allocation65 + $0x78] sm:$0xff]
        %v3256 = vld [vmem:[#allocation65 + $0x80] sm:$0xff]
        %v3257 = vld [vmem:[#allocation65 + $0x88] sm:$0xff]
        %v3258 = vld [vmem:[#allocation65 + $0x90] sm:$0xff]
        %v3259 = vld [vmem:[#allocation65 + $0x98] sm:$0xff]
        %v3260 = vld [vmem:[#allocation65 + $0xa0] sm:$0xff]
        %v3261 = vld [vmem:[#allocation65 + $0xa8] sm:$0xff]
        %v3262 = vld [vmem:[#allocation65 + $0xb0] sm:$0xff]
        %v3263 = vld [vmem:[#allocation65 + $0xb8] sm:$0xff]
        %v3264 = vld [vmem:[#allocation65 + $0xc0] sm:$0xff]
        %v3265 = vld [vmem:[#allocation65 + $0xc8] sm:$0xff]
        %v3266 = vld [vmem:[#allocation65 + $0xd0] sm:$0xff]
        %v3267 = vld [vmem:[#allocation65 + $0xd8] sm:$0xff]
        %v3268 = vld [vmem:[#allocation65 + $0xe0] sm:$0xff]
        %v3269 = vld [vmem:[#allocation65 + $0xe8] sm:$0xff]
        %v3270 = vld [vmem:[#allocation65 + $0xf0] sm:$0xff]
        %v3271 = vld [vmem:[#allocation65 + $0xf8] sm:$0xff]
        %v3272 = vld [vmem:[#allocation65 + $0x100] sm:$0xff]
        %v3273 = vld [vmem:[#allocation65 + $0x108] sm:$0xff]
        %v3274 = vld [vmem:[#allocation65 + $0x110] sm:$0xff]
        %v3275 = vld [vmem:[#allocation65 + $0x118] sm:$0xff]
        %v3276 = vld [vmem:[#allocation65 + $0x120] sm:$0xff]
        %v3277 = vld [vmem:[#allocation65 + $0x128] sm:$0xff]
        %v3278 = vld [vmem:[#allocation65 + $0x130] sm:$0xff]
        %v3279 = vld [vmem:[#allocation65 + $0x138] sm:$0xff]
        %v3280 = vld [vmem:[#allocation65 + $0x140] sm:$0xff]
        %v3281 = vld [vmem:[#allocation65 + $0x148] sm:$0xff]
        %v3282 = vld [vmem:[#allocation65 + $0x150] sm:$0xff]
        %v3283 = vld [vmem:[#allocation65 + $0x158] sm:$0xff]
        %v3284 = vld [vmem:[#allocation65 + $0x160] sm:$0xff]
        %v3285 = vld [vmem:[#allocation65 + $0x168] sm:$0xff]
        %v3286 = vld [vmem:[#allocation65 + $0x170] sm:$0xff]
        %v3287 = vld [vmem:[#allocation65 + $0x178] sm:$0xff]
        %v3288 = vld [vmem:[#allocation65 + $0x180] sm:$0xff]
        %v3289 = vld [vmem:[#allocation65 + $0x188] sm:$0xff]
        %v3290 = vld [vmem:[#allocation65 + $0x190] sm:$0xff]
        %v3291 = vld [vmem:[#allocation65 + $0x198] sm:$0xff]
        %v3292 = vld [vmem:[#allocation65 + $0x1a0] sm:$0xff]
        %v3293 = vld [vmem:[#allocation65 + $0x1a8] sm:$0xff]
        %v3294 = vld [vmem:[#allocation65 + $0x1b0] sm:$0xff]
        %v3295 = vld [vmem:[#allocation65 + $0x1b8] sm:$0xff]
        %v3296 = vld [vmem:[#allocation65 + $0x1c0] sm:$0xff]
        %v3297 = vld [vmem:[#allocation65 + $0x1c8] sm:$0xff]
        %v3298 = vld [vmem:[#allocation65 + $0x1d0] sm:$0xff]
        %v3299 = vld [vmem:[#allocation65 + $0x1d8] sm:$0xff]
        %v3300 = vld [vmem:[#allocation65 + $0x1e0] sm:$0xff]
        %v3301 = vld [vmem:[#allocation65 + $0x1e8] sm:$0xff]
        %v3302 = vld [vmem:[#allocation65 + $0x1f0] sm:$0xff]
        %v3303 = vld [vmem:[#allocation65 + $0x1f8] sm:$0xff]
        %v3304 = vld [vmem:[#allocation67] sm:$0xff]
        %v3305 = vld [vmem:[#allocation67 + $0x8] sm:$0xff]
        %v3306 = vld [vmem:[#allocation67 + $0x10] sm:$0xff]
        %v3307 = vld [vmem:[#allocation67 + $0x18] sm:$0xff]
        %v3308 = vld [vmem:[#allocation67 + $0x20] sm:$0xff]
        %v3309 = vld [vmem:[#allocation67 + $0x28] sm:$0xff]
        %v3310 = vld [vmem:[#allocation67 + $0x30] sm:$0xff]
        %v3311 = vld [vmem:[#allocation67 + $0x38] sm:$0xff]
        %v3312 = vld [vmem:[#allocation67 + $0x40] sm:$0xff]
        %v3313 = vld [vmem:[#allocation67 + $0x48] sm:$0xff]
        %v3314 = vld [vmem:[#allocation67 + $0x50] sm:$0xff]
        %v3315 = vld [vmem:[#allocation67 + $0x58] sm:$0xff]
        %v3316 = vld [vmem:[#allocation67 + $0x60] sm:$0xff]
        %v3317 = vld [vmem:[#allocation67 + $0x68] sm:$0xff]
        %v3318 = vld [vmem:[#allocation67 + $0x70] sm:$0xff]
        %v3319 = vld [vmem:[#allocation67 + $0x78] sm:$0xff]
        %v3320 = vld [vmem:[#allocation67 + $0x80] sm:$0xff]
        %v3321 = vld [vmem:[#allocation67 + $0x88] sm:$0xff]
        %v3322 = vld [vmem:[#allocation67 + $0x90] sm:$0xff]
        %v3323 = vld [vmem:[#allocation67 + $0x98] sm:$0xff]
        %v3324 = vld [vmem:[#allocation67 + $0xa0] sm:$0xff]
        %v3325 = vld [vmem:[#allocation67 + $0xa8] sm:$0xff]
        %v3326 = vld [vmem:[#allocation67 + $0xb0] sm:$0xff]
        %v3327 = vld [vmem:[#allocation67 + $0xb8] sm:$0xff]
        %v3328 = vld [vmem:[#allocation67 + $0xc0] sm:$0xff]
        %v3329 = vld [vmem:[#allocation67 + $0xc8] sm:$0xff]
        %v3330 = vld [vmem:[#allocation67 + $0xd0] sm:$0xff]
        %v3331 = vld [vmem:[#allocation67 + $0xd8] sm:$0xff]
        %v3332 = vld [vmem:[#allocation67 + $0xe0] sm:$0xff]
        %v3333 = vld [vmem:[#allocation67 + $0xe8] sm:$0xff]
        %v3334 = vld [vmem:[#allocation67 + $0xf0] sm:$0xff]
        %v3335 = vld [vmem:[#allocation67 + $0xf8] sm:$0xff]
        %v3336 = vld [vmem:[#allocation67 + $0x100] sm:$0xff]
        %v3337 = vld [vmem:[#allocation67 + $0x108] sm:$0xff]
        %v3338 = vld [vmem:[#allocation67 + $0x110] sm:$0xff]
        %v3339 = vld [vmem:[#allocation67 + $0x118] sm:$0xff]
        %v3340 = vld [vmem:[#allocation67 + $0x120] sm:$0xff]
        %v3341 = vld [vmem:[#allocation67 + $0x128] sm:$0xff]
        %v3342 = vld [vmem:[#allocation67 + $0x130] sm:$0xff]
        %v3343 = vld [vmem:[#allocation67 + $0x138] sm:$0xff]
        %v3344 = vld [vmem:[#allocation67 + $0x140] sm:$0xff]
        %v3345 = vld [vmem:[#allocation67 + $0x148] sm:$0xff]
        %v3346 = vld [vmem:[#allocation67 + $0x150] sm:$0xff]
        %v3347 = vld [vmem:[#allocation67 + $0x158] sm:$0xff]
        %v3348 = vld [vmem:[#allocation67 + $0x160] sm:$0xff]
        %v3349 = vld [vmem:[#allocation67 + $0x168] sm:$0xff]
        %v3350 = vld [vmem:[#allocation67 + $0x170] sm:$0xff]
        %v3351 = vld [vmem:[#allocation67 + $0x178] sm:$0xff]
        %v3352 = vld [vmem:[#allocation67 + $0x180] sm:$0xff]
        %v3353 = vld [vmem:[#allocation67 + $0x188] sm:$0xff]
        %v3354 = vld [vmem:[#allocation67 + $0x190] sm:$0xff]
        %v3355 = vld [vmem:[#allocation67 + $0x198] sm:$0xff]
        %v3356 = vld [vmem:[#allocation67 + $0x1a0] sm:$0xff]
        %v3357 = vld [vmem:[#allocation67 + $0x1a8] sm:$0xff]
        %v3358 = vld [vmem:[#allocation67 + $0x1b0] sm:$0xff]
        %v3359 = vld [vmem:[#allocation67 + $0x1b8] sm:$0xff]
        %v3360 = vld [vmem:[#allocation67 + $0x1c0] sm:$0xff]
        %v3361 = vld [vmem:[#allocation67 + $0x1c8] sm:$0xff]
        %v3362 = vld [vmem:[#allocation67 + $0x1d0] sm:$0xff]
        %v3363 = vld [vmem:[#allocation67 + $0x1d8] sm:$0xff]
        %v3364 = vld [vmem:[#allocation67 + $0x1e0] sm:$0xff]
        %v3365 = vld [vmem:[#allocation67 + $0x1e8] sm:$0xff]
        %v3366 = vld [vmem:[#allocation67 + $0x1f0] sm:$0xff]
        %v3367 = vld [vmem:[#allocation67 + $0x1f8] sm:$0xff]
        %v3368 = vld [vmem:[%s127] sm:$0x3]
        %v3369 = vld [vmem:[#allocation68] sm:$0xff]
        %v3370 = vld [vmem:[#allocation68 + $0x8] sm:$0xff]
        %v3371 = vld [vmem:[#allocation68 + $0x10] sm:$0xff]
        %v3372 = vld [vmem:[#allocation68 + $0x18] sm:$0xff]
        %v3373 = vld [vmem:[#allocation68 + $0x20] sm:$0xff]
        %v3374 = vld [vmem:[#allocation68 + $0x28] sm:$0xff]
        %v3375 = vld [vmem:[#allocation68 + $0x30] sm:$0xff]
        %v3376 = vld [vmem:[#allocation68 + $0x38] sm:$0xff]
        %v3377 = vld [vmem:[#allocation68 + $0x40] sm:$0xff]
        %v3378 = vld [vmem:[#allocation68 + $0x48] sm:$0xff]
        %v3379 = vld [vmem:[#allocation68 + $0x50] sm:$0xff]
        %v3380 = vld [vmem:[#allocation68 + $0x58] sm:$0xff]
        %v3381 = vld [vmem:[#allocation68 + $0x60] sm:$0xff]
        %v3382 = vld [vmem:[#allocation68 + $0x68] sm:$0xff]
        %v3383 = vld [vmem:[#allocation68 + $0x70] sm:$0xff]
        %v3384 = vld [vmem:[#allocation68 + $0x78] sm:$0xff]
        %v3385 = vld [vmem:[#allocation68 + $0x80] sm:$0xff]
        %v3386 = vld [vmem:[#allocation68 + $0x88] sm:$0xff]
        %v3387 = vld [vmem:[#allocation68 + $0x90] sm:$0xff]
        %v3388 = vld [vmem:[#allocation68 + $0x98] sm:$0xff]
        %v3389 = vld [vmem:[#allocation68 + $0xa0] sm:$0xff]
        %v3390 = vld [vmem:[#allocation68 + $0xa8] sm:$0xff]
        %v3391 = vld [vmem:[#allocation68 + $0xb0] sm:$0xff]
        %v3392 = vld [vmem:[#allocation68 + $0xb8] sm:$0xff]
        %v3393 = vld [vmem:[#allocation68 + $0xc0] sm:$0xff]
        %v3394 = vld [vmem:[#allocation68 + $0xc8] sm:$0xff]
        %v3395 = vld [vmem:[#allocation68 + $0xd0] sm:$0xff]
        %v3396 = vld [vmem:[#allocation68 + $0xd8] sm:$0xff]
        %v3397 = vld [vmem:[#allocation68 + $0xe0] sm:$0xff]
        %v3398 = vld [vmem:[#allocation68 + $0xe8] sm:$0xff]
        %v3399 = vld [vmem:[#allocation68 + $0xf0] sm:$0xff]
        %v3400 = vld [vmem:[#allocation68 + $0xf8] sm:$0xff]
        %v3401 = vld [vmem:[#allocation68 + $0x100] sm:$0xff]
        %v3402 = vld [vmem:[#allocation68 + $0x108] sm:$0xff]
        %v3403 = vld [vmem:[#allocation68 + $0x110] sm:$0xff]
        %v3404 = vld [vmem:[#allocation68 + $0x118] sm:$0xff]
        %v3405 = vld [vmem:[#allocation68 + $0x120] sm:$0xff]
        %v3406 = vld [vmem:[#allocation68 + $0x128] sm:$0xff]
        %v3407 = vld [vmem:[#allocation68 + $0x130] sm:$0xff]
        %v3408 = vld [vmem:[#allocation68 + $0x138] sm:$0xff]
        %v3409 = vld [vmem:[#allocation68 + $0x140] sm:$0xff]
        %v3410 = vld [vmem:[#allocation68 + $0x148] sm:$0xff]
        %v3411 = vld [vmem:[#allocation68 + $0x150] sm:$0xff]
        %v3412 = vld [vmem:[#allocation68 + $0x158] sm:$0xff]
        %v3413 = vld [vmem:[#allocation68 + $0x160] sm:$0xff]
        %v3414 = vld [vmem:[#allocation68 + $0x168] sm:$0xff]
        %v3415 = vld [vmem:[#allocation68 + $0x170] sm:$0xff]
        %v3416 = vld [vmem:[#allocation68 + $0x178] sm:$0xff]
        %v3417 = vld [vmem:[#allocation68 + $0x180] sm:$0xff]
        %v3418 = vld [vmem:[#allocation68 + $0x188] sm:$0xff]
        %v3419 = vld [vmem:[#allocation68 + $0x190] sm:$0xff]
        %v3420 = vld [vmem:[#allocation68 + $0x198] sm:$0xff]
        %v3421 = vld [vmem:[#allocation68 + $0x1a0] sm:$0xff]
        %v3422 = vld [vmem:[#allocation68 + $0x1a8] sm:$0xff]
        %v3423 = vld [vmem:[#allocation68 + $0x1b0] sm:$0xff]
        %v3424 = vld [vmem:[#allocation68 + $0x1b8] sm:$0xff]
        %v3425 = vld [vmem:[#allocation68 + $0x1c0] sm:$0xff]
        %v3426 = vld [vmem:[#allocation68 + $0x1c8] sm:$0xff]
        %v3427 = vld [vmem:[#allocation68 + $0x1d0] sm:$0xff]
        %v3428 = vld [vmem:[#allocation68 + $0x1d8] sm:$0xff]
        %v3429 = vld [vmem:[#allocation68 + $0x1e0] sm:$0xff]
        %v3430 = vld [vmem:[#allocation68 + $0x1e8] sm:$0xff]
        %v3431 = vld [vmem:[#allocation68 + $0x1f0] sm:$0xff]
        %v3432 = vld [vmem:[#allocation68 + $0x1f8] sm:$0xff]
        %v3433 = vld [vmem:[%s131] sm:$0x3]
        %v3434 = vld [vmem:[%s133] sm:$0x3]
        %v3435 = vld [vmem:[%s2259] sm:$0xff]
        %v3436 = vld [vmem:[%s2259 + $0x8] sm:$0xff]
        %v3437 = vld [vmem:[%s2599] sm:$0xff]
        %v3438 = vld [vmem:[%s2268] sm:$0xff]
        %v3440 = vlaneseq
        %v3441 = vshrl.u32 %v3440, 7
        %v3442 = vsub.s32 0, %v3441
        %v3443 = vrot.slane %v2682, %v3442
        %v3444 = vlaneseq
        %v3445 = vshrl.u32 %v3444, 7
        %v3446 = vsub.s32 1, %v3445
        %v3447 = vrot.slane %v2682, %v3446
        %3450 = vmatprep.subr.mxu0 %v2714
        %3451 = vmatpush1.msra.mxu0 %v2713
        %3452 = vmatprep.subr.mxu0 %v2712
        %3453 = vmatpush1.msra.mxu0 %v2711
        %3454 = vmatprep.subr.mxu0 %v2710
        %3455 = vmatpush1.msra.mxu0 %v2709
        %3456 = vmatprep.subr.mxu0 %v2708
        %3457 = vmatpush1.msra.mxu0 %v2707
        %3458 = vmatprep.subr.mxu0 %v2706
        %3459 = vmatpush1.msra.mxu0 %v2705
        %3460 = vmatprep.subr.mxu0 %v2704
        %3461 = vmatpush1.msra.mxu0 %v2703
        %3462 = vmatprep.subr.mxu0 %v2702
        %3463 = vmatpush1.msra.mxu0 %v2701
        %3464 = vmatprep.subr.mxu0 %v2700
        %3465 = vmatpush1.msra.mxu0 %v2699
        %3466 = vmatprep.subr.mxu0 %v2698
        %3467 = vmatpush1.msra.mxu0 %v2697
        %3468 = vmatprep.subr.mxu0 %v2696
        %3469 = vmatpush1.msra.mxu0 %v2695
        %3470 = vmatprep.subr.mxu0 %v2694
        %3471 = vmatpush1.msra.mxu0 %v2693
        %3472 = vmatprep.subr.mxu0 %v2692
        %3473 = vmatpush1.msra.mxu0 %v2691
        %3474 = vmatprep.subr.mxu0 %v2690
        %3475 = vmatpush1.msra.mxu0 %v2689
        %3476 = vmatprep.subr.mxu0 %v2688
        %3477 = vmatpush1.msra.mxu0 %v2687
        %3478 = vmatprep.subr.mxu0 %v2686
        %3479 = vmatpush1.msra.mxu0 %v2685
        %3480 = vmatprep.subr.mxu0 %v2684
        %3481 = vmatpush1.msra.mxu0 %v2683
        %3482 = vmatprep.subr.mxu0 %v2746
        %3483 = vmatpush2.msra.mxu0 %v2745
        %3484 = vmatprep.subr.mxu0 %v2744
        %3485 = vmatpush2.msra.mxu0 %v2743
        %3486 = vmatprep.subr.mxu0 %v2742
        %3487 = vmatpush2.msra.mxu0 %v2741
        %3488 = vmatprep.subr.mxu0 %v2740
        %3489 = vmatpush2.msra.mxu0 %v2739
        %3490 = vmatprep.subr.mxu0 %v2738
        %3491 = vmatpush2.msra.mxu0 %v2737
        %3492 = vmatprep.subr.mxu0 %v2736
        %3493 = vmatpush2.msra.mxu0 %v2735
        %3494 = vmatprep.subr.mxu0 %v2734
        %3495 = vmatpush2.msra.mxu0 %v2733
        %3496 = vmatprep.subr.mxu0 %v2732
        %3497 = vmatpush2.msra.mxu0 %v2731
        %3498 = vmatprep.subr.mxu0 %v2730
        %3499 = vmatpush2.msra.mxu0 %v2729
        %3500 = vmatprep.subr.mxu0 %v2728
        %3501 = vmatpush2.msra.mxu0 %v2727
        %3502 = vmatprep.subr.mxu0 %v2726
        %3503 = vmatpush2.msra.mxu0 %v2725
        %3504 = vmatprep.subr.mxu0 %v2724
        %3505 = vmatpush2.msra.mxu0 %v2723
        %3506 = vmatprep.subr.mxu0 %v2722
        %3507 = vmatpush2.msra.mxu0 %v2721
        %3508 = vmatprep.subr.mxu0 %v2720
        %3509 = vmatpush2.msra.mxu0 %v2719
        %3510 = vmatprep.subr.mxu0 %v2718
        %3511 = vmatpush2.msra.mxu0 %v2717
        %3512 = vmatprep.subr.mxu0 %v2716
        %3513 = vmatpush2.msra.mxu0 %v2715
        %3514 = vmatprep.mubr.f32.mxu0 %v3436
        %3515 = vmatmul.mubr.f32.gmra.mxu0 %v3435
        %v3516 = vpop.f32.mrf.mxu0
        %v3517 = vadd.f32 %v3443, %v3516
        %v3518 = vpop.f32.mrf.mxu0
        %v3519 = vadd.f32 %v3447, %v3518
        %3520 = vdwg.mxu0
        %v3521 = vsub.f32 0.0, %v3517
        %v3522 = vsub.f32 0.0, %v3519
        %v3523 = vmul.f32 %v3521, 1.442695
        %v3524 = vpow.pop %v3523
        %v3525 = vmul.f32 %v3522, 1.442695
        %v3526 = vpow.pop %v3525
        %v3527 = vadd.f32 %v3524, 1.0
        %v3528 = vadd.f32 %v3526, 1.0
        %v3529 = vrcp.pop %v3527
        %v3530 = vmul.f32 1.0, %v3529
        %v3531 = vrcp.pop %v3528
        %v3532 = vmul.f32 1.0, %v3531
        %v3533 = vmul.f32 %v3517, %v3530
        %v3534 = vmul.f32 %v3519, %v3532
        %v3536 = vlaneseq
        %v3537 = vshrl.u32 %v3536, 7
        %v3538 = vsub.s32 0, %v3537
        %v3539 = vrot.slane %v2747, %v3538
        %v3540 = vlaneseq
        %v3541 = vshrl.u32 %v3540, 7
        %v3542 = vsub.s32 1, %v3541
        %v3543 = vrot.slane %v2747, %v3542
        %3546 = vmatprep.subr.mxu0 %v2779
        %3547 = vmatpush1.msra.mxu0 %v2778
        %3548 = vmatprep.subr.mxu0 %v2777
        %3549 = vmatpush1.msra.mxu0 %v2776
        %3550 = vmatprep.subr.mxu0 %v2775
        %3551 = vmatpush1.msra.mxu0 %v2774
        %3552 = vmatprep.subr.mxu0 %v2773
        %3553 = vmatpush1.msra.mxu0 %v2772
        %3554 = vmatprep.subr.mxu0 %v2771
        %3555 = vmatpush1.msra.mxu0 %v2770
        %3556 = vmatprep.subr.mxu0 %v2769
        %3557 = vmatpush1.msra.mxu0 %v2768
        %3558 = vmatprep.subr.mxu0 %v2767
        %3559 = vmatpush1.msra.mxu0 %v2766
        %3560 = vmatprep.subr.mxu0 %v2765
        %3561 = vmatpush1.msra.mxu0 %v2764
        %3562 = vmatprep.subr.mxu0 %v2763
        %3563 = vmatpush1.msra.mxu0 %v2762
        %3564 = vmatprep.subr.mxu0 %v2761
        %3565 = vmatpush1.msra.mxu0 %v2760
        %3566 = vmatprep.subr.mxu0 %v2759
        %3567 = vmatpush1.msra.mxu0 %v2758
        %3568 = vmatprep.subr.mxu0 %v2757
        %3569 = vmatpush1.msra.mxu0 %v2756
        %3570 = vmatprep.subr.mxu0 %v2755
        %3571 = vmatpush1.msra.mxu0 %v2754
        %3572 = vmatprep.subr.mxu0 %v2753
        %3573 = vmatpush1.msra.mxu0 %v2752
        %3574 = vmatprep.subr.mxu0 %v2751
        %3575 = vmatpush1.msra.mxu0 %v2750
        %3576 = vmatprep.subr.mxu0 %v2749
        %3577 = vmatpush1.msra.mxu0 %v2748
        %3578 = vmatprep.subr.mxu0 %v2811
        %3579 = vmatpush2.msra.mxu0 %v2810
        %3580 = vmatprep.subr.mxu0 %v2809
        %3581 = vmatpush2.msra.mxu0 %v2808
        %3582 = vmatprep.subr.mxu0 %v2807
        %3583 = vmatpush2.msra.mxu0 %v2806
        %3584 = vmatprep.subr.mxu0 %v2805
        %3585 = vmatpush2.msra.mxu0 %v2804
        %3586 = vmatprep.subr.mxu0 %v2803
        %3587 = vmatpush2.msra.mxu0 %v2802
        %3588 = vmatprep.subr.mxu0 %v2801
        %3589 = vmatpush2.msra.mxu0 %v2800
        %3590 = vmatprep.subr.mxu0 %v2799
        %3591 = vmatpush2.msra.mxu0 %v2798
        %3592 = vmatprep.subr.mxu0 %v2797
        %3593 = vmatpush2.msra.mxu0 %v2796
        %3594 = vmatprep.subr.mxu0 %v2795
        %3595 = vmatpush2.msra.mxu0 %v2794
        %3596 = vmatprep.subr.mxu0 %v2793
        %3597 = vmatpush2.msra.mxu0 %v2792
        %3598 = vmatprep.subr.mxu0 %v2791
        %3599 = vmatpush2.msra.mxu0 %v2790
        %3600 = vmatprep.subr.mxu0 %v2789
        %3601 = vmatpush2.msra.mxu0 %v2788
        %3602 = vmatprep.subr.mxu0 %v2787
        %3603 = vmatpush2.msra.mxu0 %v2786
        %3604 = vmatprep.subr.mxu0 %v2785
        %3605 = vmatpush2.msra.mxu0 %v2784
        %3606 = vmatprep.subr.mxu0 %v2783
        %3607 = vmatpush2.msra.mxu0 %v2782
        %3608 = vmatprep.subr.mxu0 %v2781
        %3609 = vmatpush2.msra.mxu0 %v2780
        %3610 = vmatprep.mubr.f32.mxu0 %v3534
        %3611 = vmatmul.mubr.f32.gmra.mxu0 %v3533
        %v3612 = vpop.f32.mrf.mxu0
        %v3613 = vadd.f32 %v3539, %v3612
        %v3614 = vpop.f32.mrf.mxu0
        %v3615 = vadd.f32 %v3543, %v3614
        %3616 = vdwg.mxu0
        %v3617 = vsub.f32 0.0, %v3613
        %v3618 = vsub.f32 0.0, %v3615
        %v3619 = vmul.f32 %v3617, 1.442695
        %v3620 = vpow.pop %v3619
        %v3621 = vmul.f32 %v3618, 1.442695
        %v3622 = vpow.pop %v3621
        %v3623 = vadd.f32 %v3620, 1.0
        %v3624 = vadd.f32 %v3622, 1.0
        %v3625 = vrcp.pop %v3623
        %v3626 = vmul.f32 1.0, %v3625
        %v3627 = vrcp.pop %v3624
        %v3628 = vmul.f32 1.0, %v3627
        %v3629 = vmul.f32 %v3613, %v3626
        %v3630 = vmul.f32 %v3615, %v3628
        %3631 = vmatprep.subr.mxu0 0.0
        %3632 = vmatpush1.msra.mxu0 %v2665
        %3633 = vmatprep.subr.mxu0 0.0
        %3634 = vmatpush1.msra.mxu0 %v2664
        %3635 = vmatprep.subr.mxu0 0.0
        %3636 = vmatpush1.msra.mxu0 %v2663
        %3637 = vmatprep.subr.mxu0 0.0
        %3638 = vmatpush1.msra.mxu0 %v2662
        %3639 = vmatprep.subr.mxu0 0.0
        %3640 = vmatpush1.msra.mxu0 %v2661
        %3641 = vmatprep.subr.mxu0 0.0
        %3642 = vmatpush1.msra.mxu0 %v2660
        %3643 = vmatprep.subr.mxu0 0.0
        %3644 = vmatpush1.msra.mxu0 %v2659
        %3645 = vmatprep.subr.mxu0 0.0
        %3646 = vmatpush1.msra.mxu0 %v2658
        %3647 = vmatprep.subr.mxu0 0.0
        %3648 = vmatpush1.msra.mxu0 %v2657
        %3649 = vmatprep.subr.mxu0 0.0
        %3650 = vmatpush1.msra.mxu0 %v2656
        %3651 = vmatprep.subr.mxu0 0.0
        %3652 = vmatpush1.msra.mxu0 %v2655
        %3653 = vmatprep.subr.mxu0 0.0
        %3654 = vmatpush1.msra.mxu0 %v2654
        %3655 = vmatprep.subr.mxu0 0.0
        %3656 = vmatpush1.msra.mxu0 %v2653
        %3657 = vmatprep.subr.mxu0 0.0
        %3658 = vmatpush1.msra.mxu0 %v2652
        %3659 = vmatprep.subr.mxu0 0.0
        %3660 = vmatpush1.msra.mxu0 %v2651
        %3661 = vmatprep.subr.mxu0 0.0
        %3662 = vmatpush1.msra.mxu0 %v2650
        %3663 = vmatprep.subr.mxu0 0.0
        %3664 = vmatpush2.msra.mxu0 %v2681
        %3665 = vmatprep.subr.mxu0 0.0
        %3666 = vmatpush2.msra.mxu0 %v2680
        %3667 = vmatprep.subr.mxu0 0.0
        %3668 = vmatpush2.msra.mxu0 %v2679
        %3669 = vmatprep.subr.mxu0 0.0
        %3670 = vmatpush2.msra.mxu0 %v2678
        %3671 = vmatprep.subr.mxu0 0.0
        %3672 = vmatpush2.msra.mxu0 %v2677
        %3673 = vmatprep.subr.mxu0 0.0
        %3674 = vmatpush2.msra.mxu0 %v2676
        %3675 = vmatprep.subr.mxu0 0.0
        %3676 = vmatpush2.msra.mxu0 %v2675
        %3677 = vmatprep.subr.mxu0 0.0
        %3678 = vmatpush2.msra.mxu0 %v2674
        %3679 = vmatprep.subr.mxu0 0.0
        %3680 = vmatpush2.msra.mxu0 %v2673
        %3681 = vmatprep.subr.mxu0 0.0
        %3682 = vmatpush2.msra.mxu0 %v2672
        %3683 = vmatprep.subr.mxu0 0.0
        %3684 = vmatpush2.msra.mxu0 %v2671
        %3685 = vmatprep.subr.mxu0 0.0
        %3686 = vmatpush2.msra.mxu0 %v2670
        %3687 = vmatprep.subr.mxu0 0.0
        %3688 = vmatpush2.msra.mxu0 %v2669
        %3689 = vmatprep.subr.mxu0 0.0
        %3690 = vmatpush2.msra.mxu0 %v2668
        %3691 = vmatprep.subr.mxu0 0.0
        %3692 = vmatpush2.msra.mxu0 %v2667
        %3693 = vmatprep.subr.mxu0 0.0
        %3694 = vmatpush2.msra.mxu0 %v2666
        %3695 = vmatprep.mubr.f32.mxu0 %v3630
        %3696 = vmatmul.mubr.f32.gmra.mxu0 %v3629
        %v3697 = vpop.f32.mrf.mxu0
        %v3698 = vadd.f32 0.0, %v3697
        %v3699 = vpop.f32.mrf.mxu0
        %3700 = vdwg.mxu0
        %vm3701 = vcmask 261120
        %v3703 = vsel %vm3701, %v3698, 0
        %3705 = vmatprep.subr.mxu0 0.0
        %3706 = vmatpush1.msra.mxu0 0.0
        %3707 = vmatprep.subr.mxu0 0.0
        %3708 = vmatpush1.msra.mxu0 0.0
        %3709 = vmatprep.subr.mxu0 0.0
        %3710 = vmatpush1.msra.mxu0 0.0
        %3711 = vmatprep.subr.mxu0 0.0
        %3712 = vmatpush1.msra.mxu0 0.0
        %3713 = vmatprep.subr.mxu0 0.0
        %3714 = vmatpush1.msra.mxu0 0.0
        %3715 = vmatprep.subr.mxu0 0.0
        %3716 = vmatpush1.msra.mxu0 0.0
        %3717 = vmatprep.subr.mxu0 0.0
        %3718 = vmatpush1.msra.mxu0 0.0
        %3719 = vmatprep.subr.mxu0 0.0
        %3720 = vmatpush1.msra.mxu0 0.0
        %3721 = vmatprep.subr.mxu0 0.0
        %3722 = vmatpush1.msra.mxu0 0.0
        %3723 = vmatprep.subr.mxu0 0.0
        %3724 = vmatpush1.msra.mxu0 0.0
        %3725 = vmatprep.subr.mxu0 0.0
        %3726 = vmatpush1.msra.mxu0 0.0
        %3727 = vmatprep.subr.mxu0 0.0
        %3728 = vmatpush1.msra.mxu0 0.0
        %3729 = vmatprep.subr.mxu0 %v2648
        %3730 = vmatpush1.msra.mxu0 %v2647
        %3731 = vmatprep.subr.mxu0 %v2646
        %3732 = vmatpush1.msra.mxu0 %v2645
        %3733 = vmatprep.subr.mxu0 %v2644
        %3734 = vmatpush1.msra.mxu0 %v2643
        %3735 = vmatprep.subr.mxu0 %v2642
        %3736 = vmatpush1.msra.mxu0 %v2641
        %3737 = vmatprep.subr.mxu0 0.0
        %3738 = vmatpush2.msra.mxu0 0.0
        %3739 = vmatprep.subr.mxu0 0.0
        %3740 = vmatpush2.msra.mxu0 0.0
        %3741 = vmatprep.subr.mxu0 0.0
        %3742 = vmatpush2.msra.mxu0 0.0
        %3743 = vmatprep.subr.mxu0 0.0
        %3744 = vmatpush2.msra.mxu0 0.0
        %3745 = vmatprep.subr.mxu0 0.0
        %3746 = vmatpush2.msra.mxu0 0.0
        %3747 = vmatprep.subr.mxu0 0.0
        %3748 = vmatpush2.msra.mxu0 0.0
        %3749 = vmatprep.subr.mxu0 0.0
        %3750 = vmatpush2.msra.mxu0 0.0
        %3751 = vmatprep.subr.mxu0 0.0
        %3752 = vmatpush2.msra.mxu0 0.0
        %3753 = vmatprep.subr.mxu0 0.0
        %3754 = vmatpush2.msra.mxu0 0.0
        %3755 = vmatprep.subr.mxu0 0.0
        %3756 = vmatpush2.msra.mxu0 0.0
        %3757 = vmatprep.subr.mxu0 0.0
        %3758 = vmatpush2.msra.mxu0 0.0
        %3759 = vmatprep.subr.mxu0 0.0
        %3760 = vmatpush2.msra.mxu0 0.0
        %3761 = vmatprep.subr.mxu0 0.0
        %3762 = vmatpush2.msra.mxu0 0.0
        %3763 = vmatprep.subr.mxu0 0.0
        %3764 = vmatpush2.msra.mxu0 0.0
        %3765 = vmatprep.subr.mxu0 0.0
        %3766 = vmatpush2.msra.mxu0 0.0
        %3767 = vmatprep.subr.mxu0 0.0
        %3768 = vmatpush2.msra.mxu0 0.0
        %3769 = vmatprep.mubr.f32.mxu0 0.0
        %3770 = vmatmul.mubr.f32.gmra.mxu0 %v3703
        %v3771 = vpop.f32.mrf.mxu0
        %v3772 = vadd.f32 0.0, %v3771
        %v3773 = vpop.f32.mrf.mxu0
        %v3774 = vadd.f32 0.0, %v3773
        %3775 = vdwg.mxu0
        %v3776 = vsub.f32 %v3629, %v3772
        %v3777 = vsub.f32 %v3630, %v3774
        %v3778 = vmul.f32 %v3776, %v3776
        %v3779 = vmul.f32 %v3777, %v3777
        %3780 = vmatprep.subr.mxu0 0.0
        %3781 = vmatpush1.msra.mxu0 %v2665
        %3782 = vmatprep.subr.mxu0 0.0
        %3783 = vmatpush1.msra.mxu0 %v2664
        %3784 = vmatprep.subr.mxu0 0.0
        %3785 = vmatpush1.msra.mxu0 %v2663
        %3786 = vmatprep.subr.mxu0 0.0
        %3787 = vmatpush1.msra.mxu0 %v2662
        %3788 = vmatprep.subr.mxu0 0.0
        %3789 = vmatpush1.msra.mxu0 %v2661
        %3790 = vmatprep.subr.mxu0 0.0
        %3791 = vmatpush1.msra.mxu0 %v2660
        %3792 = vmatprep.subr.mxu0 0.0
        %3793 = vmatpush1.msra.mxu0 %v2659
        %3794 = vmatprep.subr.mxu0 0.0
        %3795 = vmatpush1.msra.mxu0 %v2658
        %3796 = vmatprep.subr.mxu0 0.0
        %3797 = vmatpush1.msra.mxu0 %v2657
        %3798 = vmatprep.subr.mxu0 0.0
        %3799 = vmatpush1.msra.mxu0 %v2656
        %3800 = vmatprep.subr.mxu0 0.0
        %3801 = vmatpush1.msra.mxu0 %v2655
        %3802 = vmatprep.subr.mxu0 0.0
        %3803 = vmatpush1.msra.mxu0 %v2654
        %3804 = vmatprep.subr.mxu0 0.0
        %3805 = vmatpush1.msra.mxu0 %v2653
        %3806 = vmatprep.subr.mxu0 0.0
        %3807 = vmatpush1.msra.mxu0 %v2652
        %3808 = vmatprep.subr.mxu0 0.0
        %3809 = vmatpush1.msra.mxu0 %v2651
        %3810 = vmatprep.subr.mxu0 0.0
        %3811 = vmatpush1.msra.mxu0 %v2650
        %3812 = vmatprep.subr.mxu0 0.0
        %3813 = vmatpush2.msra.mxu0 %v2681
        %3814 = vmatprep.subr.mxu0 0.0
        %3815 = vmatpush2.msra.mxu0 %v2680
        %3816 = vmatprep.subr.mxu0 0.0
        %3817 = vmatpush2.msra.mxu0 %v2679
        %3818 = vmatprep.subr.mxu0 0.0
        %3819 = vmatpush2.msra.mxu0 %v2678
        %3820 = vmatprep.subr.mxu0 0.0
        %3821 = vmatpush2.msra.mxu0 %v2677
        %3822 = vmatprep.subr.mxu0 0.0
        %3823 = vmatpush2.msra.mxu0 %v2676
        %3824 = vmatprep.subr.mxu0 0.0
        %3825 = vmatpush2.msra.mxu0 %v2675
        %3826 = vmatprep.subr.mxu0 0.0
        %3827 = vmatpush2.msra.mxu0 %v2674
        %3828 = vmatprep.subr.mxu0 0.0
        %3829 = vmatpush2.msra.mxu0 %v2673
        %3830 = vmatprep.subr.mxu0 0.0
        %3831 = vmatpush2.msra.mxu0 %v2672
        %3832 = vmatprep.subr.mxu0 0.0
        %3833 = vmatpush2.msra.mxu0 %v2671
        %3834 = vmatprep.subr.mxu0 0.0
        %3835 = vmatpush2.msra.mxu0 %v2670
        %3836 = vmatprep.subr.mxu0 0.0
        %3837 = vmatpush2.msra.mxu0 %v2669
        %3838 = vmatprep.subr.mxu0 0.0
        %3839 = vmatpush2.msra.mxu0 %v2668
        %3840 = vmatprep.subr.mxu0 0.0
        %3841 = vmatpush2.msra.mxu0 %v2667
        %3842 = vmatprep.subr.mxu0 0.0
        %3843 = vmatpush2.msra.mxu0 %v2666
        %3844 = vmatprep.mubr.f32.mxu0 %v3779
        %3845 = vmatmul.mubr.f32.gmra.mxu0 %v3778
        %v3846 = vpop.f32.mrf.mxu0
        %v3847 = vadd.f32 0.0, %v3846
        %v3848 = vpop.f32.mrf.mxu0
        %3849 = vdwg.mxu0
        %v3851 = vsel %vm3701, %v3847, 0
        %3853 = vmatprep.subr.mxu0 0.0
        %3854 = vmatpush1.msra.mxu0 0.0
        %3855 = vmatprep.subr.mxu0 0.0
        %3856 = vmatpush1.msra.mxu0 0.0
        %3857 = vmatprep.subr.mxu0 0.0
        %3858 = vmatpush1.msra.mxu0 0.0
        %3859 = vmatprep.subr.mxu0 0.0
        %3860 = vmatpush1.msra.mxu0 0.0
        %3861 = vmatprep.subr.mxu0 0.0
        %3862 = vmatpush1.msra.mxu0 0.0
        %3863 = vmatprep.subr.mxu0 0.0
        %3864 = vmatpush1.msra.mxu0 0.0
        %3865 = vmatprep.subr.mxu0 0.0
        %3866 = vmatpush1.msra.mxu0 0.0
        %3867 = vmatprep.subr.mxu0 0.0
        %3868 = vmatpush1.msra.mxu0 0.0
        %3869 = vmatprep.subr.mxu0 0.0
        %3870 = vmatpush1.msra.mxu0 0.0
        %3871 = vmatprep.subr.mxu0 0.0
        %3872 = vmatpush1.msra.mxu0 0.0
        %3873 = vmatprep.subr.mxu0 0.0
        %3874 = vmatpush1.msra.mxu0 0.0
        %3875 = vmatprep.subr.mxu0 0.0
        %3876 = vmatpush1.msra.mxu0 0.0
        %3877 = vmatprep.subr.mxu0 %v2648
        %3878 = vmatpush1.msra.mxu0 %v2647
        %3879 = vmatprep.subr.mxu0 %v2646
        %3880 = vmatpush1.msra.mxu0 %v2645
        %3881 = vmatprep.subr.mxu0 %v2644
        %3882 = vmatpush1.msra.mxu0 %v2643
        %3883 = vmatprep.subr.mxu0 %v2642
        %3884 = vmatpush1.msra.mxu0 %v2641
        %3885 = vmatprep.subr.mxu0 0.0
        %3886 = vmatpush2.msra.mxu0 0.0
        %3887 = vmatprep.subr.mxu0 0.0
        %3888 = vmatpush2.msra.mxu0 0.0
        %3889 = vmatprep.subr.mxu0 0.0
        %3890 = vmatpush2.msra.mxu0 0.0
        %3891 = vmatprep.subr.mxu0 0.0
        %3892 = vmatpush2.msra.mxu0 0.0
        %3893 = vmatprep.subr.mxu0 0.0
        %3894 = vmatpush2.msra.mxu0 0.0
        %3895 = vmatprep.subr.mxu0 0.0
        %3896 = vmatpush2.msra.mxu0 0.0
        %3897 = vmatprep.subr.mxu0 0.0
        %3898 = vmatpush2.msra.mxu0 0.0
        %3899 = vmatprep.subr.mxu0 0.0
        %3900 = vmatpush2.msra.mxu0 0.0
        %3901 = vmatprep.subr.mxu0 0.0
        %3902 = vmatpush2.msra.mxu0 0.0
        %3903 = vmatprep.subr.mxu0 0.0
        %3904 = vmatpush2.msra.mxu0 0.0
        %3905 = vmatprep.subr.mxu0 0.0
        %3906 = vmatpush2.msra.mxu0 0.0
        %3907 = vmatprep.subr.mxu0 0.0
        %3908 = vmatpush2.msra.mxu0 0.0
        %3909 = vmatprep.subr.mxu0 0.0
        %3910 = vmatpush2.msra.mxu0 0.0
        %3911 = vmatprep.subr.mxu0 0.0
        %3912 = vmatpush2.msra.mxu0 0.0
        %3913 = vmatprep.subr.mxu0 0.0
        %3914 = vmatpush2.msra.mxu0 0.0
        %3915 = vmatprep.subr.mxu0 0.0
        %3916 = vmatpush2.msra.mxu0 0.0
        %3917 = vmatprep.mubr.f32.mxu0 0.0
        %3918 = vmatmul.mubr.f32.gmra.mxu0 %v3851
        %v3919 = vpop.f32.mrf.mxu0
        %v3920 = vadd.f32 1e-05, %v3919
        %v3921 = vpop.f32.mrf.mxu0
        %v3922 = vadd.f32 1e-05, %v3921
        %3923 = vdwg.mxu0
        %v3924 = vrsqrt.pop %v3920
        %v3925 = vrsqrt.pop %v3922
        %v3926 = vmul.f32 %v3776, %v3924
        %v3927 = vmul.f32 %v3777, %v3925
        %v3929 = vlaneseq
        %v3930 = vshrl.u32 %v3929, 7
        %v3931 = vsub.s32 0, %v3930
        %v3932 = vrot.slane %v2649, %v3931
        %v3933 = vlaneseq
        %v3934 = vshrl.u32 %v3933, 7
        %v3935 = vsub.s32 1, %v3934
        %v3936 = vrot.slane %v2649, %v3935
        %v3939 = vmul.f32 %v3926, %v3932
        %v3940 = vmul.f32 %v3927, %v3936
        %v3942 = vlaneseq
        %v3943 = vshrl.u32 %v3942, 7
        %v3944 = vsub.s32 0, %v3943
        %v3945 = vrot.slane %v2640, %v3944
        %v3946 = vlaneseq
        %v3947 = vshrl.u32 %v3946, 7
        %v3948 = vsub.s32 1, %v3947
        %v3949 = vrot.slane %v2640, %v3948
        %v3952 = vadd.f32 %v3939, %v3945
        %v3953 = vadd.f32 %v3940, %v3949
        %v3955 = vlaneseq
        %v3956 = vshrl.u32 %v3955, 7
        %v3957 = vsub.s32 0, %v3956
        %v3958 = vrot.slane %v2812, %v3957
        %v3959 = vlaneseq
        %v3960 = vshrl.u32 %v3959, 7
        %v3961 = vsub.s32 1, %v3960
        %v3962 = vrot.slane %v2812, %v3961
        %3965 = vmatprep.subr.mxu0 %v2844
        %3966 = vmatpush1.msra.mxu0 %v2843
        %3967 = vmatprep.subr.mxu0 %v2842
        %3968 = vmatpush1.msra.mxu0 %v2841
        %3969 = vmatprep.subr.mxu0 %v2840
        %3970 = vmatpush1.msra.mxu0 %v2839
        %3971 = vmatprep.subr.mxu0 %v2838
        %3972 = vmatpush1.msra.mxu0 %v2837
        %3973 = vmatprep.subr.mxu0 %v2836
        %3974 = vmatpush1.msra.mxu0 %v2835
        %3975 = vmatprep.subr.mxu0 %v2834
        %3976 = vmatpush1.msra.mxu0 %v2833
        %3977 = vmatprep.subr.mxu0 %v2832
        %3978 = vmatpush1.msra.mxu0 %v2831
        %3979 = vmatprep.subr.mxu0 %v2830
        %3980 = vmatpush1.msra.mxu0 %v2829
        %3981 = vmatprep.subr.mxu0 %v2828
        %3982 = vmatpush1.msra.mxu0 %v2827
        %3983 = vmatprep.subr.mxu0 %v2826
        %3984 = vmatpush1.msra.mxu0 %v2825
        %3985 = vmatprep.subr.mxu0 %v2824
        %3986 = vmatpush1.msra.mxu0 %v2823
        %3987 = vmatprep.subr.mxu0 %v2822
        %3988 = vmatpush1.msra.mxu0 %v2821
        %3989 = vmatprep.subr.mxu0 %v2820
        %3990 = vmatpush1.msra.mxu0 %v2819
        %3991 = vmatprep.subr.mxu0 %v2818
        %3992 = vmatpush1.msra.mxu0 %v2817
        %3993 = vmatprep.subr.mxu0 %v2816
        %3994 = vmatpush1.msra.mxu0 %v2815
        %3995 = vmatprep.subr.mxu0 %v2814
        %3996 = vmatpush1.msra.mxu0 %v2813
        %3997 = vmatprep.subr.mxu0 %v2876
        %3998 = vmatpush2.msra.mxu0 %v2875
        %3999 = vmatprep.subr.mxu0 %v2874
        %4000 = vmatpush2.msra.mxu0 %v2873
        %4001 = vmatprep.subr.mxu0 %v2872
        %4002 = vmatpush2.msra.mxu0 %v2871
        %4003 = vmatprep.subr.mxu0 %v2870
        %4004 = vmatpush2.msra.mxu0 %v2869
        %4005 = vmatprep.subr.mxu0 %v2868
        %4006 = vmatpush2.msra.mxu0 %v2867
        %4007 = vmatprep.subr.mxu0 %v2866
        %4008 = vmatpush2.msra.mxu0 %v2865
        %4009 = vmatprep.subr.mxu0 %v2864
        %4010 = vmatpush2.msra.mxu0 %v2863
        %4011 = vmatprep.subr.mxu0 %v2862
        %4012 = vmatpush2.msra.mxu0 %v2861
        %4013 = vmatprep.subr.mxu0 %v2860
        %4014 = vmatpush2.msra.mxu0 %v2859
        %4015 = vmatprep.subr.mxu0 %v2858
        %4016 = vmatpush2.msra.mxu0 %v2857
        %4017 = vmatprep.subr.mxu0 %v2856
        %4018 = vmatpush2.msra.mxu0 %v2855
        %4019 = vmatprep.subr.mxu0 %v2854
        %4020 = vmatpush2.msra.mxu0 %v2853
        %4021 = vmatprep.subr.mxu0 %v2852
        %4022 = vmatpush2.msra.mxu0 %v2851
        %4023 = vmatprep.subr.mxu0 %v2850
        %4024 = vmatpush2.msra.mxu0 %v2849
        %4025 = vmatprep.subr.mxu0 %v2848
        %4026 = vmatpush2.msra.mxu0 %v2847
        %4027 = vmatprep.subr.mxu0 %v2846
        %4028 = vmatpush2.msra.mxu0 %v2845
        %4029 = vmatprep.mubr.f32.mxu0 %v3953
        %4030 = vmatmul.mubr.f32.gmra.mxu0 %v3952
        %v4031 = vpop.f32.mrf.mxu0
        %v4032 = vadd.f32 %v3958, %v4031
        %v4033 = vpop.f32.mrf.mxu0
        %v4034 = vadd.f32 %v3962, %v4033
        %4035 = vdwg.mxu0
        %v4036 = vsub.f32 0.0, %v4032
        %v4037 = vsub.f32 0.0, %v4034
        %v4038 = vmul.f32 %v4036, 1.442695
        %v4039 = vpow.pop %v4038
        %v4040 = vmul.f32 %v4037, 1.442695
        %v4041 = vpow.pop %v4040
        %v4042 = vadd.f32 %v4039, 1.0
        %v4043 = vadd.f32 %v4041, 1.0
        %v4044 = vrcp.pop %v4042
        %v4045 = vmul.f32 1.0, %v4044
        %v4046 = vrcp.pop %v4043
        %v4047 = vmul.f32 1.0, %v4046
        %v4048 = vmul.f32 %v4032, %v4045
        %v4049 = vmul.f32 %v4034, %v4047
        %v4050 = vadd.f32 %v3533, %v4048
        %v4051 = vadd.f32 %v3534, %v4049
        %v4053 = vlaneseq
        %v4054 = vshrl.u32 %v4053, 7
        %v4055 = vsub.s32 0, %v4054
        %v4056 = vrot.slane %v2899, %v4055
        %4058 = vmatprep.subr.mxu0 0.0
        %4059 = vmatpush1.msra.mxu0 %v2915
        %4060 = vmatprep.subr.mxu0 0.0
        %4061 = vmatpush1.msra.mxu0 %v2914
        %4062 = vmatprep.subr.mxu0 0.0
        %4063 = vmatpush1.msra.mxu0 %v2913
        %4064 = vmatprep.subr.mxu0 0.0
        %4065 = vmatpush1.msra.mxu0 %v2912
        %4066 = vmatprep.subr.mxu0 0.0
        %4067 = vmatpush1.msra.mxu0 %v2911
        %4068 = vmatprep.subr.mxu0 0.0
        %4069 = vmatpush1.msra.mxu0 %v2910
        %4070 = vmatprep.subr.mxu0 0.0
        %4071 = vmatpush1.msra.mxu0 %v2909
        %4072 = vmatprep.subr.mxu0 0.0
        %4073 = vmatpush1.msra.mxu0 %v2908
        %4074 = vmatprep.subr.mxu0 0.0
        %4075 = vmatpush1.msra.mxu0 %v2907
        %4076 = vmatprep.subr.mxu0 0.0
        %4077 = vmatpush1.msra.mxu0 %v2906
        %4078 = vmatprep.subr.mxu0 0.0
        %4079 = vmatpush1.msra.mxu0 %v2905
        %4080 = vmatprep.subr.mxu0 0.0
        %4081 = vmatpush1.msra.mxu0 %v2904
        %4082 = vmatprep.subr.mxu0 0.0
        %4083 = vmatpush1.msra.mxu0 %v2903
        %4084 = vmatprep.subr.mxu0 0.0
        %4085 = vmatpush1.msra.mxu0 %v2902
        %4086 = vmatprep.subr.mxu0 0.0
        %4087 = vmatpush1.msra.mxu0 %v2901
        %4088 = vmatprep.subr.mxu0 0.0
        %4089 = vmatpush1.msra.mxu0 %v2900
        %4090 = vmatprep.subr.mxu0 0.0
        %4091 = vmatpush2.msra.mxu0 %v2931
        %4092 = vmatprep.subr.mxu0 0.0
        %4093 = vmatpush2.msra.mxu0 %v2930
        %4094 = vmatprep.subr.mxu0 0.0
        %4095 = vmatpush2.msra.mxu0 %v2929
        %4096 = vmatprep.subr.mxu0 0.0
        %4097 = vmatpush2.msra.mxu0 %v2928
        %4098 = vmatprep.subr.mxu0 0.0
        %4099 = vmatpush2.msra.mxu0 %v2927
        %4100 = vmatprep.subr.mxu0 0.0
        %4101 = vmatpush2.msra.mxu0 %v2926
        %4102 = vmatprep.subr.mxu0 0.0
        %4103 = vmatpush2.msra.mxu0 %v2925
        %4104 = vmatprep.subr.mxu0 0.0
        %4105 = vmatpush2.msra.mxu0 %v2924
        %4106 = vmatprep.subr.mxu0 0.0
        %4107 = vmatpush2.msra.mxu0 %v2923
        %4108 = vmatprep.subr.mxu0 0.0
        %4109 = vmatpush2.msra.mxu0 %v2922
        %4110 = vmatprep.subr.mxu0 0.0
        %4111 = vmatpush2.msra.mxu0 %v2921
        %4112 = vmatprep.subr.mxu0 0.0
        %4113 = vmatpush2.msra.mxu0 %v2920
        %4114 = vmatprep.subr.mxu0 0.0
        %4115 = vmatpush2.msra.mxu0 %v2919
        %4116 = vmatprep.subr.mxu0 0.0
        %4117 = vmatpush2.msra.mxu0 %v2918
        %4118 = vmatprep.subr.mxu0 0.0
        %4119 = vmatpush2.msra.mxu0 %v2917
        %4120 = vmatprep.subr.mxu0 0.0
        %4121 = vmatpush2.msra.mxu0 %v2916
        %4122 = vmatprep.mubr.f32.mxu0 %v4051
        %4123 = vmatmul.mubr.f32.gmra.mxu0 %v4050
        %v4124 = vpop.f32.mrf.mxu0
        %v4125 = vadd.f32 %v4056, %v4124
        %v4126 = vpop.f32.mrf.mxu0
        %4127 = vdwg.mxu0
        %v4128 = vsub.f32 0.0, %v4125
        %v4129 = vmul.f32 %v4128, 1.442695
        %v4130 = vpow.pop %v4129
        %v4131 = vadd.f32 %v4130, 1.0
        %v4132 = vrcp.pop %v4131
        %v4133 = vmul.f32 1.0, %v4132
        %v4134 = vmul.f32 %v4125, %v4133
        %v4136 = vlaneseq
        %v4137 = vshrl.u32 %v4136, 7
        %v4138 = vsub.s32 0, %v4137
        %v4139 = vrot.slane %v2932, %v4138
        %4141 = vmatprep.subr.mxu0 0.0
        %4142 = vmatpush1.msra.mxu0 %v2948
        %4143 = vmatprep.subr.mxu0 0.0
        %4144 = vmatpush1.msra.mxu0 %v2947
        %4145 = vmatprep.subr.mxu0 0.0
        %4146 = vmatpush1.msra.mxu0 %v2946
        %4147 = vmatprep.subr.mxu0 0.0
        %4148 = vmatpush1.msra.mxu0 %v2945
        %4149 = vmatprep.subr.mxu0 0.0
        %4150 = vmatpush1.msra.mxu0 %v2944
        %4151 = vmatprep.subr.mxu0 0.0
        %4152 = vmatpush1.msra.mxu0 %v2943
        %4153 = vmatprep.subr.mxu0 0.0
        %4154 = vmatpush1.msra.mxu0 %v2942
        %4155 = vmatprep.subr.mxu0 0.0
        %4156 = vmatpush1.msra.mxu0 %v2941
        %4157 = vmatprep.subr.mxu0 0.0
        %4158 = vmatpush1.msra.mxu0 %v2940
        %4159 = vmatprep.subr.mxu0 0.0
        %4160 = vmatpush1.msra.mxu0 %v2939
        %4161 = vmatprep.subr.mxu0 0.0
        %4162 = vmatpush1.msra.mxu0 %v2938
        %4163 = vmatprep.subr.mxu0 0.0
        %4164 = vmatpush1.msra.mxu0 %v2937
        %4165 = vmatprep.subr.mxu0 0.0
        %4166 = vmatpush1.msra.mxu0 %v2936
        %4167 = vmatprep.subr.mxu0 0.0
        %4168 = vmatpush1.msra.mxu0 %v2935
        %4169 = vmatprep.subr.mxu0 0.0
        %4170 = vmatpush1.msra.mxu0 %v2934
        %4171 = vmatprep.subr.mxu0 0.0
        %4172 = vmatpush1.msra.mxu0 %v2933
        %4173 = vmatprep.subr.mxu0 0.0
        %4174 = vmatpush2.msra.mxu0 0.0
        %4175 = vmatprep.subr.mxu0 0.0
        %4176 = vmatpush2.msra.mxu0 0.0
        %4177 = vmatprep.subr.mxu0 0.0
        %4178 = vmatpush2.msra.mxu0 0.0
        %4179 = vmatprep.subr.mxu0 0.0
        %4180 = vmatpush2.msra.mxu0 0.0
        %4181 = vmatprep.subr.mxu0 0.0
        %4182 = vmatpush2.msra.mxu0 0.0
        %4183 = vmatprep.subr.mxu0 0.0
        %4184 = vmatpush2.msra.mxu0 0.0
        %4185 = vmatprep.subr.mxu0 0.0
        %4186 = vmatpush2.msra.mxu0 0.0
        %4187 = vmatprep.subr.mxu0 0.0
        %4188 = vmatpush2.msra.mxu0 0.0
        %4189 = vmatprep.subr.mxu0 0.0
        %4190 = vmatpush2.msra.mxu0 0.0
        %4191 = vmatprep.subr.mxu0 0.0
        %4192 = vmatpush2.msra.mxu0 0.0
        %4193 = vmatprep.subr.mxu0 0.0
        %4194 = vmatpush2.msra.mxu0 0.0
        %4195 = vmatprep.subr.mxu0 0.0
        %4196 = vmatpush2.msra.mxu0 0.0
        %4197 = vmatprep.subr.mxu0 0.0
        %4198 = vmatpush2.msra.mxu0 0.0
        %4199 = vmatprep.subr.mxu0 0.0
        %4200 = vmatpush2.msra.mxu0 0.0
        %4201 = vmatprep.subr.mxu0 0.0
        %4202 = vmatpush2.msra.mxu0 0.0
        %4203 = vmatprep.subr.mxu0 0.0
        %4204 = vmatpush2.msra.mxu0 0.0
        %4205 = vmatprep.mubr.f32.mxu0 0.0
        %4206 = vmatmul.mubr.f32.gmra.mxu0 %v4134
        %v4207 = vpop.f32.mrf.mxu0
        %v4208 = vadd.f32 %v4139, %v4207
        %v4209 = vpop.f32.mrf.mxu0
        %4210 = vdwg.mxu0
        %v4211 = vsub.f32 0.0, %v4208
        %v4212 = vmul.f32 %v4211, 1.442695
        %v4213 = vpow.pop %v4212
        %v4214 = vadd.f32 %v4213, 1.0
        %v4215 = vrcp.pop %v4214
        %v4216 = vmul.f32 1.0, %v4215
        %v4217 = vmul.f32 %v4208, %v4216
        %4218 = vmatprep.subr.mxu0 0.0
        %4219 = vmatpush1.msra.mxu0 %v2898
        %4220 = vmatprep.subr.mxu0 0.0
        %4221 = vmatpush1.msra.mxu0 %v2897
        %4222 = vmatprep.subr.mxu0 0.0
        %4223 = vmatpush1.msra.mxu0 %v2896
        %4224 = vmatprep.subr.mxu0 0.0
        %4225 = vmatpush1.msra.mxu0 %v2895
        %4226 = vmatprep.subr.mxu0 0.0
        %4227 = vmatpush1.msra.mxu0 %v2894
        %4228 = vmatprep.subr.mxu0 0.0
        %4229 = vmatpush1.msra.mxu0 %v2893
        %4230 = vmatprep.subr.mxu0 0.0
        %4231 = vmatpush1.msra.mxu0 %v2892
        %4232 = vmatprep.subr.mxu0 0.0
        %4233 = vmatpush1.msra.mxu0 %v2891
        %4234 = vmatprep.subr.mxu0 0.0
        %4235 = vmatpush1.msra.mxu0 %v2890
        %4236 = vmatprep.subr.mxu0 0.0
        %4237 = vmatpush1.msra.mxu0 %v2889
        %4238 = vmatprep.subr.mxu0 0.0
        %4239 = vmatpush1.msra.mxu0 %v2888
        %4240 = vmatprep.subr.mxu0 0.0
        %4241 = vmatpush1.msra.mxu0 %v2887
        %4242 = vmatprep.subr.mxu0 0.0
        %4243 = vmatpush1.msra.mxu0 %v2886
        %4244 = vmatprep.subr.mxu0 0.0
        %4245 = vmatpush1.msra.mxu0 %v2885
        %4246 = vmatprep.subr.mxu0 0.0
        %4247 = vmatpush1.msra.mxu0 %v2884
        %4248 = vmatprep.subr.mxu0 0.0
        %4249 = vmatpush1.msra.mxu0 %v2883
        %4250 = vmatprep.subr.mxu0 0.0
        %4251 = vmatpush2.msra.mxu0 0.0
        %4252 = vmatprep.subr.mxu0 0.0
        %4253 = vmatpush2.msra.mxu0 0.0
        %4254 = vmatprep.subr.mxu0 0.0
        %4255 = vmatpush2.msra.mxu0 0.0
        %4256 = vmatprep.subr.mxu0 0.0
        %4257 = vmatpush2.msra.mxu0 0.0
        %4258 = vmatprep.subr.mxu0 0.0
        %4259 = vmatpush2.msra.mxu0 0.0
        %4260 = vmatprep.subr.mxu0 0.0
        %4261 = vmatpush2.msra.mxu0 0.0
        %4262 = vmatprep.subr.mxu0 0.0
        %4263 = vmatpush2.msra.mxu0 0.0
        %4264 = vmatprep.subr.mxu0 0.0
        %4265 = vmatpush2.msra.mxu0 0.0
        %4266 = vmatprep.subr.mxu0 0.0
        %4267 = vmatpush2.msra.mxu0 0.0
        %4268 = vmatprep.subr.mxu0 0.0
        %4269 = vmatpush2.msra.mxu0 0.0
        %4270 = vmatprep.subr.mxu0 0.0
        %4271 = vmatpush2.msra.mxu0 0.0
        %4272 = vmatprep.subr.mxu0 0.0
        %4273 = vmatpush2.msra.mxu0 0.0
        %4274 = vmatprep.subr.mxu0 0.0
        %4275 = vmatpush2.msra.mxu0 0.0
        %4276 = vmatprep.subr.mxu0 0.0
        %4277 = vmatpush2.msra.mxu0 0.0
        %4278 = vmatprep.subr.mxu0 0.0
        %4279 = vmatpush2.msra.mxu0 0.0
        %4280 = vmatprep.subr.mxu0 0.0
        %4281 = vmatpush2.msra.mxu0 0.0
        %4282 = vmatprep.mubr.f32.mxu0 0.0
        %4283 = vmatmul.mubr.f32.gmra.mxu0 %v4217
        %v4284 = vpop.f32.mrf.mxu0
        %v4285 = vadd.f32 0.0, %v4284
        %v4286 = vpop.f32.mrf.mxu0
        %4287 = vdwg.mxu0
        %v4289 = vsel %vm3701, %v4285, 0
        %4291 = vmatprep.subr.mxu0 0.0
        %4292 = vmatpush1.msra.mxu0 0.0
        %4293 = vmatprep.subr.mxu0 0.0
        %4294 = vmatpush1.msra.mxu0 0.0
        %4295 = vmatprep.subr.mxu0 0.0
        %4296 = vmatpush1.msra.mxu0 0.0
        %4297 = vmatprep.subr.mxu0 0.0
        %4298 = vmatpush1.msra.mxu0 0.0
        %4299 = vmatprep.subr.mxu0 0.0
        %4300 = vmatpush1.msra.mxu0 0.0
        %4301 = vmatprep.subr.mxu0 0.0
        %4302 = vmatpush1.msra.mxu0 0.0
        %4303 = vmatprep.subr.mxu0 0.0
        %4304 = vmatpush1.msra.mxu0 0.0
        %4305 = vmatprep.subr.mxu0 0.0
        %4306 = vmatpush1.msra.mxu0 0.0
        %4307 = vmatprep.subr.mxu0 0.0
        %4308 = vmatpush1.msra.mxu0 0.0
        %4309 = vmatprep.subr.mxu0 0.0
        %4310 = vmatpush1.msra.mxu0 0.0
        %4311 = vmatprep.subr.mxu0 0.0
        %4312 = vmatpush1.msra.mxu0 0.0
        %4313 = vmatprep.subr.mxu0 0.0
        %4314 = vmatpush1.msra.mxu0 0.0
        %4315 = vmatprep.subr.mxu0 0.0
        %4316 = vmatpush1.msra.mxu0 %v2881
        %4317 = vmatprep.subr.mxu0 0.0
        %4318 = vmatpush1.msra.mxu0 %v2880
        %4319 = vmatprep.subr.mxu0 0.0
        %4320 = vmatpush1.msra.mxu0 %v2879
        %4321 = vmatprep.subr.mxu0 0.0
        %4322 = vmatpush1.msra.mxu0 %v2878
        %4323 = vmatprep.subr.mxu0 0.0
        %4324 = vmatpush2.msra.mxu0 0.0
        %4325 = vmatprep.subr.mxu0 0.0
        %4326 = vmatpush2.msra.mxu0 0.0
        %4327 = vmatprep.subr.mxu0 0.0
        %4328 = vmatpush2.msra.mxu0 0.0
        %4329 = vmatprep.subr.mxu0 0.0
        %4330 = vmatpush2.msra.mxu0 0.0
        %4331 = vmatprep.subr.mxu0 0.0
        %4332 = vmatpush2.msra.mxu0 0.0
        %4333 = vmatprep.subr.mxu0 0.0
        %4334 = vmatpush2.msra.mxu0 0.0
        %4335 = vmatprep.subr.mxu0 0.0
        %4336 = vmatpush2.msra.mxu0 0.0
        %4337 = vmatprep.subr.mxu0 0.0
        %4338 = vmatpush2.msra.mxu0 0.0
        %4339 = vmatprep.subr.mxu0 0.0
        %4340 = vmatpush2.msra.mxu0 0.0
        %4341 = vmatprep.subr.mxu0 0.0
        %4342 = vmatpush2.msra.mxu0 0.0
        %4343 = vmatprep.subr.mxu0 0.0
        %4344 = vmatpush2.msra.mxu0 0.0
        %4345 = vmatprep.subr.mxu0 0.0
        %4346 = vmatpush2.msra.mxu0 0.0
        %4347 = vmatprep.subr.mxu0 0.0
        %4348 = vmatpush2.msra.mxu0 0.0
        %4349 = vmatprep.subr.mxu0 0.0
        %4350 = vmatpush2.msra.mxu0 0.0
        %4351 = vmatprep.subr.mxu0 0.0
        %4352 = vmatpush2.msra.mxu0 0.0
        %4353 = vmatprep.subr.mxu0 0.0
        %4354 = vmatpush2.msra.mxu0 0.0
        %4355 = vmatprep.mubr.f32.mxu0 0.0
        %4356 = vmatmul.mubr.f32.gmra.mxu0 %v4289
        %v4357 = vpop.f32.mrf.mxu0
        %v4358 = vadd.f32 0.0, %v4357
        %v4359 = vpop.f32.mrf.mxu0
        %4360 = vdwg.mxu0
        %v4361 = vsub.f32 %v4217, %v4358
        %v4362 = vmul.f32 %v4361, %v4361
        %4363 = vmatprep.subr.mxu0 0.0
        %4364 = vmatpush1.msra.mxu0 %v2898
        %4365 = vmatprep.subr.mxu0 0.0
        %4366 = vmatpush1.msra.mxu0 %v2897
        %4367 = vmatprep.subr.mxu0 0.0
        %4368 = vmatpush1.msra.mxu0 %v2896
        %4369 = vmatprep.subr.mxu0 0.0
        %4370 = vmatpush1.msra.mxu0 %v2895
        %4371 = vmatprep.subr.mxu0 0.0
        %4372 = vmatpush1.msra.mxu0 %v2894
        %4373 = vmatprep.subr.mxu0 0.0
        %4374 = vmatpush1.msra.mxu0 %v2893
        %4375 = vmatprep.subr.mxu0 0.0
        %4376 = vmatpush1.msra.mxu0 %v2892
        %4377 = vmatprep.subr.mxu0 0.0
        %4378 = vmatpush1.msra.mxu0 %v2891
        %4379 = vmatprep.subr.mxu0 0.0
        %4380 = vmatpush1.msra.mxu0 %v2890
        %4381 = vmatprep.subr.mxu0 0.0
        %4382 = vmatpush1.msra.mxu0 %v2889
        %4383 = vmatprep.subr.mxu0 0.0
        %4384 = vmatpush1.msra.mxu0 %v2888
        %4385 = vmatprep.subr.mxu0 0.0
        %4386 = vmatpush1.msra.mxu0 %v2887
        %4387 = vmatprep.subr.mxu0 0.0
        %4388 = vmatpush1.msra.mxu0 %v2886
        %4389 = vmatprep.subr.mxu0 0.0
        %4390 = vmatpush1.msra.mxu0 %v2885
        %4391 = vmatprep.subr.mxu0 0.0
        %4392 = vmatpush1.msra.mxu0 %v2884
        %4393 = vmatprep.subr.mxu0 0.0
        %4394 = vmatpush1.msra.mxu0 %v2883
        %4395 = vmatprep.subr.mxu0 0.0
        %4396 = vmatpush2.msra.mxu0 0.0
        %4397 = vmatprep.subr.mxu0 0.0
        %4398 = vmatpush2.msra.mxu0 0.0
        %4399 = vmatprep.subr.mxu0 0.0
        %4400 = vmatpush2.msra.mxu0 0.0
        %4401 = vmatprep.subr.mxu0 0.0
        %4402 = vmatpush2.msra.mxu0 0.0
        %4403 = vmatprep.subr.mxu0 0.0
        %4404 = vmatpush2.msra.mxu0 0.0
        %4405 = vmatprep.subr.mxu0 0.0
        %4406 = vmatpush2.msra.mxu0 0.0
        %4407 = vmatprep.subr.mxu0 0.0
        %4408 = vmatpush2.msra.mxu0 0.0
        %4409 = vmatprep.subr.mxu0 0.0
        %4410 = vmatpush2.msra.mxu0 0.0
        %4411 = vmatprep.subr.mxu0 0.0
        %4412 = vmatpush2.msra.mxu0 0.0
        %4413 = vmatprep.subr.mxu0 0.0
        %4414 = vmatpush2.msra.mxu0 0.0
        %4415 = vmatprep.subr.mxu0 0.0
        %4416 = vmatpush2.msra.mxu0 0.0
        %4417 = vmatprep.subr.mxu0 0.0
        %4418 = vmatpush2.msra.mxu0 0.0
        %4419 = vmatprep.subr.mxu0 0.0
        %4420 = vmatpush2.msra.mxu0 0.0
        %4421 = vmatprep.subr.mxu0 0.0
        %4422 = vmatpush2.msra.mxu0 0.0
        %4423 = vmatprep.subr.mxu0 0.0
        %4424 = vmatpush2.msra.mxu0 0.0
        %4425 = vmatprep.subr.mxu0 0.0
        %4426 = vmatpush2.msra.mxu0 0.0
        %4427 = vmatprep.mubr.f32.mxu0 0.0
        %4428 = vmatmul.mubr.f32.gmra.mxu0 %v4362
        %v4429 = vpop.f32.mrf.mxu0
        %v4430 = vadd.f32 0.0, %v4429
        %v4431 = vpop.f32.mrf.mxu0
        %4432 = vdwg.mxu0
        %v4434 = vsel %vm3701, %v4430, 0
        %4436 = vmatprep.subr.mxu0 0.0
        %4437 = vmatpush1.msra.mxu0 0.0
        %4438 = vmatprep.subr.mxu0 0.0
        %4439 = vmatpush1.msra.mxu0 0.0
        %4440 = vmatprep.subr.mxu0 0.0
        %4441 = vmatpush1.msra.mxu0 0.0
        %4442 = vmatprep.subr.mxu0 0.0
        %4443 = vmatpush1.msra.mxu0 0.0
        %4444 = vmatprep.subr.mxu0 0.0
        %4445 = vmatpush1.msra.mxu0 0.0
        %4446 = vmatprep.subr.mxu0 0.0
        %4447 = vmatpush1.msra.mxu0 0.0
        %4448 = vmatprep.subr.mxu0 0.0
        %4449 = vmatpush1.msra.mxu0 0.0
        %4450 = vmatprep.subr.mxu0 0.0
        %4451 = vmatpush1.msra.mxu0 0.0
        %4452 = vmatprep.subr.mxu0 0.0
        %4453 = vmatpush1.msra.mxu0 0.0
        %4454 = vmatprep.subr.mxu0 0.0
        %4455 = vmatpush1.msra.mxu0 0.0
        %4456 = vmatprep.subr.mxu0 0.0
        %4457 = vmatpush1.msra.mxu0 0.0
        %4458 = vmatprep.subr.mxu0 0.0
        %4459 = vmatpush1.msra.mxu0 0.0
        %4460 = vmatprep.subr.mxu0 0.0
        %4461 = vmatpush1.msra.mxu0 %v2881
        %4462 = vmatprep.subr.mxu0 0.0
        %4463 = vmatpush1.msra.mxu0 %v2880
        %4464 = vmatprep.subr.mxu0 0.0
        %4465 = vmatpush1.msra.mxu0 %v2879
        %4466 = vmatprep.subr.mxu0 0.0
        %4467 = vmatpush1.msra.mxu0 %v2878
        %4468 = vmatprep.subr.mxu0 0.0
        %4469 = vmatpush2.msra.mxu0 0.0
        %4470 = vmatprep.subr.mxu0 0.0
        %4471 = vmatpush2.msra.mxu0 0.0
        %4472 = vmatprep.subr.mxu0 0.0
        %4473 = vmatpush2.msra.mxu0 0.0
        %4474 = vmatprep.subr.mxu0 0.0
        %4475 = vmatpush2.msra.mxu0 0.0
        %4476 = vmatprep.subr.mxu0 0.0
        %4477 = vmatpush2.msra.mxu0 0.0
        %4478 = vmatprep.subr.mxu0 0.0
        %4479 = vmatpush2.msra.mxu0 0.0
        %4480 = vmatprep.subr.mxu0 0.0
        %4481 = vmatpush2.msra.mxu0 0.0
        %4482 = vmatprep.subr.mxu0 0.0
        %4483 = vmatpush2.msra.mxu0 0.0
        %4484 = vmatprep.subr.mxu0 0.0
        %4485 = vmatpush2.msra.mxu0 0.0
        %4486 = vmatprep.subr.mxu0 0.0
        %4487 = vmatpush2.msra.mxu0 0.0
        %4488 = vmatprep.subr.mxu0 0.0
        %4489 = vmatpush2.msra.mxu0 0.0
        %4490 = vmatprep.subr.mxu0 0.0
        %4491 = vmatpush2.msra.mxu0 0.0
        %4492 = vmatprep.subr.mxu0 0.0
        %4493 = vmatpush2.msra.mxu0 0.0
        %4494 = vmatprep.subr.mxu0 0.0
        %4495 = vmatpush2.msra.mxu0 0.0
        %4496 = vmatprep.subr.mxu0 0.0
        %4497 = vmatpush2.msra.mxu0 0.0
        %4498 = vmatprep.subr.mxu0 0.0
        %4499 = vmatpush2.msra.mxu0 0.0
        %4500 = vmatprep.mubr.f32.mxu0 0.0
        %4501 = vmatmul.mubr.f32.gmra.mxu0 %v4434
        %v4502 = vpop.f32.mrf.mxu0
        %v4503 = vadd.f32 1e-05, %v4502
        %v4504 = vpop.f32.mrf.mxu0
        %4505 = vdwg.mxu0
        %v4506 = vrsqrt.pop %v4503
        %v4507 = vmul.f32 %v4361, %v4506
        %v4509 = vlaneseq
        %v4510 = vshrl.u32 %v4509, 7
        %v4511 = vsub.s32 0, %v4510
        %v4512 = vrot.slane %v2882, %v4511
        %v4514 = vmul.f32 %v4507, %v4512
        %v4516 = vlaneseq
        %v4517 = vshrl.u32 %v4516, 7
        %v4518 = vsub.s32 0, %v4517
        %v4519 = vrot.slane %v2877, %v4518
        %v4521 = vadd.f32 %v4514, %v4519
        %v4523 = vlaneseq
        %v4524 = vshrl.u32 %v4523, 7
        %v4525 = vsub.s32 0, %v4524
        %v4526 = vrot.slane %v2949, %v4525
        %4528 = vmatprep.subr.mxu0 0.0
        %4529 = vmatpush1.msra.mxu0 %v2965
        %4530 = vmatprep.subr.mxu0 0.0
        %4531 = vmatpush1.msra.mxu0 %v2964
        %4532 = vmatprep.subr.mxu0 0.0
        %4533 = vmatpush1.msra.mxu0 %v2963
        %4534 = vmatprep.subr.mxu0 0.0
        %4535 = vmatpush1.msra.mxu0 %v2962
        %4536 = vmatprep.subr.mxu0 0.0
        %4537 = vmatpush1.msra.mxu0 %v2961
        %4538 = vmatprep.subr.mxu0 0.0
        %4539 = vmatpush1.msra.mxu0 %v2960
        %4540 = vmatprep.subr.mxu0 0.0
        %4541 = vmatpush1.msra.mxu0 %v2959
        %4542 = vmatprep.subr.mxu0 0.0
        %4543 = vmatpush1.msra.mxu0 %v2958
        %4544 = vmatprep.subr.mxu0 0.0
        %4545 = vmatpush1.msra.mxu0 %v2957
        %4546 = vmatprep.subr.mxu0 0.0
        %4547 = vmatpush1.msra.mxu0 %v2956
        %4548 = vmatprep.subr.mxu0 0.0
        %4549 = vmatpush1.msra.mxu0 %v2955
        %4550 = vmatprep.subr.mxu0 0.0
        %4551 = vmatpush1.msra.mxu0 %v2954
        %4552 = vmatprep.subr.mxu0 0.0
        %4553 = vmatpush1.msra.mxu0 %v2953
        %4554 = vmatprep.subr.mxu0 0.0
        %4555 = vmatpush1.msra.mxu0 %v2952
        %4556 = vmatprep.subr.mxu0 0.0
        %4557 = vmatpush1.msra.mxu0 %v2951
        %4558 = vmatprep.subr.mxu0 0.0
        %4559 = vmatpush1.msra.mxu0 %v2950
        %4560 = vmatprep.subr.mxu0 0.0
        %4561 = vmatpush2.msra.mxu0 0.0
        %4562 = vmatprep.subr.mxu0 0.0
        %4563 = vmatpush2.msra.mxu0 0.0
        %4564 = vmatprep.subr.mxu0 0.0
        %4565 = vmatpush2.msra.mxu0 0.0
        %4566 = vmatprep.subr.mxu0 0.0
        %4567 = vmatpush2.msra.mxu0 0.0
        %4568 = vmatprep.subr.mxu0 0.0
        %4569 = vmatpush2.msra.mxu0 0.0
        %4570 = vmatprep.subr.mxu0 0.0
        %4571 = vmatpush2.msra.mxu0 0.0
        %4572 = vmatprep.subr.mxu0 0.0
        %4573 = vmatpush2.msra.mxu0 0.0
        %4574 = vmatprep.subr.mxu0 0.0
        %4575 = vmatpush2.msra.mxu0 0.0
        %4576 = vmatprep.subr.mxu0 0.0
        %4577 = vmatpush2.msra.mxu0 0.0
        %4578 = vmatprep.subr.mxu0 0.0
        %4579 = vmatpush2.msra.mxu0 0.0
        %4580 = vmatprep.subr.mxu0 0.0
        %4581 = vmatpush2.msra.mxu0 0.0
        %4582 = vmatprep.subr.mxu0 0.0
        %4583 = vmatpush2.msra.mxu0 0.0
        %4584 = vmatprep.subr.mxu0 0.0
        %4585 = vmatpush2.msra.mxu0 0.0
        %4586 = vmatprep.subr.mxu0 0.0
        %4587 = vmatpush2.msra.mxu0 0.0
        %4588 = vmatprep.subr.mxu0 0.0
        %4589 = vmatpush2.msra.mxu0 0.0
        %4590 = vmatprep.subr.mxu0 0.0
        %4591 = vmatpush2.msra.mxu0 0.0
        %4592 = vmatprep.mubr.f32.mxu0 0.0
        %4593 = vmatmul.mubr.f32.gmra.mxu0 %v4521
        %v4594 = vpop.f32.mrf.mxu0
        %v4595 = vadd.f32 %v4526, %v4594
        %v4596 = vpop.f32.mrf.mxu0
        %4597 = vdwg.mxu0
        %v4598 = vsub.f32 0.0, %v4595
        %v4599 = vmul.f32 %v4598, 1.442695
        %v4600 = vpow.pop %v4599
        %v4601 = vadd.f32 %v4600, 1.0
        %v4602 = vrcp.pop %v4601
        %v4603 = vmul.f32 1.0, %v4602
        %v4604 = vmul.f32 %v4595, %v4603
        %v4605 = vadd.f32 %v4134, %v4604
        %v4607 = vlaneseq
        %v4608 = vshrl.u32 %v4607, 7
        %v4609 = vsub.s32 0, %v4608
        %v4610 = vrot.slane %v2614, %v4609
        %4612 = vmatprep.subr.mxu0 0.0
        %4613 = vmatpush1.msra.mxu0 %v2630
        %4614 = vmatprep.subr.mxu0 0.0
        %4615 = vmatpush1.msra.mxu0 %v2629
        %4616 = vmatprep.subr.mxu0 0.0
        %4617 = vmatpush1.msra.mxu0 %v2628
        %4618 = vmatprep.subr.mxu0 0.0
        %4619 = vmatpush1.msra.mxu0 %v2627
        %4620 = vmatprep.subr.mxu0 0.0
        %4621 = vmatpush1.msra.mxu0 %v2626
        %4622 = vmatprep.subr.mxu0 0.0
        %4623 = vmatpush1.msra.mxu0 %v2625
        %4624 = vmatprep.subr.mxu0 0.0
        %4625 = vmatpush1.msra.mxu0 %v2624
        %4626 = vmatprep.subr.mxu0 0.0
        %4627 = vmatpush1.msra.mxu0 %v2623
        %4628 = vmatprep.subr.mxu0 0.0
        %4629 = vmatpush1.msra.mxu0 %v2622
        %4630 = vmatprep.subr.mxu0 0.0
        %4631 = vmatpush1.msra.mxu0 %v2621
        %4632 = vmatprep.subr.mxu0 0.0
        %4633 = vmatpush1.msra.mxu0 %v2620
        %4634 = vmatprep.subr.mxu0 0.0
        %4635 = vmatpush1.msra.mxu0 %v2619
        %4636 = vmatprep.subr.mxu0 0.0
        %4637 = vmatpush1.msra.mxu0 %v2618
        %4638 = vmatprep.subr.mxu0 0.0
        %4639 = vmatpush1.msra.mxu0 %v2617
        %4640 = vmatprep.subr.mxu0 0.0
        %4641 = vmatpush1.msra.mxu0 %v2616
        %4642 = vmatprep.subr.mxu0 0.0
        %4643 = vmatpush1.msra.mxu0 %v2615
        %4644 = vmatprep.subr.mxu0 0.0
        %4645 = vmatpush2.msra.mxu0 0.0
        %4646 = vmatprep.subr.mxu0 0.0
        %4647 = vmatpush2.msra.mxu0 0.0
        %4648 = vmatprep.subr.mxu0 0.0
        %4649 = vmatpush2.msra.mxu0 0.0
        %4650 = vmatprep.subr.mxu0 0.0
        %4651 = vmatpush2.msra.mxu0 0.0
        %4652 = vmatprep.subr.mxu0 0.0
        %4653 = vmatpush2.msra.mxu0 0.0
        %4654 = vmatprep.subr.mxu0 0.0
        %4655 = vmatpush2.msra.mxu0 0.0
        %4656 = vmatprep.subr.mxu0 0.0
        %4657 = vmatpush2.msra.mxu0 0.0
        %4658 = vmatprep.subr.mxu0 0.0
        %4659 = vmatpush2.msra.mxu0 0.0
        %4660 = vmatprep.subr.mxu0 0.0
        %4661 = vmatpush2.msra.mxu0 0.0
        %4662 = vmatprep.subr.mxu0 0.0
        %4663 = vmatpush2.msra.mxu0 0.0
        %4664 = vmatprep.subr.mxu0 0.0
        %4665 = vmatpush2.msra.mxu0 0.0
        %4666 = vmatprep.subr.mxu0 0.0
        %4667 = vmatpush2.msra.mxu0 0.0
        %4668 = vmatprep.subr.mxu0 0.0
        %4669 = vmatpush2.msra.mxu0 0.0
        %4670 = vmatprep.subr.mxu0 0.0
        %4671 = vmatpush2.msra.mxu0 0.0
        %4672 = vmatprep.subr.mxu0 0.0
        %4673 = vmatpush2.msra.mxu0 0.0
        %4674 = vmatprep.subr.mxu0 0.0
        %4675 = vmatpush2.msra.mxu0 0.0
        %4676 = vmatprep.mubr.f32.mxu0 0.0
        %4677 = vmatmul.mubr.f32.gmra.mxu0 %v4605
        %v4678 = vpop.f32.mrf.mxu0
        %v4679 = vadd.f32 %v4610, %v4678
        %v4680 = vpop.f32.mrf.mxu0
        %4681 = vdwg.mxu0
        %vm4682 = vcmask 523264
        %v4684 = vsel %vm4682, %v4679, 0
        %4686 = vmatprep.subr.mxu0 0.0
        %4687 = vmatpush1.msra.mxu0 0.0
        %4688 = vmatprep.subr.mxu0 0.0
        %4689 = vmatpush1.msra.mxu0 0.0
        %4690 = vmatprep.subr.mxu0 0.0
        %4691 = vmatpush1.msra.mxu0 0.0
        %4692 = vmatprep.subr.mxu0 0.0
        %4693 = vmatpush1.msra.mxu0 0.0
        %4694 = vmatprep.subr.mxu0 0.0
        %4695 = vmatpush1.msra.mxu0 0.0
        %4696 = vmatprep.subr.mxu0 0.0
        %4697 = vmatpush1.msra.mxu0 0.0
        %4698 = vmatprep.subr.mxu0 0.0
        %4699 = vmatpush1.msra.mxu0 0.0
        %4700 = vmatprep.subr.mxu0 0.0
        %4701 = vmatpush1.msra.mxu0 0.0
        %4702 = vmatprep.subr.mxu0 0.0
        %4703 = vmatpush1.msra.mxu0 %v2613
        %4704 = vmatprep.subr.mxu0 0.0
        %4705 = vmatpush1.msra.mxu0 %v2612
        %4706 = vmatprep.subr.mxu0 0.0
        %4707 = vmatpush1.msra.mxu0 %v2611
        %4708 = vmatprep.subr.mxu0 0.0
        %4709 = vmatpush1.msra.mxu0 %v2610
        %4710 = vmatprep.subr.mxu0 0.0
        %4711 = vmatpush1.msra.mxu0 %v2609
        %4712 = vmatprep.subr.mxu0 0.0
        %4713 = vmatpush1.msra.mxu0 %v2608
        %4714 = vmatprep.subr.mxu0 0.0
        %4715 = vmatpush1.msra.mxu0 %v2607
        %4716 = vmatprep.subr.mxu0 0.0
        %4717 = vmatpush1.msra.mxu0 %v2606
        %4718 = vmatprep.subr.mxu0 0.0
        %4719 = vmatpush2.msra.mxu0 0.0
        %4720 = vmatprep.subr.mxu0 0.0
        %4721 = vmatpush2.msra.mxu0 0.0
        %4722 = vmatprep.subr.mxu0 0.0
        %4723 = vmatpush2.msra.mxu0 0.0
        %4724 = vmatprep.subr.mxu0 0.0
        %4725 = vmatpush2.msra.mxu0 0.0
        %4726 = vmatprep.subr.mxu0 0.0
        %4727 = vmatpush2.msra.mxu0 0.0
        %4728 = vmatprep.subr.mxu0 0.0
        %4729 = vmatpush2.msra.mxu0 0.0
        %4730 = vmatprep.subr.mxu0 0.0
        %4731 = vmatpush2.msra.mxu0 0.0
        %4732 = vmatprep.subr.mxu0 0.0
        %4733 = vmatpush2.msra.mxu0 0.0
        %4734 = vmatprep.subr.mxu0 0.0
        %4735 = vmatpush2.msra.mxu0 0.0
        %4736 = vmatprep.subr.mxu0 0.0
        %4737 = vmatpush2.msra.mxu0 0.0
        %4738 = vmatprep.subr.mxu0 0.0
        %4739 = vmatpush2.msra.mxu0 0.0
        %4740 = vmatprep.subr.mxu0 0.0
        %4741 = vmatpush2.msra.mxu0 0.0
        %4742 = vmatprep.subr.mxu0 0.0
        %4743 = vmatpush2.msra.mxu0 0.0
        %4744 = vmatprep.subr.mxu0 0.0
        %4745 = vmatpush2.msra.mxu0 0.0
        %4746 = vmatprep.subr.mxu0 0.0
        %4747 = vmatpush2.msra.mxu0 0.0
        %4748 = vmatprep.subr.mxu0 0.0
        %4749 = vmatpush2.msra.mxu0 0.0
        %4750 = vmatprep.mubr.f32.mxu0 0.0
        %4751 = vmatmul.mubr.f32.gmra.mxu0 %v4684
        %v4752 = vpop.f32.mrf.mxu0
        %v4753 = vadd.f32 0.0, %v4752
        %v4754 = vpop.f32.mrf.mxu0
        %4755 = vdwg.mxu0
        %v4757 = vsel %vm3701, %v4753, 0
        %4759 = vmatprep.subr.mxu0 0.0
        %4760 = vmatpush1.msra.mxu0 0.0
        %4761 = vmatprep.subr.mxu0 0.0
        %4762 = vmatpush1.msra.mxu0 0.0
        %4763 = vmatprep.subr.mxu0 0.0
        %4764 = vmatpush1.msra.mxu0 0.0
        %4765 = vmatprep.subr.mxu0 0.0
        %4766 = vmatpush1.msra.mxu0 0.0
        %4767 = vmatprep.subr.mxu0 0.0
        %4768 = vmatpush1.msra.mxu0 0.0
        %4769 = vmatprep.subr.mxu0 0.0
        %4770 = vmatpush1.msra.mxu0 0.0
        %4771 = vmatprep.subr.mxu0 0.0
        %4772 = vmatpush1.msra.mxu0 0.0
        %4773 = vmatprep.subr.mxu0 0.0
        %4774 = vmatpush1.msra.mxu0 0.0
        %4775 = vmatprep.subr.mxu0 0.0
        %4776 = vmatpush1.msra.mxu0 0.0
        %4777 = vmatprep.subr.mxu0 0.0
        %4778 = vmatpush1.msra.mxu0 0.0
        %4779 = vmatprep.subr.mxu0 0.0
        %4780 = vmatpush1.msra.mxu0 0.0
        %4781 = vmatprep.subr.mxu0 0.0
        %4782 = vmatpush1.msra.mxu0 0.0
        %4783 = vmatprep.subr.mxu0 0.0
        %4784 = vmatpush1.msra.mxu0 %v2604
        %4785 = vmatprep.subr.mxu0 0.0
        %4786 = vmatpush1.msra.mxu0 %v2603
        %4787 = vmatprep.subr.mxu0 0.0
        %4788 = vmatpush1.msra.mxu0 %v2602
        %4789 = vmatprep.subr.mxu0 0.0
        %4790 = vmatpush1.msra.mxu0 %v2601
        %4791 = vmatprep.subr.mxu0 0.0
        %4792 = vmatpush2.msra.mxu0 0.0
        %4793 = vmatprep.subr.mxu0 0.0
        %4794 = vmatpush2.msra.mxu0 0.0
        %4795 = vmatprep.subr.mxu0 0.0
        %4796 = vmatpush2.msra.mxu0 0.0
        %4797 = vmatprep.subr.mxu0 0.0
        %4798 = vmatpush2.msra.mxu0 0.0
        %4799 = vmatprep.subr.mxu0 0.0
        %4800 = vmatpush2.msra.mxu0 0.0
        %4801 = vmatprep.subr.mxu0 0.0
        %4802 = vmatpush2.msra.mxu0 0.0
        %4803 = vmatprep.subr.mxu0 0.0
        %4804 = vmatpush2.msra.mxu0 0.0
        %4805 = vmatprep.subr.mxu0 0.0
        %4806 = vmatpush2.msra.mxu0 0.0
        %4807 = vmatprep.subr.mxu0 0.0
        %4808 = vmatpush2.msra.mxu0 0.0
        %4809 = vmatprep.subr.mxu0 0.0
        %4810 = vmatpush2.msra.mxu0 0.0
        %4811 = vmatprep.subr.mxu0 0.0
        %4812 = vmatpush2.msra.mxu0 0.0
        %4813 = vmatprep.subr.mxu0 0.0
        %4814 = vmatpush2.msra.mxu0 0.0
        %4815 = vmatprep.subr.mxu0 0.0
        %4816 = vmatpush2.msra.mxu0 0.0
        %4817 = vmatprep.subr.mxu0 0.0
        %4818 = vmatpush2.msra.mxu0 0.0
        %4819 = vmatprep.subr.mxu0 0.0
        %4820 = vmatpush2.msra.mxu0 0.0
        %4821 = vmatprep.subr.mxu0 0.0
        %4822 = vmatpush2.msra.mxu0 0.0
        %4823 = vmatprep.mubr.f32.mxu0 0.0
        %4824 = vmatmul.mubr.f32.gmra.mxu0 %v4757
        %v4825 = vpop.f32.mrf.mxu0
        %v4826 = vadd.f32 0.0, %v4825
        %v4827 = vpop.f32.mrf.mxu0
        %4828 = vdwg.mxu0
        %v4829 = vsub.f32 %v4679, %v4826
        %v4830 = vmul.f32 %v4829, %v4829
        %v4832 = vsel %vm4682, %v4830, 0
        %4834 = vmatprep.subr.mxu0 0.0
        %4835 = vmatpush1.msra.mxu0 0.0
        %4836 = vmatprep.subr.mxu0 0.0
        %4837 = vmatpush1.msra.mxu0 0.0
        %4838 = vmatprep.subr.mxu0 0.0
        %4839 = vmatpush1.msra.mxu0 0.0
        %4840 = vmatprep.subr.mxu0 0.0
        %4841 = vmatpush1.msra.mxu0 0.0
        %4842 = vmatprep.subr.mxu0 0.0
        %4843 = vmatpush1.msra.mxu0 0.0
        %4844 = vmatprep.subr.mxu0 0.0
        %4845 = vmatpush1.msra.mxu0 0.0
        %4846 = vmatprep.subr.mxu0 0.0
        %4847 = vmatpush1.msra.mxu0 0.0
        %4848 = vmatprep.subr.mxu0 0.0
        %4849 = vmatpush1.msra.mxu0 0.0
        %4850 = vmatprep.subr.mxu0 0.0
        %4851 = vmatpush1.msra.mxu0 %v2613
        %4852 = vmatprep.subr.mxu0 0.0
        %4853 = vmatpush1.msra.mxu0 %v2612
        %4854 = vmatprep.subr.mxu0 0.0
        %4855 = vmatpush1.msra.mxu0 %v2611
        %4856 = vmatprep.subr.mxu0 0.0
        %4857 = vmatpush1.msra.mxu0 %v2610
        %4858 = vmatprep.subr.mxu0 0.0
        %4859 = vmatpush1.msra.mxu0 %v2609
        %4860 = vmatprep.subr.mxu0 0.0
        %4861 = vmatpush1.msra.mxu0 %v2608
        %4862 = vmatprep.subr.mxu0 0.0
        %4863 = vmatpush1.msra.mxu0 %v2607
        %4864 = vmatprep.subr.mxu0 0.0
        %4865 = vmatpush1.msra.mxu0 %v2606
        %4866 = vmatprep.subr.mxu0 0.0
        %4867 = vmatpush2.msra.mxu0 0.0
        %4868 = vmatprep.subr.mxu0 0.0
        %4869 = vmatpush2.msra.mxu0 0.0
        %4870 = vmatprep.subr.mxu0 0.0
        %4871 = vmatpush2.msra.mxu0 0.0
        %4872 = vmatprep.subr.mxu0 0.0
        %4873 = vmatpush2.msra.mxu0 0.0
        %4874 = vmatprep.subr.mxu0 0.0
        %4875 = vmatpush2.msra.mxu0 0.0
        %4876 = vmatprep.subr.mxu0 0.0
        %4877 = vmatpush2.msra.mxu0 0.0
        %4878 = vmatprep.subr.mxu0 0.0
        %4879 = vmatpush2.msra.mxu0 0.0
        %4880 = vmatprep.subr.mxu0 0.0
        %4881 = vmatpush2.msra.mxu0 0.0
        %4882 = vmatprep.subr.mxu0 0.0
        %4883 = vmatpush2.msra.mxu0 0.0
        %4884 = vmatprep.subr.mxu0 0.0
        %4885 = vmatpush2.msra.mxu0 0.0
        %4886 = vmatprep.subr.mxu0 0.0
        %4887 = vmatpush2.msra.mxu0 0.0
        %4888 = vmatprep.subr.mxu0 0.0
        %4889 = vmatpush2.msra.mxu0 0.0
        %4890 = vmatprep.subr.mxu0 0.0
        %4891 = vmatpush2.msra.mxu0 0.0
        %4892 = vmatprep.subr.mxu0 0.0
        %4893 = vmatpush2.msra.mxu0 0.0
        %4894 = vmatprep.subr.mxu0 0.0
        %4895 = vmatpush2.msra.mxu0 0.0
        %4896 = vmatprep.subr.mxu0 0.0
        %4897 = vmatpush2.msra.mxu0 0.0
        %4898 = vmatprep.mubr.f32.mxu0 0.0
        %4899 = vmatmul.mubr.f32.gmra.mxu0 %v4832
        %v4900 = vpop.f32.mrf.mxu0
        %v4901 = vadd.f32 0.0, %v4900
        %v4902 = vpop.f32.mrf.mxu0
        %4903 = vdwg.mxu0
        %v4905 = vsel %vm3701, %v4901, 0
        %4907 = vmatprep.subr.mxu0 0.0
        %4908 = vmatpush1.msra.mxu0 0.0
        %4909 = vmatprep.subr.mxu0 0.0
        %4910 = vmatpush1.msra.mxu0 0.0
        %4911 = vmatprep.subr.mxu0 0.0
        %4912 = vmatpush1.msra.mxu0 0.0
        %4913 = vmatprep.subr.mxu0 0.0
        %4914 = vmatpush1.msra.mxu0 0.0
        %4915 = vmatprep.subr.mxu0 0.0
        %4916 = vmatpush1.msra.mxu0 0.0
        %4917 = vmatprep.subr.mxu0 0.0
        %4918 = vmatpush1.msra.mxu0 0.0
        %4919 = vmatprep.subr.mxu0 0.0
        %4920 = vmatpush1.msra.mxu0 0.0
        %4921 = vmatprep.subr.mxu0 0.0
        %4922 = vmatpush1.msra.mxu0 0.0
        %4923 = vmatprep.subr.mxu0 0.0
        %4924 = vmatpush1.msra.mxu0 0.0
        %4925 = vmatprep.subr.mxu0 0.0
        %4926 = vmatpush1.msra.mxu0 0.0
        %4927 = vmatprep.subr.mxu0 0.0
        %4928 = vmatpush1.msra.mxu0 0.0
        %4929 = vmatprep.subr.mxu0 0.0
        %4930 = vmatpush1.msra.mxu0 0.0
        %4931 = vmatprep.subr.mxu0 0.0
        %4932 = vmatpush1.msra.mxu0 %v2604
        %4933 = vmatprep.subr.mxu0 0.0
        %4934 = vmatpush1.msra.mxu0 %v2603
        %4935 = vmatprep.subr.mxu0 0.0
        %4936 = vmatpush1.msra.mxu0 %v2602
        %4937 = vmatprep.subr.mxu0 0.0
        %4938 = vmatpush1.msra.mxu0 %v2601
        %4939 = vmatprep.subr.mxu0 0.0
        %4940 = vmatpush2.msra.mxu0 0.0
        %4941 = vmatprep.subr.mxu0 0.0
        %4942 = vmatpush2.msra.mxu0 0.0
        %4943 = vmatprep.subr.mxu0 0.0
        %4944 = vmatpush2.msra.mxu0 0.0
        %4945 = vmatprep.subr.mxu0 0.0
        %4946 = vmatpush2.msra.mxu0 0.0
        %4947 = vmatprep.subr.mxu0 0.0
        %4948 = vmatpush2.msra.mxu0 0.0
        %4949 = vmatprep.subr.mxu0 0.0
        %4950 = vmatpush2.msra.mxu0 0.0
        %4951 = vmatprep.subr.mxu0 0.0
        %4952 = vmatpush2.msra.mxu0 0.0
        %4953 = vmatprep.subr.mxu0 0.0
        %4954 = vmatpush2.msra.mxu0 0.0
        %4955 = vmatprep.subr.mxu0 0.0
        %4956 = vmatpush2.msra.mxu0 0.0
        %4957 = vmatprep.subr.mxu0 0.0
        %4958 = vmatpush2.msra.mxu0 0.0
        %4959 = vmatprep.subr.mxu0 0.0
        %4960 = vmatpush2.msra.mxu0 0.0
        %4961 = vmatprep.subr.mxu0 0.0
        %4962 = vmatpush2.msra.mxu0 0.0
        %4963 = vmatprep.subr.mxu0 0.0
        %4964 = vmatpush2.msra.mxu0 0.0
        %4965 = vmatprep.subr.mxu0 0.0
        %4966 = vmatpush2.msra.mxu0 0.0
        %4967 = vmatprep.subr.mxu0 0.0
        %4968 = vmatpush2.msra.mxu0 0.0
        %4969 = vmatprep.subr.mxu0 0.0
        %4970 = vmatpush2.msra.mxu0 0.0
        %4971 = vmatprep.mubr.f32.mxu0 0.0
        %4972 = vmatmul.mubr.f32.gmra.mxu0 %v4905
        %v4973 = vpop.f32.mrf.mxu0
        %v4974 = vadd.f32 1e-05, %v4973
        %v4975 = vpop.f32.mrf.mxu0
        %4976 = vdwg.mxu0
        %v4977 = vrsqrt.pop %v4974
        %v4978 = vmul.f32 %v4829, %v4977
        %v4980 = vlaneseq
        %v4981 = vshrl.u32 %v4980, 7
        %v4982 = vsub.s32 0, %v4981
        %v4983 = vrot.slane %v2605, %v4982
        %v4985 = vmul.f32 %v4978, %v4983
        %v4987 = vlaneseq
        %v4988 = vshrl.u32 %v4987, 7
        %v4989 = vsub.s32 0, %v4988
        %v4990 = vrot.slane %v2600, %v4989
        %v4992 = vadd.f32 %v4985, %v4990
        %v4993 = vsub.f32 0.0, %v4992
        %v4994 = vmul.f32 %v4993, 1.442695
        %v4995 = vpow.pop %v4994
        %v4996 = vadd.f32 %v4995, 1.0
        %v4997 = vrcp.pop %v4996
        %v4998 = vmul.f32 1.0, %v4997
        %v4999 = vmul.f32 %v4992, %v4998
        %v5001 = vlaneseq
        %v5002 = vshrl.u32 %v5001, 7
        %v5003 = vsub.s32 0, %v5002
        %v5004 = vrot.slane %v2631, %v5003
        %v5007 = vsel %vm4682, %v4999, 0
        %5009 = vmatprep.subr.mxu0 0.0
        %5010 = vmatpush1.msra.mxu0 0.0
        %5011 = vmatprep.subr.mxu0 0.0
        %5012 = vmatpush1.msra.mxu0 0.0
        %5013 = vmatprep.subr.mxu0 0.0
        %5014 = vmatpush1.msra.mxu0 0.0
        %5015 = vmatprep.subr.mxu0 0.0
        %5016 = vmatpush1.msra.mxu0 0.0
        %5017 = vmatprep.subr.mxu0 0.0
        %5018 = vmatpush1.msra.mxu0 0.0
        %5019 = vmatprep.subr.mxu0 0.0
        %5020 = vmatpush1.msra.mxu0 0.0
        %5021 = vmatprep.subr.mxu0 0.0
        %5022 = vmatpush1.msra.mxu0 0.0
        %5023 = vmatprep.subr.mxu0 0.0
        %5024 = vmatpush1.msra.mxu0 0.0
        %5025 = vmatprep.subr.mxu0 0.0
        %5026 = vmatpush1.msra.mxu0 %v2639
        %5027 = vmatprep.subr.mxu0 0.0
        %5028 = vmatpush1.msra.mxu0 %v2638
        %5029 = vmatprep.subr.mxu0 0.0
        %5030 = vmatpush1.msra.mxu0 %v2637
        %5031 = vmatprep.subr.mxu0 0.0
        %5032 = vmatpush1.msra.mxu0 %v2636
        %5033 = vmatprep.subr.mxu0 0.0
        %5034 = vmatpush1.msra.mxu0 %v2635
        %5035 = vmatprep.subr.mxu0 0.0
        %5036 = vmatpush1.msra.mxu0 %v2634
        %5037 = vmatprep.subr.mxu0 0.0
        %5038 = vmatpush1.msra.mxu0 %v2633
        %5039 = vmatprep.subr.mxu0 0.0
        %5040 = vmatpush1.msra.mxu0 %v2632
        %5041 = vmatprep.subr.mxu0 0.0
        %5042 = vmatpush2.msra.mxu0 0.0
        %5043 = vmatprep.subr.mxu0 0.0
        %5044 = vmatpush2.msra.mxu0 0.0
        %5045 = vmatprep.subr.mxu0 0.0
        %5046 = vmatpush2.msra.mxu0 0.0
        %5047 = vmatprep.subr.mxu0 0.0
        %5048 = vmatpush2.msra.mxu0 0.0
        %5049 = vmatprep.subr.mxu0 0.0
        %5050 = vmatpush2.msra.mxu0 0.0
        %5051 = vmatprep.subr.mxu0 0.0
        %5052 = vmatpush2.msra.mxu0 0.0
        %5053 = vmatprep.subr.mxu0 0.0
        %5054 = vmatpush2.msra.mxu0 0.0
        %5055 = vmatprep.subr.mxu0 0.0
        %5056 = vmatpush2.msra.mxu0 0.0
        %5057 = vmatprep.subr.mxu0 0.0
        %5058 = vmatpush2.msra.mxu0 0.0
        %5059 = vmatprep.subr.mxu0 0.0
        %5060 = vmatpush2.msra.mxu0 0.0
        %5061 = vmatprep.subr.mxu0 0.0
        %5062 = vmatpush2.msra.mxu0 0.0
        %5063 = vmatprep.subr.mxu0 0.0
        %5064 = vmatpush2.msra.mxu0 0.0
        %5065 = vmatprep.subr.mxu0 0.0
        %5066 = vmatpush2.msra.mxu0 0.0
        %5067 = vmatprep.subr.mxu0 0.0
        %5068 = vmatpush2.msra.mxu0 0.0
        %5069 = vmatprep.subr.mxu0 0.0
        %5070 = vmatpush2.msra.mxu0 0.0
        %5071 = vmatprep.subr.mxu0 0.0
        %5072 = vmatpush2.msra.mxu0 0.0
        %5073 = vmatprep.mubr.f32.mxu0 0.0
        %5074 = vmatmul.mubr.f32.gmra.mxu0 %v5007
        %v5075 = vpop.f32.mrf.mxu0
        %v5076 = vadd.f32 %v5004, %v5075
        %v5077 = vpop.f32.mrf.mxu0
        %5078 = vdwg.mxu0
        %v5079 = vsub.f32 0.0, %v5076
        %v5080 = vmul.f32 %v5079, 1.442695
        %v5081 = vpow.pop %v5080
        %v5082 = vadd.f32 %v5081, 1.0
        %v5083 = vrcp.pop %v5082
        %v5084 = vmul.f32 1.0, %v5083
        %v5085 = vmul.f32 %v5076, %v5084
        %v5087 = vlaneseq
        %v5088 = vshrl.u32 %v5087, 7
        %v5089 = vsub.s32 0, %v5088
        %v5090 = vrot.slane %v3098, %v5089
        %v5093 = vsel %vm4682, %v5085, 0
        %5095 = vmatprep.subr.mxu0 0.0
        %5096 = vmatpush1.msra.mxu0 0.0
        %5097 = vmatprep.subr.mxu0 0.0
        %5098 = vmatpush1.msra.mxu0 0.0
        %5099 = vmatprep.subr.mxu0 0.0
        %5100 = vmatpush1.msra.mxu0 0.0
        %5101 = vmatprep.subr.mxu0 0.0
        %5102 = vmatpush1.msra.mxu0 0.0
        %5103 = vmatprep.subr.mxu0 0.0
        %5104 = vmatpush1.msra.mxu0 0.0
        %5105 = vmatprep.subr.mxu0 0.0
        %5106 = vmatpush1.msra.mxu0 0.0
        %5107 = vmatprep.subr.mxu0 0.0
        %5108 = vmatpush1.msra.mxu0 0.0
        %5109 = vmatprep.subr.mxu0 0.0
        %5110 = vmatpush1.msra.mxu0 0.0
        %5111 = vmatprep.subr.mxu0 0.0
        %5112 = vmatpush1.msra.mxu0 %v3106
        %5113 = vmatprep.subr.mxu0 0.0
        %5114 = vmatpush1.msra.mxu0 %v3105
        %5115 = vmatprep.subr.mxu0 0.0
        %5116 = vmatpush1.msra.mxu0 %v3104
        %5117 = vmatprep.subr.mxu0 0.0
        %5118 = vmatpush1.msra.mxu0 %v3103
        %5119 = vmatprep.subr.mxu0 0.0
        %5120 = vmatpush1.msra.mxu0 %v3102
        %5121 = vmatprep.subr.mxu0 0.0
        %5122 = vmatpush1.msra.mxu0 %v3101
        %5123 = vmatprep.subr.mxu0 0.0
        %5124 = vmatpush1.msra.mxu0 %v3100
        %5125 = vmatprep.subr.mxu0 0.0
        %5126 = vmatpush1.msra.mxu0 %v3099
        %5127 = vmatprep.subr.mxu0 0.0
        %5128 = vmatpush2.msra.mxu0 0.0
        %5129 = vmatprep.subr.mxu0 0.0
        %5130 = vmatpush2.msra.mxu0 0.0
        %5131 = vmatprep.subr.mxu0 0.0
        %5132 = vmatpush2.msra.mxu0 0.0
        %5133 = vmatprep.subr.mxu0 0.0
        %5134 = vmatpush2.msra.mxu0 0.0
        %5135 = vmatprep.subr.mxu0 0.0
        %5136 = vmatpush2.msra.mxu0 0.0
        %5137 = vmatprep.subr.mxu0 0.0
        %5138 = vmatpush2.msra.mxu0 0.0
        %5139 = vmatprep.subr.mxu0 0.0
        %5140 = vmatpush2.msra.mxu0 0.0
        %5141 = vmatprep.subr.mxu0 0.0
        %5142 = vmatpush2.msra.mxu0 0.0
        %5143 = vmatprep.subr.mxu0 0.0
        %5144 = vmatpush2.msra.mxu0 0.0
        %5145 = vmatprep.subr.mxu0 0.0
        %5146 = vmatpush2.msra.mxu0 0.0
        %5147 = vmatprep.subr.mxu0 0.0
        %5148 = vmatpush2.msra.mxu0 0.0
        %5149 = vmatprep.subr.mxu0 0.0
        %5150 = vmatpush2.msra.mxu0 0.0
        %5151 = vmatprep.subr.mxu0 0.0
        %5152 = vmatpush2.msra.mxu0 0.0
        %5153 = vmatprep.subr.mxu0 0.0
        %5154 = vmatpush2.msra.mxu0 0.0
        %5155 = vmatprep.subr.mxu0 0.0
        %5156 = vmatpush2.msra.mxu0 0.0
        %5157 = vmatprep.subr.mxu0 0.0
        %5158 = vmatpush2.msra.mxu0 0.0
        %5159 = vmatprep.mubr.f32.mxu0 0.0
        %5160 = vmatmul.mubr.f32.gmra.mxu0 %v5093
        %v5161 = vpop.f32.mrf.mxu0
        %v5162 = vadd.f32 %v5090, %v5161
        %v5163 = vpop.f32.mrf.mxu0
        %5164 = vdwg.mxu0
        %v5165 = vsub.f32 0.0, %v5162
        %v5166 = vmul.f32 %v5165, 1.442695
        %v5167 = vpow.pop %v5166
        %v5168 = vadd.f32 %v5167, 1.0
        %v5169 = vrcp.pop %v5168
        %v5170 = vmul.f32 1.0, %v5169
        %v5171 = vmul.f32 %v5162, %v5170
        %5172 = vmatprep.subr.mxu0 0.0
        %5173 = vmatpush1.msra.mxu0 %v3097
        %5174 = vmatprep.subr.mxu0 0.0
        %5175 = vmatpush1.msra.mxu0 %v3096
        %5176 = vmatprep.subr.mxu0 0.0
        %5177 = vmatpush1.msra.mxu0 %v3095
        %5178 = vmatprep.subr.mxu0 0.0
        %5179 = vmatpush1.msra.mxu0 %v3094
        %5180 = vmatprep.subr.mxu0 0.0
        %5181 = vmatpush1.msra.mxu0 %v3093
        %5182 = vmatprep.subr.mxu0 0.0
        %5183 = vmatpush1.msra.mxu0 %v3092
        %5184 = vmatprep.subr.mxu0 0.0
        %5185 = vmatpush1.msra.mxu0 %v3091
        %5186 = vmatprep.subr.mxu0 0.0
        %5187 = vmatpush1.msra.mxu0 %v3090
        %5188 = vmatprep.subr.mxu0 0.0
        %5189 = vmatpush1.msra.mxu0 %v3089
        %5190 = vmatprep.subr.mxu0 0.0
        %5191 = vmatpush1.msra.mxu0 %v3088
        %5192 = vmatprep.subr.mxu0 0.0
        %5193 = vmatpush1.msra.mxu0 %v3087
        %5194 = vmatprep.subr.mxu0 0.0
        %5195 = vmatpush1.msra.mxu0 %v3086
        %5196 = vmatprep.subr.mxu0 0.0
        %5197 = vmatpush1.msra.mxu0 %v3085
        %5198 = vmatprep.subr.mxu0 0.0
        %5199 = vmatpush1.msra.mxu0 %v3084
        %5200 = vmatprep.subr.mxu0 0.0
        %5201 = vmatpush1.msra.mxu0 %v3083
        %5202 = vmatprep.subr.mxu0 0.0
        %5203 = vmatpush1.msra.mxu0 %v3082
        %5204 = vmatprep.subr.mxu0 0.0
        %5205 = vmatpush2.msra.mxu0 0.0
        %5206 = vmatprep.subr.mxu0 0.0
        %5207 = vmatpush2.msra.mxu0 0.0
        %5208 = vmatprep.subr.mxu0 0.0
        %5209 = vmatpush2.msra.mxu0 0.0
        %5210 = vmatprep.subr.mxu0 0.0
        %5211 = vmatpush2.msra.mxu0 0.0
        %5212 = vmatprep.subr.mxu0 0.0
        %5213 = vmatpush2.msra.mxu0 0.0
        %5214 = vmatprep.subr.mxu0 0.0
        %5215 = vmatpush2.msra.mxu0 0.0
        %5216 = vmatprep.subr.mxu0 0.0
        %5217 = vmatpush2.msra.mxu0 0.0
        %5218 = vmatprep.subr.mxu0 0.0
        %5219 = vmatpush2.msra.mxu0 0.0
        %5220 = vmatprep.subr.mxu0 0.0
        %5221 = vmatpush2.msra.mxu0 0.0
        %5222 = vmatprep.subr.mxu0 0.0
        %5223 = vmatpush2.msra.mxu0 0.0
        %5224 = vmatprep.subr.mxu0 0.0
        %5225 = vmatpush2.msra.mxu0 0.0
        %5226 = vmatprep.subr.mxu0 0.0
        %5227 = vmatpush2.msra.mxu0 0.0
        %5228 = vmatprep.subr.mxu0 0.0
        %5229 = vmatpush2.msra.mxu0 0.0
        %5230 = vmatprep.subr.mxu0 0.0
        %5231 = vmatpush2.msra.mxu0 0.0
        %5232 = vmatprep.subr.mxu0 0.0
        %5233 = vmatpush2.msra.mxu0 0.0
        %5234 = vmatprep.subr.mxu0 0.0
        %5235 = vmatpush2.msra.mxu0 0.0
        %5236 = vmatprep.mubr.f32.mxu0 0.0
        %5237 = vmatmul.mubr.f32.gmra.mxu0 %v5171
        %v5238 = vpop.f32.mrf.mxu0
        %v5239 = vadd.f32 0.0, %v5238
        %v5240 = vpop.f32.mrf.mxu0
        %5241 = vdwg.mxu0
        %v5243 = vsel %vm3701, %v5239, 0
        %5245 = vmatprep.subr.mxu0 0.0
        %5246 = vmatpush1.msra.mxu0 0.0
        %5247 = vmatprep.subr.mxu0 0.0
        %5248 = vmatpush1.msra.mxu0 0.0
        %5249 = vmatprep.subr.mxu0 0.0
        %5250 = vmatpush1.msra.mxu0 0.0
        %5251 = vmatprep.subr.mxu0 0.0
        %5252 = vmatpush1.msra.mxu0 0.0
        %5253 = vmatprep.subr.mxu0 0.0
        %5254 = vmatpush1.msra.mxu0 0.0
        %5255 = vmatprep.subr.mxu0 0.0
        %5256 = vmatpush1.msra.mxu0 0.0
        %5257 = vmatprep.subr.mxu0 0.0
        %5258 = vmatpush1.msra.mxu0 0.0
        %5259 = vmatprep.subr.mxu0 0.0
        %5260 = vmatpush1.msra.mxu0 0.0
        %5261 = vmatprep.subr.mxu0 0.0
        %5262 = vmatpush1.msra.mxu0 0.0
        %5263 = vmatprep.subr.mxu0 0.0
        %5264 = vmatpush1.msra.mxu0 0.0
        %5265 = vmatprep.subr.mxu0 0.0
        %5266 = vmatpush1.msra.mxu0 0.0
        %5267 = vmatprep.subr.mxu0 0.0
        %5268 = vmatpush1.msra.mxu0 0.0
        %5269 = vmatprep.subr.mxu0 0.0
        %5270 = vmatpush1.msra.mxu0 %v3080
        %5271 = vmatprep.subr.mxu0 0.0
        %5272 = vmatpush1.msra.mxu0 %v3079
        %5273 = vmatprep.subr.mxu0 0.0
        %5274 = vmatpush1.msra.mxu0 %v3078
        %5275 = vmatprep.subr.mxu0 0.0
        %5276 = vmatpush1.msra.mxu0 %v3077
        %5277 = vmatprep.subr.mxu0 0.0
        %5278 = vmatpush2.msra.mxu0 0.0
        %5279 = vmatprep.subr.mxu0 0.0
        %5280 = vmatpush2.msra.mxu0 0.0
        %5281 = vmatprep.subr.mxu0 0.0
        %5282 = vmatpush2.msra.mxu0 0.0
        %5283 = vmatprep.subr.mxu0 0.0
        %5284 = vmatpush2.msra.mxu0 0.0
        %5285 = vmatprep.subr.mxu0 0.0
        %5286 = vmatpush2.msra.mxu0 0.0
        %5287 = vmatprep.subr.mxu0 0.0
        %5288 = vmatpush2.msra.mxu0 0.0
        %5289 = vmatprep.subr.mxu0 0.0
        %5290 = vmatpush2.msra.mxu0 0.0
        %5291 = vmatprep.subr.mxu0 0.0
        %5292 = vmatpush2.msra.mxu0 0.0
        %5293 = vmatprep.subr.mxu0 0.0
        %5294 = vmatpush2.msra.mxu0 0.0
        %5295 = vmatprep.subr.mxu0 0.0
        %5296 = vmatpush2.msra.mxu0 0.0
        %5297 = vmatprep.subr.mxu0 0.0
        %5298 = vmatpush2.msra.mxu0 0.0
        %5299 = vmatprep.subr.mxu0 0.0
        %5300 = vmatpush2.msra.mxu0 0.0
        %5301 = vmatprep.subr.mxu0 0.0
        %5302 = vmatpush2.msra.mxu0 0.0
        %5303 = vmatprep.subr.mxu0 0.0
        %5304 = vmatpush2.msra.mxu0 0.0
        %5305 = vmatprep.subr.mxu0 0.0
        %5306 = vmatpush2.msra.mxu0 0.0
        %5307 = vmatprep.subr.mxu0 0.0
        %5308 = vmatpush2.msra.mxu0 0.0
        %5309 = vmatprep.mubr.f32.mxu0 0.0
        %5310 = vmatmul.mubr.f32.gmra.mxu0 %v5243
        %v5311 = vpop.f32.mrf.mxu0
        %v5312 = vadd.f32 0.0, %v5311
        %v5313 = vpop.f32.mrf.mxu0
        %5314 = vdwg.mxu0
        %v5315 = vsub.f32 %v5171, %v5312
        %v5316 = vmul.f32 %v5315, %v5315
        %5317 = vmatprep.subr.mxu0 0.0
        %5318 = vmatpush1.msra.mxu0 %v3097
        %5319 = vmatprep.subr.mxu0 0.0
        %5320 = vmatpush1.msra.mxu0 %v3096
        %5321 = vmatprep.subr.mxu0 0.0
        %5322 = vmatpush1.msra.mxu0 %v3095
        %5323 = vmatprep.subr.mxu0 0.0
        %5324 = vmatpush1.msra.mxu0 %v3094
        %5325 = vmatprep.subr.mxu0 0.0
        %5326 = vmatpush1.msra.mxu0 %v3093
        %5327 = vmatprep.subr.mxu0 0.0
        %5328 = vmatpush1.msra.mxu0 %v3092
        %5329 = vmatprep.subr.mxu0 0.0
        %5330 = vmatpush1.msra.mxu0 %v3091
        %5331 = vmatprep.subr.mxu0 0.0
        %5332 = vmatpush1.msra.mxu0 %v3090
        %5333 = vmatprep.subr.mxu0 0.0
        %5334 = vmatpush1.msra.mxu0 %v3089
        %5335 = vmatprep.subr.mxu0 0.0
        %5336 = vmatpush1.msra.mxu0 %v3088
        %5337 = vmatprep.subr.mxu0 0.0
        %5338 = vmatpush1.msra.mxu0 %v3087
        %5339 = vmatprep.subr.mxu0 0.0
        %5340 = vmatpush1.msra.mxu0 %v3086
        %5341 = vmatprep.subr.mxu0 0.0
        %5342 = vmatpush1.msra.mxu0 %v3085
        %5343 = vmatprep.subr.mxu0 0.0
        %5344 = vmatpush1.msra.mxu0 %v3084
        %5345 = vmatprep.subr.mxu0 0.0
        %5346 = vmatpush1.msra.mxu0 %v3083
        %5347 = vmatprep.subr.mxu0 0.0
        %5348 = vmatpush1.msra.mxu0 %v3082
        %5349 = vmatprep.subr.mxu0 0.0
        %5350 = vmatpush2.msra.mxu0 0.0
        %5351 = vmatprep.subr.mxu0 0.0
        %5352 = vmatpush2.msra.mxu0 0.0
        %5353 = vmatprep.subr.mxu0 0.0
        %5354 = vmatpush2.msra.mxu0 0.0
        %5355 = vmatprep.subr.mxu0 0.0
        %5356 = vmatpush2.msra.mxu0 0.0
        %5357 = vmatprep.subr.mxu0 0.0
        %5358 = vmatpush2.msra.mxu0 0.0
        %5359 = vmatprep.subr.mxu0 0.0
        %5360 = vmatpush2.msra.mxu0 0.0
        %5361 = vmatprep.subr.mxu0 0.0
        %5362 = vmatpush2.msra.mxu0 0.0
        %5363 = vmatprep.subr.mxu0 0.0
        %5364 = vmatpush2.msra.mxu0 0.0
        %5365 = vmatprep.subr.mxu0 0.0
        %5366 = vmatpush2.msra.mxu0 0.0
        %5367 = vmatprep.subr.mxu0 0.0
        %5368 = vmatpush2.msra.mxu0 0.0
        %5369 = vmatprep.subr.mxu0 0.0
        %5370 = vmatpush2.msra.mxu0 0.0
        %5371 = vmatprep.subr.mxu0 0.0
        %5372 = vmatpush2.msra.mxu0 0.0
        %5373 = vmatprep.subr.mxu0 0.0
        %5374 = vmatpush2.msra.mxu0 0.0
        %5375 = vmatprep.subr.mxu0 0.0
        %5376 = vmatpush2.msra.mxu0 0.0
        %5377 = vmatprep.subr.mxu0 0.0
        %5378 = vmatpush2.msra.mxu0 0.0
        %5379 = vmatprep.subr.mxu0 0.0
        %5380 = vmatpush2.msra.mxu0 0.0
        %5381 = vmatprep.mubr.f32.mxu0 0.0
        %5382 = vmatmul.mubr.f32.gmra.mxu0 %v5316
        %v5383 = vpop.f32.mrf.mxu0
        %v5384 = vadd.f32 0.0, %v5383
        %v5385 = vpop.f32.mrf.mxu0
        %5386 = vdwg.mxu0
        %v5388 = vsel %vm3701, %v5384, 0
        %5390 = vmatprep.subr.mxu0 0.0
        %5391 = vmatpush1.msra.mxu0 0.0
        %5392 = vmatprep.subr.mxu0 0.0
        %5393 = vmatpush1.msra.mxu0 0.0
        %5394 = vmatprep.subr.mxu0 0.0
        %5395 = vmatpush1.msra.mxu0 0.0
        %5396 = vmatprep.subr.mxu0 0.0
        %5397 = vmatpush1.msra.mxu0 0.0
        %5398 = vmatprep.subr.mxu0 0.0
        %5399 = vmatpush1.msra.mxu0 0.0
        %5400 = vmatprep.subr.mxu0 0.0
        %5401 = vmatpush1.msra.mxu0 0.0
        %5402 = vmatprep.subr.mxu0 0.0
        %5403 = vmatpush1.msra.mxu0 0.0
        %5404 = vmatprep.subr.mxu0 0.0
        %5405 = vmatpush1.msra.mxu0 0.0
        %5406 = vmatprep.subr.mxu0 0.0
        %5407 = vmatpush1.msra.mxu0 0.0
        %5408 = vmatprep.subr.mxu0 0.0
        %5409 = vmatpush1.msra.mxu0 0.0
        %5410 = vmatprep.subr.mxu0 0.0
        %5411 = vmatpush1.msra.mxu0 0.0
        %5412 = vmatprep.subr.mxu0 0.0
        %5413 = vmatpush1.msra.mxu0 0.0
        %5414 = vmatprep.subr.mxu0 0.0
        %5415 = vmatpush1.msra.mxu0 %v3080
        %5416 = vmatprep.subr.mxu0 0.0
        %5417 = vmatpush1.msra.mxu0 %v3079
        %5418 = vmatprep.subr.mxu0 0.0
        %5419 = vmatpush1.msra.mxu0 %v3078
        %5420 = vmatprep.subr.mxu0 0.0
        %5421 = vmatpush1.msra.mxu0 %v3077
        %5422 = vmatprep.subr.mxu0 0.0
        %5423 = vmatpush2.msra.mxu0 0.0
        %5424 = vmatprep.subr.mxu0 0.0
        %5425 = vmatpush2.msra.mxu0 0.0
        %5426 = vmatprep.subr.mxu0 0.0
        %5427 = vmatpush2.msra.mxu0 0.0
        %5428 = vmatprep.subr.mxu0 0.0
        %5429 = vmatpush2.msra.mxu0 0.0
        %5430 = vmatprep.subr.mxu0 0.0
        %5431 = vmatpush2.msra.mxu0 0.0
        %5432 = vmatprep.subr.mxu0 0.0
        %5433 = vmatpush2.msra.mxu0 0.0
        %5434 = vmatprep.subr.mxu0 0.0
        %5435 = vmatpush2.msra.mxu0 0.0
        %5436 = vmatprep.subr.mxu0 0.0
        %5437 = vmatpush2.msra.mxu0 0.0
        %5438 = vmatprep.subr.mxu0 0.0
        %5439 = vmatpush2.msra.mxu0 0.0
        %5440 = vmatprep.subr.mxu0 0.0
        %5441 = vmatpush2.msra.mxu0 0.0
        %5442 = vmatprep.subr.mxu0 0.0
        %5443 = vmatpush2.msra.mxu0 0.0
        %5444 = vmatprep.subr.mxu0 0.0
        %5445 = vmatpush2.msra.mxu0 0.0
        %5446 = vmatprep.subr.mxu0 0.0
        %5447 = vmatpush2.msra.mxu0 0.0
        %5448 = vmatprep.subr.mxu0 0.0
        %5449 = vmatpush2.msra.mxu0 0.0
        %5450 = vmatprep.subr.mxu0 0.0
        %5451 = vmatpush2.msra.mxu0 0.0
        %5452 = vmatprep.subr.mxu0 0.0
        %5453 = vmatpush2.msra.mxu0 0.0
        %5454 = vmatprep.mubr.f32.mxu0 0.0
        %5455 = vmatmul.mubr.f32.gmra.mxu0 %v5388
        %v5456 = vpop.f32.mrf.mxu0
        %v5457 = vadd.f32 1e-05, %v5456
        %v5458 = vpop.f32.mrf.mxu0
        %5459 = vdwg.mxu0
        %v5460 = vrsqrt.pop %v5457
        %v5461 = vmul.f32 %v5315, %v5460
        %v5463 = vlaneseq
        %v5464 = vshrl.u32 %v5463, 7
        %v5465 = vsub.s32 0, %v5464
        %v5466 = vrot.slane %v3081, %v5465
        %v5468 = vmul.f32 %v5461, %v5466
        %v5470 = vlaneseq
        %v5471 = vshrl.u32 %v5470, 7
        %v5472 = vsub.s32 0, %v5471
        %v5473 = vrot.slane %v3076, %v5472
        %v5475 = vadd.f32 %v5468, %v5473
        %5476 = vmatprep.subr.mxu0 0.0
        %5477 = vmatpush1.msra.mxu0 %v3123
        %5478 = vmatprep.subr.mxu0 0.0
        %5479 = vmatpush1.msra.mxu0 %v3122
        %5480 = vmatprep.subr.mxu0 0.0
        %5481 = vmatpush1.msra.mxu0 %v3121
        %5482 = vmatprep.subr.mxu0 0.0
        %5483 = vmatpush1.msra.mxu0 %v3120
        %5484 = vmatprep.subr.mxu0 0.0
        %5485 = vmatpush1.msra.mxu0 %v3119
        %5486 = vmatprep.subr.mxu0 0.0
        %5487 = vmatpush1.msra.mxu0 %v3118
        %5488 = vmatprep.subr.mxu0 0.0
        %5489 = vmatpush1.msra.mxu0 %v3117
        %5490 = vmatprep.subr.mxu0 0.0
        %5491 = vmatpush1.msra.mxu0 %v3116
        %5492 = vmatprep.subr.mxu0 0.0
        %5493 = vmatpush1.msra.mxu0 %v3115
        %5494 = vmatprep.subr.mxu0 0.0
        %5495 = vmatpush1.msra.mxu0 %v3114
        %5496 = vmatprep.subr.mxu0 0.0
        %5497 = vmatpush1.msra.mxu0 %v3113
        %5498 = vmatprep.subr.mxu0 0.0
        %5499 = vmatpush1.msra.mxu0 %v3112
        %5500 = vmatprep.subr.mxu0 0.0
        %5501 = vmatpush1.msra.mxu0 %v3111
        %5502 = vmatprep.subr.mxu0 0.0
        %5503 = vmatpush1.msra.mxu0 %v3110
        %5504 = vmatprep.subr.mxu0 0.0
        %5505 = vmatpush1.msra.mxu0 %v3109
        %5506 = vmatprep.subr.mxu0 0.0
        %5507 = vmatpush1.msra.mxu0 %v3108
        %5508 = vmatprep.subr.mxu0 0.0
        %5509 = vmatpush2.msra.mxu0 0.0
        %5510 = vmatprep.subr.mxu0 0.0
        %5511 = vmatpush2.msra.mxu0 0.0
        %5512 = vmatprep.subr.mxu0 0.0
        %5513 = vmatpush2.msra.mxu0 0.0
        %5514 = vmatprep.subr.mxu0 0.0
        %5515 = vmatpush2.msra.mxu0 0.0
        %5516 = vmatprep.subr.mxu0 0.0
        %5517 = vmatpush2.msra.mxu0 0.0
        %5518 = vmatprep.subr.mxu0 0.0
        %5519 = vmatpush2.msra.mxu0 0.0
        %5520 = vmatprep.subr.mxu0 0.0
        %5521 = vmatpush2.msra.mxu0 0.0
        %5522 = vmatprep.subr.mxu0 0.0
        %5523 = vmatpush2.msra.mxu0 0.0
        %5524 = vmatprep.subr.mxu0 0.0
        %5525 = vmatpush2.msra.mxu0 0.0
        %5526 = vmatprep.subr.mxu0 0.0
        %5527 = vmatpush2.msra.mxu0 0.0
        %5528 = vmatprep.subr.mxu0 0.0
        %5529 = vmatpush2.msra.mxu0 0.0
        %5530 = vmatprep.subr.mxu0 0.0
        %5531 = vmatpush2.msra.mxu0 0.0
        %5532 = vmatprep.subr.mxu0 0.0
        %5533 = vmatpush2.msra.mxu0 0.0
        %5534 = vmatprep.subr.mxu0 0.0
        %5535 = vmatpush2.msra.mxu0 0.0
        %5536 = vmatprep.subr.mxu0 0.0
        %5537 = vmatpush2.msra.mxu0 0.0
        %5538 = vmatprep.subr.mxu0 0.0
        %5539 = vmatpush2.msra.mxu0 0.0
        %5540 = vmatprep.mubr.f32.mxu0 0.0
        %5541 = vmatmul.mubr.f32.gmra.mxu0 %v4217
        %v5542 = vpop.f32.mrf.mxu0
        %v5543 = vadd.f32 0.0, %v5542
        %v5544 = vpop.f32.mrf.mxu0
        %5545 = vdwg.mxu0
        %5546 = vmatprep.subr.mxu0 0.0
        %5547 = vmatpush1.msra.mxu0 %v3139
        %5548 = vmatprep.subr.mxu0 0.0
        %5549 = vmatpush1.msra.mxu0 %v3138
        %5550 = vmatprep.subr.mxu0 0.0
        %5551 = vmatpush1.msra.mxu0 %v3137
        %5552 = vmatprep.subr.mxu0 0.0
        %5553 = vmatpush1.msra.mxu0 %v3136
        %5554 = vmatprep.subr.mxu0 0.0
        %5555 = vmatpush1.msra.mxu0 %v3135
        %5556 = vmatprep.subr.mxu0 0.0
        %5557 = vmatpush1.msra.mxu0 %v3134
        %5558 = vmatprep.subr.mxu0 0.0
        %5559 = vmatpush1.msra.mxu0 %v3133
        %5560 = vmatprep.subr.mxu0 0.0
        %5561 = vmatpush1.msra.mxu0 %v3132
        %5562 = vmatprep.subr.mxu0 0.0
        %5563 = vmatpush1.msra.mxu0 %v3131
        %5564 = vmatprep.subr.mxu0 0.0
        %5565 = vmatpush1.msra.mxu0 %v3130
        %5566 = vmatprep.subr.mxu0 0.0
        %5567 = vmatpush1.msra.mxu0 %v3129
        %5568 = vmatprep.subr.mxu0 0.0
        %5569 = vmatpush1.msra.mxu0 %v3128
        %5570 = vmatprep.subr.mxu0 0.0
        %5571 = vmatpush1.msra.mxu0 %v3127
        %5572 = vmatprep.subr.mxu0 0.0
        %5573 = vmatpush1.msra.mxu0 %v3126
        %5574 = vmatprep.subr.mxu0 0.0
        %5575 = vmatpush1.msra.mxu0 %v3125
        %5576 = vmatprep.subr.mxu0 0.0
        %5577 = vmatpush1.msra.mxu0 %v3124
        %5578 = vmatprep.subr.mxu0 0.0
        %5579 = vmatpush2.msra.mxu0 0.0
        %5580 = vmatprep.subr.mxu0 0.0
        %5581 = vmatpush2.msra.mxu0 0.0
        %5582 = vmatprep.subr.mxu0 0.0
        %5583 = vmatpush2.msra.mxu0 0.0
        %5584 = vmatprep.subr.mxu0 0.0
        %5585 = vmatpush2.msra.mxu0 0.0
        %5586 = vmatprep.subr.mxu0 0.0
        %5587 = vmatpush2.msra.mxu0 0.0
        %5588 = vmatprep.subr.mxu0 0.0
        %5589 = vmatpush2.msra.mxu0 0.0
        %5590 = vmatprep.subr.mxu0 0.0
        %5591 = vmatpush2.msra.mxu0 0.0
        %5592 = vmatprep.subr.mxu0 0.0
        %5593 = vmatpush2.msra.mxu0 0.0
        %5594 = vmatprep.subr.mxu0 0.0
        %5595 = vmatpush2.msra.mxu0 0.0
        %5596 = vmatprep.subr.mxu0 0.0
        %5597 = vmatpush2.msra.mxu0 0.0
        %5598 = vmatprep.subr.mxu0 0.0
        %5599 = vmatpush2.msra.mxu0 0.0
        %5600 = vmatprep.subr.mxu0 0.0
        %5601 = vmatpush2.msra.mxu0 0.0
        %5602 = vmatprep.subr.mxu0 0.0
        %5603 = vmatpush2.msra.mxu0 0.0
        %5604 = vmatprep.subr.mxu0 0.0
        %5605 = vmatpush2.msra.mxu0 0.0
        %5606 = vmatprep.subr.mxu0 0.0
        %5607 = vmatpush2.msra.mxu0 0.0
        %5608 = vmatprep.subr.mxu0 0.0
        %5609 = vmatpush2.msra.mxu0 0.0
        %5610 = vmatprep.mubr.f32.mxu0 0.0
        %5611 = vmatmul.mubr.f32.gmra.mxu0 %v5475
        %v5612 = vpop.f32.mrf.mxu0
        %v5613 = vadd.f32 %v5543, %v5612
        %v5614 = vpop.f32.mrf.mxu0
        %5615 = vdwg.mxu0
        %v5617 = vlaneseq
        %v5618 = vshrl.u32 %v5617, 7
        %v5619 = vsub.s32 0, %v5618
        %v5620 = vrot.slane %v3107, %v5619
        %v5622 = vadd.f32 %v5613, %v5620
        %v5623 = vsub.f32 0.0, %v5622
        %v5624 = vmul.f32 %v5623, 1.442695
        %v5625 = vpow.pop %v5624
        %v5626 = vadd.f32 %v5625, 1.0
        %v5627 = vrcp.pop %v5626
        %v5628 = vmul.f32 1.0, %v5627
        %v5629 = vmul.f32 %v5622, %v5628
        %5631 = vset.pattern.permute.xlu0 0
        %5632 = vperm.xlu0 %5631, %v3437
        %v5633 = vpop.permute.xlu0 %5632
        %v5636 = vlaneseq
        %v5637 = vshrl.u32 %v5636, 7
        %v5638 = vsub.s32 0, %v5637
        %v5639 = vrot.slane %v3158, %v5638
        %v5641 = vmul.f32 %v5633, %v5639
        %v5643 = vlaneseq
        %v5644 = vshrl.u32 %v5643, 7
        %v5645 = vsub.s32 0, %v5644
        %v5646 = vrot.slane %v3157, %v5645
        %v5648 = vadd.f32 %v5641, %v5646
        %v5650 = vlaneseq
        %v5651 = vshrl.u32 %v5650, 7
        %v5652 = vsub.s32 0, %v5651
        %v5653 = vrot.slane %v3073, %v5652
        %vm5655 = vcmask 130048
        %v5657 = vsel %vm5655, %v3438, 0
        %5659 = vmatprep.subr.mxu0 0.0
        %5660 = vmatpush1.msra.mxu0 0.0
        %5661 = vmatprep.subr.mxu0 0.0
        %5662 = vmatpush1.msra.mxu0 0.0
        %5663 = vmatprep.subr.mxu0 0.0
        %5664 = vmatpush1.msra.mxu0 0.0
        %5665 = vmatprep.subr.mxu0 0.0
        %5666 = vmatpush1.msra.mxu0 0.0
        %5667 = vmatprep.subr.mxu0 0.0
        %5668 = vmatpush1.msra.mxu0 0.0
        %5669 = vmatprep.subr.mxu0 0.0
        %5670 = vmatpush1.msra.mxu0 0.0
        %5671 = vmatprep.subr.mxu0 0.0
        %5672 = vmatpush1.msra.mxu0 0.0
        %5673 = vmatprep.subr.mxu0 0.0
        %5674 = vmatpush1.msra.mxu0 0.0
        %5675 = vmatprep.subr.mxu0 0.0
        %5676 = vmatpush1.msra.mxu0 0.0
        %5677 = vmatprep.subr.mxu0 0.0
        %5678 = vmatpush1.msra.mxu0 0.0
        %5679 = vmatprep.subr.mxu0 0.0
        %5680 = vmatpush1.msra.mxu0 0.0
        %5681 = vmatprep.subr.mxu0 0.0
        %5682 = vmatpush1.msra.mxu0 0.0
        %5683 = vmatprep.subr.mxu0 0.0
        %5684 = vmatpush1.msra.mxu0 0.0
        %5685 = vmatprep.subr.mxu0 0.0
        %5686 = vmatpush1.msra.mxu0 0.0
        %5687 = vmatprep.subr.mxu0 0.0
        %5688 = vmatpush1.msra.mxu0 %v3075
        %5689 = vmatprep.subr.mxu0 0.0
        %5690 = vmatpush1.msra.mxu0 %v3074
        %5691 = vmatprep.subr.mxu0 0.0
        %5692 = vmatpush2.msra.mxu0 0.0
        %5693 = vmatprep.subr.mxu0 0.0
        %5694 = vmatpush2.msra.mxu0 0.0
        %5695 = vmatprep.subr.mxu0 0.0
        %5696 = vmatpush2.msra.mxu0 0.0
        %5697 = vmatprep.subr.mxu0 0.0
        %5698 = vmatpush2.msra.mxu0 0.0
        %5699 = vmatprep.subr.mxu0 0.0
        %5700 = vmatpush2.msra.mxu0 0.0
        %5701 = vmatprep.subr.mxu0 0.0
        %5702 = vmatpush2.msra.mxu0 0.0
        %5703 = vmatprep.subr.mxu0 0.0
        %5704 = vmatpush2.msra.mxu0 0.0
        %5705 = vmatprep.subr.mxu0 0.0
        %5706 = vmatpush2.msra.mxu0 0.0
        %5707 = vmatprep.subr.mxu0 0.0
        %5708 = vmatpush2.msra.mxu0 0.0
        %5709 = vmatprep.subr.mxu0 0.0
        %5710 = vmatpush2.msra.mxu0 0.0
        %5711 = vmatprep.subr.mxu0 0.0
        %5712 = vmatpush2.msra.mxu0 0.0
        %5713 = vmatprep.subr.mxu0 0.0
        %5714 = vmatpush2.msra.mxu0 0.0
        %5715 = vmatprep.subr.mxu0 0.0
        %5716 = vmatpush2.msra.mxu0 0.0
        %5717 = vmatprep.subr.mxu0 0.0
        %5718 = vmatpush2.msra.mxu0 0.0
        %5719 = vmatprep.subr.mxu0 0.0
        %5720 = vmatpush2.msra.mxu0 0.0
        %5721 = vmatprep.subr.mxu0 0.0
        %5722 = vmatpush2.msra.mxu0 0.0
        %5723 = vmatprep.mubr.f32.mxu0 0.0
        %5724 = vmatmul.mubr.f32.gmra.mxu0 %v5657
        %v5725 = vpop.f32.mrf.mxu0
        %v5726 = vadd.f32 %v5653, %v5725
        %v5727 = vpop.f32.mrf.mxu0
        %5728 = vdwg.mxu0
        %v5729 = vmul.f32 %v5629, %v5726
        %v5730 = vadd.f32 %v5729, %v5648
        %v5732 = vlaneseq
        %v5733 = vshrl.u32 %v5732, 7
        %v5734 = vsub.s32 0, %v5733
        %v5735 = vrot.slane %v3140, %v5734
        %5737 = vmatprep.subr.mxu0 0.0
        %5738 = vmatpush1.msra.mxu0 %v3156
        %5739 = vmatprep.subr.mxu0 0.0
        %5740 = vmatpush1.msra.mxu0 %v3155
        %5741 = vmatprep.subr.mxu0 0.0
        %5742 = vmatpush1.msra.mxu0 %v3154
        %5743 = vmatprep.subr.mxu0 0.0
        %5744 = vmatpush1.msra.mxu0 %v3153
        %5745 = vmatprep.subr.mxu0 0.0
        %5746 = vmatpush1.msra.mxu0 %v3152
        %5747 = vmatprep.subr.mxu0 0.0
        %5748 = vmatpush1.msra.mxu0 %v3151
        %5749 = vmatprep.subr.mxu0 0.0
        %5750 = vmatpush1.msra.mxu0 %v3150
        %5751 = vmatprep.subr.mxu0 0.0
        %5752 = vmatpush1.msra.mxu0 %v3149
        %5753 = vmatprep.subr.mxu0 0.0
        %5754 = vmatpush1.msra.mxu0 %v3148
        %5755 = vmatprep.subr.mxu0 0.0
        %5756 = vmatpush1.msra.mxu0 %v3147
        %5757 = vmatprep.subr.mxu0 0.0
        %5758 = vmatpush1.msra.mxu0 %v3146
        %5759 = vmatprep.subr.mxu0 0.0
        %5760 = vmatpush1.msra.mxu0 %v3145
        %5761 = vmatprep.subr.mxu0 0.0
        %5762 = vmatpush1.msra.mxu0 %v3144
        %5763 = vmatprep.subr.mxu0 0.0
        %5764 = vmatpush1.msra.mxu0 %v3143
        %5765 = vmatprep.subr.mxu0 0.0
        %5766 = vmatpush1.msra.mxu0 %v3142
        %5767 = vmatprep.subr.mxu0 0.0
        %5768 = vmatpush1.msra.mxu0 %v3141
        %5769 = vmatprep.subr.mxu0 0.0
        %5770 = vmatpush2.msra.mxu0 0.0
        %5771 = vmatprep.subr.mxu0 0.0
        %5772 = vmatpush2.msra.mxu0 0.0
        %5773 = vmatprep.subr.mxu0 0.0
        %5774 = vmatpush2.msra.mxu0 0.0
        %5775 = vmatprep.subr.mxu0 0.0
        %5776 = vmatpush2.msra.mxu0 0.0
        %5777 = vmatprep.subr.mxu0 0.0
        %5778 = vmatpush2.msra.mxu0 0.0
        %5779 = vmatprep.subr.mxu0 0.0
        %5780 = vmatpush2.msra.mxu0 0.0
        %5781 = vmatprep.subr.mxu0 0.0
        %5782 = vmatpush2.msra.mxu0 0.0
        %5783 = vmatprep.subr.mxu0 0.0
        %5784 = vmatpush2.msra.mxu0 0.0
        %5785 = vmatprep.subr.mxu0 0.0
        %5786 = vmatpush2.msra.mxu0 0.0
        %5787 = vmatprep.subr.mxu0 0.0
        %5788 = vmatpush2.msra.mxu0 0.0
        %5789 = vmatprep.subr.mxu0 0.0
        %5790 = vmatpush2.msra.mxu0 0.0
        %5791 = vmatprep.subr.mxu0 0.0
        %5792 = vmatpush2.msra.mxu0 0.0
        %5793 = vmatprep.subr.mxu0 0.0
        %5794 = vmatpush2.msra.mxu0 0.0
        %5795 = vmatprep.subr.mxu0 0.0
        %5796 = vmatpush2.msra.mxu0 0.0
        %5797 = vmatprep.subr.mxu0 0.0
        %5798 = vmatpush2.msra.mxu0 0.0
        %5799 = vmatprep.subr.mxu0 0.0
        %5800 = vmatpush2.msra.mxu0 0.0
        %5801 = vmatprep.mubr.f32.mxu0 0.0
        %5802 = vmatmul.mubr.f32.gmra.mxu0 %v5730
        %v5803 = vpop.f32.mrf.mxu0
        %v5804 = vadd.f32 %v5735, %v5803
        %v5805 = vpop.f32.mrf.mxu0
        %5806 = vdwg.mxu0
        %v5807 = vsub.f32 0.0, %v5804
        %v5808 = vmul.f32 %v5807, 1.442695
        %v5809 = vpow.pop %v5808
        %v5810 = vadd.f32 %v5809, 1.0
        %v5811 = vrcp.pop %v5810
        %v5812 = vmul.f32 1.0, %v5811
        %v5813 = vmul.f32 %v5804, %v5812
        %v5814 = vadd.f32 %v5813, %v5171
        %v5816 = vlaneseq
        %v5817 = vshrl.u32 %v5816, 7
        %v5818 = vsub.s32 0, %v5817
        %v5819 = vrot.slane %v3206, %v5818
        %v5820 = vlaneseq
        %v5821 = vshrl.u32 %v5820, 7
        %v5822 = vsub.s32 1, %v5821
        %v5823 = vrot.slane %v3206, %v5822
        %5826 = vmatprep.subr.mxu0 %v3238
        %5827 = vmatpush1.msra.mxu0 %v3237
        %5828 = vmatprep.subr.mxu0 %v3236
        %5829 = vmatpush1.msra.mxu0 %v3235
        %5830 = vmatprep.subr.mxu0 %v3234
        %5831 = vmatpush1.msra.mxu0 %v3233
        %5832 = vmatprep.subr.mxu0 %v3232
        %5833 = vmatpush1.msra.mxu0 %v3231
        %5834 = vmatprep.subr.mxu0 %v3230
        %5835 = vmatpush1.msra.mxu0 %v3229
        %5836 = vmatprep.subr.mxu0 %v3228
        %5837 = vmatpush1.msra.mxu0 %v3227
        %5838 = vmatprep.subr.mxu0 %v3226
        %5839 = vmatpush1.msra.mxu0 %v3225
        %5840 = vmatprep.subr.mxu0 %v3224
        %5841 = vmatpush1.msra.mxu0 %v3223
        %5842 = vmatprep.subr.mxu0 %v3222
        %5843 = vmatpush1.msra.mxu0 %v3221
        %5844 = vmatprep.subr.mxu0 %v3220
        %5845 = vmatpush1.msra.mxu0 %v3219
        %5846 = vmatprep.subr.mxu0 %v3218
        %5847 = vmatpush1.msra.mxu0 %v3217
        %5848 = vmatprep.subr.mxu0 %v3216
        %5849 = vmatpush1.msra.mxu0 %v3215
        %5850 = vmatprep.subr.mxu0 %v3214
        %5851 = vmatpush1.msra.mxu0 %v3213
        %5852 = vmatprep.subr.mxu0 %v3212
        %5853 = vmatpush1.msra.mxu0 %v3211
        %5854 = vmatprep.subr.mxu0 %v3210
        %5855 = vmatpush1.msra.mxu0 %v3209
        %5856 = vmatprep.subr.mxu0 %v3208
        %5857 = vmatpush1.msra.mxu0 %v3207
        %5858 = vmatprep.subr.mxu0 0.0
        %5859 = vmatpush2.msra.mxu0 0.0
        %5860 = vmatprep.subr.mxu0 0.0
        %5861 = vmatpush2.msra.mxu0 0.0
        %5862 = vmatprep.subr.mxu0 0.0
        %5863 = vmatpush2.msra.mxu0 0.0
        %5864 = vmatprep.subr.mxu0 0.0
        %5865 = vmatpush2.msra.mxu0 0.0
        %5866 = vmatprep.subr.mxu0 0.0
        %5867 = vmatpush2.msra.mxu0 0.0
        %5868 = vmatprep.subr.mxu0 0.0
        %5869 = vmatpush2.msra.mxu0 0.0
        %5870 = vmatprep.subr.mxu0 0.0
        %5871 = vmatpush2.msra.mxu0 0.0
        %5872 = vmatprep.subr.mxu0 0.0
        %5873 = vmatpush2.msra.mxu0 0.0
        %5874 = vmatprep.subr.mxu0 0.0
        %5875 = vmatpush2.msra.mxu0 0.0
        %5876 = vmatprep.subr.mxu0 0.0
        %5877 = vmatpush2.msra.mxu0 0.0
        %5878 = vmatprep.subr.mxu0 0.0
        %5879 = vmatpush2.msra.mxu0 0.0
        %5880 = vmatprep.subr.mxu0 0.0
        %5881 = vmatpush2.msra.mxu0 0.0
        %5882 = vmatprep.subr.mxu0 0.0
        %5883 = vmatpush2.msra.mxu0 0.0
        %5884 = vmatprep.subr.mxu0 0.0
        %5885 = vmatpush2.msra.mxu0 0.0
        %5886 = vmatprep.subr.mxu0 0.0
        %5887 = vmatpush2.msra.mxu0 0.0
        %5888 = vmatprep.subr.mxu0 0.0
        %5889 = vmatpush2.msra.mxu0 0.0
        %5890 = vmatprep.mubr.f32.mxu0 0.0
        %5891 = vmatmul.mubr.f32.gmra.mxu0 %v5814
        %v5892 = vpop.f32.mrf.mxu0
        %v5893 = vadd.f32 %v5819, %v5892
        %v5894 = vpop.f32.mrf.mxu0
        %v5895 = vadd.f32 %v5823, %v5894
        %5896 = vdwg.mxu0
        %v5897 = vsub.f32 0.0, %v5893
        %v5898 = vsub.f32 0.0, %v5895
        %v5899 = vmul.f32 %v5897, 1.442695
        %v5900 = vpow.pop %v5899
        %v5901 = vmul.f32 %v5898, 1.442695
        %v5902 = vpow.pop %v5901
        %v5903 = vadd.f32 %v5900, 1.0
        %v5904 = vadd.f32 %v5902, 1.0
        %v5905 = vrcp.pop %v5903
        %v5906 = vmul.f32 1.0, %v5905
        %v5907 = vrcp.pop %v5904
        %v5908 = vmul.f32 1.0, %v5907
        %v5909 = vmul.f32 %v5893, %v5906
        %v5910 = vmul.f32 %v5895, %v5908
        %5911 = vmatprep.subr.mxu0 0.0
        %5912 = vmatpush1.msra.mxu0 %v3189
        %5913 = vmatprep.subr.mxu0 0.0
        %5914 = vmatpush1.msra.mxu0 %v3188
        %5915 = vmatprep.subr.mxu0 0.0
        %5916 = vmatpush1.msra.mxu0 %v3187
        %5917 = vmatprep.subr.mxu0 0.0
        %5918 = vmatpush1.msra.mxu0 %v3186
        %5919 = vmatprep.subr.mxu0 0.0
        %5920 = vmatpush1.msra.mxu0 %v3185
        %5921 = vmatprep.subr.mxu0 0.0
        %5922 = vmatpush1.msra.mxu0 %v3184
        %5923 = vmatprep.subr.mxu0 0.0
        %5924 = vmatpush1.msra.mxu0 %v3183
        %5925 = vmatprep.subr.mxu0 0.0
        %5926 = vmatpush1.msra.mxu0 %v3182
        %5927 = vmatprep.subr.mxu0 0.0
        %5928 = vmatpush1.msra.mxu0 %v3181
        %5929 = vmatprep.subr.mxu0 0.0
        %5930 = vmatpush1.msra.mxu0 %v3180
        %5931 = vmatprep.subr.mxu0 0.0
        %5932 = vmatpush1.msra.mxu0 %v3179
        %5933 = vmatprep.subr.mxu0 0.0
        %5934 = vmatpush1.msra.mxu0 %v3178
        %5935 = vmatprep.subr.mxu0 0.0
        %5936 = vmatpush1.msra.mxu0 %v3177
        %5937 = vmatprep.subr.mxu0 0.0
        %5938 = vmatpush1.msra.mxu0 %v3176
        %5939 = vmatprep.subr.mxu0 0.0
        %5940 = vmatpush1.msra.mxu0 %v3175
        %5941 = vmatprep.subr.mxu0 0.0
        %5942 = vmatpush1.msra.mxu0 %v3174
        %5943 = vmatprep.subr.mxu0 0.0
        %5944 = vmatpush2.msra.mxu0 %v3205
        %5945 = vmatprep.subr.mxu0 0.0
        %5946 = vmatpush2.msra.mxu0 %v3204
        %5947 = vmatprep.subr.mxu0 0.0
        %5948 = vmatpush2.msra.mxu0 %v3203
        %5949 = vmatprep.subr.mxu0 0.0
        %5950 = vmatpush2.msra.mxu0 %v3202
        %5951 = vmatprep.subr.mxu0 0.0
        %5952 = vmatpush2.msra.mxu0 %v3201
        %5953 = vmatprep.subr.mxu0 0.0
        %5954 = vmatpush2.msra.mxu0 %v3200
        %5955 = vmatprep.subr.mxu0 0.0
        %5956 = vmatpush2.msra.mxu0 %v3199
        %5957 = vmatprep.subr.mxu0 0.0
        %5958 = vmatpush2.msra.mxu0 %v3198
        %5959 = vmatprep.subr.mxu0 0.0
        %5960 = vmatpush2.msra.mxu0 %v3197
        %5961 = vmatprep.subr.mxu0 0.0
        %5962 = vmatpush2.msra.mxu0 %v3196
        %5963 = vmatprep.subr.mxu0 0.0
        %5964 = vmatpush2.msra.mxu0 %v3195
        %5965 = vmatprep.subr.mxu0 0.0
        %5966 = vmatpush2.msra.mxu0 %v3194
        %5967 = vmatprep.subr.mxu0 0.0
        %5968 = vmatpush2.msra.mxu0 %v3193
        %5969 = vmatprep.subr.mxu0 0.0
        %5970 = vmatpush2.msra.mxu0 %v3192
        %5971 = vmatprep.subr.mxu0 0.0
        %5972 = vmatpush2.msra.mxu0 %v3191
        %5973 = vmatprep.subr.mxu0 0.0
        %5974 = vmatpush2.msra.mxu0 %v3190
        %5975 = vmatprep.mubr.f32.mxu0 %v5910
        %5976 = vmatmul.mubr.f32.gmra.mxu0 %v5909
        %v5977 = vpop.f32.mrf.mxu0
        %v5978 = vadd.f32 0.0, %v5977
        %v5979 = vpop.f32.mrf.mxu0
        %5980 = vdwg.mxu0
        %v5982 = vsel %vm3701, %v5978, 0
        %5984 = vmatprep.subr.mxu0 0.0
        %5985 = vmatpush1.msra.mxu0 0.0
        %5986 = vmatprep.subr.mxu0 0.0
        %5987 = vmatpush1.msra.mxu0 0.0
        %5988 = vmatprep.subr.mxu0 0.0
        %5989 = vmatpush1.msra.mxu0 0.0
        %5990 = vmatprep.subr.mxu0 0.0
        %5991 = vmatpush1.msra.mxu0 0.0
        %5992 = vmatprep.subr.mxu0 0.0
        %5993 = vmatpush1.msra.mxu0 0.0
        %5994 = vmatprep.subr.mxu0 0.0
        %5995 = vmatpush1.msra.mxu0 0.0
        %5996 = vmatprep.subr.mxu0 0.0
        %5997 = vmatpush1.msra.mxu0 0.0
        %5998 = vmatprep.subr.mxu0 0.0
        %5999 = vmatpush1.msra.mxu0 0.0
        %6000 = vmatprep.subr.mxu0 0.0
        %6001 = vmatpush1.msra.mxu0 0.0
        %6002 = vmatprep.subr.mxu0 0.0
        %6003 = vmatpush1.msra.mxu0 0.0
        %6004 = vmatprep.subr.mxu0 0.0
        %6005 = vmatpush1.msra.mxu0 0.0
        %6006 = vmatprep.subr.mxu0 0.0
        %6007 = vmatpush1.msra.mxu0 0.0
        %6008 = vmatprep.subr.mxu0 %v3172
        %6009 = vmatpush1.msra.mxu0 %v3171
        %6010 = vmatprep.subr.mxu0 %v3170
        %6011 = vmatpush1.msra.mxu0 %v3169
        %6012 = vmatprep.subr.mxu0 %v3168
        %6013 = vmatpush1.msra.mxu0 %v3167
        %6014 = vmatprep.subr.mxu0 %v3166
        %6015 = vmatpush1.msra.mxu0 %v3165
        %6016 = vmatprep.subr.mxu0 0.0
        %6017 = vmatpush2.msra.mxu0 0.0
        %6018 = vmatprep.subr.mxu0 0.0
        %6019 = vmatpush2.msra.mxu0 0.0
        %6020 = vmatprep.subr.mxu0 0.0
        %6021 = vmatpush2.msra.mxu0 0.0
        %6022 = vmatprep.subr.mxu0 0.0
        %6023 = vmatpush2.msra.mxu0 0.0
        %6024 = vmatprep.subr.mxu0 0.0
        %6025 = vmatpush2.msra.mxu0 0.0
        %6026 = vmatprep.subr.mxu0 0.0
        %6027 = vmatpush2.msra.mxu0 0.0
        %6028 = vmatprep.subr.mxu0 0.0
        %6029 = vmatpush2.msra.mxu0 0.0
        %6030 = vmatprep.subr.mxu0 0.0
        %6031 = vmatpush2.msra.mxu0 0.0
        %6032 = vmatprep.subr.mxu0 0.0
        %6033 = vmatpush2.msra.mxu0 0.0
        %6034 = vmatprep.subr.mxu0 0.0
        %6035 = vmatpush2.msra.mxu0 0.0
        %6036 = vmatprep.subr.mxu0 0.0
        %6037 = vmatpush2.msra.mxu0 0.0
        %6038 = vmatprep.subr.mxu0 0.0
        %6039 = vmatpush2.msra.mxu0 0.0
        %6040 = vmatprep.subr.mxu0 0.0
        %6041 = vmatpush2.msra.mxu0 0.0
        %6042 = vmatprep.subr.mxu0 0.0
        %6043 = vmatpush2.msra.mxu0 0.0
        %6044 = vmatprep.subr.mxu0 0.0
        %6045 = vmatpush2.msra.mxu0 0.0
        %6046 = vmatprep.subr.mxu0 0.0
        %6047 = vmatpush2.msra.mxu0 0.0
        %6048 = vmatprep.mubr.f32.mxu0 0.0
        %6049 = vmatmul.mubr.f32.gmra.mxu0 %v5982
        %v6050 = vpop.f32.mrf.mxu0
        %v6051 = vadd.f32 0.0, %v6050
        %v6052 = vpop.f32.mrf.mxu0
        %v6053 = vadd.f32 0.0, %v6052
        %6054 = vdwg.mxu0
        %v6055 = vsub.f32 %v5909, %v6051
        %v6056 = vsub.f32 %v5910, %v6053
        %v6057 = vmul.f32 %v6055, %v6055
        %v6058 = vmul.f32 %v6056, %v6056
        %6059 = vmatprep.subr.mxu0 0.0
        %6060 = vmatpush1.msra.mxu0 %v3189
        %6061 = vmatprep.subr.mxu0 0.0
        %6062 = vmatpush1.msra.mxu0 %v3188
        %6063 = vmatprep.subr.mxu0 0.0
        %6064 = vmatpush1.msra.mxu0 %v3187
        %6065 = vmatprep.subr.mxu0 0.0
        %6066 = vmatpush1.msra.mxu0 %v3186
        %6067 = vmatprep.subr.mxu0 0.0
        %6068 = vmatpush1.msra.mxu0 %v3185
        %6069 = vmatprep.subr.mxu0 0.0
        %6070 = vmatpush1.msra.mxu0 %v3184
        %6071 = vmatprep.subr.mxu0 0.0
        %6072 = vmatpush1.msra.mxu0 %v3183
        %6073 = vmatprep.subr.mxu0 0.0
        %6074 = vmatpush1.msra.mxu0 %v3182
        %6075 = vmatprep.subr.mxu0 0.0
        %6076 = vmatpush1.msra.mxu0 %v3181
        %6077 = vmatprep.subr.mxu0 0.0
        %6078 = vmatpush1.msra.mxu0 %v3180
        %6079 = vmatprep.subr.mxu0 0.0
        %6080 = vmatpush1.msra.mxu0 %v3179
        %6081 = vmatprep.subr.mxu0 0.0
        %6082 = vmatpush1.msra.mxu0 %v3178
        %6083 = vmatprep.subr.mxu0 0.0
        %6084 = vmatpush1.msra.mxu0 %v3177
        %6085 = vmatprep.subr.mxu0 0.0
        %6086 = vmatpush1.msra.mxu0 %v3176
        %6087 = vmatprep.subr.mxu0 0.0
        %6088 = vmatpush1.msra.mxu0 %v3175
        %6089 = vmatprep.subr.mxu0 0.0
        %6090 = vmatpush1.msra.mxu0 %v3174
        %6091 = vmatprep.subr.mxu0 0.0
        %6092 = vmatpush2.msra.mxu0 %v3205
        %6093 = vmatprep.subr.mxu0 0.0
        %6094 = vmatpush2.msra.mxu0 %v3204
        %6095 = vmatprep.subr.mxu0 0.0
        %6096 = vmatpush2.msra.mxu0 %v3203
        %6097 = vmatprep.subr.mxu0 0.0
        %6098 = vmatpush2.msra.mxu0 %v3202
        %6099 = vmatprep.subr.mxu0 0.0
        %6100 = vmatpush2.msra.mxu0 %v3201
        %6101 = vmatprep.subr.mxu0 0.0
        %6102 = vmatpush2.msra.mxu0 %v3200
        %6103 = vmatprep.subr.mxu0 0.0
        %6104 = vmatpush2.msra.mxu0 %v3199
        %6105 = vmatprep.subr.mxu0 0.0
        %6106 = vmatpush2.msra.mxu0 %v3198
        %6107 = vmatprep.subr.mxu0 0.0
        %6108 = vmatpush2.msra.mxu0 %v3197
        %6109 = vmatprep.subr.mxu0 0.0
        %6110 = vmatpush2.msra.mxu0 %v3196
        %6111 = vmatprep.subr.mxu0 0.0
        %6112 = vmatpush2.msra.mxu0 %v3195
        %6113 = vmatprep.subr.mxu0 0.0
        %6114 = vmatpush2.msra.mxu0 %v3194
        %6115 = vmatprep.subr.mxu0 0.0
        %6116 = vmatpush2.msra.mxu0 %v3193
        %6117 = vmatprep.subr.mxu0 0.0
        %6118 = vmatpush2.msra.mxu0 %v3192
        %6119 = vmatprep.subr.mxu0 0.0
        %6120 = vmatpush2.msra.mxu0 %v3191
        %6121 = vmatprep.subr.mxu0 0.0
        %6122 = vmatpush2.msra.mxu0 %v3190
        %6123 = vmatprep.mubr.f32.mxu0 %v6058
        %6124 = vmatmul.mubr.f32.gmra.mxu0 %v6057
        %v6125 = vpop.f32.mrf.mxu0
        %v6126 = vadd.f32 0.0, %v6125
        %v6127 = vpop.f32.mrf.mxu0
        %6128 = vdwg.mxu0
        %v6130 = vsel %vm3701, %v6126, 0
        %6132 = vmatprep.subr.mxu0 0.0
        %6133 = vmatpush1.msra.mxu0 0.0
        %6134 = vmatprep.subr.mxu0 0.0
        %6135 = vmatpush1.msra.mxu0 0.0
        %6136 = vmatprep.subr.mxu0 0.0
        %6137 = vmatpush1.msra.mxu0 0.0
        %6138 = vmatprep.subr.mxu0 0.0
        %6139 = vmatpush1.msra.mxu0 0.0
        %6140 = vmatprep.subr.mxu0 0.0
        %6141 = vmatpush1.msra.mxu0 0.0
        %6142 = vmatprep.subr.mxu0 0.0
        %6143 = vmatpush1.msra.mxu0 0.0
        %6144 = vmatprep.subr.mxu0 0.0
        %6145 = vmatpush1.msra.mxu0 0.0
        %6146 = vmatprep.subr.mxu0 0.0
        %6147 = vmatpush1.msra.mxu0 0.0
        %6148 = vmatprep.subr.mxu0 0.0
        %6149 = vmatpush1.msra.mxu0 0.0
        %6150 = vmatprep.subr.mxu0 0.0
        %6151 = vmatpush1.msra.mxu0 0.0
        %6152 = vmatprep.subr.mxu0 0.0
        %6153 = vmatpush1.msra.mxu0 0.0
        %6154 = vmatprep.subr.mxu0 0.0
        %6155 = vmatpush1.msra.mxu0 0.0
        %6156 = vmatprep.subr.mxu0 %v3172
        %6157 = vmatpush1.msra.mxu0 %v3171
        %6158 = vmatprep.subr.mxu0 %v3170
        %6159 = vmatpush1.msra.mxu0 %v3169
        %6160 = vmatprep.subr.mxu0 %v3168
        %6161 = vmatpush1.msra.mxu0 %v3167
        %6162 = vmatprep.subr.mxu0 %v3166
        %6163 = vmatpush1.msra.mxu0 %v3165
        %6164 = vmatprep.subr.mxu0 0.0
        %6165 = vmatpush2.msra.mxu0 0.0
        %6166 = vmatprep.subr.mxu0 0.0
        %6167 = vmatpush2.msra.mxu0 0.0
        %6168 = vmatprep.subr.mxu0 0.0
        %6169 = vmatpush2.msra.mxu0 0.0
        %6170 = vmatprep.subr.mxu0 0.0
        %6171 = vmatpush2.msra.mxu0 0.0
        %6172 = vmatprep.subr.mxu0 0.0
        %6173 = vmatpush2.msra.mxu0 0.0
        %6174 = vmatprep.subr.mxu0 0.0
        %6175 = vmatpush2.msra.mxu0 0.0
        %6176 = vmatprep.subr.mxu0 0.0
        %6177 = vmatpush2.msra.mxu0 0.0
        %6178 = vmatprep.subr.mxu0 0.0
        %6179 = vmatpush2.msra.mxu0 0.0
        %6180 = vmatprep.subr.mxu0 0.0
        %6181 = vmatpush2.msra.mxu0 0.0
        %6182 = vmatprep.subr.mxu0 0.0
        %6183 = vmatpush2.msra.mxu0 0.0
        %6184 = vmatprep.subr.mxu0 0.0
        %6185 = vmatpush2.msra.mxu0 0.0
        %6186 = vmatprep.subr.mxu0 0.0
        %6187 = vmatpush2.msra.mxu0 0.0
        %6188 = vmatprep.subr.mxu0 0.0
        %6189 = vmatpush2.msra.mxu0 0.0
        %6190 = vmatprep.subr.mxu0 0.0
        %6191 = vmatpush2.msra.mxu0 0.0
        %6192 = vmatprep.subr.mxu0 0.0
        %6193 = vmatpush2.msra.mxu0 0.0
        %6194 = vmatprep.subr.mxu0 0.0
        %6195 = vmatpush2.msra.mxu0 0.0
        %6196 = vmatprep.mubr.f32.mxu0 0.0
        %6197 = vmatmul.mubr.f32.gmra.mxu0 %v6130
        %v6198 = vpop.f32.mrf.mxu0
        %v6199 = vadd.f32 1e-05, %v6198
        %v6200 = vpop.f32.mrf.mxu0
        %v6201 = vadd.f32 1e-05, %v6200
        %6202 = vdwg.mxu0
        %v6203 = vrsqrt.pop %v6199
        %v6204 = vrsqrt.pop %v6201
        %v6205 = vmul.f32 %v6055, %v6203
        %v6206 = vmul.f32 %v6056, %v6204
        %v6208 = vlaneseq
        %v6209 = vshrl.u32 %v6208, 7
        %v6210 = vsub.s32 0, %v6209
        %v6211 = vrot.slane %v3173, %v6210
        %v6212 = vlaneseq
        %v6213 = vshrl.u32 %v6212, 7
        %v6214 = vsub.s32 1, %v6213
        %v6215 = vrot.slane %v3173, %v6214
        %v6218 = vmul.f32 %v6205, %v6211
        %v6219 = vmul.f32 %v6206, %v6215
        %v6221 = vlaneseq
        %v6222 = vshrl.u32 %v6221, 7
        %v6223 = vsub.s32 0, %v6222
        %v6224 = vrot.slane %v3164, %v6223
        %v6225 = vlaneseq
        %v6226 = vshrl.u32 %v6225, 7
        %v6227 = vsub.s32 1, %v6226
        %v6228 = vrot.slane %v3164, %v6227
        %v6231 = vadd.f32 %v6218, %v6224
        %v6232 = vadd.f32 %v6219, %v6228
        %6233 = vmatprep.subr.mxu0 %v3271
        %6234 = vmatpush1.msra.mxu0 %v3270
        %6235 = vmatprep.subr.mxu0 %v3269
        %6236 = vmatpush1.msra.mxu0 %v3268
        %6237 = vmatprep.subr.mxu0 %v3267
        %6238 = vmatpush1.msra.mxu0 %v3266
        %6239 = vmatprep.subr.mxu0 %v3265
        %6240 = vmatpush1.msra.mxu0 %v3264
        %6241 = vmatprep.subr.mxu0 %v3263
        %6242 = vmatpush1.msra.mxu0 %v3262
        %6243 = vmatprep.subr.mxu0 %v3261
        %6244 = vmatpush1.msra.mxu0 %v3260
        %6245 = vmatprep.subr.mxu0 %v3259
        %6246 = vmatpush1.msra.mxu0 %v3258
        %6247 = vmatprep.subr.mxu0 %v3257
        %6248 = vmatpush1.msra.mxu0 %v3256
        %6249 = vmatprep.subr.mxu0 %v3255
        %6250 = vmatpush1.msra.mxu0 %v3254
        %6251 = vmatprep.subr.mxu0 %v3253
        %6252 = vmatpush1.msra.mxu0 %v3252
        %6253 = vmatprep.subr.mxu0 %v3251
        %6254 = vmatpush1.msra.mxu0 %v3250
        %6255 = vmatprep.subr.mxu0 %v3249
        %6256 = vmatpush1.msra.mxu0 %v3248
        %6257 = vmatprep.subr.mxu0 %v3247
        %6258 = vmatpush1.msra.mxu0 %v3246
        %6259 = vmatprep.subr.mxu0 %v3245
        %6260 = vmatpush1.msra.mxu0 %v3244
        %6261 = vmatprep.subr.mxu0 %v3243
        %6262 = vmatpush1.msra.mxu0 %v3242
        %6263 = vmatprep.subr.mxu0 %v3241
        %6264 = vmatpush1.msra.mxu0 %v3240
        %6265 = vmatprep.subr.mxu0 %v3303
        %6266 = vmatpush2.msra.mxu0 %v3302
        %6267 = vmatprep.subr.mxu0 %v3301
        %6268 = vmatpush2.msra.mxu0 %v3300
        %6269 = vmatprep.subr.mxu0 %v3299
        %6270 = vmatpush2.msra.mxu0 %v3298
        %6271 = vmatprep.subr.mxu0 %v3297
        %6272 = vmatpush2.msra.mxu0 %v3296
        %6273 = vmatprep.subr.mxu0 %v3295
        %6274 = vmatpush2.msra.mxu0 %v3294
        %6275 = vmatprep.subr.mxu0 %v3293
        %6276 = vmatpush2.msra.mxu0 %v3292
        %6277 = vmatprep.subr.mxu0 %v3291
        %6278 = vmatpush2.msra.mxu0 %v3290
        %6279 = vmatprep.subr.mxu0 %v3289
        %6280 = vmatpush2.msra.mxu0 %v3288
        %6281 = vmatprep.subr.mxu0 %v3287
        %6282 = vmatpush2.msra.mxu0 %v3286
        %6283 = vmatprep.subr.mxu0 %v3285
        %6284 = vmatpush2.msra.mxu0 %v3284
        %6285 = vmatprep.subr.mxu0 %v3283
        %6286 = vmatpush2.msra.mxu0 %v3282
        %6287 = vmatprep.subr.mxu0 %v3281
        %6288 = vmatpush2.msra.mxu0 %v3280
        %6289 = vmatprep.subr.mxu0 %v3279
        %6290 = vmatpush2.msra.mxu0 %v3278
        %6291 = vmatprep.subr.mxu0 %v3277
        %6292 = vmatpush2.msra.mxu0 %v3276
        %6293 = vmatprep.subr.mxu0 %v3275
        %6294 = vmatpush2.msra.mxu0 %v3274
        %6295 = vmatprep.subr.mxu0 %v3273
        %6296 = vmatpush2.msra.mxu0 %v3272
        %6297 = vmatprep.mubr.f32.mxu0 %v3630
        %6298 = vmatmul.mubr.f32.gmra.mxu0 %v3629
        %v6299 = vpop.f32.mrf.mxu0
        %v6300 = vadd.f32 0.0, %v6299
        %v6301 = vpop.f32.mrf.mxu0
        %v6302 = vadd.f32 0.0, %v6301
        %6303 = vdwg.mxu0
        %6304 = vmatprep.subr.mxu0 %v3335
        %6305 = vmatpush1.msra.mxu0 %v3334
        %6306 = vmatprep.subr.mxu0 %v3333
        %6307 = vmatpush1.msra.mxu0 %v3332
        %6308 = vmatprep.subr.mxu0 %v3331
        %6309 = vmatpush1.msra.mxu0 %v3330
        %6310 = vmatprep.subr.mxu0 %v3329
        %6311 = vmatpush1.msra.mxu0 %v3328
        %6312 = vmatprep.subr.mxu0 %v3327
        %6313 = vmatpush1.msra.mxu0 %v3326
        %6314 = vmatprep.subr.mxu0 %v3325
        %6315 = vmatpush1.msra.mxu0 %v3324
        %6316 = vmatprep.subr.mxu0 %v3323
        %6317 = vmatpush1.msra.mxu0 %v3322
        %6318 = vmatprep.subr.mxu0 %v3321
        %6319 = vmatpush1.msra.mxu0 %v3320
        %6320 = vmatprep.subr.mxu0 %v3319
        %6321 = vmatpush1.msra.mxu0 %v3318
        %6322 = vmatprep.subr.mxu0 %v3317
        %6323 = vmatpush1.msra.mxu0 %v3316
        %6324 = vmatprep.subr.mxu0 %v3315
        %6325 = vmatpush1.msra.mxu0 %v3314
        %6326 = vmatprep.subr.mxu0 %v3313
        %6327 = vmatpush1.msra.mxu0 %v3312
        %6328 = vmatprep.subr.mxu0 %v3311
        %6329 = vmatpush1.msra.mxu0 %v3310
        %6330 = vmatprep.subr.mxu0 %v3309
        %6331 = vmatpush1.msra.mxu0 %v3308
        %6332 = vmatprep.subr.mxu0 %v3307
        %6333 = vmatpush1.msra.mxu0 %v3306
        %6334 = vmatprep.subr.mxu0 %v3305
        %6335 = vmatpush1.msra.mxu0 %v3304
        %6336 = vmatprep.subr.mxu0 %v3367
        %6337 = vmatpush2.msra.mxu0 %v3366
        %6338 = vmatprep.subr.mxu0 %v3365
        %6339 = vmatpush2.msra.mxu0 %v3364
        %6340 = vmatprep.subr.mxu0 %v3363
        %6341 = vmatpush2.msra.mxu0 %v3362
        %6342 = vmatprep.subr.mxu0 %v3361
        %6343 = vmatpush2.msra.mxu0 %v3360
        %6344 = vmatprep.subr.mxu0 %v3359
        %6345 = vmatpush2.msra.mxu0 %v3358
        %6346 = vmatprep.subr.mxu0 %v3357
        %6347 = vmatpush2.msra.mxu0 %v3356
        %6348 = vmatprep.subr.mxu0 %v3355
        %6349 = vmatpush2.msra.mxu0 %v3354
        %6350 = vmatprep.subr.mxu0 %v3353
        %6351 = vmatpush2.msra.mxu0 %v3352
        %6352 = vmatprep.subr.mxu0 %v3351
        %6353 = vmatpush2.msra.mxu0 %v3350
        %6354 = vmatprep.subr.mxu0 %v3349
        %6355 = vmatpush2.msra.mxu0 %v3348
        %6356 = vmatprep.subr.mxu0 %v3347
        %6357 = vmatpush2.msra.mxu0 %v3346
        %6358 = vmatprep.subr.mxu0 %v3345
        %6359 = vmatpush2.msra.mxu0 %v3344
        %6360 = vmatprep.subr.mxu0 %v3343
        %6361 = vmatpush2.msra.mxu0 %v3342
        %6362 = vmatprep.subr.mxu0 %v3341
        %6363 = vmatpush2.msra.mxu0 %v3340
        %6364 = vmatprep.subr.mxu0 %v3339
        %6365 = vmatpush2.msra.mxu0 %v3338
        %6366 = vmatprep.subr.mxu0 %v3337
        %6367 = vmatpush2.msra.mxu0 %v3336
        %6368 = vmatprep.mubr.f32.mxu0 %v6232
        %6369 = vmatmul.mubr.f32.gmra.mxu0 %v6231
        %v6370 = vpop.f32.mrf.mxu0
        %v6371 = vadd.f32 %v6300, %v6370
        %v6372 = vpop.f32.mrf.mxu0
        %v6373 = vadd.f32 %v6302, %v6372
        %6374 = vdwg.mxu0
        %v6376 = vlaneseq
        %v6377 = vshrl.u32 %v6376, 7
        %v6378 = vsub.s32 0, %v6377
        %v6379 = vrot.slane %v3239, %v6378
        %v6380 = vlaneseq
        %v6381 = vshrl.u32 %v6380, 7
        %v6382 = vsub.s32 1, %v6381
        %v6383 = vrot.slane %v3239, %v6382
        %v6386 = vadd.f32 %v6371, %v6379
        %v6387 = vadd.f32 %v6373, %v6383
        %v6388 = vsub.f32 0.0, %v6386
        %v6389 = vsub.f32 0.0, %v6387
        %v6390 = vmul.f32 %v6388, 1.442695
        %v6391 = vpow.pop %v6390
        %v6392 = vmul.f32 %v6389, 1.442695
        %v6393 = vpow.pop %v6392
        %v6394 = vadd.f32 %v6391, 1.0
        %v6395 = vadd.f32 %v6393, 1.0
        %v6396 = vrcp.pop %v6394
        %v6397 = vmul.f32 1.0, %v6396
        %v6398 = vrcp.pop %v6395
        %v6399 = vmul.f32 1.0, %v6398
        %v6400 = vmul.f32 %v6386, %v6397
        %v6401 = vmul.f32 %v6387, %v6399
        %v6403 = vlaneseq
        %v6404 = vshrl.u32 %v6403, 7
        %v6405 = vsub.s32 0, %v6404
        %v6406 = vrot.slane %v3434, %v6405
        %v6407 = vlaneseq
        %v6408 = vshrl.u32 %v6407, 7
        %v6409 = vsub.s32 1, %v6408
        %v6410 = vrot.slane %v3434, %v6409
        %v6413 = vmul.f32 %v5633, %v6406
        %v6414 = vmul.f32 %v5633, %v6410
        %v6416 = vlaneseq
        %v6417 = vshrl.u32 %v6416, 7
        %v6418 = vsub.s32 0, %v6417
        %v6419 = vrot.slane %v3433, %v6418
        %v6420 = vlaneseq
        %v6421 = vshrl.u32 %v6420, 7
        %v6422 = vsub.s32 1, %v6421
        %v6423 = vrot.slane %v3433, %v6422
        %v6426 = vadd.f32 %v6413, %v6419
        %v6427 = vadd.f32 %v6414, %v6423
        %v6429 = vlaneseq
        %v6430 = vshrl.u32 %v6429, 7
        %v6431 = vsub.s32 0, %v6430
        %v6432 = vrot.slane %v3159, %v6431
        %v6433 = vlaneseq
        %v6434 = vshrl.u32 %v6433, 7
        %v6435 = vsub.s32 1, %v6434
        %v6436 = vrot.slane %v3159, %v6435
        %6439 = vmatprep.subr.mxu0 0.0
        %6440 = vmatpush1.msra.mxu0 0.0
        %6441 = vmatprep.subr.mxu0 0.0
        %6442 = vmatpush1.msra.mxu0 0.0
        %6443 = vmatprep.subr.mxu0 0.0
        %6444 = vmatpush1.msra.mxu0 0.0
        %6445 = vmatprep.subr.mxu0 0.0
        %6446 = vmatpush1.msra.mxu0 0.0
        %6447 = vmatprep.subr.mxu0 0.0
        %6448 = vmatpush1.msra.mxu0 0.0
        %6449 = vmatprep.subr.mxu0 0.0
        %6450 = vmatpush1.msra.mxu0 0.0
        %6451 = vmatprep.subr.mxu0 0.0
        %6452 = vmatpush1.msra.mxu0 0.0
        %6453 = vmatprep.subr.mxu0 0.0
        %6454 = vmatpush1.msra.mxu0 0.0
        %6455 = vmatprep.subr.mxu0 0.0
        %6456 = vmatpush1.msra.mxu0 0.0
        %6457 = vmatprep.subr.mxu0 0.0
        %6458 = vmatpush1.msra.mxu0 0.0
        %6459 = vmatprep.subr.mxu0 0.0
        %6460 = vmatpush1.msra.mxu0 0.0
        %6461 = vmatprep.subr.mxu0 0.0
        %6462 = vmatpush1.msra.mxu0 0.0
        %6463 = vmatprep.subr.mxu0 0.0
        %6464 = vmatpush1.msra.mxu0 0.0
        %6465 = vmatprep.subr.mxu0 0.0
        %6466 = vmatpush1.msra.mxu0 0.0
        %6467 = vmatprep.subr.mxu0 %v3163
        %6468 = vmatpush1.msra.mxu0 %v3162
        %6469 = vmatprep.subr.mxu0 %v3161
        %6470 = vmatpush1.msra.mxu0 %v3160
        %6471 = vmatprep.subr.mxu0 0.0
        %6472 = vmatpush2.msra.mxu0 0.0
        %6473 = vmatprep.subr.mxu0 0.0
        %6474 = vmatpush2.msra.mxu0 0.0
        %6475 = vmatprep.subr.mxu0 0.0
        %6476 = vmatpush2.msra.mxu0 0.0
        %6477 = vmatprep.subr.mxu0 0.0
        %6478 = vmatpush2.msra.mxu0 0.0
        %6479 = vmatprep.subr.mxu0 0.0
        %6480 = vmatpush2.msra.mxu0 0.0
        %6481 = vmatprep.subr.mxu0 0.0
        %6482 = vmatpush2.msra.mxu0 0.0
        %6483 = vmatprep.subr.mxu0 0.0
        %6484 = vmatpush2.msra.mxu0 0.0
        %6485 = vmatprep.subr.mxu0 0.0
        %6486 = vmatpush2.msra.mxu0 0.0
        %6487 = vmatprep.subr.mxu0 0.0
        %6488 = vmatpush2.msra.mxu0 0.0
        %6489 = vmatprep.subr.mxu0 0.0
        %6490 = vmatpush2.msra.mxu0 0.0
        %6491 = vmatprep.subr.mxu0 0.0
        %6492 = vmatpush2.msra.mxu0 0.0
        %6493 = vmatprep.subr.mxu0 0.0
        %6494 = vmatpush2.msra.mxu0 0.0
        %6495 = vmatprep.subr.mxu0 0.0
        %6496 = vmatpush2.msra.mxu0 0.0
        %6497 = vmatprep.subr.mxu0 0.0
        %6498 = vmatpush2.msra.mxu0 0.0
        %6499 = vmatprep.subr.mxu0 0.0
        %6500 = vmatpush2.msra.mxu0 0.0
        %6501 = vmatprep.subr.mxu0 0.0
        %6502 = vmatpush2.msra.mxu0 0.0
        %6503 = vmatprep.mubr.f32.mxu0 0.0
        %6504 = vmatmul.mubr.f32.gmra.mxu0 %v5657
        %v6505 = vpop.f32.mrf.mxu0
        %v6506 = vadd.f32 %v6432, %v6505
        %v6507 = vpop.f32.mrf.mxu0
        %v6508 = vadd.f32 %v6436, %v6507
        %6509 = vdwg.mxu0
        %v6510 = vmul.f32 %v6400, %v6506
        %v6511 = vmul.f32 %v6401, %v6508
        %v6512 = vadd.f32 %v6510, %v6426
        %v6513 = vadd.f32 %v6511, %v6427
        %v6515 = vlaneseq
        %v6516 = vshrl.u32 %v6515, 7
        %v6517 = vsub.s32 0, %v6516
        %v6518 = vrot.slane %v3368, %v6517
        %v6519 = vlaneseq
        %v6520 = vshrl.u32 %v6519, 7
        %v6521 = vsub.s32 1, %v6520
        %v6522 = vrot.slane %v3368, %v6521
        %6525 = vmatprep.subr.mxu0 %v3400
        %6526 = vmatpush1.msra.mxu0 %v3399
        %6527 = vmatprep.subr.mxu0 %v3398
        %6528 = vmatpush1.msra.mxu0 %v3397
        %6529 = vmatprep.subr.mxu0 %v3396
        %6530 = vmatpush1.msra.mxu0 %v3395
        %6531 = vmatprep.subr.mxu0 %v3394
        %6532 = vmatpush1.msra.mxu0 %v3393
        %6533 = vmatprep.subr.mxu0 %v3392
        %6534 = vmatpush1.msra.mxu0 %v3391
        %6535 = vmatprep.subr.mxu0 %v3390
        %6536 = vmatpush1.msra.mxu0 %v3389
        %6537 = vmatprep.subr.mxu0 %v3388
        %6538 = vmatpush1.msra.mxu0 %v3387
        %6539 = vmatprep.subr.mxu0 %v3386
        %6540 = vmatpush1.msra.mxu0 %v3385
        %6541 = vmatprep.subr.mxu0 %v3384
        %6542 = vmatpush1.msra.mxu0 %v3383
        %6543 = vmatprep.subr.mxu0 %v3382
        %6544 = vmatpush1.msra.mxu0 %v3381
        %6545 = vmatprep.subr.mxu0 %v3380
        %6546 = vmatpush1.msra.mxu0 %v3379
        %6547 = vmatprep.subr.mxu0 %v3378
        %6548 = vmatpush1.msra.mxu0 %v3377
        %6549 = vmatprep.subr.mxu0 %v3376
        %6550 = vmatpush1.msra.mxu0 %v3375
        %6551 = vmatprep.subr.mxu0 %v3374
        %6552 = vmatpush1.msra.mxu0 %v3373
        %6553 = vmatprep.subr.mxu0 %v3372
        %6554 = vmatpush1.msra.mxu0 %v3371
        %6555 = vmatprep.subr.mxu0 %v3370
        %6556 = vmatpush1.msra.mxu0 %v3369
        %6557 = vmatprep.subr.mxu0 %v3432
        %6558 = vmatpush2.msra.mxu0 %v3431
        %6559 = vmatprep.subr.mxu0 %v3430
        %6560 = vmatpush2.msra.mxu0 %v3429
        %6561 = vmatprep.subr.mxu0 %v3428
        %6562 = vmatpush2.msra.mxu0 %v3427
        %6563 = vmatprep.subr.mxu0 %v3426
        %6564 = vmatpush2.msra.mxu0 %v3425
        %6565 = vmatprep.subr.mxu0 %v3424
        %6566 = vmatpush2.msra.mxu0 %v3423
        %6567 = vmatprep.subr.mxu0 %v3422
        %6568 = vmatpush2.msra.mxu0 %v3421
        %6569 = vmatprep.subr.mxu0 %v3420
        %6570 = vmatpush2.msra.mxu0 %v3419
        %6571 = vmatprep.subr.mxu0 %v3418
        %6572 = vmatpush2.msra.mxu0 %v3417
        %6573 = vmatprep.subr.mxu0 %v3416
        %6574 = vmatpush2.msra.mxu0 %v3415
        %6575 = vmatprep.subr.mxu0 %v3414
        %6576 = vmatpush2.msra.mxu0 %v3413
        %6577 = vmatprep.subr.mxu0 %v3412
        %6578 = vmatpush2.msra.mxu0 %v3411
        %6579 = vmatprep.subr.mxu0 %v3410
        %6580 = vmatpush2.msra.mxu0 %v3409
        %6581 = vmatprep.subr.mxu0 %v3408
        %6582 = vmatpush2.msra.mxu0 %v3407
        %6583 = vmatprep.subr.mxu0 %v3406
        %6584 = vmatpush2.msra.mxu0 %v3405
        %6585 = vmatprep.subr.mxu0 %v3404
        %6586 = vmatpush2.msra.mxu0 %v3403
        %6587 = vmatprep.subr.mxu0 %v3402
        %6588 = vmatpush2.msra.mxu0 %v3401
        %6589 = vmatprep.mubr.f32.mxu0 %v6513
        %6590 = vmatmul.mubr.f32.gmra.mxu0 %v6512
        %v6591 = vpop.f32.mrf.mxu0
        %v6592 = vadd.f32 %v6518, %v6591
        %v6593 = vpop.f32.mrf.mxu0
        %v6594 = vadd.f32 %v6522, %v6593
        %6595 = vdwg.mxu0
        %v6596 = vsub.f32 0.0, %v6592
        %v6597 = vsub.f32 0.0, %v6594
        %v6598 = vmul.f32 %v6596, 1.442695
        %v6599 = vpow.pop %v6598
        %v6600 = vmul.f32 %v6597, 1.442695
        %v6601 = vpow.pop %v6600
        %v6602 = vadd.f32 %v6599, 1.0
        %v6603 = vadd.f32 %v6601, 1.0
        %v6604 = vrcp.pop %v6602
        %v6605 = vmul.f32 1.0, %v6604
        %v6606 = vrcp.pop %v6603
        %v6607 = vmul.f32 1.0, %v6606
        %v6608 = vmul.f32 %v6592, %v6605
        %v6609 = vmul.f32 %v6594, %v6607
        %v6610 = vadd.f32 %v6608, %v5909
        %v6611 = vadd.f32 %v6609, %v5910
        %6612 = vmatprep.subr.mxu0 0.0
        %6613 = vmatpush1.msra.mxu0 %v2991
        %6614 = vmatprep.subr.mxu0 0.0
        %6615 = vmatpush1.msra.mxu0 %v2990
        %6616 = vmatprep.subr.mxu0 0.0
        %6617 = vmatpush1.msra.mxu0 %v2989
        %6618 = vmatprep.subr.mxu0 0.0
        %6619 = vmatpush1.msra.mxu0 %v2988
        %6620 = vmatprep.subr.mxu0 0.0
        %6621 = vmatpush1.msra.mxu0 %v2987
        %6622 = vmatprep.subr.mxu0 0.0
        %6623 = vmatpush1.msra.mxu0 %v2986
        %6624 = vmatprep.subr.mxu0 0.0
        %6625 = vmatpush1.msra.mxu0 %v2985
        %6626 = vmatprep.subr.mxu0 0.0
        %6627 = vmatpush1.msra.mxu0 %v2984
        %6628 = vmatprep.subr.mxu0 0.0
        %6629 = vmatpush1.msra.mxu0 %v2983
        %6630 = vmatprep.subr.mxu0 0.0
        %6631 = vmatpush1.msra.mxu0 %v2982
        %6632 = vmatprep.subr.mxu0 0.0
        %6633 = vmatpush1.msra.mxu0 %v2981
        %6634 = vmatprep.subr.mxu0 0.0
        %6635 = vmatpush1.msra.mxu0 %v2980
        %6636 = vmatprep.subr.mxu0 0.0
        %6637 = vmatpush1.msra.mxu0 %v2979
        %6638 = vmatprep.subr.mxu0 0.0
        %6639 = vmatpush1.msra.mxu0 %v2978
        %6640 = vmatprep.subr.mxu0 0.0
        %6641 = vmatpush1.msra.mxu0 %v2977
        %6642 = vmatprep.subr.mxu0 0.0
        %6643 = vmatpush1.msra.mxu0 %v2976
        %6644 = vmatprep.subr.mxu0 0.0
        %6645 = vmatpush2.msra.mxu0 %v3007
        %6646 = vmatprep.subr.mxu0 0.0
        %6647 = vmatpush2.msra.mxu0 %v3006
        %6648 = vmatprep.subr.mxu0 0.0
        %6649 = vmatpush2.msra.mxu0 %v3005
        %6650 = vmatprep.subr.mxu0 0.0
        %6651 = vmatpush2.msra.mxu0 %v3004
        %6652 = vmatprep.subr.mxu0 0.0
        %6653 = vmatpush2.msra.mxu0 %v3003
        %6654 = vmatprep.subr.mxu0 0.0
        %6655 = vmatpush2.msra.mxu0 %v3002
        %6656 = vmatprep.subr.mxu0 0.0
        %6657 = vmatpush2.msra.mxu0 %v3001
        %6658 = vmatprep.subr.mxu0 0.0
        %6659 = vmatpush2.msra.mxu0 %v3000
        %6660 = vmatprep.subr.mxu0 0.0
        %6661 = vmatpush2.msra.mxu0 %v2999
        %6662 = vmatprep.subr.mxu0 0.0
        %6663 = vmatpush2.msra.mxu0 %v2998
        %6664 = vmatprep.subr.mxu0 0.0
        %6665 = vmatpush2.msra.mxu0 %v2997
        %6666 = vmatprep.subr.mxu0 0.0
        %6667 = vmatpush2.msra.mxu0 %v2996
        %6668 = vmatprep.subr.mxu0 0.0
        %6669 = vmatpush2.msra.mxu0 %v2995
        %6670 = vmatprep.subr.mxu0 0.0
        %6671 = vmatpush2.msra.mxu0 %v2994
        %6672 = vmatprep.subr.mxu0 0.0
        %6673 = vmatpush2.msra.mxu0 %v2993
        %6674 = vmatprep.subr.mxu0 0.0
        %6675 = vmatpush2.msra.mxu0 %v2992
        %6676 = vmatprep.mubr.f32.mxu0 %v6611
        %6677 = vmatmul.mubr.f32.gmra.mxu0 %v6610
        %v6678 = vpop.f32.mrf.mxu0
        %v6679 = vadd.f32 0.0, %v6678
        %v6680 = vpop.f32.mrf.mxu0
        %6681 = vdwg.mxu0
        %v6683 = vsel %vm3701, %v6679, 0
        %6685 = vmatprep.subr.mxu0 0.0
        %6686 = vmatpush1.msra.mxu0 0.0
        %6687 = vmatprep.subr.mxu0 0.0
        %6688 = vmatpush1.msra.mxu0 0.0
        %6689 = vmatprep.subr.mxu0 0.0
        %6690 = vmatpush1.msra.mxu0 0.0
        %6691 = vmatprep.subr.mxu0 0.0
        %6692 = vmatpush1.msra.mxu0 0.0
        %6693 = vmatprep.subr.mxu0 0.0
        %6694 = vmatpush1.msra.mxu0 0.0
        %6695 = vmatprep.subr.mxu0 0.0
        %6696 = vmatpush1.msra.mxu0 0.0
        %6697 = vmatprep.subr.mxu0 0.0
        %6698 = vmatpush1.msra.mxu0 0.0
        %6699 = vmatprep.subr.mxu0 0.0
        %6700 = vmatpush1.msra.mxu0 0.0
        %6701 = vmatprep.subr.mxu0 0.0
        %6702 = vmatpush1.msra.mxu0 0.0
        %6703 = vmatprep.subr.mxu0 0.0
        %6704 = vmatpush1.msra.mxu0 0.0
        %6705 = vmatprep.subr.mxu0 0.0
        %6706 = vmatpush1.msra.mxu0 0.0
        %6707 = vmatprep.subr.mxu0 0.0
        %6708 = vmatpush1.msra.mxu0 0.0
        %6709 = vmatprep.subr.mxu0 %v2974
        %6710 = vmatpush1.msra.mxu0 %v2973
        %6711 = vmatprep.subr.mxu0 %v2972
        %6712 = vmatpush1.msra.mxu0 %v2971
        %6713 = vmatprep.subr.mxu0 %v2970
        %6714 = vmatpush1.msra.mxu0 %v2969
        %6715 = vmatprep.subr.mxu0 %v2968
        %6716 = vmatpush1.msra.mxu0 %v2967
        %6717 = vmatprep.subr.mxu0 0.0
        %6718 = vmatpush2.msra.mxu0 0.0
        %6719 = vmatprep.subr.mxu0 0.0
        %6720 = vmatpush2.msra.mxu0 0.0
        %6721 = vmatprep.subr.mxu0 0.0
        %6722 = vmatpush2.msra.mxu0 0.0
        %6723 = vmatprep.subr.mxu0 0.0
        %6724 = vmatpush2.msra.mxu0 0.0
        %6725 = vmatprep.subr.mxu0 0.0
        %6726 = vmatpush2.msra.mxu0 0.0
        %6727 = vmatprep.subr.mxu0 0.0
        %6728 = vmatpush2.msra.mxu0 0.0
        %6729 = vmatprep.subr.mxu0 0.0
        %6730 = vmatpush2.msra.mxu0 0.0
        %6731 = vmatprep.subr.mxu0 0.0
        %6732 = vmatpush2.msra.mxu0 0.0
        %6733 = vmatprep.subr.mxu0 0.0
        %6734 = vmatpush2.msra.mxu0 0.0
        %6735 = vmatprep.subr.mxu0 0.0
        %6736 = vmatpush2.msra.mxu0 0.0
        %6737 = vmatprep.subr.mxu0 0.0
        %6738 = vmatpush2.msra.mxu0 0.0
        %6739 = vmatprep.subr.mxu0 0.0
        %6740 = vmatpush2.msra.mxu0 0.0
        %6741 = vmatprep.subr.mxu0 0.0
        %6742 = vmatpush2.msra.mxu0 0.0
        %6743 = vmatprep.subr.mxu0 0.0
        %6744 = vmatpush2.msra.mxu0 0.0
        %6745 = vmatprep.subr.mxu0 0.0
        %6746 = vmatpush2.msra.mxu0 0.0
        %6747 = vmatprep.subr.mxu0 0.0
        %6748 = vmatpush2.msra.mxu0 0.0
        %6749 = vmatprep.mubr.f32.mxu0 0.0
        %6750 = vmatmul.mubr.f32.gmra.mxu0 %v6683
        %v6751 = vpop.f32.mrf.mxu0
        %v6752 = vadd.f32 0.0, %v6751
        %v6753 = vpop.f32.mrf.mxu0
        %v6754 = vadd.f32 0.0, %v6753
        %6755 = vdwg.mxu0
        %v6756 = vsub.f32 %v6610, %v6752
        %v6757 = vsub.f32 %v6611, %v6754
        %v6758 = vmul.f32 %v6756, %v6756
        %v6759 = vmul.f32 %v6757, %v6757
        %6760 = vmatprep.subr.mxu0 0.0
        %6761 = vmatpush1.msra.mxu0 %v2991
        %6762 = vmatprep.subr.mxu0 0.0
        %6763 = vmatpush1.msra.mxu0 %v2990
        %6764 = vmatprep.subr.mxu0 0.0
        %6765 = vmatpush1.msra.mxu0 %v2989
        %6766 = vmatprep.subr.mxu0 0.0
        %6767 = vmatpush1.msra.mxu0 %v2988
        %6768 = vmatprep.subr.mxu0 0.0
        %6769 = vmatpush1.msra.mxu0 %v2987
        %6770 = vmatprep.subr.mxu0 0.0
        %6771 = vmatpush1.msra.mxu0 %v2986
        %6772 = vmatprep.subr.mxu0 0.0
        %6773 = vmatpush1.msra.mxu0 %v2985
        %6774 = vmatprep.subr.mxu0 0.0
        %6775 = vmatpush1.msra.mxu0 %v2984
        %6776 = vmatprep.subr.mxu0 0.0
        %6777 = vmatpush1.msra.mxu0 %v2983
        %6778 = vmatprep.subr.mxu0 0.0
        %6779 = vmatpush1.msra.mxu0 %v2982
        %6780 = vmatprep.subr.mxu0 0.0
        %6781 = vmatpush1.msra.mxu0 %v2981
        %6782 = vmatprep.subr.mxu0 0.0
        %6783 = vmatpush1.msra.mxu0 %v2980
        %6784 = vmatprep.subr.mxu0 0.0
        %6785 = vmatpush1.msra.mxu0 %v2979
        %6786 = vmatprep.subr.mxu0 0.0
        %6787 = vmatpush1.msra.mxu0 %v2978
        %6788 = vmatprep.subr.mxu0 0.0
        %6789 = vmatpush1.msra.mxu0 %v2977
        %6790 = vmatprep.subr.mxu0 0.0
        %6791 = vmatpush1.msra.mxu0 %v2976
        %6792 = vmatprep.subr.mxu0 0.0
        %6793 = vmatpush2.msra.mxu0 %v3007
        %6794 = vmatprep.subr.mxu0 0.0
        %6795 = vmatpush2.msra.mxu0 %v3006
        %6796 = vmatprep.subr.mxu0 0.0
        %6797 = vmatpush2.msra.mxu0 %v3005
        %6798 = vmatprep.subr.mxu0 0.0
        %6799 = vmatpush2.msra.mxu0 %v3004
        %6800 = vmatprep.subr.mxu0 0.0
        %6801 = vmatpush2.msra.mxu0 %v3003
        %6802 = vmatprep.subr.mxu0 0.0
        %6803 = vmatpush2.msra.mxu0 %v3002
        %6804 = vmatprep.subr.mxu0 0.0
        %6805 = vmatpush2.msra.mxu0 %v3001
        %6806 = vmatprep.subr.mxu0 0.0
        %6807 = vmatpush2.msra.mxu0 %v3000
        %6808 = vmatprep.subr.mxu0 0.0
        %6809 = vmatpush2.msra.mxu0 %v2999
        %6810 = vmatprep.subr.mxu0 0.0
        %6811 = vmatpush2.msra.mxu0 %v2998
        %6812 = vmatprep.subr.mxu0 0.0
        %6813 = vmatpush2.msra.mxu0 %v2997
        %6814 = vmatprep.subr.mxu0 0.0
        %6815 = vmatpush2.msra.mxu0 %v2996
        %6816 = vmatprep.subr.mxu0 0.0
        %6817 = vmatpush2.msra.mxu0 %v2995
        %6818 = vmatprep.subr.mxu0 0.0
        %6819 = vmatpush2.msra.mxu0 %v2994
        %6820 = vmatprep.subr.mxu0 0.0
        %6821 = vmatpush2.msra.mxu0 %v2993
        %6822 = vmatprep.subr.mxu0 0.0
        %6823 = vmatpush2.msra.mxu0 %v2992
        %6824 = vmatprep.mubr.f32.mxu0 %v6759
        %6825 = vmatmul.mubr.f32.gmra.mxu0 %v6758
        %v6826 = vpop.f32.mrf.mxu0
        %v6827 = vadd.f32 0.0, %v6826
        %v6828 = vpop.f32.mrf.mxu0
        %6829 = vdwg.mxu0
        %v6831 = vsel %vm3701, %v6827, 0
        %6833 = vmatprep.subr.mxu0 0.0
        %6834 = vmatpush1.msra.mxu0 0.0
        %6835 = vmatprep.subr.mxu0 0.0
        %6836 = vmatpush1.msra.mxu0 0.0
        %6837 = vmatprep.subr.mxu0 0.0
        %6838 = vmatpush1.msra.mxu0 0.0
        %6839 = vmatprep.subr.mxu0 0.0
        %6840 = vmatpush1.msra.mxu0 0.0
        %6841 = vmatprep.subr.mxu0 0.0
        %6842 = vmatpush1.msra.mxu0 0.0
        %6843 = vmatprep.subr.mxu0 0.0
        %6844 = vmatpush1.msra.mxu0 0.0
        %6845 = vmatprep.subr.mxu0 0.0
        %6846 = vmatpush1.msra.mxu0 0.0
        %6847 = vmatprep.subr.mxu0 0.0
        %6848 = vmatpush1.msra.mxu0 0.0
        %6849 = vmatprep.subr.mxu0 0.0
        %6850 = vmatpush1.msra.mxu0 0.0
        %6851 = vmatprep.subr.mxu0 0.0
        %6852 = vmatpush1.msra.mxu0 0.0
        %6853 = vmatprep.subr.mxu0 0.0
        %6854 = vmatpush1.msra.mxu0 0.0
        %6855 = vmatprep.subr.mxu0 0.0
        %6856 = vmatpush1.msra.mxu0 0.0
        %6857 = vmatprep.subr.mxu0 %v2974
        %6858 = vmatpush1.msra.mxu0 %v2973
        %6859 = vmatprep.subr.mxu0 %v2972
        %6860 = vmatpush1.msra.mxu0 %v2971
        %6861 = vmatprep.subr.mxu0 %v2970
        %6862 = vmatpush1.msra.mxu0 %v2969
        %6863 = vmatprep.subr.mxu0 %v2968
        %6864 = vmatpush1.msra.mxu0 %v2967
        %6865 = vmatprep.subr.mxu0 0.0
        %6866 = vmatpush2.msra.mxu0 0.0
        %6867 = vmatprep.subr.mxu0 0.0
        %6868 = vmatpush2.msra.mxu0 0.0
        %6869 = vmatprep.subr.mxu0 0.0
        %6870 = vmatpush2.msra.mxu0 0.0
        %6871 = vmatprep.subr.mxu0 0.0
        %6872 = vmatpush2.msra.mxu0 0.0
        %6873 = vmatprep.subr.mxu0 0.0
        %6874 = vmatpush2.msra.mxu0 0.0
        %6875 = vmatprep.subr.mxu0 0.0
        %6876 = vmatpush2.msra.mxu0 0.0
        %6877 = vmatprep.subr.mxu0 0.0
        %6878 = vmatpush2.msra.mxu0 0.0
        %6879 = vmatprep.subr.mxu0 0.0
        %6880 = vmatpush2.msra.mxu0 0.0
        %6881 = vmatprep.subr.mxu0 0.0
        %6882 = vmatpush2.msra.mxu0 0.0
        %6883 = vmatprep.subr.mxu0 0.0
        %6884 = vmatpush2.msra.mxu0 0.0
        %6885 = vmatprep.subr.mxu0 0.0
        %6886 = vmatpush2.msra.mxu0 0.0
        %6887 = vmatprep.subr.mxu0 0.0
        %6888 = vmatpush2.msra.mxu0 0.0
        %6889 = vmatprep.subr.mxu0 0.0
        %6890 = vmatpush2.msra.mxu0 0.0
        %6891 = vmatprep.subr.mxu0 0.0
        %6892 = vmatpush2.msra.mxu0 0.0
        %6893 = vmatprep.subr.mxu0 0.0
        %6894 = vmatpush2.msra.mxu0 0.0
        %6895 = vmatprep.subr.mxu0 0.0
        %6896 = vmatpush2.msra.mxu0 0.0
        %6897 = vmatprep.mubr.f32.mxu0 0.0
        %6898 = vmatmul.mubr.f32.gmra.mxu0 %v6831
        %v6899 = vpop.f32.mrf.mxu0
        %v6900 = vadd.f32 1e-05, %v6899
        %v6901 = vpop.f32.mrf.mxu0
        %v6902 = vadd.f32 1e-05, %v6901
        %6903 = vdwg.mxu0
        %v6904 = vrsqrt.pop %v6900
        %v6905 = vrsqrt.pop %v6902
        %v6906 = vmul.f32 %v6756, %v6904
        %v6907 = vmul.f32 %v6757, %v6905
        %v6909 = vlaneseq
        %v6910 = vshrl.u32 %v6909, 7
        %v6911 = vsub.s32 0, %v6910
        %v6912 = vrot.slane %v2975, %v6911
        %v6913 = vlaneseq
        %v6914 = vshrl.u32 %v6913, 7
        %v6915 = vsub.s32 1, %v6914
        %v6916 = vrot.slane %v2975, %v6915
        %v6919 = vmul.f32 %v6906, %v6912
        %v6920 = vmul.f32 %v6907, %v6916
        %v6922 = vlaneseq
        %v6923 = vshrl.u32 %v6922, 7
        %v6924 = vsub.s32 0, %v6923
        %v6925 = vrot.slane %v2966, %v6924
        %v6926 = vlaneseq
        %v6927 = vshrl.u32 %v6926, 7
        %v6928 = vsub.s32 1, %v6927
        %v6929 = vrot.slane %v2966, %v6928
        %v6932 = vadd.f32 %v6919, %v6925
        %v6933 = vadd.f32 %v6920, %v6929
        %v6934 = vsub.f32 0.0, %v6932
        %v6935 = vsub.f32 0.0, %v6933
        %v6936 = vmul.f32 %v6934, 1.442695
        %v6937 = vpow.pop %v6936
        %v6938 = vmul.f32 %v6935, 1.442695
        %v6939 = vpow.pop %v6938
        %v6940 = vadd.f32 %v6937, 1.0
        %v6941 = vadd.f32 %v6939, 1.0
        %v6942 = vrcp.pop %v6940
        %v6943 = vmul.f32 1.0, %v6942
        %v6944 = vrcp.pop %v6941
        %v6945 = vmul.f32 1.0, %v6944
        %v6946 = vmul.f32 %v6932, %v6943
        %v6947 = vmul.f32 %v6933, %v6945
        %v6949 = vlaneseq
        %v6950 = vshrl.u32 %v6949, 7
        %v6951 = vsub.s32 0, %v6950
        %v6952 = vrot.slane %v3008, %v6951
        %v6953 = vlaneseq
        %v6954 = vshrl.u32 %v6953, 7
        %v6955 = vsub.s32 1, %v6954
        %v6956 = vrot.slane %v3008, %v6955
        %6959 = vmatprep.subr.mxu0 %v3040
        %6960 = vmatpush1.msra.mxu0 %v3039
        %6961 = vmatprep.subr.mxu0 %v3038
        %6962 = vmatpush1.msra.mxu0 %v3037
        %6963 = vmatprep.subr.mxu0 %v3036
        %6964 = vmatpush1.msra.mxu0 %v3035
        %6965 = vmatprep.subr.mxu0 %v3034
        %6966 = vmatpush1.msra.mxu0 %v3033
        %6967 = vmatprep.subr.mxu0 %v3032
        %6968 = vmatpush1.msra.mxu0 %v3031
        %6969 = vmatprep.subr.mxu0 %v3030
        %6970 = vmatpush1.msra.mxu0 %v3029
        %6971 = vmatprep.subr.mxu0 %v3028
        %6972 = vmatpush1.msra.mxu0 %v3027
        %6973 = vmatprep.subr.mxu0 %v3026
        %6974 = vmatpush1.msra.mxu0 %v3025
        %6975 = vmatprep.subr.mxu0 %v3024
        %6976 = vmatpush1.msra.mxu0 %v3023
        %6977 = vmatprep.subr.mxu0 %v3022
        %6978 = vmatpush1.msra.mxu0 %v3021
        %6979 = vmatprep.subr.mxu0 %v3020
        %6980 = vmatpush1.msra.mxu0 %v3019
        %6981 = vmatprep.subr.mxu0 %v3018
        %6982 = vmatpush1.msra.mxu0 %v3017
        %6983 = vmatprep.subr.mxu0 %v3016
        %6984 = vmatpush1.msra.mxu0 %v3015
        %6985 = vmatprep.subr.mxu0 %v3014
        %6986 = vmatpush1.msra.mxu0 %v3013
        %6987 = vmatprep.subr.mxu0 %v3012
        %6988 = vmatpush1.msra.mxu0 %v3011
        %6989 = vmatprep.subr.mxu0 %v3010
        %6990 = vmatpush1.msra.mxu0 %v3009
        %6991 = vmatprep.subr.mxu0 %v3072
        %6992 = vmatpush2.msra.mxu0 %v3071
        %6993 = vmatprep.subr.mxu0 %v3070
        %6994 = vmatpush2.msra.mxu0 %v3069
        %6995 = vmatprep.subr.mxu0 %v3068
        %6996 = vmatpush2.msra.mxu0 %v3067
        %6997 = vmatprep.subr.mxu0 %v3066
        %6998 = vmatpush2.msra.mxu0 %v3065
        %6999 = vmatprep.subr.mxu0 %v3064
        %7000 = vmatpush2.msra.mxu0 %v3063
        %7001 = vmatprep.subr.mxu0 %v3062
        %7002 = vmatpush2.msra.mxu0 %v3061
        %7003 = vmatprep.subr.mxu0 %v3060
        %7004 = vmatpush2.msra.mxu0 %v3059
        %7005 = vmatprep.subr.mxu0 %v3058
        %7006 = vmatpush2.msra.mxu0 %v3057
        %7007 = vmatprep.subr.mxu0 %v3056
        %7008 = vmatpush2.msra.mxu0 %v3055
        %7009 = vmatprep.subr.mxu0 %v3054
        %7010 = vmatpush2.msra.mxu0 %v3053
        %7011 = vmatprep.subr.mxu0 %v3052
        %7012 = vmatpush2.msra.mxu0 %v3051
        %7013 = vmatprep.subr.mxu0 %v3050
        %7014 = vmatpush2.msra.mxu0 %v3049
        %7015 = vmatprep.subr.mxu0 %v3048
        %7016 = vmatpush2.msra.mxu0 %v3047
        %7017 = vmatprep.subr.mxu0 %v3046
        %7018 = vmatpush2.msra.mxu0 %v3045
        %7019 = vmatprep.subr.mxu0 %v3044
        %7020 = vmatpush2.msra.mxu0 %v3043
        %7021 = vmatprep.subr.mxu0 %v3042
        %7022 = vmatpush2.msra.mxu0 %v3041
        %7023 = vmatprep.mubr.f32.mxu0 %v6947
        %7024 = vmatmul.mubr.f32.gmra.mxu0 %v6946
        %v7025 = vpop.f32.mrf.mxu0
        %v7026 = vadd.f32 %v6952, %v7025
        %v7027 = vpop.f32.mrf.mxu0
        %v7028 = vadd.f32 %v6956, %v7027
        %7029 = vdwg.mxu0
        %v7030 = vadd.f32 %v7026, %v3435
        %v7031 = vadd.f32 %v7028, %v3436
        %7032 = vst [vmem:[%s2595] sm:$0xff] %v7030
        %7033 = vst [vmem:[%s2595 + $0x8] sm:$0xff] %v7031
        %s7034 = sand.u32 %s1606, 1
        %s7035 = scalar_lea.sflag [#allocation4], %s7034
        %s7036 = sand.u32 %s1606, 1
        %s7037 = smul.addr %s7036, 16
        %s7038 = scalar_lea.vmem [#allocation70], %s7037
        // Predicated region
        $region465: #{tpu_custom_call.1} parent=287 // pred_check
          %p7039 = pneg %p1616
        $region466: #{tpu_custom_call.1} parent=287 // pred_check_branch
          %7041 = sbr.rel (%p7039) target = $region468
        $region467: #{tpu_custom_call.1} parent=287 // pred_region
          %s7043 = ssub.s32 256, 256
          %7044 = vsyncadd %s7035, %s7043
          %s7045 = smul.addr %s176, 2
          %s7046 = smul.addr %s7045, 128
          %s7047 = scalar_lea.hbm %s135, %s7046
          %s7049 = sshll.u32 %s7038, 4
          %s7050 = int_to_ptr.vmem [resolvable:$true] %s7049
          %7052 = dma.vmem_to_hbm [thread:$0]  %s7050, 256, %s7047, %s7035
        $region468: #{tpu_custom_call.1} parent=287 // pred_fallthru
          _
      $region288: #{tpu_custom_call.1} parent=5 // pred_fallthru
        _
      %p7053 = scmp.le.s32.totalorder 2, %s171
      // Predicated region
      $region469: #{tpu_custom_call.1} parent=5 // pred_check
        %p7054 = pneg %p7053
      $region470: #{tpu_custom_call.1} parent=5 // pred_check_branch
        %7056 = sbr.rel (%p7054) target = $region472
      $region471: #{tpu_custom_call.1} parent=5 // pred_region
        %s7057 = ssub.s32 %s171, 2
        // Predicated region
        $region473: #{tpu_custom_call.1} parent=471 // pred_check
          %p7058 = pneg %p1622
        $region474: #{tpu_custom_call.1} parent=471 // pred_check_branch
          %7060 = sbr.rel (%p7058) target = $region476
        $region475: #{tpu_custom_call.1} parent=471 // pred_region
          %s7061 = sand.u32 %s1607, 1
          %s7062 = scalar_lea.sflag [#allocation4], %s7061
          %s7063 = sand.u32 %s1607, 1
          %s7064 = smul.addr %s7063, 16
          %s7065 = scalar_lea.vmem [#allocation70], %s7064
          %7066 = dma.done %s7062, 256
        $region476: #{tpu_custom_call.1} parent=471 // pred_fallthru
          _
      $region472: #{tpu_custom_call.1} parent=5 // pred_fallthru
        _
    $region6: #{tpu_custom_call.1} parent=1 // loop_footer
      %s175 = sadd.s32 1, %s171
    $region7: #{tpu_custom_call.1} parent=1 // loop_footer_branch
      %170 = sbr.rel target = $region3
    $region8: #{tpu_custom_call.1} parent=1 // loop_exit
      _
    %7067 = vsyncpa [#allocation3], 1
    %s7068 = scalar_lea.sflag [#allocation3], 1
    %7069 = vsyncpa %s7068, 1
    %7070 = vsyncpa [#allocation6], 1
    %s7071 = scalar_lea.sflag [#allocation6], 1
    %7072 = vsyncpa %s7071, 1
    %7073 = vsyncpa [#allocation9], 1
    %7074 = vsyncpa [#allocation12], 1
    %7075 = vsyncpa [#allocation15], 1
    %7076 = vsyncpa [#allocation18], 1
    %7077 = vsyncpa [#allocation21], 1
    %7078 = vsyncpa [#allocation24], 1
    %7079 = vsyncpa [#allocation27], 1
    %7080 = vsyncpa [#allocation30], 1
    %7081 = vsyncpa [#allocation33], 1
    %7082 = vsyncpa [#allocation36], 1
    %7083 = vsyncpa [#allocation39], 1
    %7084 = vsyncpa [#allocation42], 1
    %7085 = vsyncpa [#allocation45], 1
    %7086 = vsyncpa [#allocation48], 1
    %7087 = vsyncpa [#allocation51], 1
    %7088 = vsyncpa [#allocation54], 1
    %7089 = vsyncpa [#allocation57], 1
    %7090 = vsyncpa [#allocation60], 1
    %7091 = vsyncpa [#allocation63], 1
    %7092 = vsyncpa [#allocation66], 1
    %7093 = vsyncpa [#allocation69], 1
    %7094 = vsyncpa [#allocation4], 1
    %s7095 = scalar_lea.sflag [#allocation4], 1
    %7096 = vsyncpa %s7095, 1

</llo_original>
